<compile_context>
chip_gen: v6e
topology: v6e:2x2x1
jax: 0.10.0
libtpu: 0.0.40
codegen_flags: <defaults>
</compile_context>

<pallas_src>
import functools
import math

import jax
import jax.numpy as jnp
from jax.experimental import pallas as pl
from jax.experimental.pallas import tpu as pltpu

DIM = 32
HEADS = 4
HEAD_DIM = DIM // HEADS
DEPTH = 2
FF_DIM = 2048            # nn.TransformerEncoderLayer default dim_feedforward
MLP_HIDDEN = 64
LN_EPS = 1e-5
BN_EPS = 1e-5
NEG_INF = -1e30


def _layer_norm(x, gamma, beta):
    mean = jnp.mean(x, axis=-1, keepdims=True)
    var = jnp.mean((x - mean) ** 2, axis=-1, keepdims=True)
    return (x - mean) * jax.lax.rsqrt(var + LN_EPS) * gamma + beta


def _fused_kernel(batch, seq, n_cont, sum_c,
                  ids_ref, xnum_ref, emb_ref,
                  wqkv_ref, bqkv_ref, wo_ref, bo_ref,
                  g1_ref, be1_ref, wf1_ref, bf1_ref, wf2_ref, bf2_ref,
                  g2_ref, be2_ref,
                  lngf_ref, lnbf_ref, lngn_ref, lnbn_ref,
                  w1f_ref, w1n_ref, b1_ref, w2_ref, b2_ref,
                  whm_ref, whf_ref, whn_ref, bh_ref,
                  o_ref, xf_ref):
    t = batch * seq
    f32 = jnp.float32

    # ---- Embedding lookup in-kernel: one-hot(ids) @ concatenated tables. ----
    # Token rows are s-major (row = s*batch + b) so the later flatten is a set of
    # contiguous, sublane-tile-aligned slices.
    ids = ids_ref[...]                                              # (t, 1) int32
    iota_c = jax.lax.broadcasted_iota(jnp.int32, (t, sum_c), 1)
    onehot = (iota_c == ids).astype(f32)                            # (t, sum_c)
    x = jnp.dot(onehot, emb_ref[...], preferred_element_type=f32)   # (t, DIM)

    # Additive block mask so one (t, t) score matmul realizes per-sample attention.
    row_b = jax.lax.broadcasted_iota(jnp.int32, (t, t), 0) % batch
    col_b = jax.lax.broadcasted_iota(jnp.int32, (t, t), 1) % batch
    attn_bias = jnp.where(row_b == col_b, f32(0.0), f32(NEG_INF))

    for l in range(DEPTH):
        # ---- Multi-head self-attention (eval mode: dropout = identity). ----
        attn = jnp.zeros((t, DIM), f32)
        for h in range(HEADS):
            base = (l * HEADS + h) * 3
            q = jnp.dot(x, wqkv_ref[base + 0, :, :],
                        preferred_element_type=f32) + bqkv_ref[base + 0, :, :]
            k = jnp.dot(x, wqkv_ref[base + 1, :, :],
                        preferred_element_type=f32) + bqkv_ref[base + 1, :, :]
            v = jnp.dot(x, wqkv_ref[base + 2, :, :],
                        preferred_element_type=f32) + bqkv_ref[base + 2, :, :]
            # q @ k^T without materializing a transpose (contract last dims).
            s = jax.lax.dot_general(q, k, (((1,), (1,)), ((), ())),
                                    preferred_element_type=f32) + attn_bias
            s = s - jnp.max(s, axis=-1, keepdims=True)
            p = jnp.exp(s)
            p = p * pl.reciprocal(jnp.sum(p, axis=-1, keepdims=True), approx=True)
            ctx = jnp.dot(p, v, preferred_element_type=f32)          # (t, HEAD_DIM)
            attn = attn + jnp.dot(ctx, wo_ref[l * HEADS + h, :, :],
                                  preferred_element_type=f32)
        attn = attn + bo_ref[l, :, :]

        # Post-norm residual blocks (norm_first=False).
        x = _layer_norm(x + attn, g1_ref[l, :, :], be1_ref[l, :, :])

        # ---- Feed-forward (bf16 MXU inputs, f32 accumulation). ----
        h1 = jnp.dot(x.astype(jnp.bfloat16), wf1_ref[l, :, :],
                     preferred_element_type=f32) + bf1_ref[l, :, :]
        h1 = jnp.maximum(h1, 0.0)
        ff = jnp.dot(h1.astype(jnp.bfloat16), wf2_ref[l, :, :],
                     preferred_element_type=f32) + bf2_ref[l, :, :]
        x = _layer_norm(x + ff, g2_ref[l, :, :], be2_ref[l, :, :])

    # ---- flatten(1): (t, DIM) s-major rows -> lane-dense (batch, seq*DIM). ----
    for s_idx in range(seq):
        xf_ref[:, s_idx * DIM:(s_idx + 1) * DIM] = \
            x[s_idx * batch:(s_idx + 1) * batch, :]
    xf = xf_ref[...]                                                # (batch, seq*DIM)
    xn = xnum_ref[...]                                              # (batch, n_cont)

    # ---- self.norm LayerNorm over concat([xf, xn]) without the concat. ----
    total = seq * DIM + n_cont
    mean = (jnp.sum(xf, axis=-1, keepdims=True)
            + jnp.sum(xn, axis=-1, keepdims=True)) / total
    var = (jnp.sum((xf - mean) ** 2, axis=-1, keepdims=True)
           + jnp.sum((xn - mean) ** 2, axis=-1, keepdims=True)) / total
    inv = jax.lax.rsqrt(var + LN_EPS)
    xfn = (xf - mean) * inv * lngf_ref[...] + lnbf_ref[...]
    xnn = (xn - mean) * inv * lngn_ref[...] + lnbn_ref[...]

    # ---- MLP: Linear (+ folded eval-mode BatchNorm1d) / ReLU / Linear / ReLU. ----
    hidden = (jnp.dot(xfn, w1f_ref[...], preferred_element_type=f32)
              + jnp.dot(xnn, w1n_ref[...], preferred_element_type=f32)
              + b1_ref[...])
    hidden = jnp.maximum(hidden, 0.0)
    hidden = jnp.dot(hidden, w2_ref[...], preferred_element_type=f32) + b2_ref[...]
    hidden = jnp.maximum(hidden, 0.0)

    # ---- head(cat([hidden, xfn, xnn])) via pre-split weights (no concat). ----
    o_ref[...] = (jnp.dot(hidden, whm_ref[...], preferred_element_type=f32)
                  + jnp.dot(xfn, whf_ref[...], preferred_element_type=f32)
                  + jnp.dot(xnn, whn_ref[...], preferred_element_type=f32)
                  + bh_ref[...])


def tab_transformer_forward(params, x_cat, x_num):
    batch, seq = x_cat.shape
    n_cont = x_num.shape[1]
    sum_c = params['emb'].shape[0]
    t = batch * seq

    # Tiny index preprocessing (32 int32s): shift each feature's ids into the
    # concatenated-table index space and lay them out s-major (row = s*batch + b).
    ids = (x_cat.astype(jnp.int32) + params['offsets'][None, :]).T.reshape(t, 1)

    args = (ids, x_num.astype(jnp.float32), params['emb'],
            params['wqkv'], params['bqkv'], params['wo'], params['bo'],
            params['g1'], params['be1'], params['wf1'], params['bf1'],
            params['wf2'], params['bf2'], params['g2'], params['be2'],
            params['lngf'], params['lnbf'], params['lngn'], params['lnbn'],
            params['w1f'], params['w1n'], params['b1'], params['w2'], params['b2'],
            params['whm'], params['whf'], params['whn'], params['bh'])

    kernel = functools.partial(_fused_kernel, batch, seq, n_cont, sum_c)
    out = pl.pallas_call(
        kernel,
        out_shape=jax.ShapeDtypeStruct((batch, 1), jnp.float32),
        in_specs=[pl.BlockSpec(memory_space=pltpu.MemorySpace.VMEM) for _ in args],
        out_specs=pl.BlockSpec(memory_space=pltpu.MemorySpace.VMEM),
        scratch_shapes=[pltpu.VMEM((batch, seq * DIM), jnp.float32)],
    )(*args)
    # Matches torch `.squeeze()` (note: batch of 1 would squeeze to a 0-d array).
    return jnp.squeeze(out)


# ----------------------------------------------------------------------------
# Parameter construction: synthetic PyTorch-layout params, then free transforms
# (per-head splits, Q-scale fold, BatchNorm fold, bf16 FFN weights, head splits).
# ----------------------------------------------------------------------------
def init_params(key, categories, num_continuous):
    n_cat = len(categories)
    flat = DIM * n_cat
    total = flat + num_continuous
    hd = HEAD_DIM
    keys = iter(jax.random.split(key, 256))

    def nrm(shape, scale=0.02):
        return (scale * jax.random.normal(next(keys), shape)).astype(jnp.float32)

    p = {}

    # Embedding tables (torch nn.Embedding ~ N(0,1)), concatenated row-wise.
    tables = [nrm((c, DIM), 1.0) for c in categories]
    p['emb'] = jnp.concatenate(tables, axis=0)
    offsets, off = [], 0
    for c in categories:
        offsets.append(off)
        off += c
    p['offsets'] = jnp.asarray(offsets, dtype=jnp.int32)
    # NOTE: pos_embedding exists as a parameter in the PyTorch module but is never
    # used in forward(); it is intentionally not materialized here.

    scale = 1.0 / math.sqrt(hd)
    wqkv, bqkv, wo, bo = [], [], [], []
    g1, be1, wf1, bf1, wf2, bf2, g2, be2 = ([] for _ in range(8))
    for _ in range(DEPTH):
        in_w = nrm((3 * DIM, DIM))         # in_proj_weight
        in_b = nrm((3 * DIM,))             # in_proj_bias
        out_w = nrm((DIM, DIM))            # out_proj.weight
        out_b = nrm((DIM,))                # out_proj.bias
        for h in range(HEADS):
            for j, sc in ((0, scale), (1, 1.0), (2, 1.0)):   # q (pre-scaled), k, v
                lo = j * DIM + h * hd
                hi = lo + hd
                wqkv.append(in_w[lo:hi, :].T * sc)            # (DIM, hd)
                bqkv.append((in_b[lo:hi] * sc).reshape(1, hd))
            wo.append(out_w.T[h * hd:(h + 1) * hd, :])        # (hd, DIM)
        bo.append(out_b.reshape(1, DIM))
        g1.append(jnp.ones((1, DIM), jnp.float32))
        be1.append(jnp.zeros((1, DIM), jnp.float32))
        l1_w, l1_b = nrm((FF_DIM, DIM)), nrm((FF_DIM,))       # linear1
        l2_w, l2_b = nrm((DIM, FF_DIM)), nrm((DIM,))          # linear2
        wf1.append(l1_w.T.astype(jnp.bfloat16))               # bf16 MXU inputs
        bf1.append(l1_b.reshape(1, FF_DIM))
        wf2.append(l2_w.T.astype(jnp.bfloat16))
        bf2.append(l2_b.reshape(1, DIM))
        g2.append(jnp.ones((1, DIM), jnp.float32))
        be2.append(jnp.zeros((1, DIM), jnp.float32))

    p['wqkv'] = jnp.stack(wqkv)      # (DEPTH*HEADS*3, DIM, hd)
    p['bqkv'] = jnp.stack(bqkv)      # (DEPTH*HEADS*3, 1, hd)
    p['wo'] = jnp.stack(wo)          # (DEPTH*HEADS, hd, DIM)
    p['bo'] = jnp.stack(bo)          # (DEPTH, 1, DIM)
    p['g1'] = jnp.stack(g1)
    p['be1'] = jnp.stack(be1)
    p['wf1'] = jnp.stack(wf1)
    p['bf1'] = jnp.stack(bf1)
    p['wf2'] = jnp.stack(wf2)
    p['bf2'] = jnp.stack(bf2)
    p['g2'] = jnp.stack(g2)
    p['be2'] = jnp.stack(be2)

    # self.norm = LayerNorm(total), split into transformer-flat / continuous parts.
    ln_g = jnp.ones((total,), jnp.float32)
    ln_b = jnp.zeros((total,), jnp.float32)
    p['lngf'] = ln_g[:flat].reshape(1, flat)
    p['lnbf'] = ln_b[:flat].reshape(1, flat)
    p['lngn'] = ln_g[flat:].reshape(1, num_continuous)
    p['lnbn'] = ln_b[flat:].reshape(1, num_continuous)

    # mlp[0] Linear(total, MLP_HIDDEN) with eval-mode BatchNorm1d folded in.
    m1_w, m1_b = nrm((MLP_HIDDEN, total)), nrm((MLP_HIDDEN,))
    bn_g = jnp.ones((MLP_HIDDEN,), jnp.float32)
    bn_b = jnp.zeros((MLP_HIDDEN,), jnp.float32)
    bn_m = jnp.zeros((MLP_HIDDEN,), jnp.float32)   # running_mean
    bn_v = jnp.ones((MLP_HIDDEN,), jnp.float32)    # running_var
    bn_s = bn_g / jnp.sqrt(bn_v + BN_EPS)
    w1 = m1_w.T * bn_s[None, :]
    b1 = (m1_b - bn_m) * bn_s + bn_b
    p['w1f'] = w1[:flat, :]
    p['w1n'] = w1[flat:, :]
    p['b1'] = b1.reshape(1, MLP_HIDDEN)

    m2_w, m2_b = nrm((MLP_HIDDEN, MLP_HIDDEN)), nrm((MLP_HIDDEN,))
    p['w2'] = m2_w.T
    p['b2'] = m2_b.reshape(1, MLP_HIDDEN)

    # head Linear(MLP_HIDDEN + total, 1), split to avoid the in-kernel concat.
    h_w, h_b = nrm((1, MLP_HIDDEN + total)), nrm((1,))
    wh = h_w.T
    p['whm'] = wh[:MLP_HIDDEN, :]
    p['whf'] = wh[MLP_HIDDEN:MLP_HIDDEN + flat, :]
    p['whn'] = wh[MLP_HIDDEN + flat:, :]
    p['bh'] = h_b.reshape(1, 1)
    return p


if __name__ == "__main__":
    categories = (5, 7, 4, 6)
    num_continuous = 6
    batch = 8

    key = jax.random.PRNGKey(0)
    kp, kc, kn = jax.random.split(key, 3)
    params = init_params(kp, categories, num_continuous)

    x_cat = jnp.stack(
        [jax.random.randint(jax.random.fold_in(kc, i), (batch,), 0, c)
         for i, c in enumerate(categories)], axis=1).astype(jnp.int32)     # (8, 4)
    x_num = jax.random.normal(kn, (batch, num_continuous), dtype=jnp.float32)  # (8, 6)

    fwd = jax.jit(tab_transformer_forward)
    out = jax.block_until_ready(fwd(params, x_cat, x_num))
    assert out.shape == (batch,), out.shape
    assert bool(jnp.all(jnp.isfinite(out)))
    print("KERNEL_OK")
</pallas_src>

<mosaic_0001>
module attributes {stable_mosaic.version = 11 : i64} {
  func.func @_fused_kernel(%arg0: memref<32x1xi32, #tpu.memory_space<vmem>>, %arg1: memref<8x6xf32, #tpu.memory_space<vmem>>, %arg2: memref<22x32xf32, #tpu.memory_space<vmem>>, %arg3: memref<24x32x8xf32, #tpu.memory_space<vmem>>, %arg4: memref<24x1x8xf32, #tpu.memory_space<vmem>>, %arg5: memref<8x8x32xf32, #tpu.memory_space<vmem>>, %arg6: memref<2x1x32xf32, #tpu.memory_space<vmem>>, %arg7: memref<2x1x32xf32, #tpu.memory_space<vmem>>, %arg8: memref<2x1x32xf32, #tpu.memory_space<vmem>>, %arg9: memref<2x32x2048xbf16, #tpu.memory_space<vmem>>, %arg10: memref<2x1x2048xf32, #tpu.memory_space<vmem>>, %arg11: memref<2x2048x32xbf16, #tpu.memory_space<vmem>>, %arg12: memref<2x1x32xf32, #tpu.memory_space<vmem>>, %arg13: memref<2x1x32xf32, #tpu.memory_space<vmem>>, %arg14: memref<2x1x32xf32, #tpu.memory_space<vmem>>, %arg15: memref<1x128xf32, #tpu.memory_space<vmem>>, %arg16: memref<1x128xf32, #tpu.memory_space<vmem>>, %arg17: memref<1x6xf32, #tpu.memory_space<vmem>>, %arg18: memref<1x6xf32, #tpu.memory_space<vmem>>, %arg19: memref<128x64xf32, #tpu.memory_space<vmem>>, %arg20: memref<6x64xf32, #tpu.memory_space<vmem>>, %arg21: memref<1x64xf32, #tpu.memory_space<vmem>>, %arg22: memref<64x64xf32, #tpu.memory_space<vmem>>, %arg23: memref<1x64xf32, #tpu.memory_space<vmem>>, %arg24: memref<64x1xf32, #tpu.memory_space<vmem>>, %arg25: memref<128x1xf32, #tpu.memory_space<vmem>>, %arg26: memref<6x1xf32, #tpu.memory_space<vmem>>, %arg27: memref<1x1xf32, #tpu.memory_space<vmem>>, %arg28: memref<8x1xf32, #tpu.memory_space<vmem>>, %arg29: memref<8x128xf32, #tpu.memory_space<vmem>>) attributes {dimension_semantics = [], scalar_prefetch = 0 : i64, scratch_operands = 1 : i64, tpu.core_type = #tpu.core_type<tc>} {
    %c0 = arith.constant 0 : index
    %c0_0 = arith.constant 0 : index
    %0 = vector.load %arg0[%c0, %c0_0] : memref<32x1xi32, #tpu.memory_space<vmem>>, vector<32x1xi32>
    %1 = tpu.iota {dimensions = array<i32: 1>} : vector<32x22xi32>
    %2 = vector.broadcast %0 : vector<32x1xi32> to vector<32x22xi32>
    %3 = arith.cmpi eq, %1, %2 : vector<32x22xi32>
    %4 = arith.extui %3 : vector<32x22xi1> to vector<32x22xi32>
    %5 = arith.sitofp %4 : vector<32x22xi32> to vector<32x22xf32>
    %c0_1 = arith.constant 0 : index
    %c0_2 = arith.constant 0 : index
    %6 = vector.load %arg2[%c0_1, %c0_2] : memref<22x32xf32, #tpu.memory_space<vmem>>, vector<22x32xf32>
    %cst = arith.constant dense<0.000000e+00> : vector<32x32xf32>
    %7 = tpu.matmul %5, %6, %cst {dimension_numbers = #tpu.dot_dimension_numbers<[1], [0], [0], [1], [0, 0, 1, 1], [], []>} : vector<32x22xf32>, vector<22x32xf32>, vector<32x32xf32> -> vector<32x32xf32>
    %8 = tpu.iota {dimensions = array<i32: 0>} : vector<32x32xi32>
    %c8_i32 = arith.constant 8 : i32
    %c0_i32 = arith.constant 0 : i32
    %9 = arith.cmpi eq, %c8_i32, %c0_i32 : i32
    %c1_i32 = arith.constant 1 : i32
    %10 = arith.select %9, %c1_i32, %c8_i32 : i32
    %11 = vector.broadcast %10 : i32 to vector<32x32xi32>
    %12 = arith.remsi %8, %11 : vector<32x32xi32>
    %c0_i32_3 = arith.constant 0 : i32
    %13 = vector.broadcast %c0_i32_3 : i32 to vector<32x32xi32>
    %14 = arith.cmpi ne, %12, %13 : vector<32x32xi32>
    %c0_i32_4 = arith.constant 0 : i32
    %15 = vector.broadcast %c0_i32_4 : i32 to vector<32x32xi32>
    %16 = arith.cmpi slt, %12, %15 : vector<32x32xi32>
    %c0_i32_5 = arith.constant 0 : i32
    %17 = arith.cmpi slt, %10, %c0_i32_5 : i32
    %18 = vector.broadcast %17 : i1 to vector<32x32xi1>
    %19 = vector.broadcast %18 : vector<32x32xi1> to vector<32x32xi1>
    %20 = arith.xori %16, %19 : vector<32x32xi1>
    %21 = arith.andi %20, %14 : vector<32x32xi1>
    %22 = vector.broadcast %10 : i32 to vector<32x32xi32>
    %23 = arith.addi %12, %22 : vector<32x32xi32>
    %24 = arith.select %21, %23, %12 : vector<32x32xi1>, vector<32x32xi32>
    %25 = tpu.iota {dimensions = array<i32: 1>} : vector<32x32xi32>
    %c8_i32_6 = arith.constant 8 : i32
    %c0_i32_7 = arith.constant 0 : i32
    %26 = arith.cmpi eq, %c8_i32_6, %c0_i32_7 : i32
    %c1_i32_8 = arith.constant 1 : i32
    %27 = arith.select %26, %c1_i32_8, %c8_i32_6 : i32
    %28 = vector.broadcast %27 : i32 to vector<32x32xi32>
    %29 = arith.remsi %25, %28 : vector<32x32xi32>
    %c0_i32_9 = arith.constant 0 : i32
    %30 = vector.broadcast %c0_i32_9 : i32 to vector<32x32xi32>
    %31 = arith.cmpi ne, %29, %30 : vector<32x32xi32>
    %c0_i32_10 = arith.constant 0 : i32
    %32 = vector.broadcast %c0_i32_10 : i32 to vector<32x32xi32>
    %33 = arith.cmpi slt, %29, %32 : vector<32x32xi32>
    %c0_i32_11 = arith.constant 0 : i32
    %34 = arith.cmpi slt, %27, %c0_i32_11 : i32
    %35 = vector.broadcast %34 : i1 to vector<32x32xi1>
    %36 = vector.broadcast %35 : vector<32x32xi1> to vector<32x32xi1>
    %37 = arith.xori %33, %36 : vector<32x32xi1>
    %38 = arith.andi %37, %31 : vector<32x32xi1>
    %39 = vector.broadcast %27 : i32 to vector<32x32xi32>
    %40 = arith.addi %29, %39 : vector<32x32xi32>
    %41 = arith.select %38, %40, %29 : vector<32x32xi1>, vector<32x32xi32>
    %42 = arith.cmpi eq, %24, %41 : vector<32x32xi32>
    %cst_12 = arith.constant 0.000000e+00 : f32
    %cst_13 = arith.constant -1.000000e+30 : f32
    %43 = vector.broadcast %cst_12 : f32 to vector<32x32xf32>
    %44 = vector.broadcast %cst_13 : f32 to vector<32x32xf32>
    %45 = arith.select %42, %43, %44 : vector<32x32xi1>, vector<32x32xf32>
    %cst_14 = arith.constant 0.000000e+00 : f32
    %46 = vector.broadcast %cst_14 : f32 to vector<32x32xf32>
    %c0_15 = arith.constant 0 : index
    %c0_16 = arith.constant 0 : index
    %c0_17 = arith.constant 0 : index
    %47 = vector.load %arg3[%c0_15, %c0_16, %c0_17] : memref<24x32x8xf32, #tpu.memory_space<vmem>>, vector<1x32x8xf32>
    %48 = vector.shape_cast %47 : vector<1x32x8xf32> to vector<32x8xf32>
    %cst_18 = arith.constant dense<0.000000e+00> : vector<32x8xf32>
    %49 = tpu.matmul %7, %48, %cst_18 {dimension_numbers = #tpu.dot_dimension_numbers<[1], [0], [0], [1], [0, 0, 1, 1], [], []>} : vector<32x32xf32>, vector<32x8xf32>, vector<32x8xf32> -> vector<32x8xf32>
    %c0_19 = arith.constant 0 : index
    %c0_20 = arith.constant 0 : index
    %c0_21 = arith.constant 0 : index
    %50 = vector.load %arg4[%c0_19, %c0_20, %c0_21] : memref<24x1x8xf32, #tpu.memory_space<vmem>>, vector<1x1x8xf32>
    %51 = vector.shape_cast %50 : vector<1x1x8xf32> to vector<1x8xf32>
    %52 = vector.broadcast %51 : vector<1x8xf32> to vector<32x8xf32>
    %53 = arith.addf %49, %52 : vector<32x8xf32>
    %c1 = arith.constant 1 : index
    %c0_22 = arith.constant 0 : index
    %c0_23 = arith.constant 0 : index
    %54 = vector.load %arg3[%c1, %c0_22, %c0_23] : memref<24x32x8xf32, #tpu.memory_space<vmem>>, vector<1x32x8xf32>
    %55 = vector.shape_cast %54 : vector<1x32x8xf32> to vector<32x8xf32>
    %cst_24 = arith.constant dense<0.000000e+00> : vector<32x8xf32>
    %56 = tpu.matmul %7, %55, %cst_24 {dimension_numbers = #tpu.dot_dimension_numbers<[1], [0], [0], [1], [0, 0, 1, 1], [], []>} : vector<32x32xf32>, vector<32x8xf32>, vector<32x8xf32> -> vector<32x8xf32>
    %c1_25 = arith.constant 1 : index
    %c0_26 = arith.constant 0 : index
    %c0_27 = arith.constant 0 : index
    %57 = vector.load %arg4[%c1_25, %c0_26, %c0_27] : memref<24x1x8xf32, #tpu.memory_space<vmem>>, vector<1x1x8xf32>
    %58 = vector.shape_cast %57 : vector<1x1x8xf32> to vector<1x8xf32>
    %59 = vector.broadcast %58 : vector<1x8xf32> to vector<32x8xf32>
    %60 = arith.addf %56, %59 : vector<32x8xf32>
    %c2 = arith.constant 2 : index
    %c0_28 = arith.constant 0 : index
    %c0_29 = arith.constant 0 : index
    %61 = vector.load %arg3[%c2, %c0_28, %c0_29] : memref<24x32x8xf32, #tpu.memory_space<vmem>>, vector<1x32x8xf32>
    %62 = vector.shape_cast %61 : vector<1x32x8xf32> to vector<32x8xf32>
    %cst_30 = arith.constant dense<0.000000e+00> : vector<32x8xf32>
    %63 = tpu.matmul %7, %62, %cst_30 {dimension_numbers = #tpu.dot_dimension_numbers<[1], [0], [0], [1], [0, 0, 1, 1], [], []>} : vector<32x32xf32>, vector<32x8xf32>, vector<32x8xf32> -> vector<32x8xf32>
    %c2_31 = arith.constant 2 : index
    %c0_32 = arith.constant 0 : index
    %c0_33 = arith.constant 0 : index
    %64 = vector.load %arg4[%c2_31, %c0_32, %c0_33] : memref<24x1x8xf32, #tpu.memory_space<vmem>>, vector<1x1x8xf32>
    %65 = vector.shape_cast %64 : vector<1x1x8xf32> to vector<1x8xf32>
    %66 = vector.broadcast %65 : vector<1x8xf32> to vector<32x8xf32>
    %67 = arith.addf %63, %66 : vector<32x8xf32>
    %cst_34 = arith.constant dense<0.000000e+00> : vector<32x32xf32>
    %68 = tpu.matmul %53, %60, %cst_34 {dimension_numbers = #tpu.dot_dimension_numbers<[1], [1], [0], [0], [0, 0, 1, 0], [], []>} : vector<32x8xf32>, vector<32x8xf32>, vector<32x32xf32> -> vector<32x32xf32>
    %69 = arith.addf %68, %45 : vector<32x32xf32>
    %cst_35 = arith.constant dense<0xFF800000> : vector<32xf32>
    %70 = vector.multi_reduction <maximumf>, %69, %cst_35 [1] : vector<32x32xf32> to vector<32xf32>
    %71 = vector.shape_cast %70 : vector<32xf32> to vector<32x1xf32>
    %72 = vector.broadcast %71 : vector<32x1xf32> to vector<32x32xf32>
    %73 = arith.subf %69, %72 : vector<32x32xf32>
    %74 = math.exp %73 : vector<32x32xf32>
    %cst_36 = arith.constant dense<0.000000e+00> : vector<32xf32>
    %75 = vector.multi_reduction <add>, %74, %cst_36 [1] : vector<32x32xf32> to vector<32xf32>
    %76 = vector.shape_cast %75 : vector<32xf32> to vector<32x1xf32>
    %77 = tpu.reciprocal %76 {approx = true} : vector<32x1xf32> -> vector<32x1xf32>
    %78 = vector.broadcast %77 : vector<32x1xf32> to vector<32x32xf32>
    %79 = arith.mulf %74, %78 : vector<32x32xf32>
    %cst_37 = arith.constant dense<0.000000e+00> : vector<32x8xf32>
    %80 = tpu.matmul %79, %67, %cst_37 {dimension_numbers = #tpu.dot_dimension_numbers<[1], [0], [0], [1], [0, 0, 1, 1], [], []>} : vector<32x32xf32>, vector<32x8xf32>, vector<32x8xf32> -> vector<32x8xf32>
    %c0_38 = arith.constant 0 : index
    %c0_39 = arith.constant 0 : index
    %c0_40 = arith.constant 0 : index
    %81 = vector.load %arg5[%c0_38, %c0_39, %c0_40] : memref<8x8x32xf32, #tpu.memory_space<vmem>>, vector<1x8x32xf32>
    %82 = vector.shape_cast %81 : vector<1x8x32xf32> to vector<8x32xf32>
    %cst_41 = arith.constant dense<0.000000e+00> : vector<32x32xf32>
    %83 = tpu.matmul %80, %82, %cst_41 {dimension_numbers = #tpu.dot_dimension_numbers<[1], [0], [0], [1], [0, 0, 1, 1], [], []>} : vector<32x8xf32>, vector<8x32xf32>, vector<32x32xf32> -> vector<32x32xf32>
    %84 = arith.addf %46, %83 : vector<32x32xf32>
    %c3 = arith.constant 3 : index
    %c0_42 = arith.constant 0 : index
    %c0_43 = arith.constant 0 : index
    %85 = vector.load %arg3[%c3, %c0_42, %c0_43] : memref<24x32x8xf32, #tpu.memory_space<vmem>>, vector<1x32x8xf32>
    %86 = vector.shape_cast %85 : vector<1x32x8xf32> to vector<32x8xf32>
    %cst_44 = arith.constant dense<0.000000e+00> : vector<32x8xf32>
    %87 = tpu.matmul %7, %86, %cst_44 {dimension_numbers = #tpu.dot_dimension_numbers<[1], [0], [0], [1], [0, 0, 1, 1], [], []>} : vector<32x32xf32>, vector<32x8xf32>, vector<32x8xf32> -> vector<32x8xf32>
    %c3_45 = arith.constant 3 : index
    %c0_46 = arith.constant 0 : index
    %c0_47 = arith.constant 0 : index
    %88 = vector.load %arg4[%c3_45, %c0_46, %c0_47] : memref<24x1x8xf32, #tpu.memory_space<vmem>>, vector<1x1x8xf32>
    %89 = vector.shape_cast %88 : vector<1x1x8xf32> to vector<1x8xf32>
    %90 = vector.broadcast %89 : vector<1x8xf32> to vector<32x8xf32>
    %91 = arith.addf %87, %90 : vector<32x8xf32>
    %c4 = arith.constant 4 : index
    %c0_48 = arith.constant 0 : index
    %c0_49 = arith.constant 0 : index
    %92 = vector.load %arg3[%c4, %c0_48, %c0_49] : memref<24x32x8xf32, #tpu.memory_space<vmem>>, vector<1x32x8xf32>
    %93 = vector.shape_cast %92 : vector<1x32x8xf32> to vector<32x8xf32>
    %cst_50 = arith.constant dense<0.000000e+00> : vector<32x8xf32>
    %94 = tpu.matmul %7, %93, %cst_50 {dimension_numbers = #tpu.dot_dimension_numbers<[1], [0], [0], [1], [0, 0, 1, 1], [], []>} : vector<32x32xf32>, vector<32x8xf32>, vector<32x8xf32> -> vector<32x8xf32>
    %c4_51 = arith.constant 4 : index
    %c0_52 = arith.constant 0 : index
    %c0_53 = arith.constant 0 : index
    %95 = vector.load %arg4[%c4_51, %c0_52, %c0_53] : memref<24x1x8xf32, #tpu.memory_space<vmem>>, vector<1x1x8xf32>
    %96 = vector.shape_cast %95 : vector<1x1x8xf32> to vector<1x8xf32>
    %97 = vector.broadcast %96 : vector<1x8xf32> to vector<32x8xf32>
    %98 = arith.addf %94, %97 : vector<32x8xf32>
    %c5 = arith.constant 5 : index
    %c0_54 = arith.constant 0 : index
    %c0_55 = arith.constant 0 : index
    %99 = vector.load %arg3[%c5, %c0_54, %c0_55] : memref<24x32x8xf32, #tpu.memory_space<vmem>>, vector<1x32x8xf32>
    %100 = vector.shape_cast %99 : vector<1x32x8xf32> to vector<32x8xf32>
    %cst_56 = arith.constant dense<0.000000e+00> : vector<32x8xf32>
    %101 = tpu.matmul %7, %100, %cst_56 {dimension_numbers = #tpu.dot_dimension_numbers<[1], [0], [0], [1], [0, 0, 1, 1], [], []>} : vector<32x32xf32>, vector<32x8xf32>, vector<32x8xf32> -> vector<32x8xf32>
    %c5_57 = arith.constant 5 : index
    %c0_58 = arith.constant 0 : index
    %c0_59 = arith.constant 0 : index
    %102 = vector.load %arg4[%c5_57, %c0_58, %c0_59] : memref<24x1x8xf32, #tpu.memory_space<vmem>>, vector<1x1x8xf32>
    %103 = vector.shape_cast %102 : vector<1x1x8xf32> to vector<1x8xf32>
    %104 = vector.broadcast %103 : vector<1x8xf32> to vector<32x8xf32>
    %105 = arith.addf %101, %104 : vector<32x8xf32>
    %cst_60 = arith.constant dense<0.000000e+00> : vector<32x32xf32>
    %106 = tpu.matmul %91, %98, %cst_60 {dimension_numbers = #tpu.dot_dimension_numbers<[1], [1], [0], [0], [0, 0, 1, 0], [], []>} : vector<32x8xf32>, vector<32x8xf32>, vector<32x32xf32> -> vector<32x32xf32>
    %107 = arith.addf %106, %45 : vector<32x32xf32>
    %cst_61 = arith.constant dense<0xFF800000> : vector<32xf32>
    %108 = vector.multi_reduction <maximumf>, %107, %cst_61 [1] : vector<32x32xf32> to vector<32xf32>
    %109 = vector.shape_cast %108 : vector<32xf32> to vector<32x1xf32>
    %110 = vector.broadcast %109 : vector<32x1xf32> to vector<32x32xf32>
    %111 = arith.subf %107, %110 : vector<32x32xf32>
    %112 = math.exp %111 : vector<32x32xf32>
    %cst_62 = arith.constant dense<0.000000e+00> : vector<32xf32>
    %113 = vector.multi_reduction <add>, %112, %cst_62 [1] : vector<32x32xf32> to vector<32xf32>
    %114 = vector.shape_cast %113 : vector<32xf32> to vector<32x1xf32>
    %115 = tpu.reciprocal %114 {approx = true} : vector<32x1xf32> -> vector<32x1xf32>
    %116 = vector.broadcast %115 : vector<32x1xf32> to vector<32x32xf32>
    %117 = arith.mulf %112, %116 : vector<32x32xf32>
    %cst_63 = arith.constant dense<0.000000e+00> : vector<32x8xf32>
    %118 = tpu.matmul %117, %105, %cst_63 {dimension_numbers = #tpu.dot_dimension_numbers<[1], [0], [0], [1], [0, 0, 1, 1], [], []>} : vector<32x32xf32>, vector<32x8xf32>, vector<32x8xf32> -> vector<32x8xf32>
    %c1_64 = arith.constant 1 : index
    %c0_65 = arith.constant 0 : index
    %c0_66 = arith.constant 0 : index
    %119 = vector.load %arg5[%c1_64, %c0_65, %c0_66] : memref<8x8x32xf32, #tpu.memory_space<vmem>>, vector<1x8x32xf32>
    %120 = vector.shape_cast %119 : vector<1x8x32xf32> to vector<8x32xf32>
    %cst_67 = arith.constant dense<0.000000e+00> : vector<32x32xf32>
    %121 = tpu.matmul %118, %120, %cst_67 {dimension_numbers = #tpu.dot_dimension_numbers<[1], [0], [0], [1], [0, 0, 1, 1], [], []>} : vector<32x8xf32>, vector<8x32xf32>, vector<32x32xf32> -> vector<32x32xf32>
    %122 = arith.addf %84, %121 : vector<32x32xf32>
    %c6 = arith.constant 6 : index
    %c0_68 = arith.constant 0 : index
    %c0_69 = arith.constant 0 : index
    %123 = vector.load %arg3[%c6, %c0_68, %c0_69] : memref<24x32x8xf32, #tpu.memory_space<vmem>>, vector<1x32x8xf32>
    %124 = vector.shape_cast %123 : vector<1x32x8xf32> to vector<32x8xf32>
    %cst_70 = arith.constant dense<0.000000e+00> : vector<32x8xf32>
    %125 = tpu.matmul %7, %124, %cst_70 {dimension_numbers = #tpu.dot_dimension_numbers<[1], [0], [0], [1], [0, 0, 1, 1], [], []>} : vector<32x32xf32>, vector<32x8xf32>, vector<32x8xf32> -> vector<32x8xf32>
    %c6_71 = arith.constant 6 : index
    %c0_72 = arith.constant 0 : index
    %c0_73 = arith.constant 0 : index
    %126 = vector.load %arg4[%c6_71, %c0_72, %c0_73] : memref<24x1x8xf32, #tpu.memory_space<vmem>>, vector<1x1x8xf32>
    %127 = vector.shape_cast %126 : vector<1x1x8xf32> to vector<1x8xf32>
    %128 = vector.broadcast %127 : vector<1x8xf32> to vector<32x8xf32>
    %129 = arith.addf %125, %128 : vector<32x8xf32>
    %c7 = arith.constant 7 : index
    %c0_74 = arith.constant 0 : index
    %c0_75 = arith.constant 0 : index
    %130 = vector.load %arg3[%c7, %c0_74, %c0_75] : memref<24x32x8xf32, #tpu.memory_space<vmem>>, vector<1x32x8xf32>
    %131 = vector.shape_cast %130 : vector<1x32x8xf32> to vector<32x8xf32>
    %cst_76 = arith.constant dense<0.000000e+00> : vector<32x8xf32>
    %132 = tpu.matmul %7, %131, %cst_76 {dimension_numbers = #tpu.dot_dimension_numbers<[1], [0], [0], [1], [0, 0, 1, 1], [], []>} : vector<32x32xf32>, vector<32x8xf32>, vector<32x8xf32> -> vector<32x8xf32>
    %c7_77 = arith.constant 7 : index
    %c0_78 = arith.constant 0 : index
    %c0_79 = arith.constant 0 : index
    %133 = vector.load %arg4[%c7_77, %c0_78, %c0_79] : memref<24x1x8xf32, #tpu.memory_space<vmem>>, vector<1x1x8xf32>
    %134 = vector.shape_cast %133 : vector<1x1x8xf32> to vector<1x8xf32>
    %135 = vector.broadcast %134 : vector<1x8xf32> to vector<32x8xf32>
    %136 = arith.addf %132, %135 : vector<32x8xf32>
    %c8 = arith.constant 8 : index
    %c0_80 = arith.constant 0 : index
    %c0_81 = arith.constant 0 : index
    %137 = vector.load %arg3[%c8, %c0_80, %c0_81] : memref<24x32x8xf32, #tpu.memory_space<vmem>>, vector<1x32x8xf32>
    %138 = vector.shape_cast %137 : vector<1x32x8xf32> to vector<32x8xf32>
    %cst_82 = arith.constant dense<0.000000e+00> : vector<32x8xf32>
    %139 = tpu.matmul %7, %138, %cst_82 {dimension_numbers = #tpu.dot_dimension_numbers<[1], [0], [0], [1], [0, 0, 1, 1], [], []>} : vector<32x32xf32>, vector<32x8xf32>, vector<32x8xf32> -> vector<32x8xf32>
    %c8_83 = arith.constant 8 : index
    %c0_84 = arith.constant 0 : index
    %c0_85 = arith.constant 0 : index
    %140 = vector.load %arg4[%c8_83, %c0_84, %c0_85] : memref<24x1x8xf32, #tpu.memory_space<vmem>>, vector<1x1x8xf32>
    %141 = vector.shape_cast %140 : vector<1x1x8xf32> to vector<1x8xf32>
    %142 = vector.broadcast %141 : vector<1x8xf32> to vector<32x8xf32>
    %143 = arith.addf %139, %142 : vector<32x8xf32>
    %cst_86 = arith.constant dense<0.000000e+00> : vector<32x32xf32>
    %144 = tpu.matmul %129, %136, %cst_86 {dimension_numbers = #tpu.dot_dimension_numbers<[1], [1], [0], [0], [0, 0, 1, 0], [], []>} : vector<32x8xf32>, vector<32x8xf32>, vector<32x32xf32> -> vector<32x32xf32>
    %145 = arith.addf %144, %45 : vector<32x32xf32>
    %cst_87 = arith.constant dense<0xFF800000> : vector<32xf32>
    %146 = vector.multi_reduction <maximumf>, %145, %cst_87 [1] : vector<32x32xf32> to vector<32xf32>
    %147 = vector.shape_cast %146 : vector<32xf32> to vector<32x1xf32>
    %148 = vector.broadcast %147 : vector<32x1xf32> to vector<32x32xf32>
    %149 = arith.subf %145, %148 : vector<32x32xf32>
    %150 = math.exp %149 : vector<32x32xf32>
    %cst_88 = arith.constant dense<0.000000e+00> : vector<32xf32>
    %151 = vector.multi_reduction <add>, %150, %cst_88 [1] : vector<32x32xf32> to vector<32xf32>
    %152 = vector.shape_cast %151 : vector<32xf32> to vector<32x1xf32>
    %153 = tpu.reciprocal %152 {approx = true} : vector<32x1xf32> -> vector<32x1xf32>
    %154 = vector.broadcast %153 : vector<32x1xf32> to vector<32x32xf32>
    %155 = arith.mulf %150, %154 : vector<32x32xf32>
    %cst_89 = arith.constant dense<0.000000e+00> : vector<32x8xf32>
    %156 = tpu.matmul %155, %143, %cst_89 {dimension_numbers = #tpu.dot_dimension_numbers<[1], [0], [0], [1], [0, 0, 1, 1], [], []>} : vector<32x32xf32>, vector<32x8xf32>, vector<32x8xf32> -> vector<32x8xf32>
    %c2_90 = arith.constant 2 : index
    %c0_91 = arith.constant 0 : index
    %c0_92 = arith.constant 0 : index
    %157 = vector.load %arg5[%c2_90, %c0_91, %c0_92] : memref<8x8x32xf32, #tpu.memory_space<vmem>>, vector<1x8x32xf32>
    %158 = vector.shape_cast %157 : vector<1x8x32xf32> to vector<8x32xf32>
    %cst_93 = arith.constant dense<0.000000e+00> : vector<32x32xf32>
    %159 = tpu.matmul %156, %158, %cst_93 {dimension_numbers = #tpu.dot_dimension_numbers<[1], [0], [0], [1], [0, 0, 1, 1], [], []>} : vector<32x8xf32>, vector<8x32xf32>, vector<32x32xf32> -> vector<32x32xf32>
    %160 = arith.addf %122, %159 : vector<32x32xf32>
    %c9 = arith.constant 9 : index
    %c0_94 = arith.constant 0 : index
    %c0_95 = arith.constant 0 : index
    %161 = vector.load %arg3[%c9, %c0_94, %c0_95] : memref<24x32x8xf32, #tpu.memory_space<vmem>>, vector<1x32x8xf32>
    %162 = vector.shape_cast %161 : vector<1x32x8xf32> to vector<32x8xf32>
    %cst_96 = arith.constant dense<0.000000e+00> : vector<32x8xf32>
    %163 = tpu.matmul %7, %162, %cst_96 {dimension_numbers = #tpu.dot_dimension_numbers<[1], [0], [0], [1], [0, 0, 1, 1], [], []>} : vector<32x32xf32>, vector<32x8xf32>, vector<32x8xf32> -> vector<32x8xf32>
    %c9_97 = arith.constant 9 : index
    %c0_98 = arith.constant 0 : index
    %c0_99 = arith.constant 0 : index
    %164 = vector.load %arg4[%c9_97, %c0_98, %c0_99] : memref<24x1x8xf32, #tpu.memory_space<vmem>>, vector<1x1x8xf32>
    %165 = vector.shape_cast %164 : vector<1x1x8xf32> to vector<1x8xf32>
    %166 = vector.broadcast %165 : vector<1x8xf32> to vector<32x8xf32>
    %167 = arith.addf %163, %166 : vector<32x8xf32>
    %c10 = arith.constant 10 : index
    %c0_100 = arith.constant 0 : index
    %c0_101 = arith.constant 0 : index
    %168 = vector.load %arg3[%c10, %c0_100, %c0_101] : memref<24x32x8xf32, #tpu.memory_space<vmem>>, vector<1x32x8xf32>
    %169 = vector.shape_cast %168 : vector<1x32x8xf32> to vector<32x8xf32>
    %cst_102 = arith.constant dense<0.000000e+00> : vector<32x8xf32>
    %170 = tpu.matmul %7, %169, %cst_102 {dimension_numbers = #tpu.dot_dimension_numbers<[1], [0], [0], [1], [0, 0, 1, 1], [], []>} : vector<32x32xf32>, vector<32x8xf32>, vector<32x8xf32> -> vector<32x8xf32>
    %c10_103 = arith.constant 10 : index
    %c0_104 = arith.constant 0 : index
    %c0_105 = arith.constant 0 : index
    %171 = vector.load %arg4[%c10_103, %c0_104, %c0_105] : memref<24x1x8xf32, #tpu.memory_space<vmem>>, vector<1x1x8xf32>
    %172 = vector.shape_cast %171 : vector<1x1x8xf32> to vector<1x8xf32>
    %173 = vector.broadcast %172 : vector<1x8xf32> to vector<32x8xf32>
    %174 = arith.addf %170, %173 : vector<32x8xf32>
    %c11 = arith.constant 11 : index
    %c0_106 = arith.constant 0 : index
    %c0_107 = arith.constant 0 : index
    %175 = vector.load %arg3[%c11, %c0_106, %c0_107] : memref<24x32x8xf32, #tpu.memory_space<vmem>>, vector<1x32x8xf32>
    %176 = vector.shape_cast %175 : vector<1x32x8xf32> to vector<32x8xf32>
    %cst_108 = arith.constant dense<0.000000e+00> : vector<32x8xf32>
    %177 = tpu.matmul %7, %176, %cst_108 {dimension_numbers = #tpu.dot_dimension_numbers<[1], [0], [0], [1], [0, 0, 1, 1], [], []>} : vector<32x32xf32>, vector<32x8xf32>, vector<32x8xf32> -> vector<32x8xf32>
    %c11_109 = arith.constant 11 : index
    %c0_110 = arith.constant 0 : index
    %c0_111 = arith.constant 0 : index
    %178 = vector.load %arg4[%c11_109, %c0_110, %c0_111] : memref<24x1x8xf32, #tpu.memory_space<vmem>>, vector<1x1x8xf32>
    %179 = vector.shape_cast %178 : vector<1x1x8xf32> to vector<1x8xf32>
    %180 = vector.broadcast %179 : vector<1x8xf32> to vector<32x8xf32>
    %181 = arith.addf %177, %180 : vector<32x8xf32>
    %cst_112 = arith.constant dense<0.000000e+00> : vector<32x32xf32>
    %182 = tpu.matmul %167, %174, %cst_112 {dimension_numbers = #tpu.dot_dimension_numbers<[1], [1], [0], [0], [0, 0, 1, 0], [], []>} : vector<32x8xf32>, vector<32x8xf32>, vector<32x32xf32> -> vector<32x32xf32>
    %183 = arith.addf %182, %45 : vector<32x32xf32>
    %cst_113 = arith.constant dense<0xFF800000> : vector<32xf32>
    %184 = vector.multi_reduction <maximumf>, %183, %cst_113 [1] : vector<32x32xf32> to vector<32xf32>
    %185 = vector.shape_cast %184 : vector<32xf32> to vector<32x1xf32>
    %186 = vector.broadcast %185 : vector<32x1xf32> to vector<32x32xf32>
    %187 = arith.subf %183, %186 : vector<32x32xf32>
    %188 = math.exp %187 : vector<32x32xf32>
    %cst_114 = arith.constant dense<0.000000e+00> : vector<32xf32>
    %189 = vector.multi_reduction <add>, %188, %cst_114 [1] : vector<32x32xf32> to vector<32xf32>
    %190 = vector.shape_cast %189 : vector<32xf32> to vector<32x1xf32>
    %191 = tpu.reciprocal %190 {approx = true} : vector<32x1xf32> -> vector<32x1xf32>
    %192 = vector.broadcast %191 : vector<32x1xf32> to vector<32x32xf32>
    %193 = arith.mulf %188, %192 : vector<32x32xf32>
    %cst_115 = arith.constant dense<0.000000e+00> : vector<32x8xf32>
    %194 = tpu.matmul %193, %181, %cst_115 {dimension_numbers = #tpu.dot_dimension_numbers<[1], [0], [0], [1], [0, 0, 1, 1], [], []>} : vector<32x32xf32>, vector<32x8xf32>, vector<32x8xf32> -> vector<32x8xf32>
    %c3_116 = arith.constant 3 : index
    %c0_117 = arith.constant 0 : index
    %c0_118 = arith.constant 0 : index
    %195 = vector.load %arg5[%c3_116, %c0_117, %c0_118] : memref<8x8x32xf32, #tpu.memory_space<vmem>>, vector<1x8x32xf32>
    %196 = vector.shape_cast %195 : vector<1x8x32xf32> to vector<8x32xf32>
    %cst_119 = arith.constant dense<0.000000e+00> : vector<32x32xf32>
    %197 = tpu.matmul %194, %196, %cst_119 {dimension_numbers = #tpu.dot_dimension_numbers<[1], [0], [0], [1], [0, 0, 1, 1], [], []>} : vector<32x8xf32>, vector<8x32xf32>, vector<32x32xf32> -> vector<32x32xf32>
    %198 = arith.addf %160, %197 : vector<32x32xf32>
    %c0_120 = arith.constant 0 : index
    %c0_121 = arith.constant 0 : index
    %c0_122 = arith.constant 0 : index
    %199 = vector.load %arg6[%c0_120, %c0_121, %c0_122] : memref<2x1x32xf32, #tpu.memory_space<vmem>>, vector<1x1x32xf32>
    %200 = vector.shape_cast %199 : vector<1x1x32xf32> to vector<1x32xf32>
    %201 = vector.broadcast %200 : vector<1x32xf32> to vector<32x32xf32>
    %202 = arith.addf %198, %201 : vector<32x32xf32>
    %203 = arith.addf %7, %202 : vector<32x32xf32>
    %c0_123 = arith.constant 0 : index
    %c0_124 = arith.constant 0 : index
    %c0_125 = arith.constant 0 : index
    %204 = vector.load %arg7[%c0_123, %c0_124, %c0_125] : memref<2x1x32xf32, #tpu.memory_space<vmem>>, vector<1x1x32xf32>
    %205 = vector.shape_cast %204 : vector<1x1x32xf32> to vector<1x32xf32>
    %c0_126 = arith.constant 0 : index
    %c0_127 = arith.constant 0 : index
    %c0_128 = arith.constant 0 : index
    %206 = vector.load %arg8[%c0_126, %c0_127, %c0_128] : memref<2x1x32xf32, #tpu.memory_space<vmem>>, vector<1x1x32xf32>
    %207 = vector.shape_cast %206 : vector<1x1x32xf32> to vector<1x32xf32>
    %cst_129 = arith.constant dense<0.000000e+00> : vector<32xf32>
    %208 = vector.multi_reduction <add>, %203, %cst_129 [1] : vector<32x32xf32> to vector<32xf32>
    %209 = vector.shape_cast %208 : vector<32xf32> to vector<32x1xf32>
    %cst_130 = arith.constant 3.200000e+01 : f32
    %210 = vector.broadcast %cst_130 : f32 to vector<32x1xf32>
    %211 = arith.divf %209, %210 : vector<32x1xf32>
    %212 = vector.broadcast %211 : vector<32x1xf32> to vector<32x32xf32>
    %213 = arith.subf %203, %212 : vector<32x32xf32>
    %214 = arith.mulf %213, %213 : vector<32x32xf32>
    %cst_131 = arith.constant dense<0.000000e+00> : vector<32xf32>
    %215 = vector.multi_reduction <add>, %214, %cst_131 [1] : vector<32x32xf32> to vector<32xf32>
    %216 = vector.shape_cast %215 : vector<32xf32> to vector<32x1xf32>
    %cst_132 = arith.constant 3.200000e+01 : f32
    %217 = vector.broadcast %cst_132 : f32 to vector<32x1xf32>
    %218 = arith.divf %216, %217 : vector<32x1xf32>
    %219 = vector.broadcast %211 : vector<32x1xf32> to vector<32x32xf32>
    %220 = arith.subf %203, %219 : vector<32x32xf32>
    %cst_133 = arith.constant 9.99999974E-6 : f32
    %221 = vector.broadcast %cst_133 : f32 to vector<32x1xf32>
    %222 = arith.addf %218, %221 : vector<32x1xf32>
    %223 = math.rsqrt %222 : vector<32x1xf32>
    %224 = vector.broadcast %223 : vector<32x1xf32> to vector<32x32xf32>
    %225 = arith.mulf %220, %224 : vector<32x32xf32>
    %226 = vector.broadcast %205 : vector<1x32xf32> to vector<32x32xf32>
    %227 = arith.mulf %225, %226 : vector<32x32xf32>
    %228 = vector.broadcast %207 : vector<1x32xf32> to vector<32x32xf32>
    %229 = arith.addf %227, %228 : vector<32x32xf32>
    %230 = arith.truncf %229 : vector<32x32xf32> to vector<32x32xbf16>
    %c0_134 = arith.constant 0 : index
    %c0_135 = arith.constant 0 : index
    %c0_136 = arith.constant 0 : index
    %231 = vector.load %arg9[%c0_134, %c0_135, %c0_136] : memref<2x32x2048xbf16, #tpu.memory_space<vmem>>, vector<1x32x2048xbf16>
    %232 = vector.shape_cast %231 : vector<1x32x2048xbf16> to vector<32x2048xbf16>
    %cst_137 = arith.constant dense<0.000000e+00> : vector<32x2048xf32>
    %233 = tpu.matmul %230, %232, %cst_137 {dimension_numbers = #tpu.dot_dimension_numbers<[1], [0], [0], [1], [0, 0, 1, 1], [], []>} : vector<32x32xbf16>, vector<32x2048xbf16>, vector<32x2048xf32> -> vector<32x2048xf32>
    %c0_138 = arith.constant 0 : index
    %c0_139 = arith.constant 0 : index
    %c0_140 = arith.constant 0 : index
    %234 = vector.load %arg10[%c0_138, %c0_139, %c0_140] : memref<2x1x2048xf32, #tpu.memory_space<vmem>>, vector<1x1x2048xf32>
    %235 = vector.shape_cast %234 : vector<1x1x2048xf32> to vector<1x2048xf32>
    %236 = vector.broadcast %235 : vector<1x2048xf32> to vector<32x2048xf32>
    %237 = arith.addf %233, %236 : vector<32x2048xf32>
    %cst_141 = arith.constant 0.000000e+00 : f32
    %238 = vector.broadcast %cst_141 : f32 to vector<32x2048xf32>
    %239 = arith.maximumf %237, %238 : vector<32x2048xf32>
    %240 = arith.truncf %239 : vector<32x2048xf32> to vector<32x2048xbf16>
    %c0_142 = arith.constant 0 : index
    %c0_143 = arith.constant 0 : index
    %c0_144 = arith.constant 0 : index
    %241 = vector.load %arg11[%c0_142, %c0_143, %c0_144] : memref<2x2048x32xbf16, #tpu.memory_space<vmem>>, vector<1x2048x32xbf16>
    %242 = vector.shape_cast %241 : vector<1x2048x32xbf16> to vector<2048x32xbf16>
    %cst_145 = arith.constant dense<0.000000e+00> : vector<32x32xf32>
    %243 = tpu.matmul %240, %242, %cst_145 {dimension_numbers = #tpu.dot_dimension_numbers<[1], [0], [0], [1], [0, 0, 1, 1], [], []>} : vector<32x2048xbf16>, vector<2048x32xbf16>, vector<32x32xf32> -> vector<32x32xf32>
    %c0_146 = arith.constant 0 : index
    %c0_147 = arith.constant 0 : index
    %c0_148 = arith.constant 0 : index
    %244 = vector.load %arg12[%c0_146, %c0_147, %c0_148] : memref<2x1x32xf32, #tpu.memory_space<vmem>>, vector<1x1x32xf32>
    %245 = vector.shape_cast %244 : vector<1x1x32xf32> to vector<1x32xf32>
    %246 = vector.broadcast %245 : vector<1x32xf32> to vector<32x32xf32>
    %247 = arith.addf %243, %246 : vector<32x32xf32>
    %248 = arith.addf %229, %247 : vector<32x32xf32>
    %c0_149 = arith.constant 0 : index
    %c0_150 = arith.constant 0 : index
    %c0_151 = arith.constant 0 : index
    %249 = vector.load %arg13[%c0_149, %c0_150, %c0_151] : memref<2x1x32xf32, #tpu.memory_space<vmem>>, vector<1x1x32xf32>
    %250 = vector.shape_cast %249 : vector<1x1x32xf32> to vector<1x32xf32>
    %c0_152 = arith.constant 0 : index
    %c0_153 = arith.constant 0 : index
    %c0_154 = arith.constant 0 : index
    %251 = vector.load %arg14[%c0_152, %c0_153, %c0_154] : memref<2x1x32xf32, #tpu.memory_space<vmem>>, vector<1x1x32xf32>
    %252 = vector.shape_cast %251 : vector<1x1x32xf32> to vector<1x32xf32>
    %cst_155 = arith.constant dense<0.000000e+00> : vector<32xf32>
    %253 = vector.multi_reduction <add>, %248, %cst_155 [1] : vector<32x32xf32> to vector<32xf32>
    %254 = vector.shape_cast %253 : vector<32xf32> to vector<32x1xf32>
    %cst_156 = arith.constant 3.200000e+01 : f32
    %255 = vector.broadcast %cst_156 : f32 to vector<32x1xf32>
    %256 = arith.divf %254, %255 : vector<32x1xf32>
    %257 = vector.broadcast %256 : vector<32x1xf32> to vector<32x32xf32>
    %258 = arith.subf %248, %257 : vector<32x32xf32>
    %259 = arith.mulf %258, %258 : vector<32x32xf32>
    %cst_157 = arith.constant dense<0.000000e+00> : vector<32xf32>
    %260 = vector.multi_reduction <add>, %259, %cst_157 [1] : vector<32x32xf32> to vector<32xf32>
    %261 = vector.shape_cast %260 : vector<32xf32> to vector<32x1xf32>
    %cst_158 = arith.constant 3.200000e+01 : f32
    %262 = vector.broadcast %cst_158 : f32 to vector<32x1xf32>
    %263 = arith.divf %261, %262 : vector<32x1xf32>
    %264 = vector.broadcast %256 : vector<32x1xf32> to vector<32x32xf32>
    %265 = arith.subf %248, %264 : vector<32x32xf32>
    %cst_159 = arith.constant 9.99999974E-6 : f32
    %266 = vector.broadcast %cst_159 : f32 to vector<32x1xf32>
    %267 = arith.addf %263, %266 : vector<32x1xf32>
    %268 = math.rsqrt %267 : vector<32x1xf32>
    %269 = vector.broadcast %268 : vector<32x1xf32> to vector<32x32xf32>
    %270 = arith.mulf %265, %269 : vector<32x32xf32>
    %271 = vector.broadcast %250 : vector<1x32xf32> to vector<32x32xf32>
    %272 = arith.mulf %270, %271 : vector<32x32xf32>
    %273 = vector.broadcast %252 : vector<1x32xf32> to vector<32x32xf32>
    %274 = arith.addf %272, %273 : vector<32x32xf32>
    %cst_160 = arith.constant 0.000000e+00 : f32
    %275 = vector.broadcast %cst_160 : f32 to vector<32x32xf32>
    %c12 = arith.constant 12 : index
    %c0_161 = arith.constant 0 : index
    %c0_162 = arith.constant 0 : index
    %276 = vector.load %arg3[%c12, %c0_161, %c0_162] : memref<24x32x8xf32, #tpu.memory_space<vmem>>, vector<1x32x8xf32>
    %277 = vector.shape_cast %276 : vector<1x32x8xf32> to vector<32x8xf32>
    %cst_163 = arith.constant dense<0.000000e+00> : vector<32x8xf32>
    %278 = tpu.matmul %274, %277, %cst_163 {dimension_numbers = #tpu.dot_dimension_numbers<[1], [0], [0], [1], [0, 0, 1, 1], [], []>} : vector<32x32xf32>, vector<32x8xf32>, vector<32x8xf32> -> vector<32x8xf32>
    %c12_164 = arith.constant 12 : index
    %c0_165 = arith.constant 0 : index
    %c0_166 = arith.constant 0 : index
    %279 = vector.load %arg4[%c12_164, %c0_165, %c0_166] : memref<24x1x8xf32, #tpu.memory_space<vmem>>, vector<1x1x8xf32>
    %280 = vector.shape_cast %279 : vector<1x1x8xf32> to vector<1x8xf32>
    %281 = vector.broadcast %280 : vector<1x8xf32> to vector<32x8xf32>
    %282 = arith.addf %278, %281 : vector<32x8xf32>
    %c13 = arith.constant 13 : index
    %c0_167 = arith.constant 0 : index
    %c0_168 = arith.constant 0 : index
    %283 = vector.load %arg3[%c13, %c0_167, %c0_168] : memref<24x32x8xf32, #tpu.memory_space<vmem>>, vector<1x32x8xf32>
    %284 = vector.shape_cast %283 : vector<1x32x8xf32> to vector<32x8xf32>
    %cst_169 = arith.constant dense<0.000000e+00> : vector<32x8xf32>
    %285 = tpu.matmul %274, %284, %cst_169 {dimension_numbers = #tpu.dot_dimension_numbers<[1], [0], [0], [1], [0, 0, 1, 1], [], []>} : vector<32x32xf32>, vector<32x8xf32>, vector<32x8xf32> -> vector<32x8xf32>
    %c13_170 = arith.constant 13 : index
    %c0_171 = arith.constant 0 : index
    %c0_172 = arith.constant 0 : index
    %286 = vector.load %arg4[%c13_170, %c0_171, %c0_172] : memref<24x1x8xf32, #tpu.memory_space<vmem>>, vector<1x1x8xf32>
    %287 = vector.shape_cast %286 : vector<1x1x8xf32> to vector<1x8xf32>
    %288 = vector.broadcast %287 : vector<1x8xf32> to vector<32x8xf32>
    %289 = arith.addf %285, %288 : vector<32x8xf32>
    %c14 = arith.constant 14 : index
    %c0_173 = arith.constant 0 : index
    %c0_174 = arith.constant 0 : index
    %290 = vector.load %arg3[%c14, %c0_173, %c0_174] : memref<24x32x8xf32, #tpu.memory_space<vmem>>, vector<1x32x8xf32>
    %291 = vector.shape_cast %290 : vector<1x32x8xf32> to vector<32x8xf32>
    %cst_175 = arith.constant dense<0.000000e+00> : vector<32x8xf32>
    %292 = tpu.matmul %274, %291, %cst_175 {dimension_numbers = #tpu.dot_dimension_numbers<[1], [0], [0], [1], [0, 0, 1, 1], [], []>} : vector<32x32xf32>, vector<32x8xf32>, vector<32x8xf32> -> vector<32x8xf32>
    %c14_176 = arith.constant 14 : index
    %c0_177 = arith.constant 0 : index
    %c0_178 = arith.constant 0 : index
    %293 = vector.load %arg4[%c14_176, %c0_177, %c0_178] : memref<24x1x8xf32, #tpu.memory_space<vmem>>, vector<1x1x8xf32>
    %294 = vector.shape_cast %293 : vector<1x1x8xf32> to vector<1x8xf32>
    %295 = vector.broadcast %294 : vector<1x8xf32> to vector<32x8xf32>
    %296 = arith.addf %292, %295 : vector<32x8xf32>
    %cst_179 = arith.constant dense<0.000000e+00> : vector<32x32xf32>
    %297 = tpu.matmul %282, %289, %cst_179 {dimension_numbers = #tpu.dot_dimension_numbers<[1], [1], [0], [0], [0, 0, 1, 0], [], []>} : vector<32x8xf32>, vector<32x8xf32>, vector<32x32xf32> -> vector<32x32xf32>
    %298 = arith.addf %297, %45 : vector<32x32xf32>
    %cst_180 = arith.constant dense<0xFF800000> : vector<32xf32>
    %299 = vector.multi_reduction <maximumf>, %298, %cst_180 [1] : vector<32x32xf32> to vector<32xf32>
    %300 = vector.shape_cast %299 : vector<32xf32> to vector<32x1xf32>
    %301 = vector.broadcast %300 : vector<32x1xf32> to vector<32x32xf32>
    %302 = arith.subf %298, %301 : vector<32x32xf32>
    %303 = math.exp %302 : vector<32x32xf32>
    %cst_181 = arith.constant dense<0.000000e+00> : vector<32xf32>
    %304 = vector.multi_reduction <add>, %303, %cst_181 [1] : vector<32x32xf32> to vector<32xf32>
    %305 = vector.shape_cast %304 : vector<32xf32> to vector<32x1xf32>
    %306 = tpu.reciprocal %305 {approx = true} : vector<32x1xf32> -> vector<32x1xf32>
    %307 = vector.broadcast %306 : vector<32x1xf32> to vector<32x32xf32>
    %308 = arith.mulf %303, %307 : vector<32x32xf32>
    %cst_182 = arith.constant dense<0.000000e+00> : vector<32x8xf32>
    %309 = tpu.matmul %308, %296, %cst_182 {dimension_numbers = #tpu.dot_dimension_numbers<[1], [0], [0], [1], [0, 0, 1, 1], [], []>} : vector<32x32xf32>, vector<32x8xf32>, vector<32x8xf32> -> vector<32x8xf32>
    %c4_183 = arith.constant 4 : index
    %c0_184 = arith.constant 0 : index
    %c0_185 = arith.constant 0 : index
    %310 = vector.load %arg5[%c4_183, %c0_184, %c0_185] : memref<8x8x32xf32, #tpu.memory_space<vmem>>, vector<1x8x32xf32>
    %311 = vector.shape_cast %310 : vector<1x8x32xf32> to vector<8x32xf32>
    %cst_186 = arith.constant dense<0.000000e+00> : vector<32x32xf32>
    %312 = tpu.matmul %309, %311, %cst_186 {dimension_numbers = #tpu.dot_dimension_numbers<[1], [0], [0], [1], [0, 0, 1, 1], [], []>} : vector<32x8xf32>, vector<8x32xf32>, vector<32x32xf32> -> vector<32x32xf32>
    %313 = arith.addf %275, %312 : vector<32x32xf32>
    %c15 = arith.constant 15 : index
    %c0_187 = arith.constant 0 : index
    %c0_188 = arith.constant 0 : index
    %314 = vector.load %arg3[%c15, %c0_187, %c0_188] : memref<24x32x8xf32, #tpu.memory_space<vmem>>, vector<1x32x8xf32>
    %315 = vector.shape_cast %314 : vector<1x32x8xf32> to vector<32x8xf32>
    %cst_189 = arith.constant dense<0.000000e+00> : vector<32x8xf32>
    %316 = tpu.matmul %274, %315, %cst_189 {dimension_numbers = #tpu.dot_dimension_numbers<[1], [0], [0], [1], [0, 0, 1, 1], [], []>} : vector<32x32xf32>, vector<32x8xf32>, vector<32x8xf32> -> vector<32x8xf32>
    %c15_190 = arith.constant 15 : index
    %c0_191 = arith.constant 0 : index
    %c0_192 = arith.constant 0 : index
    %317 = vector.load %arg4[%c15_190, %c0_191, %c0_192] : memref<24x1x8xf32, #tpu.memory_space<vmem>>, vector<1x1x8xf32>
    %318 = vector.shape_cast %317 : vector<1x1x8xf32> to vector<1x8xf32>
    %319 = vector.broadcast %318 : vector<1x8xf32> to vector<32x8xf32>
    %320 = arith.addf %316, %319 : vector<32x8xf32>
    %c16 = arith.constant 16 : index
    %c0_193 = arith.constant 0 : index
    %c0_194 = arith.constant 0 : index
    %321 = vector.load %arg3[%c16, %c0_193, %c0_194] : memref<24x32x8xf32, #tpu.memory_space<vmem>>, vector<1x32x8xf32>
    %322 = vector.shape_cast %321 : vector<1x32x8xf32> to vector<32x8xf32>
    %cst_195 = arith.constant dense<0.000000e+00> : vector<32x8xf32>
    %323 = tpu.matmul %274, %322, %cst_195 {dimension_numbers = #tpu.dot_dimension_numbers<[1], [0], [0], [1], [0, 0, 1, 1], [], []>} : vector<32x32xf32>, vector<32x8xf32>, vector<32x8xf32> -> vector<32x8xf32>
    %c16_196 = arith.constant 16 : index
    %c0_197 = arith.constant 0 : index
    %c0_198 = arith.constant 0 : index
    %324 = vector.load %arg4[%c16_196, %c0_197, %c0_198] : memref<24x1x8xf32, #tpu.memory_space<vmem>>, vector<1x1x8xf32>
    %325 = vector.shape_cast %324 : vector<1x1x8xf32> to vector<1x8xf32>
    %326 = vector.broadcast %325 : vector<1x8xf32> to vector<32x8xf32>
    %327 = arith.addf %323, %326 : vector<32x8xf32>
    %c17 = arith.constant 17 : index
    %c0_199 = arith.constant 0 : index
    %c0_200 = arith.constant 0 : index
    %328 = vector.load %arg3[%c17, %c0_199, %c0_200] : memref<24x32x8xf32, #tpu.memory_space<vmem>>, vector<1x32x8xf32>
    %329 = vector.shape_cast %328 : vector<1x32x8xf32> to vector<32x8xf32>
    %cst_201 = arith.constant dense<0.000000e+00> : vector<32x8xf32>
    %330 = tpu.matmul %274, %329, %cst_201 {dimension_numbers = #tpu.dot_dimension_numbers<[1], [0], [0], [1], [0, 0, 1, 1], [], []>} : vector<32x32xf32>, vector<32x8xf32>, vector<32x8xf32> -> vector<32x8xf32>
    %c17_202 = arith.constant 17 : index
    %c0_203 = arith.constant 0 : index
    %c0_204 = arith.constant 0 : index
    %331 = vector.load %arg4[%c17_202, %c0_203, %c0_204] : memref<24x1x8xf32, #tpu.memory_space<vmem>>, vector<1x1x8xf32>
    %332 = vector.shape_cast %331 : vector<1x1x8xf32> to vector<1x8xf32>
    %333 = vector.broadcast %332 : vector<1x8xf32> to vector<32x8xf32>
    %334 = arith.addf %330, %333 : vector<32x8xf32>
    %cst_205 = arith.constant dense<0.000000e+00> : vector<32x32xf32>
    %335 = tpu.matmul %320, %327, %cst_205 {dimension_numbers = #tpu.dot_dimension_numbers<[1], [1], [0], [0], [0, 0, 1, 0], [], []>} : vector<32x8xf32>, vector<32x8xf32>, vector<32x32xf32> -> vector<32x32xf32>
    %336 = arith.addf %335, %45 : vector<32x32xf32>
    %cst_206 = arith.constant dense<0xFF800000> : vector<32xf32>
    %337 = vector.multi_reduction <maximumf>, %336, %cst_206 [1] : vector<32x32xf32> to vector<32xf32>
    %338 = vector.shape_cast %337 : vector<32xf32> to vector<32x1xf32>
    %339 = vector.broadcast %338 : vector<32x1xf32> to vector<32x32xf32>
    %340 = arith.subf %336, %339 : vector<32x32xf32>
    %341 = math.exp %340 : vector<32x32xf32>
    %cst_207 = arith.constant dense<0.000000e+00> : vector<32xf32>
    %342 = vector.multi_reduction <add>, %341, %cst_207 [1] : vector<32x32xf32> to vector<32xf32>
    %343 = vector.shape_cast %342 : vector<32xf32> to vector<32x1xf32>
    %344 = tpu.reciprocal %343 {approx = true} : vector<32x1xf32> -> vector<32x1xf32>
    %345 = vector.broadcast %344 : vector<32x1xf32> to vector<32x32xf32>
    %346 = arith.mulf %341, %345 : vector<32x32xf32>
    %cst_208 = arith.constant dense<0.000000e+00> : vector<32x8xf32>
    %347 = tpu.matmul %346, %334, %cst_208 {dimension_numbers = #tpu.dot_dimension_numbers<[1], [0], [0], [1], [0, 0, 1, 1], [], []>} : vector<32x32xf32>, vector<32x8xf32>, vector<32x8xf32> -> vector<32x8xf32>
    %c5_209 = arith.constant 5 : index
    %c0_210 = arith.constant 0 : index
    %c0_211 = arith.constant 0 : index
    %348 = vector.load %arg5[%c5_209, %c0_210, %c0_211] : memref<8x8x32xf32, #tpu.memory_space<vmem>>, vector<1x8x32xf32>
    %349 = vector.shape_cast %348 : vector<1x8x32xf32> to vector<8x32xf32>
    %cst_212 = arith.constant dense<0.000000e+00> : vector<32x32xf32>
    %350 = tpu.matmul %347, %349, %cst_212 {dimension_numbers = #tpu.dot_dimension_numbers<[1], [0], [0], [1], [0, 0, 1, 1], [], []>} : vector<32x8xf32>, vector<8x32xf32>, vector<32x32xf32> -> vector<32x32xf32>
    %351 = arith.addf %313, %350 : vector<32x32xf32>
    %c18 = arith.constant 18 : index
    %c0_213 = arith.constant 0 : index
    %c0_214 = arith.constant 0 : index
    %352 = vector.load %arg3[%c18, %c0_213, %c0_214] : memref<24x32x8xf32, #tpu.memory_space<vmem>>, vector<1x32x8xf32>
    %353 = vector.shape_cast %352 : vector<1x32x8xf32> to vector<32x8xf32>
    %cst_215 = arith.constant dense<0.000000e+00> : vector<32x8xf32>
    %354 = tpu.matmul %274, %353, %cst_215 {dimension_numbers = #tpu.dot_dimension_numbers<[1], [0], [0], [1], [0, 0, 1, 1], [], []>} : vector<32x32xf32>, vector<32x8xf32>, vector<32x8xf32> -> vector<32x8xf32>
    %c18_216 = arith.constant 18 : index
    %c0_217 = arith.constant 0 : index
    %c0_218 = arith.constant 0 : index
    %355 = vector.load %arg4[%c18_216, %c0_217, %c0_218] : memref<24x1x8xf32, #tpu.memory_space<vmem>>, vector<1x1x8xf32>
    %356 = vector.shape_cast %355 : vector<1x1x8xf32> to vector<1x8xf32>
    %357 = vector.broadcast %356 : vector<1x8xf32> to vector<32x8xf32>
    %358 = arith.addf %354, %357 : vector<32x8xf32>
    %c19 = arith.constant 19 : index
    %c0_219 = arith.constant 0 : index
    %c0_220 = arith.constant 0 : index
    %359 = vector.load %arg3[%c19, %c0_219, %c0_220] : memref<24x32x8xf32, #tpu.memory_space<vmem>>, vector<1x32x8xf32>
    %360 = vector.shape_cast %359 : vector<1x32x8xf32> to vector<32x8xf32>
    %cst_221 = arith.constant dense<0.000000e+00> : vector<32x8xf32>
    %361 = tpu.matmul %274, %360, %cst_221 {dimension_numbers = #tpu.dot_dimension_numbers<[1], [0], [0], [1], [0, 0, 1, 1], [], []>} : vector<32x32xf32>, vector<32x8xf32>, vector<32x8xf32> -> vector<32x8xf32>
    %c19_222 = arith.constant 19 : index
    %c0_223 = arith.constant 0 : index
    %c0_224 = arith.constant 0 : index
    %362 = vector.load %arg4[%c19_222, %c0_223, %c0_224] : memref<24x1x8xf32, #tpu.memory_space<vmem>>, vector<1x1x8xf32>
    %363 = vector.shape_cast %362 : vector<1x1x8xf32> to vector<1x8xf32>
    %364 = vector.broadcast %363 : vector<1x8xf32> to vector<32x8xf32>
    %365 = arith.addf %361, %364 : vector<32x8xf32>
    %c20 = arith.constant 20 : index
    %c0_225 = arith.constant 0 : index
    %c0_226 = arith.constant 0 : index
    %366 = vector.load %arg3[%c20, %c0_225, %c0_226] : memref<24x32x8xf32, #tpu.memory_space<vmem>>, vector<1x32x8xf32>
    %367 = vector.shape_cast %366 : vector<1x32x8xf32> to vector<32x8xf32>
    %cst_227 = arith.constant dense<0.000000e+00> : vector<32x8xf32>
    %368 = tpu.matmul %274, %367, %cst_227 {dimension_numbers = #tpu.dot_dimension_numbers<[1], [0], [0], [1], [0, 0, 1, 1], [], []>} : vector<32x32xf32>, vector<32x8xf32>, vector<32x8xf32> -> vector<32x8xf32>
    %c20_228 = arith.constant 20 : index
    %c0_229 = arith.constant 0 : index
    %c0_230 = arith.constant 0 : index
    %369 = vector.load %arg4[%c20_228, %c0_229, %c0_230] : memref<24x1x8xf32, #tpu.memory_space<vmem>>, vector<1x1x8xf32>
    %370 = vector.shape_cast %369 : vector<1x1x8xf32> to vector<1x8xf32>
    %371 = vector.broadcast %370 : vector<1x8xf32> to vector<32x8xf32>
    %372 = arith.addf %368, %371 : vector<32x8xf32>
    %cst_231 = arith.constant dense<0.000000e+00> : vector<32x32xf32>
    %373 = tpu.matmul %358, %365, %cst_231 {dimension_numbers = #tpu.dot_dimension_numbers<[1], [1], [0], [0], [0, 0, 1, 0], [], []>} : vector<32x8xf32>, vector<32x8xf32>, vector<32x32xf32> -> vector<32x32xf32>
    %374 = arith.addf %373, %45 : vector<32x32xf32>
    %cst_232 = arith.constant dense<0xFF800000> : vector<32xf32>
    %375 = vector.multi_reduction <maximumf>, %374, %cst_232 [1] : vector<32x32xf32> to vector<32xf32>
    %376 = vector.shape_cast %375 : vector<32xf32> to vector<32x1xf32>
    %377 = vector.broadcast %376 : vector<32x1xf32> to vector<32x32xf32>
    %378 = arith.subf %374, %377 : vector<32x32xf32>
    %379 = math.exp %378 : vector<32x32xf32>
    %cst_233 = arith.constant dense<0.000000e+00> : vector<32xf32>
    %380 = vector.multi_reduction <add>, %379, %cst_233 [1] : vector<32x32xf32> to vector<32xf32>
    %381 = vector.shape_cast %380 : vector<32xf32> to vector<32x1xf32>
    %382 = tpu.reciprocal %381 {approx = true} : vector<32x1xf32> -> vector<32x1xf32>
    %383 = vector.broadcast %382 : vector<32x1xf32> to vector<32x32xf32>
    %384 = arith.mulf %379, %383 : vector<32x32xf32>
    %cst_234 = arith.constant dense<0.000000e+00> : vector<32x8xf32>
    %385 = tpu.matmul %384, %372, %cst_234 {dimension_numbers = #tpu.dot_dimension_numbers<[1], [0], [0], [1], [0, 0, 1, 1], [], []>} : vector<32x32xf32>, vector<32x8xf32>, vector<32x8xf32> -> vector<32x8xf32>
    %c6_235 = arith.constant 6 : index
    %c0_236 = arith.constant 0 : index
    %c0_237 = arith.constant 0 : index
    %386 = vector.load %arg5[%c6_235, %c0_236, %c0_237] : memref<8x8x32xf32, #tpu.memory_space<vmem>>, vector<1x8x32xf32>
    %387 = vector.shape_cast %386 : vector<1x8x32xf32> to vector<8x32xf32>
    %cst_238 = arith.constant dense<0.000000e+00> : vector<32x32xf32>
    %388 = tpu.matmul %385, %387, %cst_238 {dimension_numbers = #tpu.dot_dimension_numbers<[1], [0], [0], [1], [0, 0, 1, 1], [], []>} : vector<32x8xf32>, vector<8x32xf32>, vector<32x32xf32> -> vector<32x32xf32>
    %389 = arith.addf %351, %388 : vector<32x32xf32>
    %c21 = arith.constant 21 : index
    %c0_239 = arith.constant 0 : index
    %c0_240 = arith.constant 0 : index
    %390 = vector.load %arg3[%c21, %c0_239, %c0_240] : memref<24x32x8xf32, #tpu.memory_space<vmem>>, vector<1x32x8xf32>
    %391 = vector.shape_cast %390 : vector<1x32x8xf32> to vector<32x8xf32>
    %cst_241 = arith.constant dense<0.000000e+00> : vector<32x8xf32>
    %392 = tpu.matmul %274, %391, %cst_241 {dimension_numbers = #tpu.dot_dimension_numbers<[1], [0], [0], [1], [0, 0, 1, 1], [], []>} : vector<32x32xf32>, vector<32x8xf32>, vector<32x8xf32> -> vector<32x8xf32>
    %c21_242 = arith.constant 21 : index
    %c0_243 = arith.constant 0 : index
    %c0_244 = arith.constant 0 : index
    %393 = vector.load %arg4[%c21_242, %c0_243, %c0_244] : memref<24x1x8xf32, #tpu.memory_space<vmem>>, vector<1x1x8xf32>
    %394 = vector.shape_cast %393 : vector<1x1x8xf32> to vector<1x8xf32>
    %395 = vector.broadcast %394 : vector<1x8xf32> to vector<32x8xf32>
    %396 = arith.addf %392, %395 : vector<32x8xf32>
    %c22 = arith.constant 22 : index
    %c0_245 = arith.constant 0 : index
    %c0_246 = arith.constant 0 : index
    %397 = vector.load %arg3[%c22, %c0_245, %c0_246] : memref<24x32x8xf32, #tpu.memory_space<vmem>>, vector<1x32x8xf32>
    %398 = vector.shape_cast %397 : vector<1x32x8xf32> to vector<32x8xf32>
    %cst_247 = arith.constant dense<0.000000e+00> : vector<32x8xf32>
    %399 = tpu.matmul %274, %398, %cst_247 {dimension_numbers = #tpu.dot_dimension_numbers<[1], [0], [0], [1], [0, 0, 1, 1], [], []>} : vector<32x32xf32>, vector<32x8xf32>, vector<32x8xf32> -> vector<32x8xf32>
    %c22_248 = arith.constant 22 : index
    %c0_249 = arith.constant 0 : index
    %c0_250 = arith.constant 0 : index
    %400 = vector.load %arg4[%c22_248, %c0_249, %c0_250] : memref<24x1x8xf32, #tpu.memory_space<vmem>>, vector<1x1x8xf32>
    %401 = vector.shape_cast %400 : vector<1x1x8xf32> to vector<1x8xf32>
    %402 = vector.broadcast %401 : vector<1x8xf32> to vector<32x8xf32>
    %403 = arith.addf %399, %402 : vector<32x8xf32>
    %c23 = arith.constant 23 : index
    %c0_251 = arith.constant 0 : index
    %c0_252 = arith.constant 0 : index
    %404 = vector.load %arg3[%c23, %c0_251, %c0_252] : memref<24x32x8xf32, #tpu.memory_space<vmem>>, vector<1x32x8xf32>
    %405 = vector.shape_cast %404 : vector<1x32x8xf32> to vector<32x8xf32>
    %cst_253 = arith.constant dense<0.000000e+00> : vector<32x8xf32>
    %406 = tpu.matmul %274, %405, %cst_253 {dimension_numbers = #tpu.dot_dimension_numbers<[1], [0], [0], [1], [0, 0, 1, 1], [], []>} : vector<32x32xf32>, vector<32x8xf32>, vector<32x8xf32> -> vector<32x8xf32>
    %c23_254 = arith.constant 23 : index
    %c0_255 = arith.constant 0 : index
    %c0_256 = arith.constant 0 : index
    %407 = vector.load %arg4[%c23_254, %c0_255, %c0_256] : memref<24x1x8xf32, #tpu.memory_space<vmem>>, vector<1x1x8xf32>
    %408 = vector.shape_cast %407 : vector<1x1x8xf32> to vector<1x8xf32>
    %409 = vector.broadcast %408 : vector<1x8xf32> to vector<32x8xf32>
    %410 = arith.addf %406, %409 : vector<32x8xf32>
    %cst_257 = arith.constant dense<0.000000e+00> : vector<32x32xf32>
    %411 = tpu.matmul %396, %403, %cst_257 {dimension_numbers = #tpu.dot_dimension_numbers<[1], [1], [0], [0], [0, 0, 1, 0], [], []>} : vector<32x8xf32>, vector<32x8xf32>, vector<32x32xf32> -> vector<32x32xf32>
    %412 = arith.addf %411, %45 : vector<32x32xf32>
    %cst_258 = arith.constant dense<0xFF800000> : vector<32xf32>
    %413 = vector.multi_reduction <maximumf>, %412, %cst_258 [1] : vector<32x32xf32> to vector<32xf32>
    %414 = vector.shape_cast %413 : vector<32xf32> to vector<32x1xf32>
    %415 = vector.broadcast %414 : vector<32x1xf32> to vector<32x32xf32>
    %416 = arith.subf %412, %415 : vector<32x32xf32>
    %417 = math.exp %416 : vector<32x32xf32>
    %cst_259 = arith.constant dense<0.000000e+00> : vector<32xf32>
    %418 = vector.multi_reduction <add>, %417, %cst_259 [1] : vector<32x32xf32> to vector<32xf32>
    %419 = vector.shape_cast %418 : vector<32xf32> to vector<32x1xf32>
    %420 = tpu.reciprocal %419 {approx = true} : vector<32x1xf32> -> vector<32x1xf32>
    %421 = vector.broadcast %420 : vector<32x1xf32> to vector<32x32xf32>
    %422 = arith.mulf %417, %421 : vector<32x32xf32>
    %cst_260 = arith.constant dense<0.000000e+00> : vector<32x8xf32>
    %423 = tpu.matmul %422, %410, %cst_260 {dimension_numbers = #tpu.dot_dimension_numbers<[1], [0], [0], [1], [0, 0, 1, 1], [], []>} : vector<32x32xf32>, vector<32x8xf32>, vector<32x8xf32> -> vector<32x8xf32>
    %c7_261 = arith.constant 7 : index
    %c0_262 = arith.constant 0 : index
    %c0_263 = arith.constant 0 : index
    %424 = vector.load %arg5[%c7_261, %c0_262, %c0_263] : memref<8x8x32xf32, #tpu.memory_space<vmem>>, vector<1x8x32xf32>
    %425 = vector.shape_cast %424 : vector<1x8x32xf32> to vector<8x32xf32>
    %cst_264 = arith.constant dense<0.000000e+00> : vector<32x32xf32>
    %426 = tpu.matmul %423, %425, %cst_264 {dimension_numbers = #tpu.dot_dimension_numbers<[1], [0], [0], [1], [0, 0, 1, 1], [], []>} : vector<32x8xf32>, vector<8x32xf32>, vector<32x32xf32> -> vector<32x32xf32>
    %427 = arith.addf %389, %426 : vector<32x32xf32>
    %c1_265 = arith.constant 1 : index
    %c0_266 = arith.constant 0 : index
    %c0_267 = arith.constant 0 : index
    %428 = vector.load %arg6[%c1_265, %c0_266, %c0_267] : memref<2x1x32xf32, #tpu.memory_space<vmem>>, vector<1x1x32xf32>
    %429 = vector.shape_cast %428 : vector<1x1x32xf32> to vector<1x32xf32>
    %430 = vector.broadcast %429 : vector<1x32xf32> to vector<32x32xf32>
    %431 = arith.addf %427, %430 : vector<32x32xf32>
    %432 = arith.addf %274, %431 : vector<32x32xf32>
    %c1_268 = arith.constant 1 : index
    %c0_269 = arith.constant 0 : index
    %c0_270 = arith.constant 0 : index
    %433 = vector.load %arg7[%c1_268, %c0_269, %c0_270] : memref<2x1x32xf32, #tpu.memory_space<vmem>>, vector<1x1x32xf32>
    %434 = vector.shape_cast %433 : vector<1x1x32xf32> to vector<1x32xf32>
    %c1_271 = arith.constant 1 : index
    %c0_272 = arith.constant 0 : index
    %c0_273 = arith.constant 0 : index
    %435 = vector.load %arg8[%c1_271, %c0_272, %c0_273] : memref<2x1x32xf32, #tpu.memory_space<vmem>>, vector<1x1x32xf32>
    %436 = vector.shape_cast %435 : vector<1x1x32xf32> to vector<1x32xf32>
    %cst_274 = arith.constant dense<0.000000e+00> : vector<32xf32>
    %437 = vector.multi_reduction <add>, %432, %cst_274 [1] : vector<32x32xf32> to vector<32xf32>
    %438 = vector.shape_cast %437 : vector<32xf32> to vector<32x1xf32>
    %cst_275 = arith.constant 3.200000e+01 : f32
    %439 = vector.broadcast %cst_275 : f32 to vector<32x1xf32>
    %440 = arith.divf %438, %439 : vector<32x1xf32>
    %441 = vector.broadcast %440 : vector<32x1xf32> to vector<32x32xf32>
    %442 = arith.subf %432, %441 : vector<32x32xf32>
    %443 = arith.mulf %442, %442 : vector<32x32xf32>
    %cst_276 = arith.constant dense<0.000000e+00> : vector<32xf32>
    %444 = vector.multi_reduction <add>, %443, %cst_276 [1] : vector<32x32xf32> to vector<32xf32>
    %445 = vector.shape_cast %444 : vector<32xf32> to vector<32x1xf32>
    %cst_277 = arith.constant 3.200000e+01 : f32
    %446 = vector.broadcast %cst_277 : f32 to vector<32x1xf32>
    %447 = arith.divf %445, %446 : vector<32x1xf32>
    %448 = vector.broadcast %440 : vector<32x1xf32> to vector<32x32xf32>
    %449 = arith.subf %432, %448 : vector<32x32xf32>
    %cst_278 = arith.constant 9.99999974E-6 : f32
    %450 = vector.broadcast %cst_278 : f32 to vector<32x1xf32>
    %451 = arith.addf %447, %450 : vector<32x1xf32>
    %452 = math.rsqrt %451 : vector<32x1xf32>
    %453 = vector.broadcast %452 : vector<32x1xf32> to vector<32x32xf32>
    %454 = arith.mulf %449, %453 : vector<32x32xf32>
    %455 = vector.broadcast %434 : vector<1x32xf32> to vector<32x32xf32>
    %456 = arith.mulf %454, %455 : vector<32x32xf32>
    %457 = vector.broadcast %436 : vector<1x32xf32> to vector<32x32xf32>
    %458 = arith.addf %456, %457 : vector<32x32xf32>
    %459 = arith.truncf %458 : vector<32x32xf32> to vector<32x32xbf16>
    %c1_279 = arith.constant 1 : index
    %c0_280 = arith.constant 0 : index
    %c0_281 = arith.constant 0 : index
    %460 = vector.load %arg9[%c1_279, %c0_280, %c0_281] : memref<2x32x2048xbf16, #tpu.memory_space<vmem>>, vector<1x32x2048xbf16>
    %461 = vector.shape_cast %460 : vector<1x32x2048xbf16> to vector<32x2048xbf16>
    %cst_282 = arith.constant dense<0.000000e+00> : vector<32x2048xf32>
    %462 = tpu.matmul %459, %461, %cst_282 {dimension_numbers = #tpu.dot_dimension_numbers<[1], [0], [0], [1], [0, 0, 1, 1], [], []>} : vector<32x32xbf16>, vector<32x2048xbf16>, vector<32x2048xf32> -> vector<32x2048xf32>
    %c1_283 = arith.constant 1 : index
    %c0_284 = arith.constant 0 : index
    %c0_285 = arith.constant 0 : index
    %463 = vector.load %arg10[%c1_283, %c0_284, %c0_285] : memref<2x1x2048xf32, #tpu.memory_space<vmem>>, vector<1x1x2048xf32>
    %464 = vector.shape_cast %463 : vector<1x1x2048xf32> to vector<1x2048xf32>
    %465 = vector.broadcast %464 : vector<1x2048xf32> to vector<32x2048xf32>
    %466 = arith.addf %462, %465 : vector<32x2048xf32>
    %cst_286 = arith.constant 0.000000e+00 : f32
    %467 = vector.broadcast %cst_286 : f32 to vector<32x2048xf32>
    %468 = arith.maximumf %466, %467 : vector<32x2048xf32>
    %469 = arith.truncf %468 : vector<32x2048xf32> to vector<32x2048xbf16>
    %c1_287 = arith.constant 1 : index
    %c0_288 = arith.constant 0 : index
    %c0_289 = arith.constant 0 : index
    %470 = vector.load %arg11[%c1_287, %c0_288, %c0_289] : memref<2x2048x32xbf16, #tpu.memory_space<vmem>>, vector<1x2048x32xbf16>
    %471 = vector.shape_cast %470 : vector<1x2048x32xbf16> to vector<2048x32xbf16>
    %cst_290 = arith.constant dense<0.000000e+00> : vector<32x32xf32>
    %472 = tpu.matmul %469, %471, %cst_290 {dimension_numbers = #tpu.dot_dimension_numbers<[1], [0], [0], [1], [0, 0, 1, 1], [], []>} : vector<32x2048xbf16>, vector<2048x32xbf16>, vector<32x32xf32> -> vector<32x32xf32>
    %c1_291 = arith.constant 1 : index
    %c0_292 = arith.constant 0 : index
    %c0_293 = arith.constant 0 : index
    %473 = vector.load %arg12[%c1_291, %c0_292, %c0_293] : memref<2x1x32xf32, #tpu.memory_space<vmem>>, vector<1x1x32xf32>
    %474 = vector.shape_cast %473 : vector<1x1x32xf32> to vector<1x32xf32>
    %475 = vector.broadcast %474 : vector<1x32xf32> to vector<32x32xf32>
    %476 = arith.addf %472, %475 : vector<32x32xf32>
    %477 = arith.addf %458, %476 : vector<32x32xf32>
    %c1_294 = arith.constant 1 : index
    %c0_295 = arith.constant 0 : index
    %c0_296 = arith.constant 0 : index
    %478 = vector.load %arg13[%c1_294, %c0_295, %c0_296] : memref<2x1x32xf32, #tpu.memory_space<vmem>>, vector<1x1x32xf32>
    %479 = vector.shape_cast %478 : vector<1x1x32xf32> to vector<1x32xf32>
    %c1_297 = arith.constant 1 : index
    %c0_298 = arith.constant 0 : index
    %c0_299 = arith.constant 0 : index
    %480 = vector.load %arg14[%c1_297, %c0_298, %c0_299] : memref<2x1x32xf32, #tpu.memory_space<vmem>>, vector<1x1x32xf32>
    %481 = vector.shape_cast %480 : vector<1x1x32xf32> to vector<1x32xf32>
    %cst_300 = arith.constant dense<0.000000e+00> : vector<32xf32>
    %482 = vector.multi_reduction <add>, %477, %cst_300 [1] : vector<32x32xf32> to vector<32xf32>
    %483 = vector.shape_cast %482 : vector<32xf32> to vector<32x1xf32>
    %cst_301 = arith.constant 3.200000e+01 : f32
    %484 = vector.broadcast %cst_301 : f32 to vector<32x1xf32>
    %485 = arith.divf %483, %484 : vector<32x1xf32>
    %486 = vector.broadcast %485 : vector<32x1xf32> to vector<32x32xf32>
    %487 = arith.subf %477, %486 : vector<32x32xf32>
    %488 = arith.mulf %487, %487 : vector<32x32xf32>
    %cst_302 = arith.constant dense<0.000000e+00> : vector<32xf32>
    %489 = vector.multi_reduction <add>, %488, %cst_302 [1] : vector<32x32xf32> to vector<32xf32>
    %490 = vector.shape_cast %489 : vector<32xf32> to vector<32x1xf32>
    %cst_303 = arith.constant 3.200000e+01 : f32
    %491 = vector.broadcast %cst_303 : f32 to vector<32x1xf32>
    %492 = arith.divf %490, %491 : vector<32x1xf32>
    %493 = vector.broadcast %485 : vector<32x1xf32> to vector<32x32xf32>
    %494 = arith.subf %477, %493 : vector<32x32xf32>
    %cst_304 = arith.constant 9.99999974E-6 : f32
    %495 = vector.broadcast %cst_304 : f32 to vector<32x1xf32>
    %496 = arith.addf %492, %495 : vector<32x1xf32>
    %497 = math.rsqrt %496 : vector<32x1xf32>
    %498 = vector.broadcast %497 : vector<32x1xf32> to vector<32x32xf32>
    %499 = arith.mulf %494, %498 : vector<32x32xf32>
    %500 = vector.broadcast %479 : vector<1x32xf32> to vector<32x32xf32>
    %501 = arith.mulf %499, %500 : vector<32x32xf32>
    %502 = vector.broadcast %481 : vector<1x32xf32> to vector<32x32xf32>
    %503 = arith.addf %501, %502 : vector<32x32xf32>
    %504 = vector.extract_strided_slice %503 {offsets = [0, 0], sizes = [8, 32], strides = [1, 1]} : vector<32x32xf32> to vector<8x32xf32>
    %c0_305 = arith.constant 0 : index
    %c0_306 = arith.constant 0 : index
    %505 = vector.load %arg29[%c0_305, %c0_306] : memref<8x128xf32, #tpu.memory_space<vmem>>, vector<8x32xf32>
    tpu.vector_store %arg29[%c0_305, %c0_306], %504 {strides = array<i32>} : memref<8x128xf32, #tpu.memory_space<vmem>>, vector<8x32xf32>,
    %506 = vector.extract_strided_slice %503 {offsets = [8, 0], sizes = [8, 32], strides = [1, 1]} : vector<32x32xf32> to vector<8x32xf32>
    %c0_307 = arith.constant 0 : index
    %c32 = arith.constant 32 : index
    %507 = vector.load %arg29[%c0_307, %c32] : memref<8x128xf32, #tpu.memory_space<vmem>>, vector<8x32xf32>
    tpu.vector_store %arg29[%c0_307, %c32], %506 {strides = array<i32>} : memref<8x128xf32, #tpu.memory_space<vmem>>, vector<8x32xf32>,
    %508 = vector.extract_strided_slice %503 {offsets = [16, 0], sizes = [8, 32], strides = [1, 1]} : vector<32x32xf32> to vector<8x32xf32>
    %c0_308 = arith.constant 0 : index
    %c64 = arith.constant 64 : index
    %509 = vector.load %arg29[%c0_308, %c64] : memref<8x128xf32, #tpu.memory_space<vmem>>, vector<8x32xf32>
    tpu.vector_store %arg29[%c0_308, %c64], %508 {strides = array<i32>} : memref<8x128xf32, #tpu.memory_space<vmem>>, vector<8x32xf32>,
    %510 = vector.extract_strided_slice %503 {offsets = [24, 0], sizes = [8, 32], strides = [1, 1]} : vector<32x32xf32> to vector<8x32xf32>
    %c0_309 = arith.constant 0 : index
    %c96 = arith.constant 96 : index
    %511 = vector.load %arg29[%c0_309, %c96] : memref<8x128xf32, #tpu.memory_space<vmem>>, vector<8x32xf32>
    tpu.vector_store %arg29[%c0_309, %c96], %510 {strides = array<i32>} : memref<8x128xf32, #tpu.memory_space<vmem>>, vector<8x32xf32>,
    %c0_310 = arith.constant 0 : index
    %c0_311 = arith.constant 0 : index
    %512 = vector.load %arg29[%c0_310, %c0_311] : memref<8x128xf32, #tpu.memory_space<vmem>>, vector<8x128xf32>
    %c0_312 = arith.constant 0 : index
    %c0_313 = arith.constant 0 : index
    %513 = vector.load %arg1[%c0_312, %c0_313] : memref<8x6xf32, #tpu.memory_space<vmem>>, vector<8x6xf32>
    %cst_314 = arith.constant dense<0.000000e+00> : vector<8xf32>
    %514 = vector.multi_reduction <add>, %512, %cst_314 [1] : vector<8x128xf32> to vector<8xf32>
    %515 = vector.shape_cast %514 : vector<8xf32> to vector<8x1xf32>
    %cst_315 = arith.constant dense<0.000000e+00> : vector<8xf32>
    %516 = vector.multi_reduction <add>, %513, %cst_315 [1] : vector<8x6xf32> to vector<8xf32>
    %517 = vector.shape_cast %516 : vector<8xf32> to vector<8x1xf32>
    %518 = arith.addf %515, %517 : vector<8x1xf32>
    %cst_316 = arith.constant 1.340000e+02 : f32
    %519 = vector.broadcast %cst_316 : f32 to vector<8x1xf32>
    %520 = arith.divf %518, %519 : vector<8x1xf32>
    %521 = vector.broadcast %520 : vector<8x1xf32> to vector<8x128xf32>
    %522 = arith.subf %512, %521 : vector<8x128xf32>
    %523 = arith.mulf %522, %522 : vector<8x128xf32>
    %cst_317 = arith.constant dense<0.000000e+00> : vector<8xf32>
    %524 = vector.multi_reduction <add>, %523, %cst_317 [1] : vector<8x128xf32> to vector<8xf32>
    %525 = vector.shape_cast %524 : vector<8xf32> to vector<8x1xf32>
    %526 = vector.broadcast %520 : vector<8x1xf32> to vector<8x6xf32>
    %527 = arith.subf %513, %526 : vector<8x6xf32>
    %528 = arith.mulf %527, %527 : vector<8x6xf32>
    %cst_318 = arith.constant dense<0.000000e+00> : vector<8xf32>
    %529 = vector.multi_reduction <add>, %528, %cst_318 [1] : vector<8x6xf32> to vector<8xf32>
    %530 = vector.shape_cast %529 : vector<8xf32> to vector<8x1xf32>
    %531 = arith.addf %525, %530 : vector<8x1xf32>
    %cst_319 = arith.constant 1.340000e+02 : f32
    %532 = vector.broadcast %cst_319 : f32 to vector<8x1xf32>
    %533 = arith.divf %531, %532 : vector<8x1xf32>
    %cst_320 = arith.constant 9.99999974E-6 : f32
    %534 = vector.broadcast %cst_320 : f32 to vector<8x1xf32>
    %535 = arith.addf %533, %534 : vector<8x1xf32>
    %536 = math.rsqrt %535 : vector<8x1xf32>
    %537 = vector.broadcast %520 : vector<8x1xf32> to vector<8x128xf32>
    %538 = arith.subf %512, %537 : vector<8x128xf32>
    %539 = vector.broadcast %536 : vector<8x1xf32> to vector<8x128xf32>
    %540 = arith.mulf %538, %539 : vector<8x128xf32>
    %c0_321 = arith.constant 0 : index
    %c0_322 = arith.constant 0 : index
    %541 = vector.load %arg15[%c0_321, %c0_322] : memref<1x128xf32, #tpu.memory_space<vmem>>, vector<1x128xf32>
    %542 = vector.broadcast %541 : vector<1x128xf32> to vector<8x128xf32>
    %543 = arith.mulf %540, %542 : vector<8x128xf32>
    %c0_323 = arith.constant 0 : index
    %c0_324 = arith.constant 0 : index
    %544 = vector.load %arg16[%c0_323, %c0_324] : memref<1x128xf32, #tpu.memory_space<vmem>>, vector<1x128xf32>
    %545 = vector.broadcast %544 : vector<1x128xf32> to vector<8x128xf32>
    %546 = arith.addf %543, %545 : vector<8x128xf32>
    %547 = vector.broadcast %520 : vector<8x1xf32> to vector<8x6xf32>
    %548 = arith.subf %513, %547 : vector<8x6xf32>
    %549 = vector.broadcast %536 : vector<8x1xf32> to vector<8x6xf32>
    %550 = arith.mulf %548, %549 : vector<8x6xf32>
    %c0_325 = arith.constant 0 : index
    %c0_326 = arith.constant 0 : index
    %551 = vector.load %arg17[%c0_325, %c0_326] : memref<1x6xf32, #tpu.memory_space<vmem>>, vector<1x6xf32>
    %552 = vector.broadcast %551 : vector<1x6xf32> to vector<8x6xf32>
    %553 = arith.mulf %550, %552 : vector<8x6xf32>
    %c0_327 = arith.constant 0 : index
    %c0_328 = arith.constant 0 : index
    %554 = vector.load %arg18[%c0_327, %c0_328] : memref<1x6xf32, #tpu.memory_space<vmem>>, vector<1x6xf32>
    %555 = vector.broadcast %554 : vector<1x6xf32> to vector<8x6xf32>
    %556 = arith.addf %553, %555 : vector<8x6xf32>
    %c0_329 = arith.constant 0 : index
    %c0_330 = arith.constant 0 : index
    %557 = vector.load %arg19[%c0_329, %c0_330] : memref<128x64xf32, #tpu.memory_space<vmem>>, vector<128x64xf32>
    %cst_331 = arith.constant dense<0.000000e+00> : vector<8x64xf32>
    %558 = tpu.matmul %546, %557, %cst_331 {dimension_numbers = #tpu.dot_dimension_numbers<[1], [0], [0], [1], [0, 0, 1, 1], [], []>} : vector<8x128xf32>, vector<128x64xf32>, vector<8x64xf32> -> vector<8x64xf32>
    %c0_332 = arith.constant 0 : index
    %c0_333 = arith.constant 0 : index
    %559 = vector.load %arg20[%c0_332, %c0_333] : memref<6x64xf32, #tpu.memory_space<vmem>>, vector<6x64xf32>
    %cst_334 = arith.constant dense<0.000000e+00> : vector<8x64xf32>
    %560 = tpu.matmul %556, %559, %cst_334 {dimension_numbers = #tpu.dot_dimension_numbers<[1], [0], [0], [1], [0, 0, 1, 1], [], []>} : vector<8x6xf32>, vector<6x64xf32>, vector<8x64xf32> -> vector<8x64xf32>
    %561 = arith.addf %558, %560 : vector<8x64xf32>
    %c0_335 = arith.constant 0 : index
    %c0_336 = arith.constant 0 : index
    %562 = vector.load %arg21[%c0_335, %c0_336] : memref<1x64xf32, #tpu.memory_space<vmem>>, vector<1x64xf32>
    %563 = vector.broadcast %562 : vector<1x64xf32> to vector<8x64xf32>
    %564 = arith.addf %561, %563 : vector<8x64xf32>
    %cst_337 = arith.constant 0.000000e+00 : f32
    %565 = vector.broadcast %cst_337 : f32 to vector<8x64xf32>
    %566 = arith.maximumf %564, %565 : vector<8x64xf32>
    %c0_338 = arith.constant 0 : index
    %c0_339 = arith.constant 0 : index
    %567 = vector.load %arg22[%c0_338, %c0_339] : memref<64x64xf32, #tpu.memory_space<vmem>>, vector<64x64xf32>
    %cst_340 = arith.constant dense<0.000000e+00> : vector<8x64xf32>
    %568 = tpu.matmul %566, %567, %cst_340 {dimension_numbers = #tpu.dot_dimension_numbers<[1], [0], [0], [1], [0, 0, 1, 1], [], []>} : vector<8x64xf32>, vector<64x64xf32>, vector<8x64xf32> -> vector<8x64xf32>
    %c0_341 = arith.constant 0 : index
    %c0_342 = arith.constant 0 : index
    %569 = vector.load %arg23[%c0_341, %c0_342] : memref<1x64xf32, #tpu.memory_space<vmem>>, vector<1x64xf32>
    %570 = vector.broadcast %569 : vector<1x64xf32> to vector<8x64xf32>
    %571 = arith.addf %568, %570 : vector<8x64xf32>
    %cst_343 = arith.constant 0.000000e+00 : f32
    %572 = vector.broadcast %cst_343 : f32 to vector<8x64xf32>
    %573 = arith.maximumf %571, %572 : vector<8x64xf32>
    %c0_344 = arith.constant 0 : index
    %c0_345 = arith.constant 0 : index
    %574 = vector.load %arg24[%c0_344, %c0_345] : memref<64x1xf32, #tpu.memory_space<vmem>>, vector<64x1xf32>
    %cst_346 = arith.constant dense<0.000000e+00> : vector<8x1xf32>
    %575 = tpu.matmul %573, %574, %cst_346 {dimension_numbers = #tpu.dot_dimension_numbers<[1], [0], [0], [1], [0, 0, 1, 1], [], []>} : vector<8x64xf32>, vector<64x1xf32>, vector<8x1xf32> -> vector<8x1xf32>
    %c0_347 = arith.constant 0 : index
    %c0_348 = arith.constant 0 : index
    %576 = vector.load %arg25[%c0_347, %c0_348] : memref<128x1xf32, #tpu.memory_space<vmem>>, vector<128x1xf32>
    %cst_349 = arith.constant dense<0.000000e+00> : vector<8x1xf32>
    %577 = tpu.matmul %546, %576, %cst_349 {dimension_numbers = #tpu.dot_dimension_numbers<[1], [0], [0], [1], [0, 0, 1, 1], [], []>} : vector<8x128xf32>, vector<128x1xf32>, vector<8x1xf32> -> vector<8x1xf32>
    %578 = arith.addf %575, %577 : vector<8x1xf32>
    %c0_350 = arith.constant 0 : index
    %c0_351 = arith.constant 0 : index
    %579 = vector.load %arg26[%c0_350, %c0_351] : memref<6x1xf32, #tpu.memory_space<vmem>>, vector<6x1xf32>
    %cst_352 = arith.constant dense<0.000000e+00> : vector<8x1xf32>
    %580 = tpu.matmul %556, %579, %cst_352 {dimension_numbers = #tpu.dot_dimension_numbers<[1], [0], [0], [1], [0, 0, 1, 1], [], []>} : vector<8x6xf32>, vector<6x1xf32>, vector<8x1xf32> -> vector<8x1xf32>
    %581 = arith.addf %578, %580 : vector<8x1xf32>
    %c0_353 = arith.constant 0 : index
    %c0_354 = arith.constant 0 : index
    %582 = vector.load %arg27[%c0_353, %c0_354] : memref<1x1xf32, #tpu.memory_space<vmem>>, vector<1x1xf32>
    %583 = vector.broadcast %582 : vector<1x1xf32> to vector<8x1xf32>
    %584 = arith.addf %581, %583 : vector<8x1xf32>
    %c0_355 = arith.constant 0 : index
    %c0_356 = arith.constant 0 : index
    %585 = vector.load %arg28[%c0_355, %c0_356] : memref<8x1xf32, #tpu.memory_space<vmem>>, vector<8x1xf32>
    tpu.vector_store %arg28[%c0_355, %c0_356], %584 {strides = array<i32>} : memref<8x1xf32, #tpu.memory_space<vmem>>, vector<8x1xf32>,
    return
  }
}

</mosaic_0001>

<llo_original>
// kernel: tab_transformer_forward.1
$region0: #{tab_transformer_forward.1}
  #allocation0 [shape = 'u32[]', space=smem, size = 0x4, offset = 0x4, fixed_abs, tag = 'smem constant byte address 0x4 - core index']
  #allocation1 [shape = 'u32[144,128]{1,0:T(1,128)}', space=vmem, size = 0x12000, scoped, tag = 'internal scratch']
  #allocation2 [shape = 'f32[8,128]{1,0:T(8,128)}', space=vmem, size = 0x1000, scoped, tag = 'scratch operand']
  #allocation3 [shape = 'f32[1,1]{1,0:T(1,128)S(1)}', space=vmem, size = 0x200, scoped, tag = 'scoped memory for tab_transformer_forward.1']
  %s0 = inlined_call_operand.vmem [shape: s32[32,1], index: 0, kind: input, shape index: {}]
  %s1 = inlined_call_operand.vmem [shape: f32[8,6], index: 1, kind: input, shape index: {}]
  %s2 = inlined_call_operand.vmem [shape: f32[22,32], index: 2, kind: input, shape index: {}]
  %s3 = inlined_call_operand.vmem [shape: f32[24,32,8], index: 3, kind: input, shape index: {}]
  %s4 = inlined_call_operand.vmem [shape: f32[24,1,8], index: 4, kind: input, shape index: {}]
  %s5 = inlined_call_operand.vmem [shape: f32[8,8,32], index: 5, kind: input, shape index: {}]
  %s6 = inlined_call_operand.vmem [shape: f32[2,1,32], index: 6, kind: input, shape index: {}]
  %s7 = inlined_call_operand.vmem [shape: f32[2,1,32], index: 7, kind: input, shape index: {}]
  %s8 = inlined_call_operand.vmem [shape: f32[2,1,32], index: 8, kind: input, shape index: {}]
  %s9 = inlined_call_operand.vmem [shape: bf16[2,32,2048], index: 9, kind: input, shape index: {}]
  %s10 = inlined_call_operand.vmem [shape: f32[2,1,2048], index: 10, kind: input, shape index: {}]
  %s11 = inlined_call_operand.vmem [shape: bf16[2,2048,32], index: 11, kind: input, shape index: {}]
  %s12 = inlined_call_operand.vmem [shape: f32[2,1,32], index: 12, kind: input, shape index: {}]
  %s13 = inlined_call_operand.vmem [shape: f32[2,1,32], index: 13, kind: input, shape index: {}]
  %s14 = inlined_call_operand.vmem [shape: f32[2,1,32], index: 14, kind: input, shape index: {}]
  %s15 = inlined_call_operand.vmem [shape: f32[1,128], index: 15, kind: input, shape index: {}]
  %s16 = inlined_call_operand.vmem [shape: f32[1,128], index: 16, kind: input, shape index: {}]
  %s17 = inlined_call_operand.vmem [shape: f32[1,6], index: 17, kind: input, shape index: {}]
  %s18 = inlined_call_operand.vmem [shape: f32[1,6], index: 18, kind: input, shape index: {}]
  %s19 = inlined_call_operand.vmem [shape: f32[128,64], index: 19, kind: input, shape index: {}]
  %s20 = inlined_call_operand.vmem [shape: f32[6,64], index: 20, kind: input, shape index: {}]
  %s21 = inlined_call_operand.vmem [shape: f32[1,64], index: 21, kind: input, shape index: {}]
  %s22 = inlined_call_operand.vmem [shape: f32[64,64], index: 22, kind: input, shape index: {}]
  %s23 = inlined_call_operand.vmem [shape: f32[1,64], index: 23, kind: input, shape index: {}]
  %s24 = inlined_call_operand.vmem [shape: f32[64,1], index: 24, kind: input, shape index: {}]
  %s25 = inlined_call_operand.vmem [shape: f32[128,1], index: 25, kind: input, shape index: {}]
  %s26 = inlined_call_operand.vmem [shape: f32[6,1], index: 26, kind: input, shape index: {}]
  %s27 = inlined_call_operand.<no memory space> [shape: f32[1,1], index: 27, kind: input, shape index: {}]
  %s28 = inlined_call_operand.vmem [shape: f32[8,1], index: 28, kind: output, shape index: {}]
  %s29 = sld [smem:[#allocation0]]
  $region122: #{tab_transformer_forward.1} parent=0
    _
  %s31 = ssub.s32 1, %s29
  %s32 = scalar_select 0, %s31, %s29
  %v33 = vstv %s27
  %34 = vst [vmem:[#allocation3] sm:$0x1] %v33
  // Predicated region
  $region2: #{tab_transformer_forward.1} parent=0 // pred_check
    _
  $region3: #{tab_transformer_forward.1} parent=0 // pred_check_branch
    %36 = sbr.rel (0) target = $region5
  $region4: #{tab_transformer_forward.1} parent=0 // pred_region
    _
  $region5: #{tab_transformer_forward.1} parent=0 // pred_fallthru
    _
  // Predicated region
  $region6: #{tab_transformer_forward.1} parent=0 // pred_check
    _
  $region7: #{tab_transformer_forward.1} parent=0 // pred_check_branch
    %38 = sbr.rel (0) target = $region9
  $region8: #{tab_transformer_forward.1} parent=0 // pred_region
    _
  $region9: #{tab_transformer_forward.1} parent=0 // pred_fallthru
    _
  // Predicated region
  $region10: #{tab_transformer_forward.1} parent=0 // pred_check
    _
  $region11: #{tab_transformer_forward.1} parent=0 // pred_check_branch
    %40 = sbr.rel (0) target = $region13
  $region12: #{tab_transformer_forward.1} parent=0 // pred_region
    _
  $region13: #{tab_transformer_forward.1} parent=0 // pred_fallthru
    _
  // Predicated region
  $region14: #{tab_transformer_forward.1} parent=0 // pred_check
    _
  $region15: #{tab_transformer_forward.1} parent=0 // pred_check_branch
    %42 = sbr.rel (0) target = $region17
  $region16: #{tab_transformer_forward.1} parent=0 // pred_region
    _
  $region17: #{tab_transformer_forward.1} parent=0 // pred_fallthru
    _
  // Predicated region
  $region18: #{tab_transformer_forward.1} parent=0 // pred_check
    _
  $region19: #{tab_transformer_forward.1} parent=0 // pred_check_branch
    %44 = sbr.rel (0) target = $region21
  $region20: #{tab_transformer_forward.1} parent=0 // pred_region
    _
  $region21: #{tab_transformer_forward.1} parent=0 // pred_fallthru
    _
  // Predicated region
  $region22: #{tab_transformer_forward.1} parent=0 // pred_check
    _
  $region23: #{tab_transformer_forward.1} parent=0 // pred_check_branch
    %46 = sbr.rel (0) target = $region25
  $region24: #{tab_transformer_forward.1} parent=0 // pred_region
    _
  $region25: #{tab_transformer_forward.1} parent=0 // pred_fallthru
    _
  // Predicated region
  $region26: #{tab_transformer_forward.1} parent=0 // pred_check
    _
  $region27: #{tab_transformer_forward.1} parent=0 // pred_check_branch
    %48 = sbr.rel (0) target = $region29
  $region28: #{tab_transformer_forward.1} parent=0 // pred_region
    _
  $region29: #{tab_transformer_forward.1} parent=0 // pred_fallthru
    _
  // Predicated region
  $region30: #{tab_transformer_forward.1} parent=0 // pred_check
    _
  $region31: #{tab_transformer_forward.1} parent=0 // pred_check_branch
    %50 = sbr.rel (0) target = $region33
  $region32: #{tab_transformer_forward.1} parent=0 // pred_region
    _
  $region33: #{tab_transformer_forward.1} parent=0 // pred_fallthru
    _
  // Predicated region
  $region34: #{tab_transformer_forward.1} parent=0 // pred_check
    _
  $region35: #{tab_transformer_forward.1} parent=0 // pred_check_branch
    %52 = sbr.rel (0) target = $region37
  $region36: #{tab_transformer_forward.1} parent=0 // pred_region
    _
  $region37: #{tab_transformer_forward.1} parent=0 // pred_fallthru
    _
  // Predicated region
  $region38: #{tab_transformer_forward.1} parent=0 // pred_check
    _
  $region39: #{tab_transformer_forward.1} parent=0 // pred_check_branch
    %54 = sbr.rel (0) target = $region41
  $region40: #{tab_transformer_forward.1} parent=0 // pred_region
    _
  $region41: #{tab_transformer_forward.1} parent=0 // pred_fallthru
    _
  // Predicated region
  $region42: #{tab_transformer_forward.1} parent=0 // pred_check
    _
  $region43: #{tab_transformer_forward.1} parent=0 // pred_check_branch
    %56 = sbr.rel (0) target = $region45
  $region44: #{tab_transformer_forward.1} parent=0 // pred_region
    _
  $region45: #{tab_transformer_forward.1} parent=0 // pred_fallthru
    _
  // Predicated region
  $region46: #{tab_transformer_forward.1} parent=0 // pred_check
    _
  $region47: #{tab_transformer_forward.1} parent=0 // pred_check_branch
    %58 = sbr.rel (0) target = $region49
  $region48: #{tab_transformer_forward.1} parent=0 // pred_region
    _
  $region49: #{tab_transformer_forward.1} parent=0 // pred_fallthru
    _
  // Predicated region
  $region50: #{tab_transformer_forward.1} parent=0 // pred_check
    _
  $region51: #{tab_transformer_forward.1} parent=0 // pred_check_branch
    %60 = sbr.rel (0) target = $region53
  $region52: #{tab_transformer_forward.1} parent=0 // pred_region
    _
  $region53: #{tab_transformer_forward.1} parent=0 // pred_fallthru
    _
  // Predicated region
  $region54: #{tab_transformer_forward.1} parent=0 // pred_check
    _
  $region55: #{tab_transformer_forward.1} parent=0 // pred_check_branch
    %62 = sbr.rel (0) target = $region57
  $region56: #{tab_transformer_forward.1} parent=0 // pred_region
    _
  $region57: #{tab_transformer_forward.1} parent=0 // pred_fallthru
    _
  // Predicated region
  $region58: #{tab_transformer_forward.1} parent=0 // pred_check
    _
  $region59: #{tab_transformer_forward.1} parent=0 // pred_check_branch
    %64 = sbr.rel (0) target = $region61
  $region60: #{tab_transformer_forward.1} parent=0 // pred_region
    _
  $region61: #{tab_transformer_forward.1} parent=0 // pred_fallthru
    _
  // Predicated region
  $region62: #{tab_transformer_forward.1} parent=0 // pred_check
    _
  $region63: #{tab_transformer_forward.1} parent=0 // pred_check_branch
    %66 = sbr.rel (0) target = $region65
  $region64: #{tab_transformer_forward.1} parent=0 // pred_region
    _
  $region65: #{tab_transformer_forward.1} parent=0 // pred_fallthru
    _
  // Predicated region
  $region66: #{tab_transformer_forward.1} parent=0 // pred_check
    _
  $region67: #{tab_transformer_forward.1} parent=0 // pred_check_branch
    %68 = sbr.rel (0) target = $region69
  $region68: #{tab_transformer_forward.1} parent=0 // pred_region
    _
  $region69: #{tab_transformer_forward.1} parent=0 // pred_fallthru
    _
  // Predicated region
  $region70: #{tab_transformer_forward.1} parent=0 // pred_check
    _
  $region71: #{tab_transformer_forward.1} parent=0 // pred_check_branch
    %70 = sbr.rel (0) target = $region73
  $region72: #{tab_transformer_forward.1} parent=0 // pred_region
    _
  $region73: #{tab_transformer_forward.1} parent=0 // pred_fallthru
    _
  // Predicated region
  $region74: #{tab_transformer_forward.1} parent=0 // pred_check
    _
  $region75: #{tab_transformer_forward.1} parent=0 // pred_check_branch
    %72 = sbr.rel (0) target = $region77
  $region76: #{tab_transformer_forward.1} parent=0 // pred_region
    _
  $region77: #{tab_transformer_forward.1} parent=0 // pred_fallthru
    _
  // Predicated region
  $region78: #{tab_transformer_forward.1} parent=0 // pred_check
    _
  $region79: #{tab_transformer_forward.1} parent=0 // pred_check_branch
    %74 = sbr.rel (0) target = $region81
  $region80: #{tab_transformer_forward.1} parent=0 // pred_region
    _
  $region81: #{tab_transformer_forward.1} parent=0 // pred_fallthru
    _
  // Predicated region
  $region82: #{tab_transformer_forward.1} parent=0 // pred_check
    _
  $region83: #{tab_transformer_forward.1} parent=0 // pred_check_branch
    %76 = sbr.rel (0) target = $region85
  $region84: #{tab_transformer_forward.1} parent=0 // pred_region
    _
  $region85: #{tab_transformer_forward.1} parent=0 // pred_fallthru
    _
  // Predicated region
  $region86: #{tab_transformer_forward.1} parent=0 // pred_check
    _
  $region87: #{tab_transformer_forward.1} parent=0 // pred_check_branch
    %78 = sbr.rel (0) target = $region89
  $region88: #{tab_transformer_forward.1} parent=0 // pred_region
    _
  $region89: #{tab_transformer_forward.1} parent=0 // pred_fallthru
    _
  // Predicated region
  $region90: #{tab_transformer_forward.1} parent=0 // pred_check
    _
  $region91: #{tab_transformer_forward.1} parent=0 // pred_check_branch
    %80 = sbr.rel (0) target = $region93
  $region92: #{tab_transformer_forward.1} parent=0 // pred_region
    _
  $region93: #{tab_transformer_forward.1} parent=0 // pred_fallthru
    _
  // Predicated region
  $region94: #{tab_transformer_forward.1} parent=0 // pred_check
    _
  $region95: #{tab_transformer_forward.1} parent=0 // pred_check_branch
    %82 = sbr.rel (0) target = $region97
  $region96: #{tab_transformer_forward.1} parent=0 // pred_region
    _
  $region97: #{tab_transformer_forward.1} parent=0 // pred_fallthru
    _
  // Predicated region
  $region98: #{tab_transformer_forward.1} parent=0 // pred_check
    _
  $region99: #{tab_transformer_forward.1} parent=0 // pred_check_branch
    %84 = sbr.rel (0) target = $region101
  $region100: #{tab_transformer_forward.1} parent=0 // pred_region
    _
  $region101: #{tab_transformer_forward.1} parent=0 // pred_fallthru
    _
  // Predicated region
  $region102: #{tab_transformer_forward.1} parent=0 // pred_check
    _
  $region103: #{tab_transformer_forward.1} parent=0 // pred_check_branch
    %86 = sbr.rel (0) target = $region105
  $region104: #{tab_transformer_forward.1} parent=0 // pred_region
    _
  $region105: #{tab_transformer_forward.1} parent=0 // pred_fallthru
    _
  // Predicated region
  $region106: #{tab_transformer_forward.1} parent=0 // pred_check
    _
  $region107: #{tab_transformer_forward.1} parent=0 // pred_check_branch
    %88 = sbr.rel (0) target = $region109
  $region108: #{tab_transformer_forward.1} parent=0 // pred_region
    _
  $region109: #{tab_transformer_forward.1} parent=0 // pred_fallthru
    _
  // Predicated region
  $region110: #{tab_transformer_forward.1} parent=0 // pred_check
    _
  $region111: #{tab_transformer_forward.1} parent=0 // pred_check_branch
    %90 = sbr.rel (0) target = $region113
  $region112: #{tab_transformer_forward.1} parent=0 // pred_region
    _
  $region113: #{tab_transformer_forward.1} parent=0 // pred_fallthru
    _
  %v92 = vld [vmem:[%s0] sm:$0xff]
  %v93 = vld [vmem:[%s0 + $0x8] sm:$0xff]
  %v94 = vld [vmem:[%s0 + $0x10] sm:$0xff]
  %v95 = vld [vmem:[%s0 + $0x18] sm:$0xff]
  %v96 = vlaneseq
  %v97 = vand.u32 %v96, 127
  %98 = vset.pattern.permute.xlu0 0
  %99 = vperm.xlu0 %98, %v92
  %v100 = vpop.permute.xlu0 %99
  %101 = vset.pattern.permute.xlu0 0
  %102 = vperm.xlu0 %101, %v93
  %v103 = vpop.permute.xlu0 %102
  %104 = vset.pattern.permute.xlu0 0
  %105 = vperm.xlu0 %104, %v94
  %v106 = vpop.permute.xlu0 %105
  %107 = vset.pattern.permute.xlu0 0
  %108 = vperm.xlu0 %107, %v95
  %v109 = vpop.permute.xlu0 %108
  %vm110 = vcmp.eq.s32.totalorder %v97, %v100
  %vm111 = vcmp.eq.s32.totalorder %v97, %v103
  %vm112 = vcmp.eq.s32.totalorder %v97, %v106
  %vm113 = vcmp.eq.s32.totalorder %v97, %v109
  %v114 = vsel %vm110, 1, 0
  %v115 = vsel %vm111, 1, 0
  %v116 = vsel %vm112, 1, 0
  %v117 = vsel %vm113, 1, 0
  %v118 = vcvt.s32.f32 %v114
  %v119 = vcvt.s32.f32 %v115
  %v120 = vcvt.s32.f32 %v116
  %v121 = vcvt.s32.f32 %v117
  %v122 = vld [vmem:[%s2] sm:$0xff]
  %v123 = vld [vmem:[%s2 + $0x8] sm:$0xff]
  %v124 = vld [vmem:[%s2 + $0x10] sm:$0x3f]
  %vm125 = vcmask 179200
  %v127 = vsel %vm125, %v118, 0
  %v130 = vsel %vm125, %v119, 0
  %v133 = vsel %vm125, %v120, 0
  %v136 = vsel %vm125, %v121, 0
  %vm138 = vcmask 1045504
  %v140 = vsel %vm138, %v124, 0
  %142 = vmatprep.subr.mxu0 0.0
  %143 = vmatpush1.msra.mxu0 0.0
  %144 = vmatprep.subr.mxu0 0.0
  %145 = vmatpush1.msra.mxu0 0.0
  %146 = vmatprep.subr.mxu0 0.0
  %147 = vmatpush1.msra.mxu0 0.0
  %148 = vmatprep.subr.mxu0 0.0
  %149 = vmatpush1.msra.mxu0 0.0
  %150 = vmatprep.subr.mxu0 0.0
  %151 = vmatpush1.msra.mxu0 0.0
  %152 = vmatprep.subr.mxu0 0.0
  %153 = vmatpush1.msra.mxu0 0.0
  %154 = vmatprep.subr.mxu0 0.0
  %155 = vmatpush1.msra.mxu0 0.0
  %156 = vmatprep.subr.mxu0 0.0
  %157 = vmatpush1.msra.mxu0 0.0
  %158 = vmatprep.subr.mxu0 0.0
  %159 = vmatpush1.msra.mxu0 0.0
  %160 = vmatprep.subr.mxu0 0.0
  %161 = vmatpush1.msra.mxu0 0.0
  %162 = vmatprep.subr.mxu0 0.0
  %163 = vmatpush1.msra.mxu0 0.0
  %164 = vmatprep.subr.mxu0 0.0
  %165 = vmatpush1.msra.mxu0 0.0
  %166 = vmatprep.subr.mxu0 0.0
  %167 = vmatpush1.msra.mxu0 0.0
  %168 = vmatprep.subr.mxu0 0.0
  %169 = vmatpush1.msra.mxu0 %v140
  %170 = vmatprep.subr.mxu0 0.0
  %171 = vmatpush1.msra.mxu0 %v123
  %172 = vmatprep.subr.mxu0 0.0
  %173 = vmatpush1.msra.mxu0 %v122
  %174 = vmatprep.subr.mxu0 0.0
  %175 = vmatpush2.msra.mxu0 0.0
  %176 = vmatprep.subr.mxu0 0.0
  %177 = vmatpush2.msra.mxu0 0.0
  %178 = vmatprep.subr.mxu0 0.0
  %179 = vmatpush2.msra.mxu0 0.0
  %180 = vmatprep.subr.mxu0 0.0
  %181 = vmatpush2.msra.mxu0 0.0
  %182 = vmatprep.subr.mxu0 0.0
  %183 = vmatpush2.msra.mxu0 0.0
  %184 = vmatprep.subr.mxu0 0.0
  %185 = vmatpush2.msra.mxu0 0.0
  %186 = vmatprep.subr.mxu0 0.0
  %187 = vmatpush2.msra.mxu0 0.0
  %188 = vmatprep.subr.mxu0 0.0
  %189 = vmatpush2.msra.mxu0 0.0
  %190 = vmatprep.subr.mxu0 0.0
  %191 = vmatpush2.msra.mxu0 0.0
  %192 = vmatprep.subr.mxu0 0.0
  %193 = vmatpush2.msra.mxu0 0.0
  %194 = vmatprep.subr.mxu0 0.0
  %195 = vmatpush2.msra.mxu0 0.0
  %196 = vmatprep.subr.mxu0 0.0
  %197 = vmatpush2.msra.mxu0 0.0
  %198 = vmatprep.subr.mxu0 0.0
  %199 = vmatpush2.msra.mxu0 0.0
  %200 = vmatprep.subr.mxu0 0.0
  %201 = vmatpush2.msra.mxu0 0.0
  %202 = vmatprep.subr.mxu0 0.0
  %203 = vmatpush2.msra.mxu0 0.0
  %204 = vmatprep.subr.mxu0 0.0
  %205 = vmatpush2.msra.mxu0 0.0
  %206 = vmatprep.mubr.f32.mxu0 0.0
  %207 = vmatmul.mubr.f32.gmra.mxu0 %v127
  %v208 = vpop.f32.mrf.mxu0
  %v209 = vadd.f32 0.0, %v208
  %v210 = vpop.f32.mrf.mxu0
  %211 = vmatprep.mubr.f32.mxu0 0.0
  %212 = vmatmul.mubr.f32.gmra.mxu0 %v130
  %v213 = vpop.f32.mrf.mxu0
  %v214 = vadd.f32 0.0, %v213
  %v215 = vpop.f32.mrf.mxu0
  %216 = vmatprep.mubr.f32.mxu0 0.0
  %217 = vmatmul.mubr.f32.gmra.mxu0 %v133
  %v218 = vpop.f32.mrf.mxu0
  %v219 = vadd.f32 0.0, %v218
  %v220 = vpop.f32.mrf.mxu0
  %221 = vmatprep.mubr.f32.mxu0 0.0
  %222 = vmatmul.mubr.f32.gmra.mxu0 %v136
  %v223 = vpop.f32.mrf.mxu0
  %v224 = vadd.f32 0.0, %v223
  %v225 = vpop.f32.mrf.mxu0
  %226 = vdwg.mxu0
  %v227 = vlaneseq
  %v228 = vshrl.u32 %v227, 7
  %v229 = vadd.s32 %v228, 8
  %v230 = vadd.s32 %v228, 16
  %v231 = vadd.s32 %v228, 24
  %vm232 = vcmp.lt.s32.totalorder %v228, 0
  %v233 = vsub.s32 0, %v228
  %v234 = vsel %vm232, %v233, %v228
  %v235 = vshrl.u32 %v234, 3
  %v236 = vand.u32 %v234, 7
  %v237 = vsub.s32 0, %v236
  %v238 = vsel %vm232, %v237, %v236
  %vm239 = vcmp.lt.s32.totalorder %v229, 0
  %v240 = vsub.s32 0, %v229
  %v241 = vsel %vm239, %v240, %v229
  %v242 = vshrl.u32 %v241, 3
  %v243 = vand.u32 %v241, 7
  %v244 = vsub.s32 0, %v243
  %v245 = vsel %vm239, %v244, %v243
  %vm246 = vcmp.lt.s32.totalorder %v230, 0
  %v247 = vsub.s32 0, %v230
  %v248 = vsel %vm246, %v247, %v230
  %v249 = vshrl.u32 %v248, 3
  %v250 = vand.u32 %v248, 7
  %v251 = vsub.s32 0, %v250
  %v252 = vsel %vm246, %v251, %v250
  %vm253 = vcmp.lt.s32.totalorder %v231, 0
  %v254 = vsub.s32 0, %v231
  %v255 = vsel %vm253, %v254, %v231
  %v256 = vshrl.u32 %v255, 3
  %v257 = vand.u32 %v255, 7
  %v258 = vsub.s32 0, %v257
  %v259 = vsel %vm253, %v258, %v257
  %vm260 = vcmp.ne.s32.totalorder %v238, 0
  %vm261 = vcmp.ne.s32.totalorder %v245, 0
  %vm262 = vcmp.ne.s32.totalorder %v252, 0
  %vm263 = vcmp.ne.s32.totalorder %v259, 0
  %vm264 = vcmp.lt.s32.totalorder %v238, 0
  %vm265 = vcmp.lt.s32.totalorder %v245, 0
  %vm266 = vcmp.lt.s32.totalorder %v252, 0
  %vm267 = vcmp.lt.s32.totalorder %v259, 0
  %vm268 = vmand %vm264, %vm260
  %vm269 = vmand %vm265, %vm261
  %vm270 = vmand %vm266, %vm262
  %vm271 = vmand %vm267, %vm263
  %v272 = vadd.s32 %v238, 8
  %v273 = vadd.s32 %v245, 8
  %v274 = vadd.s32 %v252, 8
  %v275 = vadd.s32 %v259, 8
  %v276 = vsel %vm268, %v272, %v238
  %v277 = vsel %vm269, %v273, %v245
  %v278 = vsel %vm270, %v274, %v252
  %v279 = vsel %vm271, %v275, %v259
  %vm280 = vcmp.lt.s32.totalorder %v97, 0
  %v281 = vsub.s32 0, %v97
  %v282 = vsel %vm280, %v281, %v97
  %v283 = vshrl.u32 %v282, 3
  %v284 = vand.u32 %v282, 7
  %v285 = vsub.s32 0, %v284
  %v286 = vsel %vm280, %v285, %v284
  %vm287 = vcmp.ne.s32.totalorder %v286, 0
  %vm288 = vcmp.lt.s32.totalorder %v286, 0
  %vm289 = vmand %vm288, %vm287
  %v290 = vadd.s32 %v286, 8
  %v291 = vsel %vm289, %v290, %v286
  %vm292 = vcmp.eq.s32.totalorder %v276, %v291
  %vm293 = vcmp.eq.s32.totalorder %v277, %v291
  %vm294 = vcmp.eq.s32.totalorder %v278, %v291
  %vm295 = vcmp.eq.s32.totalorder %v279, %v291
  %v296 = vsel %vm292, 0.0, -1e+30
  %v297 = vsel %vm293, 0.0, -1e+30
  %v298 = vsel %vm294, 0.0, -1e+30
  %v299 = vsel %vm295, 0.0, -1e+30
  %v300 = vld [vmem:[%s3] sm:$0xff]
  %v301 = vld [vmem:[%s3 + $0x8] sm:$0xff]
  %v302 = vld [vmem:[%s3 + $0x10] sm:$0xff]
  %v303 = vld [vmem:[%s3 + $0x18] sm:$0xff]
  %v304 = vld [vmem:[%s4] sm:$0x1]
  %v306 = vlaneseq
  %v307 = vshrl.u32 %v306, 7
  %v308 = vsub.s32 0, %v307
  %v309 = vrot.slane %v304, %v308
  %vm311 = vcmask 261120
  %v313 = vsel %vm311, %v209, 0
  %v316 = vsel %vm311, %v214, 0
  %v319 = vsel %vm311, %v219, 0
  %v322 = vsel %vm311, %v224, 0
  %324 = vmatprep.subr.mxu0 0.0
  %325 = vmatpush1.msra.mxu0 0.0
  %326 = vmatprep.subr.mxu0 0.0
  %327 = vmatpush1.msra.mxu0 0.0
  %328 = vmatprep.subr.mxu0 0.0
  %329 = vmatpush1.msra.mxu0 0.0
  %330 = vmatprep.subr.mxu0 0.0
  %331 = vmatpush1.msra.mxu0 0.0
  %332 = vmatprep.subr.mxu0 0.0
  %333 = vmatpush1.msra.mxu0 0.0
  %334 = vmatprep.subr.mxu0 0.0
  %335 = vmatpush1.msra.mxu0 0.0
  %336 = vmatprep.subr.mxu0 0.0
  %337 = vmatpush1.msra.mxu0 0.0
  %338 = vmatprep.subr.mxu0 0.0
  %339 = vmatpush1.msra.mxu0 0.0
  %340 = vmatprep.subr.mxu0 0.0
  %341 = vmatpush1.msra.mxu0 0.0
  %342 = vmatprep.subr.mxu0 0.0
  %343 = vmatpush1.msra.mxu0 0.0
  %344 = vmatprep.subr.mxu0 0.0
  %345 = vmatpush1.msra.mxu0 0.0
  %346 = vmatprep.subr.mxu0 0.0
  %347 = vmatpush1.msra.mxu0 0.0
  %348 = vmatprep.subr.mxu0 0.0
  %349 = vmatpush1.msra.mxu0 %v303
  %350 = vmatprep.subr.mxu0 0.0
  %351 = vmatpush1.msra.mxu0 %v302
  %352 = vmatprep.subr.mxu0 0.0
  %353 = vmatpush1.msra.mxu0 %v301
  %354 = vmatprep.subr.mxu0 0.0
  %355 = vmatpush1.msra.mxu0 %v300
  %356 = vmatprep.subr.mxu0 0.0
  %357 = vmatpush2.msra.mxu0 0.0
  %358 = vmatprep.subr.mxu0 0.0
  %359 = vmatpush2.msra.mxu0 0.0
  %360 = vmatprep.subr.mxu0 0.0
  %361 = vmatpush2.msra.mxu0 0.0
  %362 = vmatprep.subr.mxu0 0.0
  %363 = vmatpush2.msra.mxu0 0.0
  %364 = vmatprep.subr.mxu0 0.0
  %365 = vmatpush2.msra.mxu0 0.0
  %366 = vmatprep.subr.mxu0 0.0
  %367 = vmatpush2.msra.mxu0 0.0
  %368 = vmatprep.subr.mxu0 0.0
  %369 = vmatpush2.msra.mxu0 0.0
  %370 = vmatprep.subr.mxu0 0.0
  %371 = vmatpush2.msra.mxu0 0.0
  %372 = vmatprep.subr.mxu0 0.0
  %373 = vmatpush2.msra.mxu0 0.0
  %374 = vmatprep.subr.mxu0 0.0
  %375 = vmatpush2.msra.mxu0 0.0
  %376 = vmatprep.subr.mxu0 0.0
  %377 = vmatpush2.msra.mxu0 0.0
  %378 = vmatprep.subr.mxu0 0.0
  %379 = vmatpush2.msra.mxu0 0.0
  %380 = vmatprep.subr.mxu0 0.0
  %381 = vmatpush2.msra.mxu0 0.0
  %382 = vmatprep.subr.mxu0 0.0
  %383 = vmatpush2.msra.mxu0 0.0
  %384 = vmatprep.subr.mxu0 0.0
  %385 = vmatpush2.msra.mxu0 0.0
  %386 = vmatprep.subr.mxu0 0.0
  %387 = vmatpush2.msra.mxu0 0.0
  %388 = vmatprep.mubr.f32.mxu0 0.0
  %389 = vmatmul.mubr.f32.gmra.mxu0 %v313
  %v390 = vpop.f32.mrf.mxu0
  %v391 = vadd.f32 %v309, %v390
  %v392 = vpop.f32.mrf.mxu0
  %393 = vmatprep.mubr.f32.mxu0 0.0
  %394 = vmatmul.mubr.f32.gmra.mxu0 %v316
  %v395 = vpop.f32.mrf.mxu0
  %v396 = vadd.f32 %v309, %v395
  %v397 = vpop.f32.mrf.mxu0
  %398 = vmatprep.mubr.f32.mxu0 0.0
  %399 = vmatmul.mubr.f32.gmra.mxu0 %v319
  %v400 = vpop.f32.mrf.mxu0
  %v401 = vadd.f32 %v309, %v400
  %v402 = vpop.f32.mrf.mxu0
  %403 = vmatprep.mubr.f32.mxu0 0.0
  %404 = vmatmul.mubr.f32.gmra.mxu0 %v322
  %v405 = vpop.f32.mrf.mxu0
  %v406 = vadd.f32 %v309, %v405
  %v407 = vpop.f32.mrf.mxu0
  %408 = vdwg.mxu0
  %s409 = scalar_lea.vmem %s3, 32
  %v410 = vld [vmem:[%s409] sm:$0xff]
  %v411 = vld [vmem:[%s409 + $0x8] sm:$0xff]
  %v412 = vld [vmem:[%s409 + $0x10] sm:$0xff]
  %v413 = vld [vmem:[%s409 + $0x18] sm:$0xff]
  %s414 = scalar_lea.vmem %s4, 1
  %v415 = vld [vmem:[%s414] sm:$0x1]
  %v417 = vlaneseq
  %v418 = vshrl.u32 %v417, 7
  %v419 = vsub.s32 0, %v418
  %v420 = vrot.slane %v415, %v419
  %422 = vmatprep.subr.mxu0 0.0
  %423 = vmatpush1.msra.mxu0 0.0
  %424 = vmatprep.subr.mxu0 0.0
  %425 = vmatpush1.msra.mxu0 0.0
  %426 = vmatprep.subr.mxu0 0.0
  %427 = vmatpush1.msra.mxu0 0.0
  %428 = vmatprep.subr.mxu0 0.0
  %429 = vmatpush1.msra.mxu0 0.0
  %430 = vmatprep.subr.mxu0 0.0
  %431 = vmatpush1.msra.mxu0 0.0
  %432 = vmatprep.subr.mxu0 0.0
  %433 = vmatpush1.msra.mxu0 0.0
  %434 = vmatprep.subr.mxu0 0.0
  %435 = vmatpush1.msra.mxu0 0.0
  %436 = vmatprep.subr.mxu0 0.0
  %437 = vmatpush1.msra.mxu0 0.0
  %438 = vmatprep.subr.mxu0 0.0
  %439 = vmatpush1.msra.mxu0 0.0
  %440 = vmatprep.subr.mxu0 0.0
  %441 = vmatpush1.msra.mxu0 0.0
  %442 = vmatprep.subr.mxu0 0.0
  %443 = vmatpush1.msra.mxu0 0.0
  %444 = vmatprep.subr.mxu0 0.0
  %445 = vmatpush1.msra.mxu0 0.0
  %446 = vmatprep.subr.mxu0 0.0
  %447 = vmatpush1.msra.mxu0 %v413
  %448 = vmatprep.subr.mxu0 0.0
  %449 = vmatpush1.msra.mxu0 %v412
  %450 = vmatprep.subr.mxu0 0.0
  %451 = vmatpush1.msra.mxu0 %v411
  %452 = vmatprep.subr.mxu0 0.0
  %453 = vmatpush1.msra.mxu0 %v410
  %454 = vmatprep.subr.mxu0 0.0
  %455 = vmatpush2.msra.mxu0 0.0
  %456 = vmatprep.subr.mxu0 0.0
  %457 = vmatpush2.msra.mxu0 0.0
  %458 = vmatprep.subr.mxu0 0.0
  %459 = vmatpush2.msra.mxu0 0.0
  %460 = vmatprep.subr.mxu0 0.0
  %461 = vmatpush2.msra.mxu0 0.0
  %462 = vmatprep.subr.mxu0 0.0
  %463 = vmatpush2.msra.mxu0 0.0
  %464 = vmatprep.subr.mxu0 0.0
  %465 = vmatpush2.msra.mxu0 0.0
  %466 = vmatprep.subr.mxu0 0.0
  %467 = vmatpush2.msra.mxu0 0.0
  %468 = vmatprep.subr.mxu0 0.0
  %469 = vmatpush2.msra.mxu0 0.0
  %470 = vmatprep.subr.mxu0 0.0
  %471 = vmatpush2.msra.mxu0 0.0
  %472 = vmatprep.subr.mxu0 0.0
  %473 = vmatpush2.msra.mxu0 0.0
  %474 = vmatprep.subr.mxu0 0.0
  %475 = vmatpush2.msra.mxu0 0.0
  %476 = vmatprep.subr.mxu0 0.0
  %477 = vmatpush2.msra.mxu0 0.0
  %478 = vmatprep.subr.mxu0 0.0
  %479 = vmatpush2.msra.mxu0 0.0
  %480 = vmatprep.subr.mxu0 0.0
  %481 = vmatpush2.msra.mxu0 0.0
  %482 = vmatprep.subr.mxu0 0.0
  %483 = vmatpush2.msra.mxu0 0.0
  %484 = vmatprep.subr.mxu0 0.0
  %485 = vmatpush2.msra.mxu0 0.0
  %486 = vmatprep.mubr.f32.mxu0 0.0
  %487 = vmatmul.mubr.f32.gmra.mxu0 %v313
  %v488 = vpop.f32.mrf.mxu0
  %v489 = vadd.f32 %v420, %v488
  %v490 = vpop.f32.mrf.mxu0
  %491 = vmatprep.mubr.f32.mxu0 0.0
  %492 = vmatmul.mubr.f32.gmra.mxu0 %v316
  %v493 = vpop.f32.mrf.mxu0
  %v494 = vadd.f32 %v420, %v493
  %v495 = vpop.f32.mrf.mxu0
  %496 = vmatprep.mubr.f32.mxu0 0.0
  %497 = vmatmul.mubr.f32.gmra.mxu0 %v319
  %v498 = vpop.f32.mrf.mxu0
  %v499 = vadd.f32 %v420, %v498
  %v500 = vpop.f32.mrf.mxu0
  %501 = vmatprep.mubr.f32.mxu0 0.0
  %502 = vmatmul.mubr.f32.gmra.mxu0 %v322
  %v503 = vpop.f32.mrf.mxu0
  %v504 = vadd.f32 %v420, %v503
  %v505 = vpop.f32.mrf.mxu0
  %506 = vdwg.mxu0
  %s507 = scalar_lea.vmem %s3, 64
  %v508 = vld [vmem:[%s507] sm:$0xff]
  %v509 = vld [vmem:[%s507 + $0x8] sm:$0xff]
  %v510 = vld [vmem:[%s507 + $0x10] sm:$0xff]
  %v511 = vld [vmem:[%s507 + $0x18] sm:$0xff]
  %s512 = scalar_lea.vmem %s4, 2
  %v513 = vld [vmem:[%s512] sm:$0x1]
  %v515 = vlaneseq
  %v516 = vshrl.u32 %v515, 7
  %v517 = vsub.s32 0, %v516
  %v518 = vrot.slane %v513, %v517
  %520 = vmatprep.subr.mxu0 0.0
  %521 = vmatpush1.msra.mxu0 0.0
  %522 = vmatprep.subr.mxu0 0.0
  %523 = vmatpush1.msra.mxu0 0.0
  %524 = vmatprep.subr.mxu0 0.0
  %525 = vmatpush1.msra.mxu0 0.0
  %526 = vmatprep.subr.mxu0 0.0
  %527 = vmatpush1.msra.mxu0 0.0
  %528 = vmatprep.subr.mxu0 0.0
  %529 = vmatpush1.msra.mxu0 0.0
  %530 = vmatprep.subr.mxu0 0.0
  %531 = vmatpush1.msra.mxu0 0.0
  %532 = vmatprep.subr.mxu0 0.0
  %533 = vmatpush1.msra.mxu0 0.0
  %534 = vmatprep.subr.mxu0 0.0
  %535 = vmatpush1.msra.mxu0 0.0
  %536 = vmatprep.subr.mxu0 0.0
  %537 = vmatpush1.msra.mxu0 0.0
  %538 = vmatprep.subr.mxu0 0.0
  %539 = vmatpush1.msra.mxu0 0.0
  %540 = vmatprep.subr.mxu0 0.0
  %541 = vmatpush1.msra.mxu0 0.0
  %542 = vmatprep.subr.mxu0 0.0
  %543 = vmatpush1.msra.mxu0 0.0
  %544 = vmatprep.subr.mxu0 0.0
  %545 = vmatpush1.msra.mxu0 %v511
  %546 = vmatprep.subr.mxu0 0.0
  %547 = vmatpush1.msra.mxu0 %v510
  %548 = vmatprep.subr.mxu0 0.0
  %549 = vmatpush1.msra.mxu0 %v509
  %550 = vmatprep.subr.mxu0 0.0
  %551 = vmatpush1.msra.mxu0 %v508
  %552 = vmatprep.subr.mxu0 0.0
  %553 = vmatpush2.msra.mxu0 0.0
  %554 = vmatprep.subr.mxu0 0.0
  %555 = vmatpush2.msra.mxu0 0.0
  %556 = vmatprep.subr.mxu0 0.0
  %557 = vmatpush2.msra.mxu0 0.0
  %558 = vmatprep.subr.mxu0 0.0
  %559 = vmatpush2.msra.mxu0 0.0
  %560 = vmatprep.subr.mxu0 0.0
  %561 = vmatpush2.msra.mxu0 0.0
  %562 = vmatprep.subr.mxu0 0.0
  %563 = vmatpush2.msra.mxu0 0.0
  %564 = vmatprep.subr.mxu0 0.0
  %565 = vmatpush2.msra.mxu0 0.0
  %566 = vmatprep.subr.mxu0 0.0
  %567 = vmatpush2.msra.mxu0 0.0
  %568 = vmatprep.subr.mxu0 0.0
  %569 = vmatpush2.msra.mxu0 0.0
  %570 = vmatprep.subr.mxu0 0.0
  %571 = vmatpush2.msra.mxu0 0.0
  %572 = vmatprep.subr.mxu0 0.0
  %573 = vmatpush2.msra.mxu0 0.0
  %574 = vmatprep.subr.mxu0 0.0
  %575 = vmatpush2.msra.mxu0 0.0
  %576 = vmatprep.subr.mxu0 0.0
  %577 = vmatpush2.msra.mxu0 0.0
  %578 = vmatprep.subr.mxu0 0.0
  %579 = vmatpush2.msra.mxu0 0.0
  %580 = vmatprep.subr.mxu0 0.0
  %581 = vmatpush2.msra.mxu0 0.0
  %582 = vmatprep.subr.mxu0 0.0
  %583 = vmatpush2.msra.mxu0 0.0
  %584 = vmatprep.mubr.f32.mxu0 0.0
  %585 = vmatmul.mubr.f32.gmra.mxu0 %v313
  %v586 = vpop.f32.mrf.mxu0
  %v587 = vadd.f32 %v518, %v586
  %v588 = vpop.f32.mrf.mxu0
  %589 = vmatprep.mubr.f32.mxu0 0.0
  %590 = vmatmul.mubr.f32.gmra.mxu0 %v316
  %v591 = vpop.f32.mrf.mxu0
  %v592 = vadd.f32 %v518, %v591
  %v593 = vpop.f32.mrf.mxu0
  %594 = vmatprep.mubr.f32.mxu0 0.0
  %595 = vmatmul.mubr.f32.gmra.mxu0 %v319
  %v596 = vpop.f32.mrf.mxu0
  %v597 = vadd.f32 %v518, %v596
  %v598 = vpop.f32.mrf.mxu0
  %599 = vmatprep.mubr.f32.mxu0 0.0
  %600 = vmatmul.mubr.f32.gmra.mxu0 %v322
  %v601 = vpop.f32.mrf.mxu0
  %v602 = vadd.f32 %v518, %v601
  %v603 = vpop.f32.mrf.mxu0
  %604 = vdwg.mxu0
  %vm605 = vcmask 64512
  %v607 = vsel %vm605, %v391, 0
  %v610 = vsel %vm605, %v396, 0
  %v613 = vsel %vm605, %v401, 0
  %v616 = vsel %vm605, %v406, 0
  %v619 = vsel %vm605, %v489, 0
  %v622 = vsel %vm605, %v494, 0
  %v625 = vsel %vm605, %v499, 0
  %v628 = vsel %vm605, %v504, 0
  %630 = vmatprep.subr.mxu0 0.0
  %631 = vmatpush1.xpose.msra.mxu0 0.0
  %632 = vmatprep.subr.mxu0 0.0
  %633 = vmatpush1.xpose.msra.mxu0 0.0
  %634 = vmatprep.subr.mxu0 0.0
  %635 = vmatpush1.xpose.msra.mxu0 0.0
  %636 = vmatprep.subr.mxu0 0.0
  %637 = vmatpush1.xpose.msra.mxu0 0.0
  %638 = vmatprep.subr.mxu0 0.0
  %639 = vmatpush1.xpose.msra.mxu0 0.0
  %640 = vmatprep.subr.mxu0 0.0
  %641 = vmatpush1.xpose.msra.mxu0 0.0
  %642 = vmatprep.subr.mxu0 0.0
  %643 = vmatpush1.xpose.msra.mxu0 0.0
  %644 = vmatprep.subr.mxu0 0.0
  %645 = vmatpush1.xpose.msra.mxu0 0.0
  %646 = vmatprep.subr.mxu0 0.0
  %647 = vmatpush1.xpose.msra.mxu0 0.0
  %648 = vmatprep.subr.mxu0 0.0
  %649 = vmatpush1.xpose.msra.mxu0 0.0
  %650 = vmatprep.subr.mxu0 0.0
  %651 = vmatpush1.xpose.msra.mxu0 0.0
  %652 = vmatprep.subr.mxu0 0.0
  %653 = vmatpush1.xpose.msra.mxu0 0.0
  %654 = vmatprep.subr.mxu0 0.0
  %655 = vmatpush1.xpose.msra.mxu0 %v628
  %656 = vmatprep.subr.mxu0 0.0
  %657 = vmatpush1.xpose.msra.mxu0 %v625
  %658 = vmatprep.subr.mxu0 0.0
  %659 = vmatpush1.xpose.msra.mxu0 %v622
  %660 = vmatprep.subr.mxu0 0.0
  %661 = vmatpush1.xpose.msra.mxu0 %v619
  %662 = vmatprep.subr.mxu0 0.0
  %663 = vmatpush2.xpose.msra.mxu0 0.0
  %664 = vmatprep.subr.mxu0 0.0
  %665 = vmatpush2.xpose.msra.mxu0 0.0
  %666 = vmatprep.subr.mxu0 0.0
  %667 = vmatpush2.xpose.msra.mxu0 0.0
  %668 = vmatprep.subr.mxu0 0.0
  %669 = vmatpush2.xpose.msra.mxu0 0.0
  %670 = vmatprep.subr.mxu0 0.0
  %671 = vmatpush2.xpose.msra.mxu0 0.0
  %672 = vmatprep.subr.mxu0 0.0
  %673 = vmatpush2.xpose.msra.mxu0 0.0
  %674 = vmatprep.subr.mxu0 0.0
  %675 = vmatpush2.xpose.msra.mxu0 0.0
  %676 = vmatprep.subr.mxu0 0.0
  %677 = vmatpush2.xpose.msra.mxu0 0.0
  %678 = vmatprep.subr.mxu0 0.0
  %679 = vmatpush2.xpose.msra.mxu0 0.0
  %680 = vmatprep.subr.mxu0 0.0
  %681 = vmatpush2.xpose.msra.mxu0 0.0
  %682 = vmatprep.subr.mxu0 0.0
  %683 = vmatpush2.xpose.msra.mxu0 0.0
  %684 = vmatprep.subr.mxu0 0.0
  %685 = vmatpush2.xpose.msra.mxu0 0.0
  %686 = vmatprep.subr.mxu0 0.0
  %687 = vmatpush2.xpose.msra.mxu0 0.0
  %688 = vmatprep.subr.mxu0 0.0
  %689 = vmatpush2.xpose.msra.mxu0 0.0
  %690 = vmatprep.subr.mxu0 0.0
  %691 = vmatpush2.xpose.msra.mxu0 0.0
  %692 = vmatprep.subr.mxu0 0.0
  %693 = vmatpush2.xpose.msra.mxu0 0.0
  %694 = vmatprep.mubr.f32.mxu0 0.0
  %695 = vmatmul.mubr.f32.gmra.mxu0 %v607
  %v696 = vpop.f32.mrf.mxu0
  %v697 = vadd.f32 %v296, %v696
  %v698 = vpop.f32.mrf.mxu0
  %699 = vmatprep.mubr.f32.mxu0 0.0
  %700 = vmatmul.mubr.f32.gmra.mxu0 %v610
  %v701 = vpop.f32.mrf.mxu0
  %v702 = vadd.f32 %v297, %v701
  %v703 = vpop.f32.mrf.mxu0
  %704 = vmatprep.mubr.f32.mxu0 0.0
  %705 = vmatmul.mubr.f32.gmra.mxu0 %v613
  %v706 = vpop.f32.mrf.mxu0
  %v707 = vadd.f32 %v298, %v706
  %v708 = vpop.f32.mrf.mxu0
  %709 = vmatprep.mubr.f32.mxu0 0.0
  %710 = vmatmul.mubr.f32.gmra.mxu0 %v616
  %v711 = vpop.f32.mrf.mxu0
  %v712 = vadd.f32 %v299, %v711
  %v713 = vpop.f32.mrf.mxu0
  %714 = vdwg.mxu0
  %v715 = vsel %vm311, %v697, -inf
  %716 = vmax.xlane.f32.xlu0 %v715
  %v717 = vpop.xlane.xlu0 %716
  %v718 = vsel %vm311, %v702, -inf
  %719 = vmax.xlane.f32.xlu0 %v718
  %v720 = vpop.xlane.xlu0 %719
  %v721 = vsel %vm311, %v707, -inf
  %722 = vmax.xlane.f32.xlu0 %v721
  %v723 = vpop.xlane.xlu0 %722
  %v724 = vsel %vm311, %v712, -inf
  %725 = vmax.xlane.f32.xlu0 %v724
  %v726 = vpop.xlane.xlu0 %725
  %v727 = vsub.f32 %v697, %v717
  %v728 = vsub.f32 %v702, %v720
  %v729 = vsub.f32 %v707, %v723
  %v730 = vsub.f32 %v712, %v726
  %v731 = vmul.f32 %v727, 1.442695
  %v732 = vpow.pop %v731
  %v733 = vmul.f32 %v728, 1.442695
  %v734 = vpow.pop %v733
  %v735 = vmul.f32 %v729, 1.442695
  %v736 = vpow.pop %v735
  %v737 = vmul.f32 %v730, 1.442695
  %v738 = vpow.pop %v737
  %v739 = vsel %vm311, %v732, 0.0
  %740 = vadd.xlane.f32.xlu0 %v739
  %v741 = vpop.xlane.xlu0 %740
  %v742 = vsel %vm311, %v734, 0.0
  %743 = vadd.xlane.f32.xlu0 %v742
  %v744 = vpop.xlane.xlu0 %743
  %v745 = vsel %vm311, %v736, 0.0
  %746 = vadd.xlane.f32.xlu0 %v745
  %v747 = vpop.xlane.xlu0 %746
  %v748 = vsel %vm311, %v738, 0.0
  %749 = vadd.xlane.f32.xlu0 %v748
  %v750 = vpop.xlane.xlu0 %749
  %v751 = vrcp.pop %v741
  %v752 = vrcp.pop %v744
  %v753 = vrcp.pop %v747
  %v754 = vrcp.pop %v750
  %v755 = vmul.f32 %v732, %v751
  %v756 = vmul.f32 %v734, %v752
  %v757 = vmul.f32 %v736, %v753
  %v758 = vmul.f32 %v738, %v754
  %v760 = vsel %vm311, %v755, 0
  %v763 = vsel %vm311, %v756, 0
  %v766 = vsel %vm311, %v757, 0
  %v769 = vsel %vm311, %v758, 0
  %771 = vmatprep.subr.mxu0 0.0
  %772 = vmatpush1.msra.mxu0 0.0
  %773 = vmatprep.subr.mxu0 0.0
  %774 = vmatpush1.msra.mxu0 0.0
  %775 = vmatprep.subr.mxu0 0.0
  %776 = vmatpush1.msra.mxu0 0.0
  %777 = vmatprep.subr.mxu0 0.0
  %778 = vmatpush1.msra.mxu0 0.0
  %779 = vmatprep.subr.mxu0 0.0
  %780 = vmatpush1.msra.mxu0 0.0
  %781 = vmatprep.subr.mxu0 0.0
  %782 = vmatpush1.msra.mxu0 0.0
  %783 = vmatprep.subr.mxu0 0.0
  %784 = vmatpush1.msra.mxu0 0.0
  %785 = vmatprep.subr.mxu0 0.0
  %786 = vmatpush1.msra.mxu0 0.0
  %787 = vmatprep.subr.mxu0 0.0
  %788 = vmatpush1.msra.mxu0 0.0
  %789 = vmatprep.subr.mxu0 0.0
  %790 = vmatpush1.msra.mxu0 0.0
  %791 = vmatprep.subr.mxu0 0.0
  %792 = vmatpush1.msra.mxu0 0.0
  %793 = vmatprep.subr.mxu0 0.0
  %794 = vmatpush1.msra.mxu0 0.0
  %795 = vmatprep.subr.mxu0 0.0
  %796 = vmatpush1.msra.mxu0 %v602
  %797 = vmatprep.subr.mxu0 0.0
  %798 = vmatpush1.msra.mxu0 %v597
  %799 = vmatprep.subr.mxu0 0.0
  %800 = vmatpush1.msra.mxu0 %v592
  %801 = vmatprep.subr.mxu0 0.0
  %802 = vmatpush1.msra.mxu0 %v587
  %803 = vmatprep.subr.mxu0 0.0
  %804 = vmatpush2.msra.mxu0 0.0
  %805 = vmatprep.subr.mxu0 0.0
  %806 = vmatpush2.msra.mxu0 0.0
  %807 = vmatprep.subr.mxu0 0.0
  %808 = vmatpush2.msra.mxu0 0.0
  %809 = vmatprep.subr.mxu0 0.0
  %810 = vmatpush2.msra.mxu0 0.0
  %811 = vmatprep.subr.mxu0 0.0
  %812 = vmatpush2.msra.mxu0 0.0
  %813 = vmatprep.subr.mxu0 0.0
  %814 = vmatpush2.msra.mxu0 0.0
  %815 = vmatprep.subr.mxu0 0.0
  %816 = vmatpush2.msra.mxu0 0.0
  %817 = vmatprep.subr.mxu0 0.0
  %818 = vmatpush2.msra.mxu0 0.0
  %819 = vmatprep.subr.mxu0 0.0
  %820 = vmatpush2.msra.mxu0 0.0
  %821 = vmatprep.subr.mxu0 0.0
  %822 = vmatpush2.msra.mxu0 0.0
  %823 = vmatprep.subr.mxu0 0.0
  %824 = vmatpush2.msra.mxu0 0.0
  %825 = vmatprep.subr.mxu0 0.0
  %826 = vmatpush2.msra.mxu0 0.0
  %827 = vmatprep.subr.mxu0 0.0
  %828 = vmatpush2.msra.mxu0 0.0
  %829 = vmatprep.subr.mxu0 0.0
  %830 = vmatpush2.msra.mxu0 0.0
  %831 = vmatprep.subr.mxu0 0.0
  %832 = vmatpush2.msra.mxu0 0.0
  %833 = vmatprep.subr.mxu0 0.0
  %834 = vmatpush2.msra.mxu0 0.0
  %835 = vmatprep.mubr.f32.mxu0 0.0
  %836 = vmatmul.mubr.f32.gmra.mxu0 %v760
  %v837 = vpop.f32.mrf.mxu0
  %v838 = vadd.f32 0.0, %v837
  %v839 = vpop.f32.mrf.mxu0
  %840 = vmatprep.mubr.f32.mxu0 0.0
  %841 = vmatmul.mubr.f32.gmra.mxu0 %v763
  %v842 = vpop.f32.mrf.mxu0
  %v843 = vadd.f32 0.0, %v842
  %v844 = vpop.f32.mrf.mxu0
  %845 = vmatprep.mubr.f32.mxu0 0.0
  %846 = vmatmul.mubr.f32.gmra.mxu0 %v766
  %v847 = vpop.f32.mrf.mxu0
  %v848 = vadd.f32 0.0, %v847
  %v849 = vpop.f32.mrf.mxu0
  %850 = vmatprep.mubr.f32.mxu0 0.0
  %851 = vmatmul.mubr.f32.gmra.mxu0 %v769
  %v852 = vpop.f32.mrf.mxu0
  %v853 = vadd.f32 0.0, %v852
  %v854 = vpop.f32.mrf.mxu0
  %855 = vdwg.mxu0
  %v856 = vld [vmem:[%s5] sm:$0xff]
  %s857 = scalar_lea.vmem %s3, 96
  %v858 = vld [vmem:[%s857] sm:$0xff]
  %v859 = vld [vmem:[%s857 + $0x8] sm:$0xff]
  %v860 = vld [vmem:[%s857 + $0x10] sm:$0xff]
  %v861 = vld [vmem:[%s857 + $0x18] sm:$0xff]
  %s862 = scalar_lea.vmem %s4, 3
  %v863 = vld [vmem:[%s862] sm:$0x1]
  %v865 = vlaneseq
  %v866 = vshrl.u32 %v865, 7
  %v867 = vsub.s32 0, %v866
  %v868 = vrot.slane %v863, %v867
  %870 = vmatprep.subr.mxu0 0.0
  %871 = vmatpush1.msra.mxu0 0.0
  %872 = vmatprep.subr.mxu0 0.0
  %873 = vmatpush1.msra.mxu0 0.0
  %874 = vmatprep.subr.mxu0 0.0
  %875 = vmatpush1.msra.mxu0 0.0
  %876 = vmatprep.subr.mxu0 0.0
  %877 = vmatpush1.msra.mxu0 0.0
  %878 = vmatprep.subr.mxu0 0.0
  %879 = vmatpush1.msra.mxu0 0.0
  %880 = vmatprep.subr.mxu0 0.0
  %881 = vmatpush1.msra.mxu0 0.0
  %882 = vmatprep.subr.mxu0 0.0
  %883 = vmatpush1.msra.mxu0 0.0
  %884 = vmatprep.subr.mxu0 0.0
  %885 = vmatpush1.msra.mxu0 0.0
  %886 = vmatprep.subr.mxu0 0.0
  %887 = vmatpush1.msra.mxu0 0.0
  %888 = vmatprep.subr.mxu0 0.0
  %889 = vmatpush1.msra.mxu0 0.0
  %890 = vmatprep.subr.mxu0 0.0
  %891 = vmatpush1.msra.mxu0 0.0
  %892 = vmatprep.subr.mxu0 0.0
  %893 = vmatpush1.msra.mxu0 0.0
  %894 = vmatprep.subr.mxu0 0.0
  %895 = vmatpush1.msra.mxu0 %v861
  %896 = vmatprep.subr.mxu0 0.0
  %897 = vmatpush1.msra.mxu0 %v860
  %898 = vmatprep.subr.mxu0 0.0
  %899 = vmatpush1.msra.mxu0 %v859
  %900 = vmatprep.subr.mxu0 0.0
  %901 = vmatpush1.msra.mxu0 %v858
  %902 = vmatprep.subr.mxu0 0.0
  %903 = vmatpush2.msra.mxu0 0.0
  %904 = vmatprep.subr.mxu0 0.0
  %905 = vmatpush2.msra.mxu0 0.0
  %906 = vmatprep.subr.mxu0 0.0
  %907 = vmatpush2.msra.mxu0 0.0
  %908 = vmatprep.subr.mxu0 0.0
  %909 = vmatpush2.msra.mxu0 0.0
  %910 = vmatprep.subr.mxu0 0.0
  %911 = vmatpush2.msra.mxu0 0.0
  %912 = vmatprep.subr.mxu0 0.0
  %913 = vmatpush2.msra.mxu0 0.0
  %914 = vmatprep.subr.mxu0 0.0
  %915 = vmatpush2.msra.mxu0 0.0
  %916 = vmatprep.subr.mxu0 0.0
  %917 = vmatpush2.msra.mxu0 0.0
  %918 = vmatprep.subr.mxu0 0.0
  %919 = vmatpush2.msra.mxu0 0.0
  %920 = vmatprep.subr.mxu0 0.0
  %921 = vmatpush2.msra.mxu0 0.0
  %922 = vmatprep.subr.mxu0 0.0
  %923 = vmatpush2.msra.mxu0 0.0
  %924 = vmatprep.subr.mxu0 0.0
  %925 = vmatpush2.msra.mxu0 0.0
  %926 = vmatprep.subr.mxu0 0.0
  %927 = vmatpush2.msra.mxu0 0.0
  %928 = vmatprep.subr.mxu0 0.0
  %929 = vmatpush2.msra.mxu0 0.0
  %930 = vmatprep.subr.mxu0 0.0
  %931 = vmatpush2.msra.mxu0 0.0
  %932 = vmatprep.subr.mxu0 0.0
  %933 = vmatpush2.msra.mxu0 0.0
  %934 = vmatprep.mubr.f32.mxu0 0.0
  %935 = vmatmul.mubr.f32.gmra.mxu0 %v313
  %v936 = vpop.f32.mrf.mxu0
  %v937 = vadd.f32 %v868, %v936
  %v938 = vpop.f32.mrf.mxu0
  %939 = vmatprep.mubr.f32.mxu0 0.0
  %940 = vmatmul.mubr.f32.gmra.mxu0 %v316
  %v941 = vpop.f32.mrf.mxu0
  %v942 = vadd.f32 %v868, %v941
  %v943 = vpop.f32.mrf.mxu0
  %944 = vmatprep.mubr.f32.mxu0 0.0
  %945 = vmatmul.mubr.f32.gmra.mxu0 %v319
  %v946 = vpop.f32.mrf.mxu0
  %v947 = vadd.f32 %v868, %v946
  %v948 = vpop.f32.mrf.mxu0
  %949 = vmatprep.mubr.f32.mxu0 0.0
  %950 = vmatmul.mubr.f32.gmra.mxu0 %v322
  %v951 = vpop.f32.mrf.mxu0
  %v952 = vadd.f32 %v868, %v951
  %v953 = vpop.f32.mrf.mxu0
  %954 = vdwg.mxu0
  %s955 = scalar_lea.vmem %s3, 128
  %v956 = vld [vmem:[%s955] sm:$0xff]
  %v957 = vld [vmem:[%s955 + $0x8] sm:$0xff]
  %v958 = vld [vmem:[%s955 + $0x10] sm:$0xff]
  %v959 = vld [vmem:[%s955 + $0x18] sm:$0xff]
  %s960 = scalar_lea.vmem %s4, 4
  %v961 = vld [vmem:[%s960] sm:$0x1]
  %v963 = vlaneseq
  %v964 = vshrl.u32 %v963, 7
  %v965 = vsub.s32 0, %v964
  %v966 = vrot.slane %v961, %v965
  %968 = vmatprep.subr.mxu0 0.0
  %969 = vmatpush1.msra.mxu0 0.0
  %970 = vmatprep.subr.mxu0 0.0
  %971 = vmatpush1.msra.mxu0 0.0
  %972 = vmatprep.subr.mxu0 0.0
  %973 = vmatpush1.msra.mxu0 0.0
  %974 = vmatprep.subr.mxu0 0.0
  %975 = vmatpush1.msra.mxu0 0.0
  %976 = vmatprep.subr.mxu0 0.0
  %977 = vmatpush1.msra.mxu0 0.0
  %978 = vmatprep.subr.mxu0 0.0
  %979 = vmatpush1.msra.mxu0 0.0
  %980 = vmatprep.subr.mxu0 0.0
  %981 = vmatpush1.msra.mxu0 0.0
  %982 = vmatprep.subr.mxu0 0.0
  %983 = vmatpush1.msra.mxu0 0.0
  %984 = vmatprep.subr.mxu0 0.0
  %985 = vmatpush1.msra.mxu0 0.0
  %986 = vmatprep.subr.mxu0 0.0
  %987 = vmatpush1.msra.mxu0 0.0
  %988 = vmatprep.subr.mxu0 0.0
  %989 = vmatpush1.msra.mxu0 0.0
  %990 = vmatprep.subr.mxu0 0.0
  %991 = vmatpush1.msra.mxu0 0.0
  %992 = vmatprep.subr.mxu0 0.0
  %993 = vmatpush1.msra.mxu0 %v959
  %994 = vmatprep.subr.mxu0 0.0
  %995 = vmatpush1.msra.mxu0 %v958
  %996 = vmatprep.subr.mxu0 0.0
  %997 = vmatpush1.msra.mxu0 %v957
  %998 = vmatprep.subr.mxu0 0.0
  %999 = vmatpush1.msra.mxu0 %v956
  %1000 = vmatprep.subr.mxu0 0.0
  %1001 = vmatpush2.msra.mxu0 0.0
  %1002 = vmatprep.subr.mxu0 0.0
  %1003 = vmatpush2.msra.mxu0 0.0
  %1004 = vmatprep.subr.mxu0 0.0
  %1005 = vmatpush2.msra.mxu0 0.0
  %1006 = vmatprep.subr.mxu0 0.0
  %1007 = vmatpush2.msra.mxu0 0.0
  %1008 = vmatprep.subr.mxu0 0.0
  %1009 = vmatpush2.msra.mxu0 0.0
  %1010 = vmatprep.subr.mxu0 0.0
  %1011 = vmatpush2.msra.mxu0 0.0
  %1012 = vmatprep.subr.mxu0 0.0
  %1013 = vmatpush2.msra.mxu0 0.0
  %1014 = vmatprep.subr.mxu0 0.0
  %1015 = vmatpush2.msra.mxu0 0.0
  %1016 = vmatprep.subr.mxu0 0.0
  %1017 = vmatpush2.msra.mxu0 0.0
  %1018 = vmatprep.subr.mxu0 0.0
  %1019 = vmatpush2.msra.mxu0 0.0
  %1020 = vmatprep.subr.mxu0 0.0
  %1021 = vmatpush2.msra.mxu0 0.0
  %1022 = vmatprep.subr.mxu0 0.0
  %1023 = vmatpush2.msra.mxu0 0.0
  %1024 = vmatprep.subr.mxu0 0.0
  %1025 = vmatpush2.msra.mxu0 0.0
  %1026 = vmatprep.subr.mxu0 0.0
  %1027 = vmatpush2.msra.mxu0 0.0
  %1028 = vmatprep.subr.mxu0 0.0
  %1029 = vmatpush2.msra.mxu0 0.0
  %1030 = vmatprep.subr.mxu0 0.0
  %1031 = vmatpush2.msra.mxu0 0.0
  %1032 = vmatprep.mubr.f32.mxu0 0.0
  %1033 = vmatmul.mubr.f32.gmra.mxu0 %v313
  %v1034 = vpop.f32.mrf.mxu0
  %v1035 = vadd.f32 %v966, %v1034
  %v1036 = vpop.f32.mrf.mxu0
  %1037 = vmatprep.mubr.f32.mxu0 0.0
  %1038 = vmatmul.mubr.f32.gmra.mxu0 %v316
  %v1039 = vpop.f32.mrf.mxu0
  %v1040 = vadd.f32 %v966, %v1039
  %v1041 = vpop.f32.mrf.mxu0
  %1042 = vmatprep.mubr.f32.mxu0 0.0
  %1043 = vmatmul.mubr.f32.gmra.mxu0 %v319
  %v1044 = vpop.f32.mrf.mxu0
  %v1045 = vadd.f32 %v966, %v1044
  %v1046 = vpop.f32.mrf.mxu0
  %1047 = vmatprep.mubr.f32.mxu0 0.0
  %1048 = vmatmul.mubr.f32.gmra.mxu0 %v322
  %v1049 = vpop.f32.mrf.mxu0
  %v1050 = vadd.f32 %v966, %v1049
  %v1051 = vpop.f32.mrf.mxu0
  %1052 = vdwg.mxu0
  %s1053 = scalar_lea.vmem %s3, 160
  %v1054 = vld [vmem:[%s1053] sm:$0xff]
  %v1055 = vld [vmem:[%s1053 + $0x8] sm:$0xff]
  %v1056 = vld [vmem:[%s1053 + $0x10] sm:$0xff]
  %v1057 = vld [vmem:[%s1053 + $0x18] sm:$0xff]
  %s1058 = scalar_lea.vmem %s4, 5
  %v1059 = vld [vmem:[%s1058] sm:$0x1]
  %v1061 = vlaneseq
  %v1062 = vshrl.u32 %v1061, 7
  %v1063 = vsub.s32 0, %v1062
  %v1064 = vrot.slane %v1059, %v1063
  %1066 = vmatprep.subr.mxu0 0.0
  %1067 = vmatpush1.msra.mxu0 0.0
  %1068 = vmatprep.subr.mxu0 0.0
  %1069 = vmatpush1.msra.mxu0 0.0
  %1070 = vmatprep.subr.mxu0 0.0
  %1071 = vmatpush1.msra.mxu0 0.0
  %1072 = vmatprep.subr.mxu0 0.0
  %1073 = vmatpush1.msra.mxu0 0.0
  %1074 = vmatprep.subr.mxu0 0.0
  %1075 = vmatpush1.msra.mxu0 0.0
  %1076 = vmatprep.subr.mxu0 0.0
  %1077 = vmatpush1.msra.mxu0 0.0
  %1078 = vmatprep.subr.mxu0 0.0
  %1079 = vmatpush1.msra.mxu0 0.0
  %1080 = vmatprep.subr.mxu0 0.0
  %1081 = vmatpush1.msra.mxu0 0.0
  %1082 = vmatprep.subr.mxu0 0.0
  %1083 = vmatpush1.msra.mxu0 0.0
  %1084 = vmatprep.subr.mxu0 0.0
  %1085 = vmatpush1.msra.mxu0 0.0
  %1086 = vmatprep.subr.mxu0 0.0
  %1087 = vmatpush1.msra.mxu0 0.0
  %1088 = vmatprep.subr.mxu0 0.0
  %1089 = vmatpush1.msra.mxu0 0.0
  %1090 = vmatprep.subr.mxu0 0.0
  %1091 = vmatpush1.msra.mxu0 %v1057
  %1092 = vmatprep.subr.mxu0 0.0
  %1093 = vmatpush1.msra.mxu0 %v1056
  %1094 = vmatprep.subr.mxu0 0.0
  %1095 = vmatpush1.msra.mxu0 %v1055
  %1096 = vmatprep.subr.mxu0 0.0
  %1097 = vmatpush1.msra.mxu0 %v1054
  %1098 = vmatprep.subr.mxu0 0.0
  %1099 = vmatpush2.msra.mxu0 0.0
  %1100 = vmatprep.subr.mxu0 0.0
  %1101 = vmatpush2.msra.mxu0 0.0
  %1102 = vmatprep.subr.mxu0 0.0
  %1103 = vmatpush2.msra.mxu0 0.0
  %1104 = vmatprep.subr.mxu0 0.0
  %1105 = vmatpush2.msra.mxu0 0.0
  %1106 = vmatprep.subr.mxu0 0.0
  %1107 = vmatpush2.msra.mxu0 0.0
  %1108 = vmatprep.subr.mxu0 0.0
  %1109 = vmatpush2.msra.mxu0 0.0
  %1110 = vmatprep.subr.mxu0 0.0
  %1111 = vmatpush2.msra.mxu0 0.0
  %1112 = vmatprep.subr.mxu0 0.0
  %1113 = vmatpush2.msra.mxu0 0.0
  %1114 = vmatprep.subr.mxu0 0.0
  %1115 = vmatpush2.msra.mxu0 0.0
  %1116 = vmatprep.subr.mxu0 0.0
  %1117 = vmatpush2.msra.mxu0 0.0
  %1118 = vmatprep.subr.mxu0 0.0
  %1119 = vmatpush2.msra.mxu0 0.0
  %1120 = vmatprep.subr.mxu0 0.0
  %1121 = vmatpush2.msra.mxu0 0.0
  %1122 = vmatprep.subr.mxu0 0.0
  %1123 = vmatpush2.msra.mxu0 0.0
  %1124 = vmatprep.subr.mxu0 0.0
  %1125 = vmatpush2.msra.mxu0 0.0
  %1126 = vmatprep.subr.mxu0 0.0
  %1127 = vmatpush2.msra.mxu0 0.0
  %1128 = vmatprep.subr.mxu0 0.0
  %1129 = vmatpush2.msra.mxu0 0.0
  %1130 = vmatprep.mubr.f32.mxu0 0.0
  %1131 = vmatmul.mubr.f32.gmra.mxu0 %v313
  %v1132 = vpop.f32.mrf.mxu0
  %v1133 = vadd.f32 %v1064, %v1132
  %v1134 = vpop.f32.mrf.mxu0
  %1135 = vmatprep.mubr.f32.mxu0 0.0
  %1136 = vmatmul.mubr.f32.gmra.mxu0 %v316
  %v1137 = vpop.f32.mrf.mxu0
  %v1138 = vadd.f32 %v1064, %v1137
  %v1139 = vpop.f32.mrf.mxu0
  %1140 = vmatprep.mubr.f32.mxu0 0.0
  %1141 = vmatmul.mubr.f32.gmra.mxu0 %v319
  %v1142 = vpop.f32.mrf.mxu0
  %v1143 = vadd.f32 %v1064, %v1142
  %v1144 = vpop.f32.mrf.mxu0
  %1145 = vmatprep.mubr.f32.mxu0 0.0
  %1146 = vmatmul.mubr.f32.gmra.mxu0 %v322
  %v1147 = vpop.f32.mrf.mxu0
  %v1148 = vadd.f32 %v1064, %v1147
  %v1149 = vpop.f32.mrf.mxu0
  %1150 = vdwg.mxu0
  %v1152 = vsel %vm605, %v937, 0
  %v1155 = vsel %vm605, %v942, 0
  %v1158 = vsel %vm605, %v947, 0
  %v1161 = vsel %vm605, %v952, 0
  %v1164 = vsel %vm605, %v1035, 0
  %v1167 = vsel %vm605, %v1040, 0
  %v1170 = vsel %vm605, %v1045, 0
  %v1173 = vsel %vm605, %v1050, 0
  %1175 = vmatprep.subr.mxu0 0.0
  %1176 = vmatpush1.xpose.msra.mxu0 0.0
  %1177 = vmatprep.subr.mxu0 0.0
  %1178 = vmatpush1.xpose.msra.mxu0 0.0
  %1179 = vmatprep.subr.mxu0 0.0
  %1180 = vmatpush1.xpose.msra.mxu0 0.0
  %1181 = vmatprep.subr.mxu0 0.0
  %1182 = vmatpush1.xpose.msra.mxu0 0.0
  %1183 = vmatprep.subr.mxu0 0.0
  %1184 = vmatpush1.xpose.msra.mxu0 0.0
  %1185 = vmatprep.subr.mxu0 0.0
  %1186 = vmatpush1.xpose.msra.mxu0 0.0
  %1187 = vmatprep.subr.mxu0 0.0
  %1188 = vmatpush1.xpose.msra.mxu0 0.0
  %1189 = vmatprep.subr.mxu0 0.0
  %1190 = vmatpush1.xpose.msra.mxu0 0.0
  %1191 = vmatprep.subr.mxu0 0.0
  %1192 = vmatpush1.xpose.msra.mxu0 0.0
  %1193 = vmatprep.subr.mxu0 0.0
  %1194 = vmatpush1.xpose.msra.mxu0 0.0
  %1195 = vmatprep.subr.mxu0 0.0
  %1196 = vmatpush1.xpose.msra.mxu0 0.0
  %1197 = vmatprep.subr.mxu0 0.0
  %1198 = vmatpush1.xpose.msra.mxu0 0.0
  %1199 = vmatprep.subr.mxu0 0.0
  %1200 = vmatpush1.xpose.msra.mxu0 %v1173
  %1201 = vmatprep.subr.mxu0 0.0
  %1202 = vmatpush1.xpose.msra.mxu0 %v1170
  %1203 = vmatprep.subr.mxu0 0.0
  %1204 = vmatpush1.xpose.msra.mxu0 %v1167
  %1205 = vmatprep.subr.mxu0 0.0
  %1206 = vmatpush1.xpose.msra.mxu0 %v1164
  %1207 = vmatprep.subr.mxu0 0.0
  %1208 = vmatpush2.xpose.msra.mxu0 0.0
  %1209 = vmatprep.subr.mxu0 0.0
  %1210 = vmatpush2.xpose.msra.mxu0 0.0
  %1211 = vmatprep.subr.mxu0 0.0
  %1212 = vmatpush2.xpose.msra.mxu0 0.0
  %1213 = vmatprep.subr.mxu0 0.0
  %1214 = vmatpush2.xpose.msra.mxu0 0.0
  %1215 = vmatprep.subr.mxu0 0.0
  %1216 = vmatpush2.xpose.msra.mxu0 0.0
  %1217 = vmatprep.subr.mxu0 0.0
  %1218 = vmatpush2.xpose.msra.mxu0 0.0
  %1219 = vmatprep.subr.mxu0 0.0
  %1220 = vmatpush2.xpose.msra.mxu0 0.0
  %1221 = vmatprep.subr.mxu0 0.0
  %1222 = vmatpush2.xpose.msra.mxu0 0.0
  %1223 = vmatprep.subr.mxu0 0.0
  %1224 = vmatpush2.xpose.msra.mxu0 0.0
  %1225 = vmatprep.subr.mxu0 0.0
  %1226 = vmatpush2.xpose.msra.mxu0 0.0
  %1227 = vmatprep.subr.mxu0 0.0
  %1228 = vmatpush2.xpose.msra.mxu0 0.0
  %1229 = vmatprep.subr.mxu0 0.0
  %1230 = vmatpush2.xpose.msra.mxu0 0.0
  %1231 = vmatprep.subr.mxu0 0.0
  %1232 = vmatpush2.xpose.msra.mxu0 0.0
  %1233 = vmatprep.subr.mxu0 0.0
  %1234 = vmatpush2.xpose.msra.mxu0 0.0
  %1235 = vmatprep.subr.mxu0 0.0
  %1236 = vmatpush2.xpose.msra.mxu0 0.0
  %1237 = vmatprep.subr.mxu0 0.0
  %1238 = vmatpush2.xpose.msra.mxu0 0.0
  %1239 = vmatprep.mubr.f32.mxu0 0.0
  %1240 = vmatmul.mubr.f32.gmra.mxu0 %v1152
  %v1241 = vpop.f32.mrf.mxu0
  %v1242 = vadd.f32 %v296, %v1241
  %v1243 = vpop.f32.mrf.mxu0
  %1244 = vmatprep.mubr.f32.mxu0 0.0
  %1245 = vmatmul.mubr.f32.gmra.mxu0 %v1155
  %v1246 = vpop.f32.mrf.mxu0
  %v1247 = vadd.f32 %v297, %v1246
  %v1248 = vpop.f32.mrf.mxu0
  %1249 = vmatprep.mubr.f32.mxu0 0.0
  %1250 = vmatmul.mubr.f32.gmra.mxu0 %v1158
  %v1251 = vpop.f32.mrf.mxu0
  %v1252 = vadd.f32 %v298, %v1251
  %v1253 = vpop.f32.mrf.mxu0
  %1254 = vmatprep.mubr.f32.mxu0 0.0
  %1255 = vmatmul.mubr.f32.gmra.mxu0 %v1161
  %v1256 = vpop.f32.mrf.mxu0
  %v1257 = vadd.f32 %v299, %v1256
  %v1258 = vpop.f32.mrf.mxu0
  %1259 = vdwg.mxu0
  %v1260 = vsel %vm311, %v1242, -inf
  %1261 = vmax.xlane.f32.xlu0 %v1260
  %v1262 = vpop.xlane.xlu0 %1261
  %v1263 = vsel %vm311, %v1247, -inf
  %1264 = vmax.xlane.f32.xlu0 %v1263
  %v1265 = vpop.xlane.xlu0 %1264
  %v1266 = vsel %vm311, %v1252, -inf
  %1267 = vmax.xlane.f32.xlu0 %v1266
  %v1268 = vpop.xlane.xlu0 %1267
  %v1269 = vsel %vm311, %v1257, -inf
  %1270 = vmax.xlane.f32.xlu0 %v1269
  %v1271 = vpop.xlane.xlu0 %1270
  %v1272 = vsub.f32 %v1242, %v1262
  %v1273 = vsub.f32 %v1247, %v1265
  %v1274 = vsub.f32 %v1252, %v1268
  %v1275 = vsub.f32 %v1257, %v1271
  %v1276 = vmul.f32 %v1272, 1.442695
  %v1277 = vpow.pop %v1276
  %v1278 = vmul.f32 %v1273, 1.442695
  %v1279 = vpow.pop %v1278
  %v1280 = vmul.f32 %v1274, 1.442695
  %v1281 = vpow.pop %v1280
  %v1282 = vmul.f32 %v1275, 1.442695
  %v1283 = vpow.pop %v1282
  %v1284 = vsel %vm311, %v1277, 0.0
  %1285 = vadd.xlane.f32.xlu0 %v1284
  %v1286 = vpop.xlane.xlu0 %1285
  %v1287 = vsel %vm311, %v1279, 0.0
  %1288 = vadd.xlane.f32.xlu0 %v1287
  %v1289 = vpop.xlane.xlu0 %1288
  %v1290 = vsel %vm311, %v1281, 0.0
  %1291 = vadd.xlane.f32.xlu0 %v1290
  %v1292 = vpop.xlane.xlu0 %1291
  %v1293 = vsel %vm311, %v1283, 0.0
  %1294 = vadd.xlane.f32.xlu0 %v1293
  %v1295 = vpop.xlane.xlu0 %1294
  %v1296 = vrcp.pop %v1286
  %v1297 = vrcp.pop %v1289
  %v1298 = vrcp.pop %v1292
  %v1299 = vrcp.pop %v1295
  %v1300 = vmul.f32 %v1277, %v1296
  %v1301 = vmul.f32 %v1279, %v1297
  %v1302 = vmul.f32 %v1281, %v1298
  %v1303 = vmul.f32 %v1283, %v1299
  %v1305 = vsel %vm311, %v1300, 0
  %v1308 = vsel %vm311, %v1301, 0
  %v1311 = vsel %vm311, %v1302, 0
  %v1314 = vsel %vm311, %v1303, 0
  %1316 = vmatprep.subr.mxu0 0.0
  %1317 = vmatpush1.msra.mxu0 0.0
  %1318 = vmatprep.subr.mxu0 0.0
  %1319 = vmatpush1.msra.mxu0 0.0
  %1320 = vmatprep.subr.mxu0 0.0
  %1321 = vmatpush1.msra.mxu0 0.0
  %1322 = vmatprep.subr.mxu0 0.0
  %1323 = vmatpush1.msra.mxu0 0.0
  %1324 = vmatprep.subr.mxu0 0.0
  %1325 = vmatpush1.msra.mxu0 0.0
  %1326 = vmatprep.subr.mxu0 0.0
  %1327 = vmatpush1.msra.mxu0 0.0
  %1328 = vmatprep.subr.mxu0 0.0
  %1329 = vmatpush1.msra.mxu0 0.0
  %1330 = vmatprep.subr.mxu0 0.0
  %1331 = vmatpush1.msra.mxu0 0.0
  %1332 = vmatprep.subr.mxu0 0.0
  %1333 = vmatpush1.msra.mxu0 0.0
  %1334 = vmatprep.subr.mxu0 0.0
  %1335 = vmatpush1.msra.mxu0 0.0
  %1336 = vmatprep.subr.mxu0 0.0
  %1337 = vmatpush1.msra.mxu0 0.0
  %1338 = vmatprep.subr.mxu0 0.0
  %1339 = vmatpush1.msra.mxu0 0.0
  %1340 = vmatprep.subr.mxu0 0.0
  %1341 = vmatpush1.msra.mxu0 %v1148
  %1342 = vmatprep.subr.mxu0 0.0
  %1343 = vmatpush1.msra.mxu0 %v1143
  %1344 = vmatprep.subr.mxu0 0.0
  %1345 = vmatpush1.msra.mxu0 %v1138
  %1346 = vmatprep.subr.mxu0 0.0
  %1347 = vmatpush1.msra.mxu0 %v1133
  %1348 = vmatprep.subr.mxu0 0.0
  %1349 = vmatpush2.msra.mxu0 0.0
  %1350 = vmatprep.subr.mxu0 0.0
  %1351 = vmatpush2.msra.mxu0 0.0
  %1352 = vmatprep.subr.mxu0 0.0
  %1353 = vmatpush2.msra.mxu0 0.0
  %1354 = vmatprep.subr.mxu0 0.0
  %1355 = vmatpush2.msra.mxu0 0.0
  %1356 = vmatprep.subr.mxu0 0.0
  %1357 = vmatpush2.msra.mxu0 0.0
  %1358 = vmatprep.subr.mxu0 0.0
  %1359 = vmatpush2.msra.mxu0 0.0
  %1360 = vmatprep.subr.mxu0 0.0
  %1361 = vmatpush2.msra.mxu0 0.0
  %1362 = vmatprep.subr.mxu0 0.0
  %1363 = vmatpush2.msra.mxu0 0.0
  %1364 = vmatprep.subr.mxu0 0.0
  %1365 = vmatpush2.msra.mxu0 0.0
  %1366 = vmatprep.subr.mxu0 0.0
  %1367 = vmatpush2.msra.mxu0 0.0
  %1368 = vmatprep.subr.mxu0 0.0
  %1369 = vmatpush2.msra.mxu0 0.0
  %1370 = vmatprep.subr.mxu0 0.0
  %1371 = vmatpush2.msra.mxu0 0.0
  %1372 = vmatprep.subr.mxu0 0.0
  %1373 = vmatpush2.msra.mxu0 0.0
  %1374 = vmatprep.subr.mxu0 0.0
  %1375 = vmatpush2.msra.mxu0 0.0
  %1376 = vmatprep.subr.mxu0 0.0
  %1377 = vmatpush2.msra.mxu0 0.0
  %1378 = vmatprep.subr.mxu0 0.0
  %1379 = vmatpush2.msra.mxu0 0.0
  %1380 = vmatprep.mubr.f32.mxu0 0.0
  %1381 = vmatmul.mubr.f32.gmra.mxu0 %v1305
  %v1382 = vpop.f32.mrf.mxu0
  %v1383 = vadd.f32 0.0, %v1382
  %v1384 = vpop.f32.mrf.mxu0
  %1385 = vmatprep.mubr.f32.mxu0 0.0
  %1386 = vmatmul.mubr.f32.gmra.mxu0 %v1308
  %v1387 = vpop.f32.mrf.mxu0
  %v1388 = vadd.f32 0.0, %v1387
  %v1389 = vpop.f32.mrf.mxu0
  %1390 = vmatprep.mubr.f32.mxu0 0.0
  %1391 = vmatmul.mubr.f32.gmra.mxu0 %v1311
  %v1392 = vpop.f32.mrf.mxu0
  %v1393 = vadd.f32 0.0, %v1392
  %v1394 = vpop.f32.mrf.mxu0
  %1395 = vmatprep.mubr.f32.mxu0 0.0
  %1396 = vmatmul.mubr.f32.gmra.mxu0 %v1314
  %v1397 = vpop.f32.mrf.mxu0
  %v1398 = vadd.f32 0.0, %v1397
  %v1399 = vpop.f32.mrf.mxu0
  %1400 = vdwg.mxu0
  %s1401 = scalar_lea.vmem %s5, 8
  %v1402 = vld [vmem:[%s1401] sm:$0xff]
  %v1404 = vsel %vm605, %v1383, 0
  %v1407 = vsel %vm605, %v1388, 0
  %v1410 = vsel %vm605, %v1393, 0
  %v1413 = vsel %vm605, %v1398, 0
  %1415 = vmatprep.subr.mxu0 0.0
  %1416 = vmatpush1.msra.mxu0 0.0
  %1417 = vmatprep.subr.mxu0 0.0
  %1418 = vmatpush1.msra.mxu0 0.0
  %1419 = vmatprep.subr.mxu0 0.0
  %1420 = vmatpush1.msra.mxu0 0.0
  %1421 = vmatprep.subr.mxu0 0.0
  %1422 = vmatpush1.msra.mxu0 0.0
  %1423 = vmatprep.subr.mxu0 0.0
  %1424 = vmatpush1.msra.mxu0 0.0
  %1425 = vmatprep.subr.mxu0 0.0
  %1426 = vmatpush1.msra.mxu0 0.0
  %1427 = vmatprep.subr.mxu0 0.0
  %1428 = vmatpush1.msra.mxu0 0.0
  %1429 = vmatprep.subr.mxu0 0.0
  %1430 = vmatpush1.msra.mxu0 0.0
  %1431 = vmatprep.subr.mxu0 0.0
  %1432 = vmatpush1.msra.mxu0 0.0
  %1433 = vmatprep.subr.mxu0 0.0
  %1434 = vmatpush1.msra.mxu0 0.0
  %1435 = vmatprep.subr.mxu0 0.0
  %1436 = vmatpush1.msra.mxu0 0.0
  %1437 = vmatprep.subr.mxu0 0.0
  %1438 = vmatpush1.msra.mxu0 0.0
  %1439 = vmatprep.subr.mxu0 0.0
  %1440 = vmatpush1.msra.mxu0 0.0
  %1441 = vmatprep.subr.mxu0 0.0
  %1442 = vmatpush1.msra.mxu0 0.0
  %1443 = vmatprep.subr.mxu0 0.0
  %1444 = vmatpush1.msra.mxu0 0.0
  %1445 = vmatprep.subr.mxu0 0.0
  %1446 = vmatpush1.msra.mxu0 %v1402
  %1447 = vmatprep.subr.mxu0 0.0
  %1448 = vmatpush2.msra.mxu0 0.0
  %1449 = vmatprep.subr.mxu0 0.0
  %1450 = vmatpush2.msra.mxu0 0.0
  %1451 = vmatprep.subr.mxu0 0.0
  %1452 = vmatpush2.msra.mxu0 0.0
  %1453 = vmatprep.subr.mxu0 0.0
  %1454 = vmatpush2.msra.mxu0 0.0
  %1455 = vmatprep.subr.mxu0 0.0
  %1456 = vmatpush2.msra.mxu0 0.0
  %1457 = vmatprep.subr.mxu0 0.0
  %1458 = vmatpush2.msra.mxu0 0.0
  %1459 = vmatprep.subr.mxu0 0.0
  %1460 = vmatpush2.msra.mxu0 0.0
  %1461 = vmatprep.subr.mxu0 0.0
  %1462 = vmatpush2.msra.mxu0 0.0
  %1463 = vmatprep.subr.mxu0 0.0
  %1464 = vmatpush2.msra.mxu0 0.0
  %1465 = vmatprep.subr.mxu0 0.0
  %1466 = vmatpush2.msra.mxu0 0.0
  %1467 = vmatprep.subr.mxu0 0.0
  %1468 = vmatpush2.msra.mxu0 0.0
  %1469 = vmatprep.subr.mxu0 0.0
  %1470 = vmatpush2.msra.mxu0 0.0
  %1471 = vmatprep.subr.mxu0 0.0
  %1472 = vmatpush2.msra.mxu0 0.0
  %1473 = vmatprep.subr.mxu0 0.0
  %1474 = vmatpush2.msra.mxu0 0.0
  %1475 = vmatprep.subr.mxu0 0.0
  %1476 = vmatpush2.msra.mxu0 0.0
  %1477 = vmatprep.subr.mxu0 0.0
  %1478 = vmatpush2.msra.mxu0 0.0
  %1479 = vmatprep.mubr.f32.mxu0 0.0
  %1480 = vmatmul.mubr.f32.gmra.mxu0 %v1404
  %v1481 = vpop.f32.mrf.mxu0
  %v1482 = vadd.f32 0.0, %v1481
  %v1483 = vpop.f32.mrf.mxu0
  %1484 = vmatprep.mubr.f32.mxu0 0.0
  %1485 = vmatmul.mubr.f32.gmra.mxu0 %v1407
  %v1486 = vpop.f32.mrf.mxu0
  %v1487 = vadd.f32 0.0, %v1486
  %v1488 = vpop.f32.mrf.mxu0
  %1489 = vmatprep.mubr.f32.mxu0 0.0
  %1490 = vmatmul.mubr.f32.gmra.mxu0 %v1410
  %v1491 = vpop.f32.mrf.mxu0
  %v1492 = vadd.f32 0.0, %v1491
  %v1493 = vpop.f32.mrf.mxu0
  %1494 = vmatprep.mubr.f32.mxu0 0.0
  %1495 = vmatmul.mubr.f32.gmra.mxu0 %v1413
  %v1496 = vpop.f32.mrf.mxu0
  %v1497 = vadd.f32 0.0, %v1496
  %v1498 = vpop.f32.mrf.mxu0
  %1499 = vdwg.mxu0
  %v1501 = vsel %vm605, %v838, 0
  %v1504 = vsel %vm605, %v843, 0
  %v1507 = vsel %vm605, %v848, 0
  %v1510 = vsel %vm605, %v853, 0
  %1512 = vmatprep.subr.mxu0 0.0
  %1513 = vmatpush1.msra.mxu0 0.0
  %1514 = vmatprep.subr.mxu0 0.0
  %1515 = vmatpush1.msra.mxu0 0.0
  %1516 = vmatprep.subr.mxu0 0.0
  %1517 = vmatpush1.msra.mxu0 0.0
  %1518 = vmatprep.subr.mxu0 0.0
  %1519 = vmatpush1.msra.mxu0 0.0
  %1520 = vmatprep.subr.mxu0 0.0
  %1521 = vmatpush1.msra.mxu0 0.0
  %1522 = vmatprep.subr.mxu0 0.0
  %1523 = vmatpush1.msra.mxu0 0.0
  %1524 = vmatprep.subr.mxu0 0.0
  %1525 = vmatpush1.msra.mxu0 0.0
  %1526 = vmatprep.subr.mxu0 0.0
  %1527 = vmatpush1.msra.mxu0 0.0
  %1528 = vmatprep.subr.mxu0 0.0
  %1529 = vmatpush1.msra.mxu0 0.0
  %1530 = vmatprep.subr.mxu0 0.0
  %1531 = vmatpush1.msra.mxu0 0.0
  %1532 = vmatprep.subr.mxu0 0.0
  %1533 = vmatpush1.msra.mxu0 0.0
  %1534 = vmatprep.subr.mxu0 0.0
  %1535 = vmatpush1.msra.mxu0 0.0
  %1536 = vmatprep.subr.mxu0 0.0
  %1537 = vmatpush1.msra.mxu0 0.0
  %1538 = vmatprep.subr.mxu0 0.0
  %1539 = vmatpush1.msra.mxu0 0.0
  %1540 = vmatprep.subr.mxu0 0.0
  %1541 = vmatpush1.msra.mxu0 0.0
  %1542 = vmatprep.subr.mxu0 0.0
  %1543 = vmatpush1.msra.mxu0 %v856
  %1544 = vmatprep.subr.mxu0 0.0
  %1545 = vmatpush2.msra.mxu0 0.0
  %1546 = vmatprep.subr.mxu0 0.0
  %1547 = vmatpush2.msra.mxu0 0.0
  %1548 = vmatprep.subr.mxu0 0.0
  %1549 = vmatpush2.msra.mxu0 0.0
  %1550 = vmatprep.subr.mxu0 0.0
  %1551 = vmatpush2.msra.mxu0 0.0
  %1552 = vmatprep.subr.mxu0 0.0
  %1553 = vmatpush2.msra.mxu0 0.0
  %1554 = vmatprep.subr.mxu0 0.0
  %1555 = vmatpush2.msra.mxu0 0.0
  %1556 = vmatprep.subr.mxu0 0.0
  %1557 = vmatpush2.msra.mxu0 0.0
  %1558 = vmatprep.subr.mxu0 0.0
  %1559 = vmatpush2.msra.mxu0 0.0
  %1560 = vmatprep.subr.mxu0 0.0
  %1561 = vmatpush2.msra.mxu0 0.0
  %1562 = vmatprep.subr.mxu0 0.0
  %1563 = vmatpush2.msra.mxu0 0.0
  %1564 = vmatprep.subr.mxu0 0.0
  %1565 = vmatpush2.msra.mxu0 0.0
  %1566 = vmatprep.subr.mxu0 0.0
  %1567 = vmatpush2.msra.mxu0 0.0
  %1568 = vmatprep.subr.mxu0 0.0
  %1569 = vmatpush2.msra.mxu0 0.0
  %1570 = vmatprep.subr.mxu0 0.0
  %1571 = vmatpush2.msra.mxu0 0.0
  %1572 = vmatprep.subr.mxu0 0.0
  %1573 = vmatpush2.msra.mxu0 0.0
  %1574 = vmatprep.subr.mxu0 0.0
  %1575 = vmatpush2.msra.mxu0 0.0
  %1576 = vmatprep.mubr.f32.mxu0 0.0
  %1577 = vmatmul.mubr.f32.gmra.mxu0 %v1501
  %v1578 = vpop.f32.mrf.mxu0
  %v1579 = vadd.f32 %v1482, %v1578
  %v1580 = vpop.f32.mrf.mxu0
  %1581 = vmatprep.mubr.f32.mxu0 0.0
  %1582 = vmatmul.mubr.f32.gmra.mxu0 %v1504
  %v1583 = vpop.f32.mrf.mxu0
  %v1584 = vadd.f32 %v1487, %v1583
  %v1585 = vpop.f32.mrf.mxu0
  %1586 = vmatprep.mubr.f32.mxu0 0.0
  %1587 = vmatmul.mubr.f32.gmra.mxu0 %v1507
  %v1588 = vpop.f32.mrf.mxu0
  %v1589 = vadd.f32 %v1492, %v1588
  %v1590 = vpop.f32.mrf.mxu0
  %1591 = vmatprep.mubr.f32.mxu0 0.0
  %1592 = vmatmul.mubr.f32.gmra.mxu0 %v1510
  %v1593 = vpop.f32.mrf.mxu0
  %v1594 = vadd.f32 %v1497, %v1593
  %v1595 = vpop.f32.mrf.mxu0
  %1596 = vdwg.mxu0
  %s1597 = scalar_lea.vmem %s3, 192
  %v1598 = vld [vmem:[%s1597] sm:$0xff]
  %v1599 = vld [vmem:[%s1597 + $0x8] sm:$0xff]
  %v1600 = vld [vmem:[%s1597 + $0x10] sm:$0xff]
  %v1601 = vld [vmem:[%s1597 + $0x18] sm:$0xff]
  %s1602 = scalar_lea.vmem %s4, 6
  %v1603 = vld [vmem:[%s1602] sm:$0x1]
  %v1605 = vlaneseq
  %v1606 = vshrl.u32 %v1605, 7
  %v1607 = vsub.s32 0, %v1606
  %v1608 = vrot.slane %v1603, %v1607
  %1610 = vmatprep.subr.mxu0 0.0
  %1611 = vmatpush1.msra.mxu0 0.0
  %1612 = vmatprep.subr.mxu0 0.0
  %1613 = vmatpush1.msra.mxu0 0.0
  %1614 = vmatprep.subr.mxu0 0.0
  %1615 = vmatpush1.msra.mxu0 0.0
  %1616 = vmatprep.subr.mxu0 0.0
  %1617 = vmatpush1.msra.mxu0 0.0
  %1618 = vmatprep.subr.mxu0 0.0
  %1619 = vmatpush1.msra.mxu0 0.0
  %1620 = vmatprep.subr.mxu0 0.0
  %1621 = vmatpush1.msra.mxu0 0.0
  %1622 = vmatprep.subr.mxu0 0.0
  %1623 = vmatpush1.msra.mxu0 0.0
  %1624 = vmatprep.subr.mxu0 0.0
  %1625 = vmatpush1.msra.mxu0 0.0
  %1626 = vmatprep.subr.mxu0 0.0
  %1627 = vmatpush1.msra.mxu0 0.0
  %1628 = vmatprep.subr.mxu0 0.0
  %1629 = vmatpush1.msra.mxu0 0.0
  %1630 = vmatprep.subr.mxu0 0.0
  %1631 = vmatpush1.msra.mxu0 0.0
  %1632 = vmatprep.subr.mxu0 0.0
  %1633 = vmatpush1.msra.mxu0 0.0
  %1634 = vmatprep.subr.mxu0 0.0
  %1635 = vmatpush1.msra.mxu0 %v1601
  %1636 = vmatprep.subr.mxu0 0.0
  %1637 = vmatpush1.msra.mxu0 %v1600
  %1638 = vmatprep.subr.mxu0 0.0
  %1639 = vmatpush1.msra.mxu0 %v1599
  %1640 = vmatprep.subr.mxu0 0.0
  %1641 = vmatpush1.msra.mxu0 %v1598
  %1642 = vmatprep.subr.mxu0 0.0
  %1643 = vmatpush2.msra.mxu0 0.0
  %1644 = vmatprep.subr.mxu0 0.0
  %1645 = vmatpush2.msra.mxu0 0.0
  %1646 = vmatprep.subr.mxu0 0.0
  %1647 = vmatpush2.msra.mxu0 0.0
  %1648 = vmatprep.subr.mxu0 0.0
  %1649 = vmatpush2.msra.mxu0 0.0
  %1650 = vmatprep.subr.mxu0 0.0
  %1651 = vmatpush2.msra.mxu0 0.0
  %1652 = vmatprep.subr.mxu0 0.0
  %1653 = vmatpush2.msra.mxu0 0.0
  %1654 = vmatprep.subr.mxu0 0.0
  %1655 = vmatpush2.msra.mxu0 0.0
  %1656 = vmatprep.subr.mxu0 0.0
  %1657 = vmatpush2.msra.mxu0 0.0
  %1658 = vmatprep.subr.mxu0 0.0
  %1659 = vmatpush2.msra.mxu0 0.0
  %1660 = vmatprep.subr.mxu0 0.0
  %1661 = vmatpush2.msra.mxu0 0.0
  %1662 = vmatprep.subr.mxu0 0.0
  %1663 = vmatpush2.msra.mxu0 0.0
  %1664 = vmatprep.subr.mxu0 0.0
  %1665 = vmatpush2.msra.mxu0 0.0
  %1666 = vmatprep.subr.mxu0 0.0
  %1667 = vmatpush2.msra.mxu0 0.0
  %1668 = vmatprep.subr.mxu0 0.0
  %1669 = vmatpush2.msra.mxu0 0.0
  %1670 = vmatprep.subr.mxu0 0.0
  %1671 = vmatpush2.msra.mxu0 0.0
  %1672 = vmatprep.subr.mxu0 0.0
  %1673 = vmatpush2.msra.mxu0 0.0
  %1674 = vmatprep.mubr.f32.mxu0 0.0
  %1675 = vmatmul.mubr.f32.gmra.mxu0 %v313
  %v1676 = vpop.f32.mrf.mxu0
  %v1677 = vadd.f32 %v1608, %v1676
  %v1678 = vpop.f32.mrf.mxu0
  %1679 = vmatprep.mubr.f32.mxu0 0.0
  %1680 = vmatmul.mubr.f32.gmra.mxu0 %v316
  %v1681 = vpop.f32.mrf.mxu0
  %v1682 = vadd.f32 %v1608, %v1681
  %v1683 = vpop.f32.mrf.mxu0
  %1684 = vmatprep.mubr.f32.mxu0 0.0
  %1685 = vmatmul.mubr.f32.gmra.mxu0 %v319
  %v1686 = vpop.f32.mrf.mxu0
  %v1687 = vadd.f32 %v1608, %v1686
  %v1688 = vpop.f32.mrf.mxu0
  %1689 = vmatprep.mubr.f32.mxu0 0.0
  %1690 = vmatmul.mubr.f32.gmra.mxu0 %v322
  %v1691 = vpop.f32.mrf.mxu0
  %v1692 = vadd.f32 %v1608, %v1691
  %v1693 = vpop.f32.mrf.mxu0
  %1694 = vdwg.mxu0
  %s1695 = scalar_lea.vmem %s3, 224
  %v1696 = vld [vmem:[%s1695] sm:$0xff]
  %v1697 = vld [vmem:[%s1695 + $0x8] sm:$0xff]
  %v1698 = vld [vmem:[%s1695 + $0x10] sm:$0xff]
  %v1699 = vld [vmem:[%s1695 + $0x18] sm:$0xff]
  %s1700 = scalar_lea.vmem %s4, 7
  %v1701 = vld [vmem:[%s1700] sm:$0x1]
  %v1703 = vlaneseq
  %v1704 = vshrl.u32 %v1703, 7
  %v1705 = vsub.s32 0, %v1704
  %v1706 = vrot.slane %v1701, %v1705
  %1708 = vmatprep.subr.mxu0 0.0
  %1709 = vmatpush1.msra.mxu0 0.0
  %1710 = vmatprep.subr.mxu0 0.0
  %1711 = vmatpush1.msra.mxu0 0.0
  %1712 = vmatprep.subr.mxu0 0.0
  %1713 = vmatpush1.msra.mxu0 0.0
  %1714 = vmatprep.subr.mxu0 0.0
  %1715 = vmatpush1.msra.mxu0 0.0
  %1716 = vmatprep.subr.mxu0 0.0
  %1717 = vmatpush1.msra.mxu0 0.0
  %1718 = vmatprep.subr.mxu0 0.0
  %1719 = vmatpush1.msra.mxu0 0.0
  %1720 = vmatprep.subr.mxu0 0.0
  %1721 = vmatpush1.msra.mxu0 0.0
  %1722 = vmatprep.subr.mxu0 0.0
  %1723 = vmatpush1.msra.mxu0 0.0
  %1724 = vmatprep.subr.mxu0 0.0
  %1725 = vmatpush1.msra.mxu0 0.0
  %1726 = vmatprep.subr.mxu0 0.0
  %1727 = vmatpush1.msra.mxu0 0.0
  %1728 = vmatprep.subr.mxu0 0.0
  %1729 = vmatpush1.msra.mxu0 0.0
  %1730 = vmatprep.subr.mxu0 0.0
  %1731 = vmatpush1.msra.mxu0 0.0
  %1732 = vmatprep.subr.mxu0 0.0
  %1733 = vmatpush1.msra.mxu0 %v1699
  %1734 = vmatprep.subr.mxu0 0.0
  %1735 = vmatpush1.msra.mxu0 %v1698
  %1736 = vmatprep.subr.mxu0 0.0
  %1737 = vmatpush1.msra.mxu0 %v1697
  %1738 = vmatprep.subr.mxu0 0.0
  %1739 = vmatpush1.msra.mxu0 %v1696
  %1740 = vmatprep.subr.mxu0 0.0
  %1741 = vmatpush2.msra.mxu0 0.0
  %1742 = vmatprep.subr.mxu0 0.0
  %1743 = vmatpush2.msra.mxu0 0.0
  %1744 = vmatprep.subr.mxu0 0.0
  %1745 = vmatpush2.msra.mxu0 0.0
  %1746 = vmatprep.subr.mxu0 0.0
  %1747 = vmatpush2.msra.mxu0 0.0
  %1748 = vmatprep.subr.mxu0 0.0
  %1749 = vmatpush2.msra.mxu0 0.0
  %1750 = vmatprep.subr.mxu0 0.0
  %1751 = vmatpush2.msra.mxu0 0.0
  %1752 = vmatprep.subr.mxu0 0.0
  %1753 = vmatpush2.msra.mxu0 0.0
  %1754 = vmatprep.subr.mxu0 0.0
  %1755 = vmatpush2.msra.mxu0 0.0
  %1756 = vmatprep.subr.mxu0 0.0
  %1757 = vmatpush2.msra.mxu0 0.0
  %1758 = vmatprep.subr.mxu0 0.0
  %1759 = vmatpush2.msra.mxu0 0.0
  %1760 = vmatprep.subr.mxu0 0.0
  %1761 = vmatpush2.msra.mxu0 0.0
  %1762 = vmatprep.subr.mxu0 0.0
  %1763 = vmatpush2.msra.mxu0 0.0
  %1764 = vmatprep.subr.mxu0 0.0
  %1765 = vmatpush2.msra.mxu0 0.0
  %1766 = vmatprep.subr.mxu0 0.0
  %1767 = vmatpush2.msra.mxu0 0.0
  %1768 = vmatprep.subr.mxu0 0.0
  %1769 = vmatpush2.msra.mxu0 0.0
  %1770 = vmatprep.subr.mxu0 0.0
  %1771 = vmatpush2.msra.mxu0 0.0
  %1772 = vmatprep.mubr.f32.mxu0 0.0
  %1773 = vmatmul.mubr.f32.gmra.mxu0 %v313
  %v1774 = vpop.f32.mrf.mxu0
  %v1775 = vadd.f32 %v1706, %v1774
  %v1776 = vpop.f32.mrf.mxu0
  %1777 = vmatprep.mubr.f32.mxu0 0.0
  %1778 = vmatmul.mubr.f32.gmra.mxu0 %v316
  %v1779 = vpop.f32.mrf.mxu0
  %v1780 = vadd.f32 %v1706, %v1779
  %v1781 = vpop.f32.mrf.mxu0
  %1782 = vmatprep.mubr.f32.mxu0 0.0
  %1783 = vmatmul.mubr.f32.gmra.mxu0 %v319
  %v1784 = vpop.f32.mrf.mxu0
  %v1785 = vadd.f32 %v1706, %v1784
  %v1786 = vpop.f32.mrf.mxu0
  %1787 = vmatprep.mubr.f32.mxu0 0.0
  %1788 = vmatmul.mubr.f32.gmra.mxu0 %v322
  %v1789 = vpop.f32.mrf.mxu0
  %v1790 = vadd.f32 %v1706, %v1789
  %v1791 = vpop.f32.mrf.mxu0
  %1792 = vdwg.mxu0
  %s1793 = scalar_lea.vmem %s3, 256
  %v1794 = vld [vmem:[%s1793] sm:$0xff]
  %v1795 = vld [vmem:[%s1793 + $0x8] sm:$0xff]
  %v1796 = vld [vmem:[%s1793 + $0x10] sm:$0xff]
  %v1797 = vld [vmem:[%s1793 + $0x18] sm:$0xff]
  %s1798 = scalar_lea.vmem %s4, 8
  %v1799 = vld [vmem:[%s1798] sm:$0x1]
  %v1801 = vlaneseq
  %v1802 = vshrl.u32 %v1801, 7
  %v1803 = vsub.s32 0, %v1802
  %v1804 = vrot.slane %v1799, %v1803
  %1806 = vmatprep.subr.mxu0 0.0
  %1807 = vmatpush1.msra.mxu0 0.0
  %1808 = vmatprep.subr.mxu0 0.0
  %1809 = vmatpush1.msra.mxu0 0.0
  %1810 = vmatprep.subr.mxu0 0.0
  %1811 = vmatpush1.msra.mxu0 0.0
  %1812 = vmatprep.subr.mxu0 0.0
  %1813 = vmatpush1.msra.mxu0 0.0
  %1814 = vmatprep.subr.mxu0 0.0
  %1815 = vmatpush1.msra.mxu0 0.0
  %1816 = vmatprep.subr.mxu0 0.0
  %1817 = vmatpush1.msra.mxu0 0.0
  %1818 = vmatprep.subr.mxu0 0.0
  %1819 = vmatpush1.msra.mxu0 0.0
  %1820 = vmatprep.subr.mxu0 0.0
  %1821 = vmatpush1.msra.mxu0 0.0
  %1822 = vmatprep.subr.mxu0 0.0
  %1823 = vmatpush1.msra.mxu0 0.0
  %1824 = vmatprep.subr.mxu0 0.0
  %1825 = vmatpush1.msra.mxu0 0.0
  %1826 = vmatprep.subr.mxu0 0.0
  %1827 = vmatpush1.msra.mxu0 0.0
  %1828 = vmatprep.subr.mxu0 0.0
  %1829 = vmatpush1.msra.mxu0 0.0
  %1830 = vmatprep.subr.mxu0 0.0
  %1831 = vmatpush1.msra.mxu0 %v1797
  %1832 = vmatprep.subr.mxu0 0.0
  %1833 = vmatpush1.msra.mxu0 %v1796
  %1834 = vmatprep.subr.mxu0 0.0
  %1835 = vmatpush1.msra.mxu0 %v1795
  %1836 = vmatprep.subr.mxu0 0.0
  %1837 = vmatpush1.msra.mxu0 %v1794
  %1838 = vmatprep.subr.mxu0 0.0
  %1839 = vmatpush2.msra.mxu0 0.0
  %1840 = vmatprep.subr.mxu0 0.0
  %1841 = vmatpush2.msra.mxu0 0.0
  %1842 = vmatprep.subr.mxu0 0.0
  %1843 = vmatpush2.msra.mxu0 0.0
  %1844 = vmatprep.subr.mxu0 0.0
  %1845 = vmatpush2.msra.mxu0 0.0
  %1846 = vmatprep.subr.mxu0 0.0
  %1847 = vmatpush2.msra.mxu0 0.0
  %1848 = vmatprep.subr.mxu0 0.0
  %1849 = vmatpush2.msra.mxu0 0.0
  %1850 = vmatprep.subr.mxu0 0.0
  %1851 = vmatpush2.msra.mxu0 0.0
  %1852 = vmatprep.subr.mxu0 0.0
  %1853 = vmatpush2.msra.mxu0 0.0
  %1854 = vmatprep.subr.mxu0 0.0
  %1855 = vmatpush2.msra.mxu0 0.0
  %1856 = vmatprep.subr.mxu0 0.0
  %1857 = vmatpush2.msra.mxu0 0.0
  %1858 = vmatprep.subr.mxu0 0.0
  %1859 = vmatpush2.msra.mxu0 0.0
  %1860 = vmatprep.subr.mxu0 0.0
  %1861 = vmatpush2.msra.mxu0 0.0
  %1862 = vmatprep.subr.mxu0 0.0
  %1863 = vmatpush2.msra.mxu0 0.0
  %1864 = vmatprep.subr.mxu0 0.0
  %1865 = vmatpush2.msra.mxu0 0.0
  %1866 = vmatprep.subr.mxu0 0.0
  %1867 = vmatpush2.msra.mxu0 0.0
  %1868 = vmatprep.subr.mxu0 0.0
  %1869 = vmatpush2.msra.mxu0 0.0
  %1870 = vmatprep.mubr.f32.mxu0 0.0
  %1871 = vmatmul.mubr.f32.gmra.mxu0 %v313
  %v1872 = vpop.f32.mrf.mxu0
  %v1873 = vadd.f32 %v1804, %v1872
  %v1874 = vpop.f32.mrf.mxu0
  %1875 = vmatprep.mubr.f32.mxu0 0.0
  %1876 = vmatmul.mubr.f32.gmra.mxu0 %v316
  %v1877 = vpop.f32.mrf.mxu0
  %v1878 = vadd.f32 %v1804, %v1877
  %v1879 = vpop.f32.mrf.mxu0
  %1880 = vmatprep.mubr.f32.mxu0 0.0
  %1881 = vmatmul.mubr.f32.gmra.mxu0 %v319
  %v1882 = vpop.f32.mrf.mxu0
  %v1883 = vadd.f32 %v1804, %v1882
  %v1884 = vpop.f32.mrf.mxu0
  %1885 = vmatprep.mubr.f32.mxu0 0.0
  %1886 = vmatmul.mubr.f32.gmra.mxu0 %v322
  %v1887 = vpop.f32.mrf.mxu0
  %v1888 = vadd.f32 %v1804, %v1887
  %v1889 = vpop.f32.mrf.mxu0
  %1890 = vdwg.mxu0
  %v1892 = vsel %vm605, %v1677, 0
  %v1895 = vsel %vm605, %v1682, 0
  %v1898 = vsel %vm605, %v1687, 0
  %v1901 = vsel %vm605, %v1692, 0
  %v1904 = vsel %vm605, %v1775, 0
  %v1907 = vsel %vm605, %v1780, 0
  %v1910 = vsel %vm605, %v1785, 0
  %v1913 = vsel %vm605, %v1790, 0
  %1915 = vmatprep.subr.mxu0 0.0
  %1916 = vmatpush1.xpose.msra.mxu0 0.0
  %1917 = vmatprep.subr.mxu0 0.0
  %1918 = vmatpush1.xpose.msra.mxu0 0.0
  %1919 = vmatprep.subr.mxu0 0.0
  %1920 = vmatpush1.xpose.msra.mxu0 0.0
  %1921 = vmatprep.subr.mxu0 0.0
  %1922 = vmatpush1.xpose.msra.mxu0 0.0
  %1923 = vmatprep.subr.mxu0 0.0
  %1924 = vmatpush1.xpose.msra.mxu0 0.0
  %1925 = vmatprep.subr.mxu0 0.0
  %1926 = vmatpush1.xpose.msra.mxu0 0.0
  %1927 = vmatprep.subr.mxu0 0.0
  %1928 = vmatpush1.xpose.msra.mxu0 0.0
  %1929 = vmatprep.subr.mxu0 0.0
  %1930 = vmatpush1.xpose.msra.mxu0 0.0
  %1931 = vmatprep.subr.mxu0 0.0
  %1932 = vmatpush1.xpose.msra.mxu0 0.0
  %1933 = vmatprep.subr.mxu0 0.0
  %1934 = vmatpush1.xpose.msra.mxu0 0.0
  %1935 = vmatprep.subr.mxu0 0.0
  %1936 = vmatpush1.xpose.msra.mxu0 0.0
  %1937 = vmatprep.subr.mxu0 0.0
  %1938 = vmatpush1.xpose.msra.mxu0 0.0
  %1939 = vmatprep.subr.mxu0 0.0
  %1940 = vmatpush1.xpose.msra.mxu0 %v1913
  %1941 = vmatprep.subr.mxu0 0.0
  %1942 = vmatpush1.xpose.msra.mxu0 %v1910
  %1943 = vmatprep.subr.mxu0 0.0
  %1944 = vmatpush1.xpose.msra.mxu0 %v1907
  %1945 = vmatprep.subr.mxu0 0.0
  %1946 = vmatpush1.xpose.msra.mxu0 %v1904
  %1947 = vmatprep.subr.mxu0 0.0
  %1948 = vmatpush2.xpose.msra.mxu0 0.0
  %1949 = vmatprep.subr.mxu0 0.0
  %1950 = vmatpush2.xpose.msra.mxu0 0.0
  %1951 = vmatprep.subr.mxu0 0.0
  %1952 = vmatpush2.xpose.msra.mxu0 0.0
  %1953 = vmatprep.subr.mxu0 0.0
  %1954 = vmatpush2.xpose.msra.mxu0 0.0
  %1955 = vmatprep.subr.mxu0 0.0
  %1956 = vmatpush2.xpose.msra.mxu0 0.0
  %1957 = vmatprep.subr.mxu0 0.0
  %1958 = vmatpush2.xpose.msra.mxu0 0.0
  %1959 = vmatprep.subr.mxu0 0.0
  %1960 = vmatpush2.xpose.msra.mxu0 0.0
  %1961 = vmatprep.subr.mxu0 0.0
  %1962 = vmatpush2.xpose.msra.mxu0 0.0
  %1963 = vmatprep.subr.mxu0 0.0
  %1964 = vmatpush2.xpose.msra.mxu0 0.0
  %1965 = vmatprep.subr.mxu0 0.0
  %1966 = vmatpush2.xpose.msra.mxu0 0.0
  %1967 = vmatprep.subr.mxu0 0.0
  %1968 = vmatpush2.xpose.msra.mxu0 0.0
  %1969 = vmatprep.subr.mxu0 0.0
  %1970 = vmatpush2.xpose.msra.mxu0 0.0
  %1971 = vmatprep.subr.mxu0 0.0
  %1972 = vmatpush2.xpose.msra.mxu0 0.0
  %1973 = vmatprep.subr.mxu0 0.0
  %1974 = vmatpush2.xpose.msra.mxu0 0.0
  %1975 = vmatprep.subr.mxu0 0.0
  %1976 = vmatpush2.xpose.msra.mxu0 0.0
  %1977 = vmatprep.subr.mxu0 0.0
  %1978 = vmatpush2.xpose.msra.mxu0 0.0
  %1979 = vmatprep.mubr.f32.mxu0 0.0
  %1980 = vmatmul.mubr.f32.gmra.mxu0 %v1892
  %v1981 = vpop.f32.mrf.mxu0
  %v1982 = vadd.f32 %v296, %v1981
  %v1983 = vpop.f32.mrf.mxu0
  %1984 = vmatprep.mubr.f32.mxu0 0.0
  %1985 = vmatmul.mubr.f32.gmra.mxu0 %v1895
  %v1986 = vpop.f32.mrf.mxu0
  %v1987 = vadd.f32 %v297, %v1986
  %v1988 = vpop.f32.mrf.mxu0
  %1989 = vmatprep.mubr.f32.mxu0 0.0
  %1990 = vmatmul.mubr.f32.gmra.mxu0 %v1898
  %v1991 = vpop.f32.mrf.mxu0
  %v1992 = vadd.f32 %v298, %v1991
  %v1993 = vpop.f32.mrf.mxu0
  %1994 = vmatprep.mubr.f32.mxu0 0.0
  %1995 = vmatmul.mubr.f32.gmra.mxu0 %v1901
  %v1996 = vpop.f32.mrf.mxu0
  %v1997 = vadd.f32 %v299, %v1996
  %v1998 = vpop.f32.mrf.mxu0
  %1999 = vdwg.mxu0
  %v2000 = vsel %vm311, %v1982, -inf
  %2001 = vmax.xlane.f32.xlu0 %v2000
  %v2002 = vpop.xlane.xlu0 %2001
  %v2003 = vsel %vm311, %v1987, -inf
  %2004 = vmax.xlane.f32.xlu0 %v2003
  %v2005 = vpop.xlane.xlu0 %2004
  %v2006 = vsel %vm311, %v1992, -inf
  %2007 = vmax.xlane.f32.xlu0 %v2006
  %v2008 = vpop.xlane.xlu0 %2007
  %v2009 = vsel %vm311, %v1997, -inf
  %2010 = vmax.xlane.f32.xlu0 %v2009
  %v2011 = vpop.xlane.xlu0 %2010
  %v2012 = vsub.f32 %v1982, %v2002
  %v2013 = vsub.f32 %v1987, %v2005
  %v2014 = vsub.f32 %v1992, %v2008
  %v2015 = vsub.f32 %v1997, %v2011
  %v2016 = vmul.f32 %v2012, 1.442695
  %v2017 = vpow.pop %v2016
  %v2018 = vmul.f32 %v2013, 1.442695
  %v2019 = vpow.pop %v2018
  %v2020 = vmul.f32 %v2014, 1.442695
  %v2021 = vpow.pop %v2020
  %v2022 = vmul.f32 %v2015, 1.442695
  %v2023 = vpow.pop %v2022
  %v2024 = vsel %vm311, %v2017, 0.0
  %2025 = vadd.xlane.f32.xlu0 %v2024
  %v2026 = vpop.xlane.xlu0 %2025
  %v2027 = vsel %vm311, %v2019, 0.0
  %2028 = vadd.xlane.f32.xlu0 %v2027
  %v2029 = vpop.xlane.xlu0 %2028
  %v2030 = vsel %vm311, %v2021, 0.0
  %2031 = vadd.xlane.f32.xlu0 %v2030
  %v2032 = vpop.xlane.xlu0 %2031
  %v2033 = vsel %vm311, %v2023, 0.0
  %2034 = vadd.xlane.f32.xlu0 %v2033
  %v2035 = vpop.xlane.xlu0 %2034
  %v2036 = vrcp.pop %v2026
  %v2037 = vrcp.pop %v2029
  %v2038 = vrcp.pop %v2032
  %v2039 = vrcp.pop %v2035
  %v2040 = vmul.f32 %v2017, %v2036
  %v2041 = vmul.f32 %v2019, %v2037
  %v2042 = vmul.f32 %v2021, %v2038
  %v2043 = vmul.f32 %v2023, %v2039
  %v2045 = vsel %vm311, %v2040, 0
  %v2048 = vsel %vm311, %v2041, 0
  %v2051 = vsel %vm311, %v2042, 0
  %v2054 = vsel %vm311, %v2043, 0
  %2056 = vmatprep.subr.mxu0 0.0
  %2057 = vmatpush1.msra.mxu0 0.0
  %2058 = vmatprep.subr.mxu0 0.0
  %2059 = vmatpush1.msra.mxu0 0.0
  %2060 = vmatprep.subr.mxu0 0.0
  %2061 = vmatpush1.msra.mxu0 0.0
  %2062 = vmatprep.subr.mxu0 0.0
  %2063 = vmatpush1.msra.mxu0 0.0
  %2064 = vmatprep.subr.mxu0 0.0
  %2065 = vmatpush1.msra.mxu0 0.0
  %2066 = vmatprep.subr.mxu0 0.0
  %2067 = vmatpush1.msra.mxu0 0.0
  %2068 = vmatprep.subr.mxu0 0.0
  %2069 = vmatpush1.msra.mxu0 0.0
  %2070 = vmatprep.subr.mxu0 0.0
  %2071 = vmatpush1.msra.mxu0 0.0
  %2072 = vmatprep.subr.mxu0 0.0
  %2073 = vmatpush1.msra.mxu0 0.0
  %2074 = vmatprep.subr.mxu0 0.0
  %2075 = vmatpush1.msra.mxu0 0.0
  %2076 = vmatprep.subr.mxu0 0.0
  %2077 = vmatpush1.msra.mxu0 0.0
  %2078 = vmatprep.subr.mxu0 0.0
  %2079 = vmatpush1.msra.mxu0 0.0
  %2080 = vmatprep.subr.mxu0 0.0
  %2081 = vmatpush1.msra.mxu0 %v1888
  %2082 = vmatprep.subr.mxu0 0.0
  %2083 = vmatpush1.msra.mxu0 %v1883
  %2084 = vmatprep.subr.mxu0 0.0
  %2085 = vmatpush1.msra.mxu0 %v1878
  %2086 = vmatprep.subr.mxu0 0.0
  %2087 = vmatpush1.msra.mxu0 %v1873
  %2088 = vmatprep.subr.mxu0 0.0
  %2089 = vmatpush2.msra.mxu0 0.0
  %2090 = vmatprep.subr.mxu0 0.0
  %2091 = vmatpush2.msra.mxu0 0.0
  %2092 = vmatprep.subr.mxu0 0.0
  %2093 = vmatpush2.msra.mxu0 0.0
  %2094 = vmatprep.subr.mxu0 0.0
  %2095 = vmatpush2.msra.mxu0 0.0
  %2096 = vmatprep.subr.mxu0 0.0
  %2097 = vmatpush2.msra.mxu0 0.0
  %2098 = vmatprep.subr.mxu0 0.0
  %2099 = vmatpush2.msra.mxu0 0.0
  %2100 = vmatprep.subr.mxu0 0.0
  %2101 = vmatpush2.msra.mxu0 0.0
  %2102 = vmatprep.subr.mxu0 0.0
  %2103 = vmatpush2.msra.mxu0 0.0
  %2104 = vmatprep.subr.mxu0 0.0
  %2105 = vmatpush2.msra.mxu0 0.0
  %2106 = vmatprep.subr.mxu0 0.0
  %2107 = vmatpush2.msra.mxu0 0.0
  %2108 = vmatprep.subr.mxu0 0.0
  %2109 = vmatpush2.msra.mxu0 0.0
  %2110 = vmatprep.subr.mxu0 0.0
  %2111 = vmatpush2.msra.mxu0 0.0
  %2112 = vmatprep.subr.mxu0 0.0
  %2113 = vmatpush2.msra.mxu0 0.0
  %2114 = vmatprep.subr.mxu0 0.0
  %2115 = vmatpush2.msra.mxu0 0.0
  %2116 = vmatprep.subr.mxu0 0.0
  %2117 = vmatpush2.msra.mxu0 0.0
  %2118 = vmatprep.subr.mxu0 0.0
  %2119 = vmatpush2.msra.mxu0 0.0
  %2120 = vmatprep.mubr.f32.mxu0 0.0
  %2121 = vmatmul.mubr.f32.gmra.mxu0 %v2045
  %v2122 = vpop.f32.mrf.mxu0
  %v2123 = vadd.f32 0.0, %v2122
  %v2124 = vpop.f32.mrf.mxu0
  %2125 = vmatprep.mubr.f32.mxu0 0.0
  %2126 = vmatmul.mubr.f32.gmra.mxu0 %v2048
  %v2127 = vpop.f32.mrf.mxu0
  %v2128 = vadd.f32 0.0, %v2127
  %v2129 = vpop.f32.mrf.mxu0
  %2130 = vmatprep.mubr.f32.mxu0 0.0
  %2131 = vmatmul.mubr.f32.gmra.mxu0 %v2051
  %v2132 = vpop.f32.mrf.mxu0
  %v2133 = vadd.f32 0.0, %v2132
  %v2134 = vpop.f32.mrf.mxu0
  %2135 = vmatprep.mubr.f32.mxu0 0.0
  %2136 = vmatmul.mubr.f32.gmra.mxu0 %v2054
  %v2137 = vpop.f32.mrf.mxu0
  %v2138 = vadd.f32 0.0, %v2137
  %v2139 = vpop.f32.mrf.mxu0
  %2140 = vdwg.mxu0
  %s2141 = scalar_lea.vmem %s5, 16
  %v2142 = vld [vmem:[%s2141] sm:$0xff]
  %v2144 = vsel %vm605, %v2123, 0
  %v2147 = vsel %vm605, %v2128, 0
  %v2150 = vsel %vm605, %v2133, 0
  %v2153 = vsel %vm605, %v2138, 0
  %2155 = vmatprep.subr.mxu0 0.0
  %2156 = vmatpush1.msra.mxu0 0.0
  %2157 = vmatprep.subr.mxu0 0.0
  %2158 = vmatpush1.msra.mxu0 0.0
  %2159 = vmatprep.subr.mxu0 0.0
  %2160 = vmatpush1.msra.mxu0 0.0
  %2161 = vmatprep.subr.mxu0 0.0
  %2162 = vmatpush1.msra.mxu0 0.0
  %2163 = vmatprep.subr.mxu0 0.0
  %2164 = vmatpush1.msra.mxu0 0.0
  %2165 = vmatprep.subr.mxu0 0.0
  %2166 = vmatpush1.msra.mxu0 0.0
  %2167 = vmatprep.subr.mxu0 0.0
  %2168 = vmatpush1.msra.mxu0 0.0
  %2169 = vmatprep.subr.mxu0 0.0
  %2170 = vmatpush1.msra.mxu0 0.0
  %2171 = vmatprep.subr.mxu0 0.0
  %2172 = vmatpush1.msra.mxu0 0.0
  %2173 = vmatprep.subr.mxu0 0.0
  %2174 = vmatpush1.msra.mxu0 0.0
  %2175 = vmatprep.subr.mxu0 0.0
  %2176 = vmatpush1.msra.mxu0 0.0
  %2177 = vmatprep.subr.mxu0 0.0
  %2178 = vmatpush1.msra.mxu0 0.0
  %2179 = vmatprep.subr.mxu0 0.0
  %2180 = vmatpush1.msra.mxu0 0.0
  %2181 = vmatprep.subr.mxu0 0.0
  %2182 = vmatpush1.msra.mxu0 0.0
  %2183 = vmatprep.subr.mxu0 0.0
  %2184 = vmatpush1.msra.mxu0 0.0
  %2185 = vmatprep.subr.mxu0 0.0
  %2186 = vmatpush1.msra.mxu0 %v2142
  %2187 = vmatprep.subr.mxu0 0.0
  %2188 = vmatpush2.msra.mxu0 0.0
  %2189 = vmatprep.subr.mxu0 0.0
  %2190 = vmatpush2.msra.mxu0 0.0
  %2191 = vmatprep.subr.mxu0 0.0
  %2192 = vmatpush2.msra.mxu0 0.0
  %2193 = vmatprep.subr.mxu0 0.0
  %2194 = vmatpush2.msra.mxu0 0.0
  %2195 = vmatprep.subr.mxu0 0.0
  %2196 = vmatpush2.msra.mxu0 0.0
  %2197 = vmatprep.subr.mxu0 0.0
  %2198 = vmatpush2.msra.mxu0 0.0
  %2199 = vmatprep.subr.mxu0 0.0
  %2200 = vmatpush2.msra.mxu0 0.0
  %2201 = vmatprep.subr.mxu0 0.0
  %2202 = vmatpush2.msra.mxu0 0.0
  %2203 = vmatprep.subr.mxu0 0.0
  %2204 = vmatpush2.msra.mxu0 0.0
  %2205 = vmatprep.subr.mxu0 0.0
  %2206 = vmatpush2.msra.mxu0 0.0
  %2207 = vmatprep.subr.mxu0 0.0
  %2208 = vmatpush2.msra.mxu0 0.0
  %2209 = vmatprep.subr.mxu0 0.0
  %2210 = vmatpush2.msra.mxu0 0.0
  %2211 = vmatprep.subr.mxu0 0.0
  %2212 = vmatpush2.msra.mxu0 0.0
  %2213 = vmatprep.subr.mxu0 0.0
  %2214 = vmatpush2.msra.mxu0 0.0
  %2215 = vmatprep.subr.mxu0 0.0
  %2216 = vmatpush2.msra.mxu0 0.0
  %2217 = vmatprep.subr.mxu0 0.0
  %2218 = vmatpush2.msra.mxu0 0.0
  %2219 = vmatprep.mubr.f32.mxu0 0.0
  %2220 = vmatmul.mubr.f32.gmra.mxu0 %v2144
  %v2221 = vpop.f32.mrf.mxu0
  %v2222 = vadd.f32 0.0, %v2221
  %v2223 = vpop.f32.mrf.mxu0
  %2224 = vmatprep.mubr.f32.mxu0 0.0
  %2225 = vmatmul.mubr.f32.gmra.mxu0 %v2147
  %v2226 = vpop.f32.mrf.mxu0
  %v2227 = vadd.f32 0.0, %v2226
  %v2228 = vpop.f32.mrf.mxu0
  %2229 = vmatprep.mubr.f32.mxu0 0.0
  %2230 = vmatmul.mubr.f32.gmra.mxu0 %v2150
  %v2231 = vpop.f32.mrf.mxu0
  %v2232 = vadd.f32 0.0, %v2231
  %v2233 = vpop.f32.mrf.mxu0
  %2234 = vmatprep.mubr.f32.mxu0 0.0
  %2235 = vmatmul.mubr.f32.gmra.mxu0 %v2153
  %v2236 = vpop.f32.mrf.mxu0
  %v2237 = vadd.f32 0.0, %v2236
  %v2238 = vpop.f32.mrf.mxu0
  %2239 = vdwg.mxu0
  %v2240 = vadd.f32 %v1579, %v2222
  %v2241 = vadd.f32 %v1584, %v2227
  %v2242 = vadd.f32 %v1589, %v2232
  %v2243 = vadd.f32 %v1594, %v2237
  %s2244 = scalar_lea.vmem %s3, 288
  %v2245 = vld [vmem:[%s2244] sm:$0xff]
  %v2246 = vld [vmem:[%s2244 + $0x8] sm:$0xff]
  %v2247 = vld [vmem:[%s2244 + $0x10] sm:$0xff]
  %v2248 = vld [vmem:[%s2244 + $0x18] sm:$0xff]
  %s2249 = scalar_lea.vmem %s4, 9
  %v2250 = vld [vmem:[%s2249] sm:$0x1]
  %v2252 = vlaneseq
  %v2253 = vshrl.u32 %v2252, 7
  %v2254 = vsub.s32 0, %v2253
  %v2255 = vrot.slane %v2250, %v2254
  %2257 = vmatprep.subr.mxu0 0.0
  %2258 = vmatpush1.msra.mxu0 0.0
  %2259 = vmatprep.subr.mxu0 0.0
  %2260 = vmatpush1.msra.mxu0 0.0
  %2261 = vmatprep.subr.mxu0 0.0
  %2262 = vmatpush1.msra.mxu0 0.0
  %2263 = vmatprep.subr.mxu0 0.0
  %2264 = vmatpush1.msra.mxu0 0.0
  %2265 = vmatprep.subr.mxu0 0.0
  %2266 = vmatpush1.msra.mxu0 0.0
  %2267 = vmatprep.subr.mxu0 0.0
  %2268 = vmatpush1.msra.mxu0 0.0
  %2269 = vmatprep.subr.mxu0 0.0
  %2270 = vmatpush1.msra.mxu0 0.0
  %2271 = vmatprep.subr.mxu0 0.0
  %2272 = vmatpush1.msra.mxu0 0.0
  %2273 = vmatprep.subr.mxu0 0.0
  %2274 = vmatpush1.msra.mxu0 0.0
  %2275 = vmatprep.subr.mxu0 0.0
  %2276 = vmatpush1.msra.mxu0 0.0
  %2277 = vmatprep.subr.mxu0 0.0
  %2278 = vmatpush1.msra.mxu0 0.0
  %2279 = vmatprep.subr.mxu0 0.0
  %2280 = vmatpush1.msra.mxu0 0.0
  %2281 = vmatprep.subr.mxu0 0.0
  %2282 = vmatpush1.msra.mxu0 %v2248
  %2283 = vmatprep.subr.mxu0 0.0
  %2284 = vmatpush1.msra.mxu0 %v2247
  %2285 = vmatprep.subr.mxu0 0.0
  %2286 = vmatpush1.msra.mxu0 %v2246
  %2287 = vmatprep.subr.mxu0 0.0
  %2288 = vmatpush1.msra.mxu0 %v2245
  %2289 = vmatprep.subr.mxu0 0.0
  %2290 = vmatpush2.msra.mxu0 0.0
  %2291 = vmatprep.subr.mxu0 0.0
  %2292 = vmatpush2.msra.mxu0 0.0
  %2293 = vmatprep.subr.mxu0 0.0
  %2294 = vmatpush2.msra.mxu0 0.0
  %2295 = vmatprep.subr.mxu0 0.0
  %2296 = vmatpush2.msra.mxu0 0.0
  %2297 = vmatprep.subr.mxu0 0.0
  %2298 = vmatpush2.msra.mxu0 0.0
  %2299 = vmatprep.subr.mxu0 0.0
  %2300 = vmatpush2.msra.mxu0 0.0
  %2301 = vmatprep.subr.mxu0 0.0
  %2302 = vmatpush2.msra.mxu0 0.0
  %2303 = vmatprep.subr.mxu0 0.0
  %2304 = vmatpush2.msra.mxu0 0.0
  %2305 = vmatprep.subr.mxu0 0.0
  %2306 = vmatpush2.msra.mxu0 0.0
  %2307 = vmatprep.subr.mxu0 0.0
  %2308 = vmatpush2.msra.mxu0 0.0
  %2309 = vmatprep.subr.mxu0 0.0
  %2310 = vmatpush2.msra.mxu0 0.0
  %2311 = vmatprep.subr.mxu0 0.0
  %2312 = vmatpush2.msra.mxu0 0.0
  %2313 = vmatprep.subr.mxu0 0.0
  %2314 = vmatpush2.msra.mxu0 0.0
  %2315 = vmatprep.subr.mxu0 0.0
  %2316 = vmatpush2.msra.mxu0 0.0
  %2317 = vmatprep.subr.mxu0 0.0
  %2318 = vmatpush2.msra.mxu0 0.0
  %2319 = vmatprep.subr.mxu0 0.0
  %2320 = vmatpush2.msra.mxu0 0.0
  %2321 = vmatprep.mubr.f32.mxu0 0.0
  %2322 = vmatmul.mubr.f32.gmra.mxu0 %v313
  %v2323 = vpop.f32.mrf.mxu0
  %v2324 = vadd.f32 %v2255, %v2323
  %v2325 = vpop.f32.mrf.mxu0
  %2326 = vmatprep.mubr.f32.mxu0 0.0
  %2327 = vmatmul.mubr.f32.gmra.mxu0 %v316
  %v2328 = vpop.f32.mrf.mxu0
  %v2329 = vadd.f32 %v2255, %v2328
  %v2330 = vpop.f32.mrf.mxu0
  %2331 = vmatprep.mubr.f32.mxu0 0.0
  %2332 = vmatmul.mubr.f32.gmra.mxu0 %v319
  %v2333 = vpop.f32.mrf.mxu0
  %v2334 = vadd.f32 %v2255, %v2333
  %v2335 = vpop.f32.mrf.mxu0
  %2336 = vmatprep.mubr.f32.mxu0 0.0
  %2337 = vmatmul.mubr.f32.gmra.mxu0 %v322
  %v2338 = vpop.f32.mrf.mxu0
  %v2339 = vadd.f32 %v2255, %v2338
  %v2340 = vpop.f32.mrf.mxu0
  %2341 = vdwg.mxu0
  %s2342 = scalar_lea.vmem %s3, 320
  %v2343 = vld [vmem:[%s2342] sm:$0xff]
  %v2344 = vld [vmem:[%s2342 + $0x8] sm:$0xff]
  %v2345 = vld [vmem:[%s2342 + $0x10] sm:$0xff]
  %v2346 = vld [vmem:[%s2342 + $0x18] sm:$0xff]
  %s2347 = scalar_lea.vmem %s4, 10
  %v2348 = vld [vmem:[%s2347] sm:$0x1]
  %v2350 = vlaneseq
  %v2351 = vshrl.u32 %v2350, 7
  %v2352 = vsub.s32 0, %v2351
  %v2353 = vrot.slane %v2348, %v2352
  %2355 = vmatprep.subr.mxu0 0.0
  %2356 = vmatpush1.msra.mxu0 0.0
  %2357 = vmatprep.subr.mxu0 0.0
  %2358 = vmatpush1.msra.mxu0 0.0
  %2359 = vmatprep.subr.mxu0 0.0
  %2360 = vmatpush1.msra.mxu0 0.0
  %2361 = vmatprep.subr.mxu0 0.0
  %2362 = vmatpush1.msra.mxu0 0.0
  %2363 = vmatprep.subr.mxu0 0.0
  %2364 = vmatpush1.msra.mxu0 0.0
  %2365 = vmatprep.subr.mxu0 0.0
  %2366 = vmatpush1.msra.mxu0 0.0
  %2367 = vmatprep.subr.mxu0 0.0
  %2368 = vmatpush1.msra.mxu0 0.0
  %2369 = vmatprep.subr.mxu0 0.0
  %2370 = vmatpush1.msra.mxu0 0.0
  %2371 = vmatprep.subr.mxu0 0.0
  %2372 = vmatpush1.msra.mxu0 0.0
  %2373 = vmatprep.subr.mxu0 0.0
  %2374 = vmatpush1.msra.mxu0 0.0
  %2375 = vmatprep.subr.mxu0 0.0
  %2376 = vmatpush1.msra.mxu0 0.0
  %2377 = vmatprep.subr.mxu0 0.0
  %2378 = vmatpush1.msra.mxu0 0.0
  %2379 = vmatprep.subr.mxu0 0.0
  %2380 = vmatpush1.msra.mxu0 %v2346
  %2381 = vmatprep.subr.mxu0 0.0
  %2382 = vmatpush1.msra.mxu0 %v2345
  %2383 = vmatprep.subr.mxu0 0.0
  %2384 = vmatpush1.msra.mxu0 %v2344
  %2385 = vmatprep.subr.mxu0 0.0
  %2386 = vmatpush1.msra.mxu0 %v2343
  %2387 = vmatprep.subr.mxu0 0.0
  %2388 = vmatpush2.msra.mxu0 0.0
  %2389 = vmatprep.subr.mxu0 0.0
  %2390 = vmatpush2.msra.mxu0 0.0
  %2391 = vmatprep.subr.mxu0 0.0
  %2392 = vmatpush2.msra.mxu0 0.0
  %2393 = vmatprep.subr.mxu0 0.0
  %2394 = vmatpush2.msra.mxu0 0.0
  %2395 = vmatprep.subr.mxu0 0.0
  %2396 = vmatpush2.msra.mxu0 0.0
  %2397 = vmatprep.subr.mxu0 0.0
  %2398 = vmatpush2.msra.mxu0 0.0
  %2399 = vmatprep.subr.mxu0 0.0
  %2400 = vmatpush2.msra.mxu0 0.0
  %2401 = vmatprep.subr.mxu0 0.0
  %2402 = vmatpush2.msra.mxu0 0.0
  %2403 = vmatprep.subr.mxu0 0.0
  %2404 = vmatpush2.msra.mxu0 0.0
  %2405 = vmatprep.subr.mxu0 0.0
  %2406 = vmatpush2.msra.mxu0 0.0
  %2407 = vmatprep.subr.mxu0 0.0
  %2408 = vmatpush2.msra.mxu0 0.0
  %2409 = vmatprep.subr.mxu0 0.0
  %2410 = vmatpush2.msra.mxu0 0.0
  %2411 = vmatprep.subr.mxu0 0.0
  %2412 = vmatpush2.msra.mxu0 0.0
  %2413 = vmatprep.subr.mxu0 0.0
  %2414 = vmatpush2.msra.mxu0 0.0
  %2415 = vmatprep.subr.mxu0 0.0
  %2416 = vmatpush2.msra.mxu0 0.0
  %2417 = vmatprep.subr.mxu0 0.0
  %2418 = vmatpush2.msra.mxu0 0.0
  %2419 = vmatprep.mubr.f32.mxu0 0.0
  %2420 = vmatmul.mubr.f32.gmra.mxu0 %v313
  %v2421 = vpop.f32.mrf.mxu0
  %v2422 = vadd.f32 %v2353, %v2421
  %v2423 = vpop.f32.mrf.mxu0
  %2424 = vmatprep.mubr.f32.mxu0 0.0
  %2425 = vmatmul.mubr.f32.gmra.mxu0 %v316
  %v2426 = vpop.f32.mrf.mxu0
  %v2427 = vadd.f32 %v2353, %v2426
  %v2428 = vpop.f32.mrf.mxu0
  %2429 = vmatprep.mubr.f32.mxu0 0.0
  %2430 = vmatmul.mubr.f32.gmra.mxu0 %v319
  %v2431 = vpop.f32.mrf.mxu0
  %v2432 = vadd.f32 %v2353, %v2431
  %v2433 = vpop.f32.mrf.mxu0
  %2434 = vmatprep.mubr.f32.mxu0 0.0
  %2435 = vmatmul.mubr.f32.gmra.mxu0 %v322
  %v2436 = vpop.f32.mrf.mxu0
  %v2437 = vadd.f32 %v2353, %v2436
  %v2438 = vpop.f32.mrf.mxu0
  %2439 = vdwg.mxu0
  %s2440 = scalar_lea.vmem %s3, 352
  %v2441 = vld [vmem:[%s2440] sm:$0xff]
  %v2442 = vld [vmem:[%s2440 + $0x8] sm:$0xff]
  %v2443 = vld [vmem:[%s2440 + $0x10] sm:$0xff]
  %v2444 = vld [vmem:[%s2440 + $0x18] sm:$0xff]
  %s2445 = scalar_lea.vmem %s4, 11
  %v2446 = vld [vmem:[%s2445] sm:$0x1]
  %v2448 = vlaneseq
  %v2449 = vshrl.u32 %v2448, 7
  %v2450 = vsub.s32 0, %v2449
  %v2451 = vrot.slane %v2446, %v2450
  %2453 = vmatprep.subr.mxu0 0.0
  %2454 = vmatpush1.msra.mxu0 0.0
  %2455 = vmatprep.subr.mxu0 0.0
  %2456 = vmatpush1.msra.mxu0 0.0
  %2457 = vmatprep.subr.mxu0 0.0
  %2458 = vmatpush1.msra.mxu0 0.0
  %2459 = vmatprep.subr.mxu0 0.0
  %2460 = vmatpush1.msra.mxu0 0.0
  %2461 = vmatprep.subr.mxu0 0.0
  %2462 = vmatpush1.msra.mxu0 0.0
  %2463 = vmatprep.subr.mxu0 0.0
  %2464 = vmatpush1.msra.mxu0 0.0
  %2465 = vmatprep.subr.mxu0 0.0
  %2466 = vmatpush1.msra.mxu0 0.0
  %2467 = vmatprep.subr.mxu0 0.0
  %2468 = vmatpush1.msra.mxu0 0.0
  %2469 = vmatprep.subr.mxu0 0.0
  %2470 = vmatpush1.msra.mxu0 0.0
  %2471 = vmatprep.subr.mxu0 0.0
  %2472 = vmatpush1.msra.mxu0 0.0
  %2473 = vmatprep.subr.mxu0 0.0
  %2474 = vmatpush1.msra.mxu0 0.0
  %2475 = vmatprep.subr.mxu0 0.0
  %2476 = vmatpush1.msra.mxu0 0.0
  %2477 = vmatprep.subr.mxu0 0.0
  %2478 = vmatpush1.msra.mxu0 %v2444
  %2479 = vmatprep.subr.mxu0 0.0
  %2480 = vmatpush1.msra.mxu0 %v2443
  %2481 = vmatprep.subr.mxu0 0.0
  %2482 = vmatpush1.msra.mxu0 %v2442
  %2483 = vmatprep.subr.mxu0 0.0
  %2484 = vmatpush1.msra.mxu0 %v2441
  %2485 = vmatprep.subr.mxu0 0.0
  %2486 = vmatpush2.msra.mxu0 0.0
  %2487 = vmatprep.subr.mxu0 0.0
  %2488 = vmatpush2.msra.mxu0 0.0
  %2489 = vmatprep.subr.mxu0 0.0
  %2490 = vmatpush2.msra.mxu0 0.0
  %2491 = vmatprep.subr.mxu0 0.0
  %2492 = vmatpush2.msra.mxu0 0.0
  %2493 = vmatprep.subr.mxu0 0.0
  %2494 = vmatpush2.msra.mxu0 0.0
  %2495 = vmatprep.subr.mxu0 0.0
  %2496 = vmatpush2.msra.mxu0 0.0
  %2497 = vmatprep.subr.mxu0 0.0
  %2498 = vmatpush2.msra.mxu0 0.0
  %2499 = vmatprep.subr.mxu0 0.0
  %2500 = vmatpush2.msra.mxu0 0.0
  %2501 = vmatprep.subr.mxu0 0.0
  %2502 = vmatpush2.msra.mxu0 0.0
  %2503 = vmatprep.subr.mxu0 0.0
  %2504 = vmatpush2.msra.mxu0 0.0
  %2505 = vmatprep.subr.mxu0 0.0
  %2506 = vmatpush2.msra.mxu0 0.0
  %2507 = vmatprep.subr.mxu0 0.0
  %2508 = vmatpush2.msra.mxu0 0.0
  %2509 = vmatprep.subr.mxu0 0.0
  %2510 = vmatpush2.msra.mxu0 0.0
  %2511 = vmatprep.subr.mxu0 0.0
  %2512 = vmatpush2.msra.mxu0 0.0
  %2513 = vmatprep.subr.mxu0 0.0
  %2514 = vmatpush2.msra.mxu0 0.0
  %2515 = vmatprep.subr.mxu0 0.0
  %2516 = vmatpush2.msra.mxu0 0.0
  %2517 = vmatprep.mubr.f32.mxu0 0.0
  %2518 = vmatmul.mubr.f32.gmra.mxu0 %v313
  %v2519 = vpop.f32.mrf.mxu0
  %v2520 = vadd.f32 %v2451, %v2519
  %v2521 = vpop.f32.mrf.mxu0
  %2522 = vmatprep.mubr.f32.mxu0 0.0
  %2523 = vmatmul.mubr.f32.gmra.mxu0 %v316
  %v2524 = vpop.f32.mrf.mxu0
  %v2525 = vadd.f32 %v2451, %v2524
  %v2526 = vpop.f32.mrf.mxu0
  %2527 = vmatprep.mubr.f32.mxu0 0.0
  %2528 = vmatmul.mubr.f32.gmra.mxu0 %v319
  %v2529 = vpop.f32.mrf.mxu0
  %v2530 = vadd.f32 %v2451, %v2529
  %v2531 = vpop.f32.mrf.mxu0
  %2532 = vmatprep.mubr.f32.mxu0 0.0
  %2533 = vmatmul.mubr.f32.gmra.mxu0 %v322
  %v2534 = vpop.f32.mrf.mxu0
  %v2535 = vadd.f32 %v2451, %v2534
  %v2536 = vpop.f32.mrf.mxu0
  %2537 = vdwg.mxu0
  %v2539 = vsel %vm605, %v2324, 0
  %v2542 = vsel %vm605, %v2329, 0
  %v2545 = vsel %vm605, %v2334, 0
  %v2548 = vsel %vm605, %v2339, 0
  %v2551 = vsel %vm605, %v2422, 0
  %v2554 = vsel %vm605, %v2427, 0
  %v2557 = vsel %vm605, %v2432, 0
  %v2560 = vsel %vm605, %v2437, 0
  %2562 = vmatprep.subr.mxu0 0.0
  %2563 = vmatpush1.xpose.msra.mxu0 0.0
  %2564 = vmatprep.subr.mxu0 0.0
  %2565 = vmatpush1.xpose.msra.mxu0 0.0
  %2566 = vmatprep.subr.mxu0 0.0
  %2567 = vmatpush1.xpose.msra.mxu0 0.0
  %2568 = vmatprep.subr.mxu0 0.0
  %2569 = vmatpush1.xpose.msra.mxu0 0.0
  %2570 = vmatprep.subr.mxu0 0.0
  %2571 = vmatpush1.xpose.msra.mxu0 0.0
  %2572 = vmatprep.subr.mxu0 0.0
  %2573 = vmatpush1.xpose.msra.mxu0 0.0
  %2574 = vmatprep.subr.mxu0 0.0
  %2575 = vmatpush1.xpose.msra.mxu0 0.0
  %2576 = vmatprep.subr.mxu0 0.0
  %2577 = vmatpush1.xpose.msra.mxu0 0.0
  %2578 = vmatprep.subr.mxu0 0.0
  %2579 = vmatpush1.xpose.msra.mxu0 0.0
  %2580 = vmatprep.subr.mxu0 0.0
  %2581 = vmatpush1.xpose.msra.mxu0 0.0
  %2582 = vmatprep.subr.mxu0 0.0
  %2583 = vmatpush1.xpose.msra.mxu0 0.0
  %2584 = vmatprep.subr.mxu0 0.0
  %2585 = vmatpush1.xpose.msra.mxu0 0.0
  %2586 = vmatprep.subr.mxu0 0.0
  %2587 = vmatpush1.xpose.msra.mxu0 %v2560
  %2588 = vmatprep.subr.mxu0 0.0
  %2589 = vmatpush1.xpose.msra.mxu0 %v2557
  %2590 = vmatprep.subr.mxu0 0.0
  %2591 = vmatpush1.xpose.msra.mxu0 %v2554
  %2592 = vmatprep.subr.mxu0 0.0
  %2593 = vmatpush1.xpose.msra.mxu0 %v2551
  %2594 = vmatprep.subr.mxu0 0.0
  %2595 = vmatpush2.xpose.msra.mxu0 0.0
  %2596 = vmatprep.subr.mxu0 0.0
  %2597 = vmatpush2.xpose.msra.mxu0 0.0
  %2598 = vmatprep.subr.mxu0 0.0
  %2599 = vmatpush2.xpose.msra.mxu0 0.0
  %2600 = vmatprep.subr.mxu0 0.0
  %2601 = vmatpush2.xpose.msra.mxu0 0.0
  %2602 = vmatprep.subr.mxu0 0.0
  %2603 = vmatpush2.xpose.msra.mxu0 0.0
  %2604 = vmatprep.subr.mxu0 0.0
  %2605 = vmatpush2.xpose.msra.mxu0 0.0
  %2606 = vmatprep.subr.mxu0 0.0
  %2607 = vmatpush2.xpose.msra.mxu0 0.0
  %2608 = vmatprep.subr.mxu0 0.0
  %2609 = vmatpush2.xpose.msra.mxu0 0.0
  %2610 = vmatprep.subr.mxu0 0.0
  %2611 = vmatpush2.xpose.msra.mxu0 0.0
  %2612 = vmatprep.subr.mxu0 0.0
  %2613 = vmatpush2.xpose.msra.mxu0 0.0
  %2614 = vmatprep.subr.mxu0 0.0
  %2615 = vmatpush2.xpose.msra.mxu0 0.0
  %2616 = vmatprep.subr.mxu0 0.0
  %2617 = vmatpush2.xpose.msra.mxu0 0.0
  %2618 = vmatprep.subr.mxu0 0.0
  %2619 = vmatpush2.xpose.msra.mxu0 0.0
  %2620 = vmatprep.subr.mxu0 0.0
  %2621 = vmatpush2.xpose.msra.mxu0 0.0
  %2622 = vmatprep.subr.mxu0 0.0
  %2623 = vmatpush2.xpose.msra.mxu0 0.0
  %2624 = vmatprep.subr.mxu0 0.0
  %2625 = vmatpush2.xpose.msra.mxu0 0.0
  %2626 = vmatprep.mubr.f32.mxu0 0.0
  %2627 = vmatmul.mubr.f32.gmra.mxu0 %v2539
  %v2628 = vpop.f32.mrf.mxu0
  %v2629 = vadd.f32 %v296, %v2628
  %v2630 = vpop.f32.mrf.mxu0
  %2631 = vmatprep.mubr.f32.mxu0 0.0
  %2632 = vmatmul.mubr.f32.gmra.mxu0 %v2542
  %v2633 = vpop.f32.mrf.mxu0
  %v2634 = vadd.f32 %v297, %v2633
  %v2635 = vpop.f32.mrf.mxu0
  %2636 = vmatprep.mubr.f32.mxu0 0.0
  %2637 = vmatmul.mubr.f32.gmra.mxu0 %v2545
  %v2638 = vpop.f32.mrf.mxu0
  %v2639 = vadd.f32 %v298, %v2638
  %v2640 = vpop.f32.mrf.mxu0
  %2641 = vmatprep.mubr.f32.mxu0 0.0
  %2642 = vmatmul.mubr.f32.gmra.mxu0 %v2548
  %v2643 = vpop.f32.mrf.mxu0
  %v2644 = vadd.f32 %v299, %v2643
  %v2645 = vpop.f32.mrf.mxu0
  %2646 = vdwg.mxu0
  %v2647 = vsel %vm311, %v2629, -inf
  %2648 = vmax.xlane.f32.xlu0 %v2647
  %v2649 = vpop.xlane.xlu0 %2648
  %v2650 = vsel %vm311, %v2634, -inf
  %2651 = vmax.xlane.f32.xlu0 %v2650
  %v2652 = vpop.xlane.xlu0 %2651
  %v2653 = vsel %vm311, %v2639, -inf
  %2654 = vmax.xlane.f32.xlu0 %v2653
  %v2655 = vpop.xlane.xlu0 %2654
  %v2656 = vsel %vm311, %v2644, -inf
  %2657 = vmax.xlane.f32.xlu0 %v2656
  %v2658 = vpop.xlane.xlu0 %2657
  %v2659 = vsub.f32 %v2629, %v2649
  %v2660 = vsub.f32 %v2634, %v2652
  %v2661 = vsub.f32 %v2639, %v2655
  %v2662 = vsub.f32 %v2644, %v2658
  %v2663 = vmul.f32 %v2659, 1.442695
  %v2664 = vpow.pop %v2663
  %v2665 = vmul.f32 %v2660, 1.442695
  %v2666 = vpow.pop %v2665
  %v2667 = vmul.f32 %v2661, 1.442695
  %v2668 = vpow.pop %v2667
  %v2669 = vmul.f32 %v2662, 1.442695
  %v2670 = vpow.pop %v2669
  %v2671 = vsel %vm311, %v2664, 0.0
  %2672 = vadd.xlane.f32.xlu0 %v2671
  %v2673 = vpop.xlane.xlu0 %2672
  %v2674 = vsel %vm311, %v2666, 0.0
  %2675 = vadd.xlane.f32.xlu0 %v2674
  %v2676 = vpop.xlane.xlu0 %2675
  %v2677 = vsel %vm311, %v2668, 0.0
  %2678 = vadd.xlane.f32.xlu0 %v2677
  %v2679 = vpop.xlane.xlu0 %2678
  %v2680 = vsel %vm311, %v2670, 0.0
  %2681 = vadd.xlane.f32.xlu0 %v2680
  %v2682 = vpop.xlane.xlu0 %2681
  %v2683 = vrcp.pop %v2673
  %v2684 = vrcp.pop %v2676
  %v2685 = vrcp.pop %v2679
  %v2686 = vrcp.pop %v2682
  %v2687 = vmul.f32 %v2664, %v2683
  %v2688 = vmul.f32 %v2666, %v2684
  %v2689 = vmul.f32 %v2668, %v2685
  %v2690 = vmul.f32 %v2670, %v2686
  %v2692 = vsel %vm311, %v2687, 0
  %v2695 = vsel %vm311, %v2688, 0
  %v2698 = vsel %vm311, %v2689, 0
  %v2701 = vsel %vm311, %v2690, 0
  %2703 = vmatprep.subr.mxu0 0.0
  %2704 = vmatpush1.msra.mxu0 0.0
  %2705 = vmatprep.subr.mxu0 0.0
  %2706 = vmatpush1.msra.mxu0 0.0
  %2707 = vmatprep.subr.mxu0 0.0
  %2708 = vmatpush1.msra.mxu0 0.0
  %2709 = vmatprep.subr.mxu0 0.0
  %2710 = vmatpush1.msra.mxu0 0.0
  %2711 = vmatprep.subr.mxu0 0.0
  %2712 = vmatpush1.msra.mxu0 0.0
  %2713 = vmatprep.subr.mxu0 0.0
  %2714 = vmatpush1.msra.mxu0 0.0
  %2715 = vmatprep.subr.mxu0 0.0
  %2716 = vmatpush1.msra.mxu0 0.0
  %2717 = vmatprep.subr.mxu0 0.0
  %2718 = vmatpush1.msra.mxu0 0.0
  %2719 = vmatprep.subr.mxu0 0.0
  %2720 = vmatpush1.msra.mxu0 0.0
  %2721 = vmatprep.subr.mxu0 0.0
  %2722 = vmatpush1.msra.mxu0 0.0
  %2723 = vmatprep.subr.mxu0 0.0
  %2724 = vmatpush1.msra.mxu0 0.0
  %2725 = vmatprep.subr.mxu0 0.0
  %2726 = vmatpush1.msra.mxu0 0.0
  %2727 = vmatprep.subr.mxu0 0.0
  %2728 = vmatpush1.msra.mxu0 %v2535
  %2729 = vmatprep.subr.mxu0 0.0
  %2730 = vmatpush1.msra.mxu0 %v2530
  %2731 = vmatprep.subr.mxu0 0.0
  %2732 = vmatpush1.msra.mxu0 %v2525
  %2733 = vmatprep.subr.mxu0 0.0
  %2734 = vmatpush1.msra.mxu0 %v2520
  %2735 = vmatprep.subr.mxu0 0.0
  %2736 = vmatpush2.msra.mxu0 0.0
  %2737 = vmatprep.subr.mxu0 0.0
  %2738 = vmatpush2.msra.mxu0 0.0
  %2739 = vmatprep.subr.mxu0 0.0
  %2740 = vmatpush2.msra.mxu0 0.0
  %2741 = vmatprep.subr.mxu0 0.0
  %2742 = vmatpush2.msra.mxu0 0.0
  %2743 = vmatprep.subr.mxu0 0.0
  %2744 = vmatpush2.msra.mxu0 0.0
  %2745 = vmatprep.subr.mxu0 0.0
  %2746 = vmatpush2.msra.mxu0 0.0
  %2747 = vmatprep.subr.mxu0 0.0
  %2748 = vmatpush2.msra.mxu0 0.0
  %2749 = vmatprep.subr.mxu0 0.0
  %2750 = vmatpush2.msra.mxu0 0.0
  %2751 = vmatprep.subr.mxu0 0.0
  %2752 = vmatpush2.msra.mxu0 0.0
  %2753 = vmatprep.subr.mxu0 0.0
  %2754 = vmatpush2.msra.mxu0 0.0
  %2755 = vmatprep.subr.mxu0 0.0
  %2756 = vmatpush2.msra.mxu0 0.0
  %2757 = vmatprep.subr.mxu0 0.0
  %2758 = vmatpush2.msra.mxu0 0.0
  %2759 = vmatprep.subr.mxu0 0.0
  %2760 = vmatpush2.msra.mxu0 0.0
  %2761 = vmatprep.subr.mxu0 0.0
  %2762 = vmatpush2.msra.mxu0 0.0
  %2763 = vmatprep.subr.mxu0 0.0
  %2764 = vmatpush2.msra.mxu0 0.0
  %2765 = vmatprep.subr.mxu0 0.0
  %2766 = vmatpush2.msra.mxu0 0.0
  %2767 = vmatprep.mubr.f32.mxu0 0.0
  %2768 = vmatmul.mubr.f32.gmra.mxu0 %v2692
  %v2769 = vpop.f32.mrf.mxu0
  %v2770 = vadd.f32 0.0, %v2769
  %v2771 = vpop.f32.mrf.mxu0
  %2772 = vmatprep.mubr.f32.mxu0 0.0
  %2773 = vmatmul.mubr.f32.gmra.mxu0 %v2695
  %v2774 = vpop.f32.mrf.mxu0
  %v2775 = vadd.f32 0.0, %v2774
  %v2776 = vpop.f32.mrf.mxu0
  %2777 = vmatprep.mubr.f32.mxu0 0.0
  %2778 = vmatmul.mubr.f32.gmra.mxu0 %v2698
  %v2779 = vpop.f32.mrf.mxu0
  %v2780 = vadd.f32 0.0, %v2779
  %v2781 = vpop.f32.mrf.mxu0
  %2782 = vmatprep.mubr.f32.mxu0 0.0
  %2783 = vmatmul.mubr.f32.gmra.mxu0 %v2701
  %v2784 = vpop.f32.mrf.mxu0
  %v2785 = vadd.f32 0.0, %v2784
  %v2786 = vpop.f32.mrf.mxu0
  %2787 = vdwg.mxu0
  %s2788 = scalar_lea.vmem %s5, 24
  %v2789 = vld [vmem:[%s2788] sm:$0xff]
  %v2791 = vsel %vm605, %v2770, 0
  %v2794 = vsel %vm605, %v2775, 0
  %v2797 = vsel %vm605, %v2780, 0
  %v2800 = vsel %vm605, %v2785, 0
  %2802 = vmatprep.subr.mxu0 0.0
  %2803 = vmatpush1.msra.mxu0 0.0
  %2804 = vmatprep.subr.mxu0 0.0
  %2805 = vmatpush1.msra.mxu0 0.0
  %2806 = vmatprep.subr.mxu0 0.0
  %2807 = vmatpush1.msra.mxu0 0.0
  %2808 = vmatprep.subr.mxu0 0.0
  %2809 = vmatpush1.msra.mxu0 0.0
  %2810 = vmatprep.subr.mxu0 0.0
  %2811 = vmatpush1.msra.mxu0 0.0
  %2812 = vmatprep.subr.mxu0 0.0
  %2813 = vmatpush1.msra.mxu0 0.0
  %2814 = vmatprep.subr.mxu0 0.0
  %2815 = vmatpush1.msra.mxu0 0.0
  %2816 = vmatprep.subr.mxu0 0.0
  %2817 = vmatpush1.msra.mxu0 0.0
  %2818 = vmatprep.subr.mxu0 0.0
  %2819 = vmatpush1.msra.mxu0 0.0
  %2820 = vmatprep.subr.mxu0 0.0
  %2821 = vmatpush1.msra.mxu0 0.0
  %2822 = vmatprep.subr.mxu0 0.0
  %2823 = vmatpush1.msra.mxu0 0.0
  %2824 = vmatprep.subr.mxu0 0.0
  %2825 = vmatpush1.msra.mxu0 0.0
  %2826 = vmatprep.subr.mxu0 0.0
  %2827 = vmatpush1.msra.mxu0 0.0
  %2828 = vmatprep.subr.mxu0 0.0
  %2829 = vmatpush1.msra.mxu0 0.0
  %2830 = vmatprep.subr.mxu0 0.0
  %2831 = vmatpush1.msra.mxu0 0.0
  %2832 = vmatprep.subr.mxu0 0.0
  %2833 = vmatpush1.msra.mxu0 %v2789
  %2834 = vmatprep.subr.mxu0 0.0
  %2835 = vmatpush2.msra.mxu0 0.0
  %2836 = vmatprep.subr.mxu0 0.0
  %2837 = vmatpush2.msra.mxu0 0.0
  %2838 = vmatprep.subr.mxu0 0.0
  %2839 = vmatpush2.msra.mxu0 0.0
  %2840 = vmatprep.subr.mxu0 0.0
  %2841 = vmatpush2.msra.mxu0 0.0
  %2842 = vmatprep.subr.mxu0 0.0
  %2843 = vmatpush2.msra.mxu0 0.0
  %2844 = vmatprep.subr.mxu0 0.0
  %2845 = vmatpush2.msra.mxu0 0.0
  %2846 = vmatprep.subr.mxu0 0.0
  %2847 = vmatpush2.msra.mxu0 0.0
  %2848 = vmatprep.subr.mxu0 0.0
  %2849 = vmatpush2.msra.mxu0 0.0
  %2850 = vmatprep.subr.mxu0 0.0
  %2851 = vmatpush2.msra.mxu0 0.0
  %2852 = vmatprep.subr.mxu0 0.0
  %2853 = vmatpush2.msra.mxu0 0.0
  %2854 = vmatprep.subr.mxu0 0.0
  %2855 = vmatpush2.msra.mxu0 0.0
  %2856 = vmatprep.subr.mxu0 0.0
  %2857 = vmatpush2.msra.mxu0 0.0
  %2858 = vmatprep.subr.mxu0 0.0
  %2859 = vmatpush2.msra.mxu0 0.0
  %2860 = vmatprep.subr.mxu0 0.0
  %2861 = vmatpush2.msra.mxu0 0.0
  %2862 = vmatprep.subr.mxu0 0.0
  %2863 = vmatpush2.msra.mxu0 0.0
  %2864 = vmatprep.subr.mxu0 0.0
  %2865 = vmatpush2.msra.mxu0 0.0
  %2866 = vmatprep.mubr.f32.mxu0 0.0
  %2867 = vmatmul.mubr.f32.gmra.mxu0 %v2791
  %v2868 = vpop.f32.mrf.mxu0
  %v2869 = vadd.f32 0.0, %v2868
  %v2870 = vpop.f32.mrf.mxu0
  %2871 = vmatprep.mubr.f32.mxu0 0.0
  %2872 = vmatmul.mubr.f32.gmra.mxu0 %v2794
  %v2873 = vpop.f32.mrf.mxu0
  %v2874 = vadd.f32 0.0, %v2873
  %v2875 = vpop.f32.mrf.mxu0
  %2876 = vmatprep.mubr.f32.mxu0 0.0
  %2877 = vmatmul.mubr.f32.gmra.mxu0 %v2797
  %v2878 = vpop.f32.mrf.mxu0
  %v2879 = vadd.f32 0.0, %v2878
  %v2880 = vpop.f32.mrf.mxu0
  %2881 = vmatprep.mubr.f32.mxu0 0.0
  %2882 = vmatmul.mubr.f32.gmra.mxu0 %v2800
  %v2883 = vpop.f32.mrf.mxu0
  %v2884 = vadd.f32 0.0, %v2883
  %v2885 = vpop.f32.mrf.mxu0
  %2886 = vdwg.mxu0
  %v2887 = vadd.f32 %v2240, %v2869
  %v2888 = vadd.f32 %v2241, %v2874
  %v2889 = vadd.f32 %v2242, %v2879
  %v2890 = vadd.f32 %v2243, %v2884
  %v2891 = vld [vmem:[%s6] sm:$0x1]
  %v2893 = vlaneseq
  %v2894 = vshrl.u32 %v2893, 7
  %v2895 = vsub.s32 0, %v2894
  %v2896 = vrot.slane %v2891, %v2895
  %v2898 = vadd.f32 %v2887, %v2896
  %v2899 = vadd.f32 %v2888, %v2896
  %v2900 = vadd.f32 %v2889, %v2896
  %v2901 = vadd.f32 %v2890, %v2896
  %v2902 = vadd.f32 %v209, %v2898
  %v2903 = vadd.f32 %v214, %v2899
  %v2904 = vadd.f32 %v219, %v2900
  %v2905 = vadd.f32 %v224, %v2901
  %v2906 = vld [vmem:[%s7] sm:$0x1]
  %v2907 = vld [vmem:[%s8] sm:$0x1]
  %v2908 = vsel %vm311, %v2902, 0.0
  %2909 = vadd.xlane.f32.xlu0 %v2908
  %v2910 = vpop.xlane.xlu0 %2909
  %v2911 = vsel %vm311, %v2903, 0.0
  %2912 = vadd.xlane.f32.xlu0 %v2911
  %v2913 = vpop.xlane.xlu0 %2912
  %v2914 = vsel %vm311, %v2904, 0.0
  %2915 = vadd.xlane.f32.xlu0 %v2914
  %v2916 = vpop.xlane.xlu0 %2915
  %v2917 = vsel %vm311, %v2905, 0.0
  %2918 = vadd.xlane.f32.xlu0 %v2917
  %v2919 = vpop.xlane.xlu0 %2918
  %v2920 = vrcp.pop 32.0
  %v2921 = vmul.f32 %v2910, %v2920
  %v2922 = vmul.f32 %v2913, %v2920
  %v2923 = vmul.f32 %v2916, %v2920
  %v2924 = vmul.f32 %v2919, %v2920
  %v2925 = vsub.f32 %v2902, %v2921
  %v2926 = vsub.f32 %v2903, %v2922
  %v2927 = vsub.f32 %v2904, %v2923
  %v2928 = vsub.f32 %v2905, %v2924
  %v2929 = vmul.f32 %v2925, %v2925
  %v2930 = vmul.f32 %v2926, %v2926
  %v2931 = vmul.f32 %v2927, %v2927
  %v2932 = vmul.f32 %v2928, %v2928
  %v2933 = vsel %vm311, %v2929, 0.0
  %2934 = vadd.xlane.f32.xlu0 %v2933
  %v2935 = vpop.xlane.xlu0 %2934
  %v2936 = vsel %vm311, %v2930, 0.0
  %2937 = vadd.xlane.f32.xlu0 %v2936
  %v2938 = vpop.xlane.xlu0 %2937
  %v2939 = vsel %vm311, %v2931, 0.0
  %2940 = vadd.xlane.f32.xlu0 %v2939
  %v2941 = vpop.xlane.xlu0 %2940
  %v2942 = vsel %vm311, %v2932, 0.0
  %2943 = vadd.xlane.f32.xlu0 %v2942
  %v2944 = vpop.xlane.xlu0 %2943
  %v2945 = vmul.f32 %v2935, %v2920
  %v2946 = vmul.f32 %v2938, %v2920
  %v2947 = vmul.f32 %v2941, %v2920
  %v2948 = vmul.f32 %v2944, %v2920
  %v2949 = vadd.f32 %v2945, 1e-05
  %v2950 = vadd.f32 %v2946, 1e-05
  %v2951 = vadd.f32 %v2947, 1e-05
  %v2952 = vadd.f32 %v2948, 1e-05
  %v2953 = vrsqrt.pop %v2949
  %v2954 = vrsqrt.pop %v2950
  %v2955 = vrsqrt.pop %v2951
  %v2956 = vrsqrt.pop %v2952
  %v2957 = vmul.f32 %v2925, %v2953
  %v2958 = vmul.f32 %v2926, %v2954
  %v2959 = vmul.f32 %v2927, %v2955
  %v2960 = vmul.f32 %v2928, %v2956
  %v2962 = vlaneseq
  %v2963 = vshrl.u32 %v2962, 7
  %v2964 = vsub.s32 0, %v2963
  %v2965 = vrot.slane %v2906, %v2964
  %v2967 = vmul.f32 %v2957, %v2965
  %v2968 = vmul.f32 %v2958, %v2965
  %v2969 = vmul.f32 %v2959, %v2965
  %v2970 = vmul.f32 %v2960, %v2965
  %v2972 = vlaneseq
  %v2973 = vshrl.u32 %v2972, 7
  %v2974 = vsub.s32 0, %v2973
  %v2975 = vrot.slane %v2907, %v2974
  %v2977 = vadd.f32 %v2967, %v2975
  %v2978 = vadd.f32 %v2968, %v2975
  %v2979 = vadd.f32 %v2969, %v2975
  %v2980 = vadd.f32 %v2970, %v2975
  %v2981 = vpack.c.bf16 %v2978, %v2977
  %v2982 = vpack.c.bf16 %v2980, %v2979
  %v2983 = vld [vmem:[%s9] sm:$0xff]
  %v2984 = vld [vmem:[%s9 + $0x8] sm:$0xff]
  %v2985 = vld [vmem:[%s9 + $0x10] sm:$0xff]
  %v2986 = vld [vmem:[%s9 + $0x18] sm:$0xff]
  %v2987 = vld [vmem:[%s9 + $0x20] sm:$0xff]
  %v2988 = vld [vmem:[%s9 + $0x28] sm:$0xff]
  %v2989 = vld [vmem:[%s9 + $0x30] sm:$0xff]
  %v2990 = vld [vmem:[%s9 + $0x38] sm:$0xff]
  %v2991 = vld [vmem:[%s9 + $0x40] sm:$0xff]
  %v2992 = vld [vmem:[%s9 + $0x48] sm:$0xff]
  %v2993 = vld [vmem:[%s9 + $0x50] sm:$0xff]
  %v2994 = vld [vmem:[%s9 + $0x58] sm:$0xff]
  %v2995 = vld [vmem:[%s9 + $0x60] sm:$0xff]
  %v2996 = vld [vmem:[%s9 + $0x68] sm:$0xff]
  %v2997 = vld [vmem:[%s9 + $0x70] sm:$0xff]
  %v2998 = vld [vmem:[%s9 + $0x78] sm:$0xff]
  %v2999 = vld [vmem:[%s9 + $0x80] sm:$0xff]
  %v3000 = vld [vmem:[%s9 + $0x88] sm:$0xff]
  %v3001 = vld [vmem:[%s9 + $0x90] sm:$0xff]
  %v3002 = vld [vmem:[%s9 + $0x98] sm:$0xff]
  %v3003 = vld [vmem:[%s9 + $0xa0] sm:$0xff]
  %v3004 = vld [vmem:[%s9 + $0xa8] sm:$0xff]
  %v3005 = vld [vmem:[%s9 + $0xb0] sm:$0xff]
  %v3006 = vld [vmem:[%s9 + $0xb8] sm:$0xff]
  %v3007 = vld [vmem:[%s9 + $0xc0] sm:$0xff]
  %v3008 = vld [vmem:[%s9 + $0xc8] sm:$0xff]
  %v3009 = vld [vmem:[%s9 + $0xd0] sm:$0xff]
  %v3010 = vld [vmem:[%s9 + $0xd8] sm:$0xff]
  %v3011 = vld [vmem:[%s9 + $0xe0] sm:$0xff]
  %v3012 = vld [vmem:[%s9 + $0xe8] sm:$0xff]
  %v3013 = vld [vmem:[%s9 + $0xf0] sm:$0xff]
  %v3014 = vld [vmem:[%s9 + $0xf8] sm:$0xff]
  %v3015 = vld [vmem:[%s10] sm:$0xff]
  %v3016 = vld [vmem:[%s10 + $0x8] sm:$0xff]
  %v3019 = vlaneseq
  %v3020 = vshrl.u32 %v3019, 7
  %v3021 = vsub.s32 0, %v3020
  %v3022 = vrot.slane %v3015, %v3021
  %v3023 = vlaneseq
  %v3024 = vshrl.u32 %v3023, 7
  %v3025 = vsub.s32 1, %v3024
  %v3026 = vrot.slane %v3015, %v3025
  %v3027 = vlaneseq
  %v3028 = vshrl.u32 %v3027, 7
  %v3029 = vsub.s32 2, %v3028
  %v3030 = vrot.slane %v3015, %v3029
  %v3031 = vlaneseq
  %v3032 = vshrl.u32 %v3031, 7
  %v3033 = vsub.s32 3, %v3032
  %v3034 = vrot.slane %v3015, %v3033
  %v3035 = vlaneseq
  %v3036 = vshrl.u32 %v3035, 7
  %v3037 = vsub.s32 4, %v3036
  %v3038 = vrot.slane %v3015, %v3037
  %v3039 = vlaneseq
  %v3040 = vshrl.u32 %v3039, 7
  %v3041 = vsub.s32 5, %v3040
  %v3042 = vrot.slane %v3015, %v3041
  %v3043 = vlaneseq
  %v3044 = vshrl.u32 %v3043, 7
  %v3045 = vsub.s32 6, %v3044
  %v3046 = vrot.slane %v3015, %v3045
  %v3047 = vlaneseq
  %v3048 = vshrl.u32 %v3047, 7
  %v3049 = vsub.s32 7, %v3048
  %v3050 = vrot.slane %v3015, %v3049
  %v3051 = vlaneseq
  %v3052 = vshrl.u32 %v3051, 7
  %v3053 = vsub.s32 0, %v3052
  %v3054 = vrot.slane %v3016, %v3053
  %v3055 = vlaneseq
  %v3056 = vshrl.u32 %v3055, 7
  %v3057 = vsub.s32 1, %v3056
  %v3058 = vrot.slane %v3016, %v3057
  %v3059 = vlaneseq
  %v3060 = vshrl.u32 %v3059, 7
  %v3061 = vsub.s32 2, %v3060
  %v3062 = vrot.slane %v3016, %v3061
  %v3063 = vlaneseq
  %v3064 = vshrl.u32 %v3063, 7
  %v3065 = vsub.s32 3, %v3064
  %v3066 = vrot.slane %v3016, %v3065
  %v3067 = vlaneseq
  %v3068 = vshrl.u32 %v3067, 7
  %v3069 = vsub.s32 4, %v3068
  %v3070 = vrot.slane %v3016, %v3069
  %v3071 = vlaneseq
  %v3072 = vshrl.u32 %v3071, 7
  %v3073 = vsub.s32 5, %v3072
  %v3074 = vrot.slane %v3016, %v3073
  %v3075 = vlaneseq
  %v3076 = vshrl.u32 %v3075, 7
  %v3077 = vsub.s32 6, %v3076
  %v3078 = vrot.slane %v3016, %v3077
  %v3079 = vlaneseq
  %v3080 = vshrl.u32 %v3079, 7
  %v3081 = vsub.s32 7, %v3080
  %v3082 = vrot.slane %v3016, %v3081
  %v3131 = vunpack.c.l.b16 %v2983
  %v3132 = vunpack.c.h.b16 %v2983
  %v3133 = vunpack.c.l.b16 %v2984
  %v3134 = vunpack.c.h.b16 %v2984
  %v3135 = vunpack.c.l.b16 %v2985
  %v3136 = vunpack.c.h.b16 %v2985
  %v3137 = vunpack.c.l.b16 %v2986
  %v3138 = vunpack.c.h.b16 %v2986
  %v3139 = vunpack.c.l.b16 %v2987
  %v3140 = vunpack.c.h.b16 %v2987
  %v3141 = vunpack.c.l.b16 %v2988
  %v3142 = vunpack.c.h.b16 %v2988
  %v3143 = vunpack.c.l.b16 %v2989
  %v3144 = vunpack.c.h.b16 %v2989
  %v3145 = vunpack.c.l.b16 %v2990
  %v3146 = vunpack.c.h.b16 %v2990
  %v3147 = vunpack.c.l.b16 %v2991
  %v3148 = vunpack.c.h.b16 %v2991
  %v3149 = vunpack.c.l.b16 %v2992
  %v3150 = vunpack.c.h.b16 %v2992
  %v3151 = vunpack.c.l.b16 %v2993
  %v3152 = vunpack.c.h.b16 %v2993
  %v3153 = vunpack.c.l.b16 %v2994
  %v3154 = vunpack.c.h.b16 %v2994
  %v3155 = vunpack.c.l.b16 %v2995
  %v3156 = vunpack.c.h.b16 %v2995
  %v3157 = vunpack.c.l.b16 %v2996
  %v3158 = vunpack.c.h.b16 %v2996
  %v3159 = vunpack.c.l.b16 %v2997
  %v3160 = vunpack.c.h.b16 %v2997
  %v3161 = vunpack.c.l.b16 %v2998
  %v3162 = vunpack.c.h.b16 %v2998
  %v3163 = vunpack.c.l.b16 %v2999
  %v3164 = vunpack.c.h.b16 %v2999
  %v3165 = vunpack.c.l.b16 %v3000
  %v3166 = vunpack.c.h.b16 %v3000
  %v3167 = vunpack.c.l.b16 %v3001
  %v3168 = vunpack.c.h.b16 %v3001
  %v3169 = vunpack.c.l.b16 %v3002
  %v3170 = vunpack.c.h.b16 %v3002
  %v3171 = vunpack.c.l.b16 %v3003
  %v3172 = vunpack.c.h.b16 %v3003
  %v3173 = vunpack.c.l.b16 %v3004
  %v3174 = vunpack.c.h.b16 %v3004
  %v3175 = vunpack.c.l.b16 %v3005
  %v3176 = vunpack.c.h.b16 %v3005
  %v3177 = vunpack.c.l.b16 %v3006
  %v3178 = vunpack.c.h.b16 %v3006
  %v3179 = vunpack.c.l.b16 %v3007
  %v3180 = vunpack.c.h.b16 %v3007
  %v3181 = vunpack.c.l.b16 %v3008
  %v3182 = vunpack.c.h.b16 %v3008
  %v3183 = vunpack.c.l.b16 %v3009
  %v3184 = vunpack.c.h.b16 %v3009
  %v3185 = vunpack.c.l.b16 %v3010
  %v3186 = vunpack.c.h.b16 %v3010
  %v3187 = vunpack.c.l.b16 %v3011
  %v3188 = vunpack.c.h.b16 %v3011
  %v3189 = vunpack.c.l.b16 %v3012
  %v3190 = vunpack.c.h.b16 %v3012
  %v3191 = vunpack.c.l.b16 %v3013
  %v3192 = vunpack.c.h.b16 %v3013
  %v3193 = vunpack.c.l.b16 %v3014
  %v3194 = vunpack.c.h.b16 %v3014
  %v3195 = vpack.c.b16 %v3147, %v3131
  %v3196 = vpack.c.b16 %v3148, %v3132
  %v3197 = vpack.c.b16 %v3149, %v3133
  %v3198 = vpack.c.b16 %v3150, %v3134
  %v3199 = vpack.c.b16 %v3151, %v3135
  %v3200 = vpack.c.b16 %v3152, %v3136
  %v3201 = vpack.c.b16 %v3153, %v3137
  %v3202 = vpack.c.b16 %v3154, %v3138
  %v3203 = vpack.c.b16 %v3155, %v3139
  %v3204 = vpack.c.b16 %v3156, %v3140
  %v3205 = vpack.c.b16 %v3157, %v3141
  %v3206 = vpack.c.b16 %v3158, %v3142
  %v3207 = vpack.c.b16 %v3159, %v3143
  %v3208 = vpack.c.b16 %v3160, %v3144
  %v3209 = vpack.c.b16 %v3161, %v3145
  %v3210 = vpack.c.b16 %v3162, %v3146
  %v3211 = vpack.c.b16 %v3179, %v3163
  %v3212 = vpack.c.b16 %v3180, %v3164
  %v3213 = vpack.c.b16 %v3181, %v3165
  %v3214 = vpack.c.b16 %v3182, %v3166
  %v3215 = vpack.c.b16 %v3183, %v3167
  %v3216 = vpack.c.b16 %v3184, %v3168
  %v3217 = vpack.c.b16 %v3185, %v3169
  %v3218 = vpack.c.b16 %v3186, %v3170
  %v3219 = vpack.c.b16 %v3187, %v3171
  %v3220 = vpack.c.b16 %v3188, %v3172
  %v3221 = vpack.c.b16 %v3189, %v3173
  %v3222 = vpack.c.b16 %v3190, %v3174
  %v3223 = vpack.c.b16 %v3191, %v3175
  %v3224 = vpack.c.b16 %v3192, %v3176
  %v3225 = vpack.c.b16 %v3193, %v3177
  %v3226 = vpack.c.b16 %v3194, %v3178
  %v3260 = vsel %vm311, %v2981, 0
  %v3263 = vsel %vm311, %v2982, 0
  %3265 = vmatprep.subr.bf16.mxu0 0
  %3266 = vmatpush1.bf16.msra.mxu0 0
  %3267 = vmatprep.subr.bf16.mxu0 0
  %3268 = vmatpush1.bf16.msra.mxu0 0
  %3269 = vmatprep.subr.bf16.mxu0 0
  %3270 = vmatpush1.bf16.msra.mxu0 0
  %3271 = vmatprep.subr.bf16.mxu0 0
  %3272 = vmatpush1.bf16.msra.mxu0 0
  %3273 = vmatprep.subr.bf16.mxu0 0
  %3274 = vmatpush1.bf16.msra.mxu0 0
  %3275 = vmatprep.subr.bf16.mxu0 0
  %3276 = vmatpush1.bf16.msra.mxu0 0
  %3277 = vmatprep.subr.bf16.mxu0 %v3212
  %3278 = vmatpush1.bf16.msra.mxu0 %v3211
  %3279 = vmatprep.subr.bf16.mxu0 %v3196
  %3280 = vmatpush1.bf16.msra.mxu0 %v3195
  %3281 = vmatprep.subr.bf16.mxu0 0
  %3282 = vmatpush2.bf16.msra.mxu0 0
  %3283 = vmatprep.subr.bf16.mxu0 0
  %3284 = vmatpush2.bf16.msra.mxu0 0
  %3285 = vmatprep.subr.bf16.mxu0 0
  %3286 = vmatpush2.bf16.msra.mxu0 0
  %3287 = vmatprep.subr.bf16.mxu0 0
  %3288 = vmatpush2.bf16.msra.mxu0 0
  %3289 = vmatprep.subr.bf16.mxu0 0
  %3290 = vmatpush2.bf16.msra.mxu0 0
  %3291 = vmatprep.subr.bf16.mxu0 0
  %3292 = vmatpush2.bf16.msra.mxu0 0
  %3293 = vmatprep.subr.bf16.mxu0 0
  %3294 = vmatpush2.bf16.msra.mxu0 0
  %3295 = vmatprep.subr.bf16.mxu0 0
  %3296 = vmatpush2.bf16.msra.mxu0 0
  %3297 = vmatprep.mubr.bf16.mxu0 0
  %3298 = vmatmul.mubr.bf16.gmra.mxu0 %v3260
  %v3299 = vpop.f32.mrf.mxu0
  %v3300 = vadd.f32 %v3022, %v3299
  %v3301 = vpop.f32.mrf.mxu0
  %v3302 = vadd.f32 %v3026, %v3301
  %v3303 = vpop.f32.mrf.mxu0
  %v3304 = vadd.f32 %v3022, %v3303
  %v3305 = vpop.f32.mrf.mxu0
  %v3306 = vadd.f32 %v3026, %v3305
  %3307 = vmatprep.mubr.bf16.mxu0 0
  %3308 = vmatmul.mubr.bf16.gmra.mxu0 %v3263
  %v3309 = vpop.f32.mrf.mxu0
  %v3310 = vadd.f32 %v3022, %v3309
  %v3311 = vpop.f32.mrf.mxu0
  %v3312 = vadd.f32 %v3026, %v3311
  %v3313 = vpop.f32.mrf.mxu0
  %v3314 = vadd.f32 %v3022, %v3313
  %v3315 = vpop.f32.mrf.mxu0
  %v3316 = vadd.f32 %v3026, %v3315
  %3317 = vdwg.mxu0
  %3318 = vmatprep.subr.bf16.mxu0 0
  %3319 = vmatpush1.bf16.msra.mxu0 0
  %3320 = vmatprep.subr.bf16.mxu0 0
  %3321 = vmatpush1.bf16.msra.mxu0 0
  %3322 = vmatprep.subr.bf16.mxu0 0
  %3323 = vmatpush1.bf16.msra.mxu0 0
  %3324 = vmatprep.subr.bf16.mxu0 0
  %3325 = vmatpush1.bf16.msra.mxu0 0
  %3326 = vmatprep.subr.bf16.mxu0 0
  %3327 = vmatpush1.bf16.msra.mxu0 0
  %3328 = vmatprep.subr.bf16.mxu0 0
  %3329 = vmatpush1.bf16.msra.mxu0 0
  %3330 = vmatprep.subr.bf16.mxu0 %v3214
  %3331 = vmatpush1.bf16.msra.mxu0 %v3213
  %3332 = vmatprep.subr.bf16.mxu0 %v3198
  %3333 = vmatpush1.bf16.msra.mxu0 %v3197
  %3334 = vmatprep.subr.bf16.mxu0 0
  %3335 = vmatpush2.bf16.msra.mxu0 0
  %3336 = vmatprep.subr.bf16.mxu0 0
  %3337 = vmatpush2.bf16.msra.mxu0 0
  %3338 = vmatprep.subr.bf16.mxu0 0
  %3339 = vmatpush2.bf16.msra.mxu0 0
  %3340 = vmatprep.subr.bf16.mxu0 0
  %3341 = vmatpush2.bf16.msra.mxu0 0
  %3342 = vmatprep.subr.bf16.mxu0 0
  %3343 = vmatpush2.bf16.msra.mxu0 0
  %3344 = vmatprep.subr.bf16.mxu0 0
  %3345 = vmatpush2.bf16.msra.mxu0 0
  %3346 = vmatprep.subr.bf16.mxu0 0
  %3347 = vmatpush2.bf16.msra.mxu0 0
  %3348 = vmatprep.subr.bf16.mxu0 0
  %3349 = vmatpush2.bf16.msra.mxu0 0
  %3350 = vmatprep.mubr.bf16.mxu0 0
  %3351 = vmatmul.mubr.bf16.gmra.mxu0 %v3260
  %v3352 = vpop.f32.mrf.mxu0
  %v3353 = vadd.f32 %v3030, %v3352
  %v3354 = vpop.f32.mrf.mxu0
  %v3355 = vadd.f32 %v3034, %v3354
  %v3356 = vpop.f32.mrf.mxu0
  %v3357 = vadd.f32 %v3030, %v3356
  %v3358 = vpop.f32.mrf.mxu0
  %v3359 = vadd.f32 %v3034, %v3358
  %3360 = vmatprep.mubr.bf16.mxu0 0
  %3361 = vmatmul.mubr.bf16.gmra.mxu0 %v3263
  %v3362 = vpop.f32.mrf.mxu0
  %v3363 = vadd.f32 %v3030, %v3362
  %v3364 = vpop.f32.mrf.mxu0
  %v3365 = vadd.f32 %v3034, %v3364
  %v3366 = vpop.f32.mrf.mxu0
  %v3367 = vadd.f32 %v3030, %v3366
  %v3368 = vpop.f32.mrf.mxu0
  %v3369 = vadd.f32 %v3034, %v3368
  %3370 = vdwg.mxu0
  %3371 = vmatprep.subr.bf16.mxu0 0
  %3372 = vmatpush1.bf16.msra.mxu0 0
  %3373 = vmatprep.subr.bf16.mxu0 0
  %3374 = vmatpush1.bf16.msra.mxu0 0
  %3375 = vmatprep.subr.bf16.mxu0 0
  %3376 = vmatpush1.bf16.msra.mxu0 0
  %3377 = vmatprep.subr.bf16.mxu0 0
  %3378 = vmatpush1.bf16.msra.mxu0 0
  %3379 = vmatprep.subr.bf16.mxu0 0
  %3380 = vmatpush1.bf16.msra.mxu0 0
  %3381 = vmatprep.subr.bf16.mxu0 0
  %3382 = vmatpush1.bf16.msra.mxu0 0
  %3383 = vmatprep.subr.bf16.mxu0 %v3216
  %3384 = vmatpush1.bf16.msra.mxu0 %v3215
  %3385 = vmatprep.subr.bf16.mxu0 %v3200
  %3386 = vmatpush1.bf16.msra.mxu0 %v3199
  %3387 = vmatprep.subr.bf16.mxu0 0
  %3388 = vmatpush2.bf16.msra.mxu0 0
  %3389 = vmatprep.subr.bf16.mxu0 0
  %3390 = vmatpush2.bf16.msra.mxu0 0
  %3391 = vmatprep.subr.bf16.mxu0 0
  %3392 = vmatpush2.bf16.msra.mxu0 0
  %3393 = vmatprep.subr.bf16.mxu0 0
  %3394 = vmatpush2.bf16.msra.mxu0 0
  %3395 = vmatprep.subr.bf16.mxu0 0
  %3396 = vmatpush2.bf16.msra.mxu0 0
  %3397 = vmatprep.subr.bf16.mxu0 0
  %3398 = vmatpush2.bf16.msra.mxu0 0
  %3399 = vmatprep.subr.bf16.mxu0 0
  %3400 = vmatpush2.bf16.msra.mxu0 0
  %3401 = vmatprep.subr.bf16.mxu0 0
  %3402 = vmatpush2.bf16.msra.mxu0 0
  %3403 = vmatprep.mubr.bf16.mxu0 0
  %3404 = vmatmul.mubr.bf16.gmra.mxu0 %v3260
  %v3405 = vpop.f32.mrf.mxu0
  %v3406 = vadd.f32 %v3038, %v3405
  %v3407 = vpop.f32.mrf.mxu0
  %v3408 = vadd.f32 %v3042, %v3407
  %v3409 = vpop.f32.mrf.mxu0
  %v3410 = vadd.f32 %v3038, %v3409
  %v3411 = vpop.f32.mrf.mxu0
  %v3412 = vadd.f32 %v3042, %v3411
  %3413 = vmatprep.mubr.bf16.mxu0 0
  %3414 = vmatmul.mubr.bf16.gmra.mxu0 %v3263
  %v3415 = vpop.f32.mrf.mxu0
  %v3416 = vadd.f32 %v3038, %v3415
  %v3417 = vpop.f32.mrf.mxu0
  %v3418 = vadd.f32 %v3042, %v3417
  %v3419 = vpop.f32.mrf.mxu0
  %v3420 = vadd.f32 %v3038, %v3419
  %v3421 = vpop.f32.mrf.mxu0
  %v3422 = vadd.f32 %v3042, %v3421
  %3423 = vdwg.mxu0
  %3424 = vmatprep.subr.bf16.mxu0 0
  %3425 = vmatpush1.bf16.msra.mxu0 0
  %3426 = vmatprep.subr.bf16.mxu0 0
  %3427 = vmatpush1.bf16.msra.mxu0 0
  %3428 = vmatprep.subr.bf16.mxu0 0
  %3429 = vmatpush1.bf16.msra.mxu0 0
  %3430 = vmatprep.subr.bf16.mxu0 0
  %3431 = vmatpush1.bf16.msra.mxu0 0
  %3432 = vmatprep.subr.bf16.mxu0 0
  %3433 = vmatpush1.bf16.msra.mxu0 0
  %3434 = vmatprep.subr.bf16.mxu0 0
  %3435 = vmatpush1.bf16.msra.mxu0 0
  %3436 = vmatprep.subr.bf16.mxu0 %v3218
  %3437 = vmatpush1.bf16.msra.mxu0 %v3217
  %3438 = vmatprep.subr.bf16.mxu0 %v3202
  %3439 = vmatpush1.bf16.msra.mxu0 %v3201
  %3440 = vmatprep.subr.bf16.mxu0 0
  %3441 = vmatpush2.bf16.msra.mxu0 0
  %3442 = vmatprep.subr.bf16.mxu0 0
  %3443 = vmatpush2.bf16.msra.mxu0 0
  %3444 = vmatprep.subr.bf16.mxu0 0
  %3445 = vmatpush2.bf16.msra.mxu0 0
  %3446 = vmatprep.subr.bf16.mxu0 0
  %3447 = vmatpush2.bf16.msra.mxu0 0
  %3448 = vmatprep.subr.bf16.mxu0 0
  %3449 = vmatpush2.bf16.msra.mxu0 0
  %3450 = vmatprep.subr.bf16.mxu0 0
  %3451 = vmatpush2.bf16.msra.mxu0 0
  %3452 = vmatprep.subr.bf16.mxu0 0
  %3453 = vmatpush2.bf16.msra.mxu0 0
  %3454 = vmatprep.subr.bf16.mxu0 0
  %3455 = vmatpush2.bf16.msra.mxu0 0
  %3456 = vmatprep.mubr.bf16.mxu0 0
  %3457 = vmatmul.mubr.bf16.gmra.mxu0 %v3260
  %v3458 = vpop.f32.mrf.mxu0
  %v3459 = vadd.f32 %v3046, %v3458
  %v3460 = vpop.f32.mrf.mxu0
  %v3461 = vadd.f32 %v3050, %v3460
  %v3462 = vpop.f32.mrf.mxu0
  %v3463 = vadd.f32 %v3046, %v3462
  %v3464 = vpop.f32.mrf.mxu0
  %v3465 = vadd.f32 %v3050, %v3464
  %3466 = vmatprep.mubr.bf16.mxu0 0
  %3467 = vmatmul.mubr.bf16.gmra.mxu0 %v3263
  %v3468 = vpop.f32.mrf.mxu0
  %v3469 = vadd.f32 %v3046, %v3468
  %v3470 = vpop.f32.mrf.mxu0
  %v3471 = vadd.f32 %v3050, %v3470
  %v3472 = vpop.f32.mrf.mxu0
  %v3473 = vadd.f32 %v3046, %v3472
  %v3474 = vpop.f32.mrf.mxu0
  %v3475 = vadd.f32 %v3050, %v3474
  %3476 = vdwg.mxu0
  %3477 = vmatprep.subr.bf16.mxu0 0
  %3478 = vmatpush1.bf16.msra.mxu0 0
  %3479 = vmatprep.subr.bf16.mxu0 0
  %3480 = vmatpush1.bf16.msra.mxu0 0
  %3481 = vmatprep.subr.bf16.mxu0 0
  %3482 = vmatpush1.bf16.msra.mxu0 0
  %3483 = vmatprep.subr.bf16.mxu0 0
  %3484 = vmatpush1.bf16.msra.mxu0 0
  %3485 = vmatprep.subr.bf16.mxu0 0
  %3486 = vmatpush1.bf16.msra.mxu0 0
  %3487 = vmatprep.subr.bf16.mxu0 0
  %3488 = vmatpush1.bf16.msra.mxu0 0
  %3489 = vmatprep.subr.bf16.mxu0 %v3220
  %3490 = vmatpush1.bf16.msra.mxu0 %v3219
  %3491 = vmatprep.subr.bf16.mxu0 %v3204
  %3492 = vmatpush1.bf16.msra.mxu0 %v3203
  %3493 = vmatprep.subr.bf16.mxu0 0
  %3494 = vmatpush2.bf16.msra.mxu0 0
  %3495 = vmatprep.subr.bf16.mxu0 0
  %3496 = vmatpush2.bf16.msra.mxu0 0
  %3497 = vmatprep.subr.bf16.mxu0 0
  %3498 = vmatpush2.bf16.msra.mxu0 0
  %3499 = vmatprep.subr.bf16.mxu0 0
  %3500 = vmatpush2.bf16.msra.mxu0 0
  %3501 = vmatprep.subr.bf16.mxu0 0
  %3502 = vmatpush2.bf16.msra.mxu0 0
  %3503 = vmatprep.subr.bf16.mxu0 0
  %3504 = vmatpush2.bf16.msra.mxu0 0
  %3505 = vmatprep.subr.bf16.mxu0 0
  %3506 = vmatpush2.bf16.msra.mxu0 0
  %3507 = vmatprep.subr.bf16.mxu0 0
  %3508 = vmatpush2.bf16.msra.mxu0 0
  %3509 = vmatprep.mubr.bf16.mxu0 0
  %3510 = vmatmul.mubr.bf16.gmra.mxu0 %v3260
  %v3511 = vpop.f32.mrf.mxu0
  %v3512 = vadd.f32 %v3054, %v3511
  %v3513 = vpop.f32.mrf.mxu0
  %v3514 = vadd.f32 %v3058, %v3513
  %v3515 = vpop.f32.mrf.mxu0
  %v3516 = vadd.f32 %v3054, %v3515
  %v3517 = vpop.f32.mrf.mxu0
  %v3518 = vadd.f32 %v3058, %v3517
  %3519 = vmatprep.mubr.bf16.mxu0 0
  %3520 = vmatmul.mubr.bf16.gmra.mxu0 %v3263
  %v3521 = vpop.f32.mrf.mxu0
  %v3522 = vadd.f32 %v3054, %v3521
  %v3523 = vpop.f32.mrf.mxu0
  %v3524 = vadd.f32 %v3058, %v3523
  %v3525 = vpop.f32.mrf.mxu0
  %v3526 = vadd.f32 %v3054, %v3525
  %v3527 = vpop.f32.mrf.mxu0
  %v3528 = vadd.f32 %v3058, %v3527
  %3529 = vdwg.mxu0
  %3530 = vmatprep.subr.bf16.mxu0 0
  %3531 = vmatpush1.bf16.msra.mxu0 0
  %3532 = vmatprep.subr.bf16.mxu0 0
  %3533 = vmatpush1.bf16.msra.mxu0 0
  %3534 = vmatprep.subr.bf16.mxu0 0
  %3535 = vmatpush1.bf16.msra.mxu0 0
  %3536 = vmatprep.subr.bf16.mxu0 0
  %3537 = vmatpush1.bf16.msra.mxu0 0
  %3538 = vmatprep.subr.bf16.mxu0 0
  %3539 = vmatpush1.bf16.msra.mxu0 0
  %3540 = vmatprep.subr.bf16.mxu0 0
  %3541 = vmatpush1.bf16.msra.mxu0 0
  %3542 = vmatprep.subr.bf16.mxu0 %v3222
  %3543 = vmatpush1.bf16.msra.mxu0 %v3221
  %3544 = vmatprep.subr.bf16.mxu0 %v3206
  %3545 = vmatpush1.bf16.msra.mxu0 %v3205
  %3546 = vmatprep.subr.bf16.mxu0 0
  %3547 = vmatpush2.bf16.msra.mxu0 0
  %3548 = vmatprep.subr.bf16.mxu0 0
  %3549 = vmatpush2.bf16.msra.mxu0 0
  %3550 = vmatprep.subr.bf16.mxu0 0
  %3551 = vmatpush2.bf16.msra.mxu0 0
  %3552 = vmatprep.subr.bf16.mxu0 0
  %3553 = vmatpush2.bf16.msra.mxu0 0
  %3554 = vmatprep.subr.bf16.mxu0 0
  %3555 = vmatpush2.bf16.msra.mxu0 0
  %3556 = vmatprep.subr.bf16.mxu0 0
  %3557 = vmatpush2.bf16.msra.mxu0 0
  %3558 = vmatprep.subr.bf16.mxu0 0
  %3559 = vmatpush2.bf16.msra.mxu0 0
  %3560 = vmatprep.subr.bf16.mxu0 0
  %3561 = vmatpush2.bf16.msra.mxu0 0
  %3562 = vmatprep.mubr.bf16.mxu0 0
  %3563 = vmatmul.mubr.bf16.gmra.mxu0 %v3260
  %v3564 = vpop.f32.mrf.mxu0
  %v3565 = vadd.f32 %v3062, %v3564
  %v3566 = vpop.f32.mrf.mxu0
  %v3567 = vadd.f32 %v3066, %v3566
  %v3568 = vpop.f32.mrf.mxu0
  %v3569 = vadd.f32 %v3062, %v3568
  %v3570 = vpop.f32.mrf.mxu0
  %v3571 = vadd.f32 %v3066, %v3570
  %3572 = vmatprep.mubr.bf16.mxu0 0
  %3573 = vmatmul.mubr.bf16.gmra.mxu0 %v3263
  %v3574 = vpop.f32.mrf.mxu0
  %v3575 = vadd.f32 %v3062, %v3574
  %v3576 = vpop.f32.mrf.mxu0
  %v3577 = vadd.f32 %v3066, %v3576
  %v3578 = vpop.f32.mrf.mxu0
  %v3579 = vadd.f32 %v3062, %v3578
  %v3580 = vpop.f32.mrf.mxu0
  %v3581 = vadd.f32 %v3066, %v3580
  %3582 = vdwg.mxu0
  %3583 = vmatprep.subr.bf16.mxu0 0
  %3584 = vmatpush1.bf16.msra.mxu0 0
  %3585 = vmatprep.subr.bf16.mxu0 0
  %3586 = vmatpush1.bf16.msra.mxu0 0
  %3587 = vmatprep.subr.bf16.mxu0 0
  %3588 = vmatpush1.bf16.msra.mxu0 0
  %3589 = vmatprep.subr.bf16.mxu0 0
  %3590 = vmatpush1.bf16.msra.mxu0 0
  %3591 = vmatprep.subr.bf16.mxu0 0
  %3592 = vmatpush1.bf16.msra.mxu0 0
  %3593 = vmatprep.subr.bf16.mxu0 0
  %3594 = vmatpush1.bf16.msra.mxu0 0
  %3595 = vmatprep.subr.bf16.mxu0 %v3224
  %3596 = vmatpush1.bf16.msra.mxu0 %v3223
  %3597 = vmatprep.subr.bf16.mxu0 %v3208
  %3598 = vmatpush1.bf16.msra.mxu0 %v3207
  %3599 = vmatprep.subr.bf16.mxu0 0
  %3600 = vmatpush2.bf16.msra.mxu0 0
  %3601 = vmatprep.subr.bf16.mxu0 0
  %3602 = vmatpush2.bf16.msra.mxu0 0
  %3603 = vmatprep.subr.bf16.mxu0 0
  %3604 = vmatpush2.bf16.msra.mxu0 0
  %3605 = vmatprep.subr.bf16.mxu0 0
  %3606 = vmatpush2.bf16.msra.mxu0 0
  %3607 = vmatprep.subr.bf16.mxu0 0
  %3608 = vmatpush2.bf16.msra.mxu0 0
  %3609 = vmatprep.subr.bf16.mxu0 0
  %3610 = vmatpush2.bf16.msra.mxu0 0
  %3611 = vmatprep.subr.bf16.mxu0 0
  %3612 = vmatpush2.bf16.msra.mxu0 0
  %3613 = vmatprep.subr.bf16.mxu0 0
  %3614 = vmatpush2.bf16.msra.mxu0 0
  %3615 = vmatprep.mubr.bf16.mxu0 0
  %3616 = vmatmul.mubr.bf16.gmra.mxu0 %v3260
  %v3617 = vpop.f32.mrf.mxu0
  %v3618 = vadd.f32 %v3070, %v3617
  %v3619 = vpop.f32.mrf.mxu0
  %v3620 = vadd.f32 %v3074, %v3619
  %v3621 = vpop.f32.mrf.mxu0
  %v3622 = vadd.f32 %v3070, %v3621
  %v3623 = vpop.f32.mrf.mxu0
  %v3624 = vadd.f32 %v3074, %v3623
  %3625 = vmatprep.mubr.bf16.mxu0 0
  %3626 = vmatmul.mubr.bf16.gmra.mxu0 %v3263
  %v3627 = vpop.f32.mrf.mxu0
  %v3628 = vadd.f32 %v3070, %v3627
  %v3629 = vpop.f32.mrf.mxu0
  %v3630 = vadd.f32 %v3074, %v3629
  %v3631 = vpop.f32.mrf.mxu0
  %v3632 = vadd.f32 %v3070, %v3631
  %v3633 = vpop.f32.mrf.mxu0
  %v3634 = vadd.f32 %v3074, %v3633
  %3635 = vdwg.mxu0
  %3636 = vmatprep.subr.bf16.mxu0 0
  %3637 = vmatpush1.bf16.msra.mxu0 0
  %3638 = vmatprep.subr.bf16.mxu0 0
  %3639 = vmatpush1.bf16.msra.mxu0 0
  %3640 = vmatprep.subr.bf16.mxu0 0
  %3641 = vmatpush1.bf16.msra.mxu0 0
  %3642 = vmatprep.subr.bf16.mxu0 0
  %3643 = vmatpush1.bf16.msra.mxu0 0
  %3644 = vmatprep.subr.bf16.mxu0 0
  %3645 = vmatpush1.bf16.msra.mxu0 0
  %3646 = vmatprep.subr.bf16.mxu0 0
  %3647 = vmatpush1.bf16.msra.mxu0 0
  %3648 = vmatprep.subr.bf16.mxu0 %v3226
  %3649 = vmatpush1.bf16.msra.mxu0 %v3225
  %3650 = vmatprep.subr.bf16.mxu0 %v3210
  %3651 = vmatpush1.bf16.msra.mxu0 %v3209
  %3652 = vmatprep.subr.bf16.mxu0 0
  %3653 = vmatpush2.bf16.msra.mxu0 0
  %3654 = vmatprep.subr.bf16.mxu0 0
  %3655 = vmatpush2.bf16.msra.mxu0 0
  %3656 = vmatprep.subr.bf16.mxu0 0
  %3657 = vmatpush2.bf16.msra.mxu0 0
  %3658 = vmatprep.subr.bf16.mxu0 0
  %3659 = vmatpush2.bf16.msra.mxu0 0
  %3660 = vmatprep.subr.bf16.mxu0 0
  %3661 = vmatpush2.bf16.msra.mxu0 0
  %3662 = vmatprep.subr.bf16.mxu0 0
  %3663 = vmatpush2.bf16.msra.mxu0 0
  %3664 = vmatprep.subr.bf16.mxu0 0
  %3665 = vmatpush2.bf16.msra.mxu0 0
  %3666 = vmatprep.subr.bf16.mxu0 0
  %3667 = vmatpush2.bf16.msra.mxu0 0
  %3668 = vmatprep.mubr.bf16.mxu0 0
  %3669 = vmatmul.mubr.bf16.gmra.mxu0 %v3260
  %v3670 = vpop.f32.mrf.mxu0
  %v3671 = vadd.f32 %v3078, %v3670
  %v3672 = vpop.f32.mrf.mxu0
  %v3673 = vadd.f32 %v3082, %v3672
  %v3674 = vpop.f32.mrf.mxu0
  %v3675 = vadd.f32 %v3078, %v3674
  %v3676 = vpop.f32.mrf.mxu0
  %v3677 = vadd.f32 %v3082, %v3676
  %3678 = vmatprep.mubr.bf16.mxu0 0
  %3679 = vmatmul.mubr.bf16.gmra.mxu0 %v3263
  %v3680 = vpop.f32.mrf.mxu0
  %v3681 = vadd.f32 %v3078, %v3680
  %v3682 = vpop.f32.mrf.mxu0
  %v3683 = vadd.f32 %v3082, %v3682
  %v3684 = vpop.f32.mrf.mxu0
  %v3685 = vadd.f32 %v3078, %v3684
  %v3686 = vpop.f32.mrf.mxu0
  %v3687 = vadd.f32 %v3082, %v3686
  %3688 = vdwg.mxu0
  %v3689 = vmax.f32 %v3300, 0.0
  %v3690 = vmax.f32 %v3302, 0.0
  %v3691 = vmax.f32 %v3353, 0.0
  %v3692 = vmax.f32 %v3355, 0.0
  %v3693 = vmax.f32 %v3406, 0.0
  %v3694 = vmax.f32 %v3408, 0.0
  %v3695 = vmax.f32 %v3459, 0.0
  %v3696 = vmax.f32 %v3461, 0.0
  %v3697 = vmax.f32 %v3512, 0.0
  %v3698 = vmax.f32 %v3514, 0.0
  %v3699 = vmax.f32 %v3565, 0.0
  %v3700 = vmax.f32 %v3567, 0.0
  %v3701 = vmax.f32 %v3618, 0.0
  %v3702 = vmax.f32 %v3620, 0.0
  %v3703 = vmax.f32 %v3671, 0.0
  %v3704 = vmax.f32 %v3673, 0.0
  %v3705 = vmax.f32 %v3304, 0.0
  %v3706 = vmax.f32 %v3306, 0.0
  %v3707 = vmax.f32 %v3357, 0.0
  %v3708 = vmax.f32 %v3359, 0.0
  %v3709 = vmax.f32 %v3410, 0.0
  %v3710 = vmax.f32 %v3412, 0.0
  %v3711 = vmax.f32 %v3463, 0.0
  %v3712 = vmax.f32 %v3465, 0.0
  %v3713 = vmax.f32 %v3516, 0.0
  %v3714 = vmax.f32 %v3518, 0.0
  %v3715 = vmax.f32 %v3569, 0.0
  %v3716 = vmax.f32 %v3571, 0.0
  %v3717 = vmax.f32 %v3622, 0.0
  %v3718 = vmax.f32 %v3624, 0.0
  %v3719 = vmax.f32 %v3675, 0.0
  %v3720 = vmax.f32 %v3677, 0.0
  %v3721 = vmax.f32 %v3310, 0.0
  %v3722 = vmax.f32 %v3312, 0.0
  %v3723 = vmax.f32 %v3363, 0.0
  %v3724 = vmax.f32 %v3365, 0.0
  %v3725 = vmax.f32 %v3416, 0.0
  %v3726 = vmax.f32 %v3418, 0.0
  %v3727 = vmax.f32 %v3469, 0.0
  %v3728 = vmax.f32 %v3471, 0.0
  %v3729 = vmax.f32 %v3522, 0.0
  %v3730 = vmax.f32 %v3524, 0.0
  %v3731 = vmax.f32 %v3575, 0.0
  %v3732 = vmax.f32 %v3577, 0.0
  %v3733 = vmax.f32 %v3628, 0.0
  %v3734 = vmax.f32 %v3630, 0.0
  %v3735 = vmax.f32 %v3681, 0.0
  %v3736 = vmax.f32 %v3683, 0.0
  %v3737 = vmax.f32 %v3314, 0.0
  %v3738 = vmax.f32 %v3316, 0.0
  %v3739 = vmax.f32 %v3367, 0.0
  %v3740 = vmax.f32 %v3369, 0.0
  %v3741 = vmax.f32 %v3420, 0.0
  %v3742 = vmax.f32 %v3422, 0.0
  %v3743 = vmax.f32 %v3473, 0.0
  %v3744 = vmax.f32 %v3475, 0.0
  %v3745 = vmax.f32 %v3526, 0.0
  %v3746 = vmax.f32 %v3528, 0.0
  %v3747 = vmax.f32 %v3579, 0.0
  %v3748 = vmax.f32 %v3581, 0.0
  %v3749 = vmax.f32 %v3632, 0.0
  %v3750 = vmax.f32 %v3634, 0.0
  %v3751 = vmax.f32 %v3685, 0.0
  %v3752 = vmax.f32 %v3687, 0.0
  %v3753 = vpack.c.bf16 %v3705, %v3689
  %v3754 = vpack.c.bf16 %v3706, %v3690
  %v3755 = vpack.c.bf16 %v3707, %v3691
  %v3756 = vpack.c.bf16 %v3708, %v3692
  %v3757 = vpack.c.bf16 %v3709, %v3693
  %v3758 = vpack.c.bf16 %v3710, %v3694
  %v3759 = vpack.c.bf16 %v3711, %v3695
  %v3760 = vpack.c.bf16 %v3712, %v3696
  %v3761 = vpack.c.bf16 %v3713, %v3697
  %v3762 = vpack.c.bf16 %v3714, %v3698
  %v3763 = vpack.c.bf16 %v3715, %v3699
  %v3764 = vpack.c.bf16 %v3716, %v3700
  %v3765 = vpack.c.bf16 %v3717, %v3701
  %v3766 = vpack.c.bf16 %v3718, %v3702
  %v3767 = vpack.c.bf16 %v3719, %v3703
  %v3768 = vpack.c.bf16 %v3720, %v3704
  %v3769 = vpack.c.bf16 %v3737, %v3721
  %v3770 = vpack.c.bf16 %v3738, %v3722
  %v3771 = vpack.c.bf16 %v3739, %v3723
  %v3772 = vpack.c.bf16 %v3740, %v3724
  %v3773 = vpack.c.bf16 %v3741, %v3725
  %v3774 = vpack.c.bf16 %v3742, %v3726
  %v3775 = vpack.c.bf16 %v3743, %v3727
  %v3776 = vpack.c.bf16 %v3744, %v3728
  %v3777 = vpack.c.bf16 %v3745, %v3729
  %v3778 = vpack.c.bf16 %v3746, %v3730
  %v3779 = vpack.c.bf16 %v3747, %v3731
  %v3780 = vpack.c.bf16 %v3748, %v3732
  %v3781 = vpack.c.bf16 %v3749, %v3733
  %v3782 = vpack.c.bf16 %v3750, %v3734
  %v3783 = vpack.c.bf16 %v3751, %v3735
  %v3784 = vpack.c.bf16 %v3752, %v3736
  %v3785 = vld [vmem:[%s11] sm:$0xf]
  %v3786 = vld [vmem:[%s11 + $0x4] sm:$0xf]
  %v3787 = vld [vmem:[%s11 + $0x8] sm:$0xf]
  %v3788 = vld [vmem:[%s11 + $0xc] sm:$0xf]
  %v3789 = vld [vmem:[%s11 + $0x10] sm:$0xf]
  %v3790 = vld [vmem:[%s11 + $0x14] sm:$0xf]
  %v3791 = vld [vmem:[%s11 + $0x18] sm:$0xf]
  %v3792 = vld [vmem:[%s11 + $0x1c] sm:$0xf]
  %v3793 = vld [vmem:[%s11 + $0x20] sm:$0xf]
  %v3794 = vld [vmem:[%s11 + $0x24] sm:$0xf]
  %v3795 = vld [vmem:[%s11 + $0x28] sm:$0xf]
  %v3796 = vld [vmem:[%s11 + $0x2c] sm:$0xf]
  %v3797 = vld [vmem:[%s11 + $0x30] sm:$0xf]
  %v3798 = vld [vmem:[%s11 + $0x34] sm:$0xf]
  %v3799 = vld [vmem:[%s11 + $0x38] sm:$0xf]
  %v3800 = vld [vmem:[%s11 + $0x3c] sm:$0xf]
  %v3801 = vld [vmem:[%s11 + $0x40] sm:$0xf]
  %v3802 = vld [vmem:[%s11 + $0x44] sm:$0xf]
  %v3803 = vld [vmem:[%s11 + $0x48] sm:$0xf]
  %v3804 = vld [vmem:[%s11 + $0x4c] sm:$0xf]
  %v3805 = vld [vmem:[%s11 + $0x50] sm:$0xf]
  %v3806 = vld [vmem:[%s11 + $0x54] sm:$0xf]
  %v3807 = vld [vmem:[%s11 + $0x58] sm:$0xf]
  %v3808 = vld [vmem:[%s11 + $0x5c] sm:$0xf]
  %v3809 = vld [vmem:[%s11 + $0x60] sm:$0xf]
  %v3810 = vld [vmem:[%s11 + $0x64] sm:$0xf]
  %v3811 = vld [vmem:[%s11 + $0x68] sm:$0xf]
  %v3812 = vld [vmem:[%s11 + $0x6c] sm:$0xf]
  %v3813 = vld [vmem:[%s11 + $0x70] sm:$0xf]
  %v3814 = vld [vmem:[%s11 + $0x74] sm:$0xf]
  %v3815 = vld [vmem:[%s11 + $0x78] sm:$0xf]
  %v3816 = vld [vmem:[%s11 + $0x7c] sm:$0xf]
  %v3817 = vld [vmem:[%s11 + $0x80] sm:$0xf]
  %v3818 = vld [vmem:[%s11 + $0x84] sm:$0xf]
  %v3819 = vld [vmem:[%s11 + $0x88] sm:$0xf]
  %v3820 = vld [vmem:[%s11 + $0x8c] sm:$0xf]
  %v3821 = vld [vmem:[%s11 + $0x90] sm:$0xf]
  %v3822 = vld [vmem:[%s11 + $0x94] sm:$0xf]
  %v3823 = vld [vmem:[%s11 + $0x98] sm:$0xf]
  %v3824 = vld [vmem:[%s11 + $0x9c] sm:$0xf]
  %v3825 = vld [vmem:[%s11 + $0xa0] sm:$0xf]
  %v3826 = vld [vmem:[%s11 + $0xa4] sm:$0xf]
  %v3827 = vld [vmem:[%s11 + $0xa8] sm:$0xf]
  %v3828 = vld [vmem:[%s11 + $0xac] sm:$0xf]
  %v3829 = vld [vmem:[%s11 + $0xb0] sm:$0xf]
  %v3830 = vld [vmem:[%s11 + $0xb4] sm:$0xf]
  %v3831 = vld [vmem:[%s11 + $0xb8] sm:$0xf]
  %v3832 = vld [vmem:[%s11 + $0xbc] sm:$0xf]
  %v3833 = vld [vmem:[%s11 + $0xc0] sm:$0xf]
  %v3834 = vld [vmem:[%s11 + $0xc4] sm:$0xf]
  %v3835 = vld [vmem:[%s11 + $0xc8] sm:$0xf]
  %v3836 = vld [vmem:[%s11 + $0xcc] sm:$0xf]
  %v3837 = vld [vmem:[%s11 + $0xd0] sm:$0xf]
  %v3838 = vld [vmem:[%s11 + $0xd4] sm:$0xf]
  %v3839 = vld [vmem:[%s11 + $0xd8] sm:$0xf]
  %v3840 = vld [vmem:[%s11 + $0xdc] sm:$0xf]
  %v3841 = vld [vmem:[%s11 + $0xe0] sm:$0xf]
  %v3842 = vld [vmem:[%s11 + $0xe4] sm:$0xf]
  %v3843 = vld [vmem:[%s11 + $0xe8] sm:$0xf]
  %v3844 = vld [vmem:[%s11 + $0xec] sm:$0xf]
  %v3845 = vld [vmem:[%s11 + $0xf0] sm:$0xf]
  %v3846 = vld [vmem:[%s11 + $0xf4] sm:$0xf]
  %v3847 = vld [vmem:[%s11 + $0xf8] sm:$0xf]
  %v3848 = vld [vmem:[%s11 + $0xfc] sm:$0xf]
  %v3849 = vld [vmem:[%s11 + $0x100] sm:$0xf]
  %v3850 = vld [vmem:[%s11 + $0x104] sm:$0xf]
  %v3851 = vld [vmem:[%s11 + $0x108] sm:$0xf]
  %v3852 = vld [vmem:[%s11 + $0x10c] sm:$0xf]
  %v3853 = vld [vmem:[%s11 + $0x110] sm:$0xf]
  %v3854 = vld [vmem:[%s11 + $0x114] sm:$0xf]
  %v3855 = vld [vmem:[%s11 + $0x118] sm:$0xf]
  %v3856 = vld [vmem:[%s11 + $0x11c] sm:$0xf]
  %v3857 = vld [vmem:[%s11 + $0x120] sm:$0xf]
  %v3858 = vld [vmem:[%s11 + $0x124] sm:$0xf]
  %v3859 = vld [vmem:[%s11 + $0x128] sm:$0xf]
  %v3860 = vld [vmem:[%s11 + $0x12c] sm:$0xf]
  %v3861 = vld [vmem:[%s11 + $0x130] sm:$0xf]
  %v3862 = vld [vmem:[%s11 + $0x134] sm:$0xf]
  %v3863 = vld [vmem:[%s11 + $0x138] sm:$0xf]
  %v3864 = vld [vmem:[%s11 + $0x13c] sm:$0xf]
  %v3865 = vld [vmem:[%s11 + $0x140] sm:$0xf]
  %v3866 = vld [vmem:[%s11 + $0x144] sm:$0xf]
  %v3867 = vld [vmem:[%s11 + $0x148] sm:$0xf]
  %v3868 = vld [vmem:[%s11 + $0x14c] sm:$0xf]
  %v3869 = vld [vmem:[%s11 + $0x150] sm:$0xf]
  %v3870 = vld [vmem:[%s11 + $0x154] sm:$0xf]
  %v3871 = vld [vmem:[%s11 + $0x158] sm:$0xf]
  %v3872 = vld [vmem:[%s11 + $0x15c] sm:$0xf]
  %v3873 = vld [vmem:[%s11 + $0x160] sm:$0xf]
  %v3874 = vld [vmem:[%s11 + $0x164] sm:$0xf]
  %v3875 = vld [vmem:[%s11 + $0x168] sm:$0xf]
  %v3876 = vld [vmem:[%s11 + $0x16c] sm:$0xf]
  %v3877 = vld [vmem:[%s11 + $0x170] sm:$0xf]
  %v3878 = vld [vmem:[%s11 + $0x174] sm:$0xf]
  %v3879 = vld [vmem:[%s11 + $0x178] sm:$0xf]
  %v3880 = vld [vmem:[%s11 + $0x17c] sm:$0xf]
  %v3881 = vld [vmem:[%s11 + $0x180] sm:$0xf]
  %v3882 = vld [vmem:[%s11 + $0x184] sm:$0xf]
  %v3883 = vld [vmem:[%s11 + $0x188] sm:$0xf]
  %v3884 = vld [vmem:[%s11 + $0x18c] sm:$0xf]
  %v3885 = vld [vmem:[%s11 + $0x190] sm:$0xf]
  %v3886 = vld [vmem:[%s11 + $0x194] sm:$0xf]
  %v3887 = vld [vmem:[%s11 + $0x198] sm:$0xf]
  %v3888 = vld [vmem:[%s11 + $0x19c] sm:$0xf]
  %v3889 = vld [vmem:[%s11 + $0x1a0] sm:$0xf]
  %v3890 = vld [vmem:[%s11 + $0x1a4] sm:$0xf]
  %v3891 = vld [vmem:[%s11 + $0x1a8] sm:$0xf]
  %v3892 = vld [vmem:[%s11 + $0x1ac] sm:$0xf]
  %v3893 = vld [vmem:[%s11 + $0x1b0] sm:$0xf]
  %v3894 = vld [vmem:[%s11 + $0x1b4] sm:$0xf]
  %v3895 = vld [vmem:[%s11 + $0x1b8] sm:$0xf]
  %v3896 = vld [vmem:[%s11 + $0x1bc] sm:$0xf]
  %v3897 = vld [vmem:[%s11 + $0x1c0] sm:$0xf]
  %v3898 = vld [vmem:[%s11 + $0x1c4] sm:$0xf]
  %v3899 = vld [vmem:[%s11 + $0x1c8] sm:$0xf]
  %v3900 = vld [vmem:[%s11 + $0x1cc] sm:$0xf]
  %v3901 = vld [vmem:[%s11 + $0x1d0] sm:$0xf]
  %v3902 = vld [vmem:[%s11 + $0x1d4] sm:$0xf]
  %v3903 = vld [vmem:[%s11 + $0x1d8] sm:$0xf]
  %v3904 = vld [vmem:[%s11 + $0x1dc] sm:$0xf]
  %v3905 = vld [vmem:[%s11 + $0x1e0] sm:$0xf]
  %v3906 = vld [vmem:[%s11 + $0x1e4] sm:$0xf]
  %v3907 = vld [vmem:[%s11 + $0x1e8] sm:$0xf]
  %v3908 = vld [vmem:[%s11 + $0x1ec] sm:$0xf]
  %v3909 = vld [vmem:[%s11 + $0x1f0] sm:$0xf]
  %v3910 = vld [vmem:[%s11 + $0x1f4] sm:$0xf]
  %v3911 = vld [vmem:[%s11 + $0x1f8] sm:$0xf]
  %v3912 = vld [vmem:[%s11 + $0x1fc] sm:$0xf]
  %v3913 = vld [vmem:[%s11 + $0x200] sm:$0xf]
  %v3914 = vld [vmem:[%s11 + $0x204] sm:$0xf]
  %v3915 = vld [vmem:[%s11 + $0x208] sm:$0xf]
  %v3916 = vld [vmem:[%s11 + $0x20c] sm:$0xf]
  %v3917 = vld [vmem:[%s11 + $0x210] sm:$0xf]
  %v3918 = vld [vmem:[%s11 + $0x214] sm:$0xf]
  %v3919 = vld [vmem:[%s11 + $0x218] sm:$0xf]
  %v3920 = vld [vmem:[%s11 + $0x21c] sm:$0xf]
  %v3921 = vld [vmem:[%s11 + $0x220] sm:$0xf]
  %v3922 = vld [vmem:[%s11 + $0x224] sm:$0xf]
  %v3923 = vld [vmem:[%s11 + $0x228] sm:$0xf]
  %v3924 = vld [vmem:[%s11 + $0x22c] sm:$0xf]
  %v3925 = vld [vmem:[%s11 + $0x230] sm:$0xf]
  %v3926 = vld [vmem:[%s11 + $0x234] sm:$0xf]
  %v3927 = vld [vmem:[%s11 + $0x238] sm:$0xf]
  %v3928 = vld [vmem:[%s11 + $0x23c] sm:$0xf]
  %v3929 = vld [vmem:[%s11 + $0x240] sm:$0xf]
  %v3930 = vld [vmem:[%s11 + $0x244] sm:$0xf]
  %v3931 = vld [vmem:[%s11 + $0x248] sm:$0xf]
  %v3932 = vld [vmem:[%s11 + $0x24c] sm:$0xf]
  %v3933 = vld [vmem:[%s11 + $0x250] sm:$0xf]
  %v3934 = vld [vmem:[%s11 + $0x254] sm:$0xf]
  %v3935 = vld [vmem:[%s11 + $0x258] sm:$0xf]
  %v3936 = vld [vmem:[%s11 + $0x25c] sm:$0xf]
  %v3937 = vld [vmem:[%s11 + $0x260] sm:$0xf]
  %v3938 = vld [vmem:[%s11 + $0x264] sm:$0xf]
  %v3939 = vld [vmem:[%s11 + $0x268] sm:$0xf]
  %v3940 = vld [vmem:[%s11 + $0x26c] sm:$0xf]
  %v3941 = vld [vmem:[%s11 + $0x270] sm:$0xf]
  %v3942 = vld [vmem:[%s11 + $0x274] sm:$0xf]
  %v3943 = vld [vmem:[%s11 + $0x278] sm:$0xf]
  %v3944 = vld [vmem:[%s11 + $0x27c] sm:$0xf]
  %v3945 = vld [vmem:[%s11 + $0x280] sm:$0xf]
  %v3946 = vld [vmem:[%s11 + $0x284] sm:$0xf]
  %v3947 = vld [vmem:[%s11 + $0x288] sm:$0xf]
  %v3948 = vld [vmem:[%s11 + $0x28c] sm:$0xf]
  %v3949 = vld [vmem:[%s11 + $0x290] sm:$0xf]
  %v3950 = vld [vmem:[%s11 + $0x294] sm:$0xf]
  %v3951 = vld [vmem:[%s11 + $0x298] sm:$0xf]
  %v3952 = vld [vmem:[%s11 + $0x29c] sm:$0xf]
  %v3953 = vld [vmem:[%s11 + $0x2a0] sm:$0xf]
  %v3954 = vld [vmem:[%s11 + $0x2a4] sm:$0xf]
  %v3955 = vld [vmem:[%s11 + $0x2a8] sm:$0xf]
  %v3956 = vld [vmem:[%s11 + $0x2ac] sm:$0xf]
  %v3957 = vld [vmem:[%s11 + $0x2b0] sm:$0xf]
  %v3958 = vld [vmem:[%s11 + $0x2b4] sm:$0xf]
  %v3959 = vld [vmem:[%s11 + $0x2b8] sm:$0xf]
  %v3960 = vld [vmem:[%s11 + $0x2bc] sm:$0xf]
  %v3961 = vld [vmem:[%s11 + $0x2c0] sm:$0xf]
  %v3962 = vld [vmem:[%s11 + $0x2c4] sm:$0xf]
  %v3963 = vld [vmem:[%s11 + $0x2c8] sm:$0xf]
  %v3964 = vld [vmem:[%s11 + $0x2cc] sm:$0xf]
  %v3965 = vld [vmem:[%s11 + $0x2d0] sm:$0xf]
  %v3966 = vld [vmem:[%s11 + $0x2d4] sm:$0xf]
  %v3967 = vld [vmem:[%s11 + $0x2d8] sm:$0xf]
  %v3968 = vld [vmem:[%s11 + $0x2dc] sm:$0xf]
  %v3969 = vld [vmem:[%s11 + $0x2e0] sm:$0xf]
  %v3970 = vld [vmem:[%s11 + $0x2e4] sm:$0xf]
  %v3971 = vld [vmem:[%s11 + $0x2e8] sm:$0xf]
  %v3972 = vld [vmem:[%s11 + $0x2ec] sm:$0xf]
  %v3973 = vld [vmem:[%s11 + $0x2f0] sm:$0xf]
  %v3974 = vld [vmem:[%s11 + $0x2f4] sm:$0xf]
  %v3975 = vld [vmem:[%s11 + $0x2f8] sm:$0xf]
  %v3976 = vld [vmem:[%s11 + $0x2fc] sm:$0xf]
  %v3977 = vld [vmem:[%s11 + $0x300] sm:$0xf]
  %v3978 = vld [vmem:[%s11 + $0x304] sm:$0xf]
  %v3979 = vld [vmem:[%s11 + $0x308] sm:$0xf]
  %v3980 = vld [vmem:[%s11 + $0x30c] sm:$0xf]
  %v3981 = vld [vmem:[%s11 + $0x310] sm:$0xf]
  %v3982 = vld [vmem:[%s11 + $0x314] sm:$0xf]
  %v3983 = vld [vmem:[%s11 + $0x318] sm:$0xf]
  %v3984 = vld [vmem:[%s11 + $0x31c] sm:$0xf]
  %v3985 = vld [vmem:[%s11 + $0x320] sm:$0xf]
  %v3986 = vld [vmem:[%s11 + $0x324] sm:$0xf]
  %v3987 = vld [vmem:[%s11 + $0x328] sm:$0xf]
  %v3988 = vld [vmem:[%s11 + $0x32c] sm:$0xf]
  %v3989 = vld [vmem:[%s11 + $0x330] sm:$0xf]
  %v3990 = vld [vmem:[%s11 + $0x334] sm:$0xf]
  %v3991 = vld [vmem:[%s11 + $0x338] sm:$0xf]
  %v3992 = vld [vmem:[%s11 + $0x33c] sm:$0xf]
  %v3993 = vld [vmem:[%s11 + $0x340] sm:$0xf]
  %v3994 = vld [vmem:[%s11 + $0x344] sm:$0xf]
  %v3995 = vld [vmem:[%s11 + $0x348] sm:$0xf]
  %v3996 = vld [vmem:[%s11 + $0x34c] sm:$0xf]
  %v3997 = vld [vmem:[%s11 + $0x350] sm:$0xf]
  %v3998 = vld [vmem:[%s11 + $0x354] sm:$0xf]
  %v3999 = vld [vmem:[%s11 + $0x358] sm:$0xf]
  %v4000 = vld [vmem:[%s11 + $0x35c] sm:$0xf]
  %v4001 = vld [vmem:[%s11 + $0x360] sm:$0xf]
  %v4002 = vld [vmem:[%s11 + $0x364] sm:$0xf]
  %v4003 = vld [vmem:[%s11 + $0x368] sm:$0xf]
  %v4004 = vld [vmem:[%s11 + $0x36c] sm:$0xf]
  %v4005 = vld [vmem:[%s11 + $0x370] sm:$0xf]
  %v4006 = vld [vmem:[%s11 + $0x374] sm:$0xf]
  %v4007 = vld [vmem:[%s11 + $0x378] sm:$0xf]
  %v4008 = vld [vmem:[%s11 + $0x37c] sm:$0xf]
  %v4009 = vld [vmem:[%s11 + $0x380] sm:$0xf]
  %v4010 = vld [vmem:[%s11 + $0x384] sm:$0xf]
  %v4011 = vld [vmem:[%s11 + $0x388] sm:$0xf]
  %v4012 = vld [vmem:[%s11 + $0x38c] sm:$0xf]
  %v4013 = vld [vmem:[%s11 + $0x390] sm:$0xf]
  %v4014 = vld [vmem:[%s11 + $0x394] sm:$0xf]
  %v4015 = vld [vmem:[%s11 + $0x398] sm:$0xf]
  %v4016 = vld [vmem:[%s11 + $0x39c] sm:$0xf]
  %v4017 = vld [vmem:[%s11 + $0x3a0] sm:$0xf]
  %v4018 = vld [vmem:[%s11 + $0x3a4] sm:$0xf]
  %v4019 = vld [vmem:[%s11 + $0x3a8] sm:$0xf]
  %v4020 = vld [vmem:[%s11 + $0x3ac] sm:$0xf]
  %v4021 = vld [vmem:[%s11 + $0x3b0] sm:$0xf]
  %v4022 = vld [vmem:[%s11 + $0x3b4] sm:$0xf]
  %v4023 = vld [vmem:[%s11 + $0x3b8] sm:$0xf]
  %v4024 = vld [vmem:[%s11 + $0x3bc] sm:$0xf]
  %v4025 = vld [vmem:[%s11 + $0x3c0] sm:$0xf]
  %v4026 = vld [vmem:[%s11 + $0x3c4] sm:$0xf]
  %v4027 = vld [vmem:[%s11 + $0x3c8] sm:$0xf]
  %v4028 = vld [vmem:[%s11 + $0x3cc] sm:$0xf]
  %v4029 = vld [vmem:[%s11 + $0x3d0] sm:$0xf]
  %v4030 = vld [vmem:[%s11 + $0x3d4] sm:$0xf]
  %v4031 = vld [vmem:[%s11 + $0x3d8] sm:$0xf]
  %v4032 = vld [vmem:[%s11 + $0x3dc] sm:$0xf]
  %v4033 = vld [vmem:[%s11 + $0x3e0] sm:$0xf]
  %v4034 = vld [vmem:[%s11 + $0x3e4] sm:$0xf]
  %v4035 = vld [vmem:[%s11 + $0x3e8] sm:$0xf]
  %v4036 = vld [vmem:[%s11 + $0x3ec] sm:$0xf]
  %v4037 = vld [vmem:[%s11 + $0x3f0] sm:$0xf]
  %v4038 = vld [vmem:[%s11 + $0x3f4] sm:$0xf]
  %v4039 = vld [vmem:[%s11 + $0x3f8] sm:$0xf]
  %v4040 = vld [vmem:[%s11 + $0x3fc] sm:$0xf]
  %v4041 = vld [vmem:[%s12] sm:$0x1]
  %v4043 = vlaneseq
  %v4044 = vshrl.u32 %v4043, 7
  %v4045 = vsub.s32 0, %v4044
  %v4046 = vrot.slane %v4041, %v4045
  %v4304 = vunpack.c.l.b16 %v3785
  %v4305 = vunpack.c.l.b16 %v3786
  %v4306 = vunpack.c.l.b16 %v3787
  %v4307 = vunpack.c.l.b16 %v3788
  %v4308 = vunpack.c.l.b16 %v3789
  %v4309 = vunpack.c.l.b16 %v3790
  %v4310 = vunpack.c.l.b16 %v3791
  %v4311 = vunpack.c.l.b16 %v3792
  %v4312 = vunpack.c.l.b16 %v3793
  %v4313 = vunpack.c.l.b16 %v3794
  %v4314 = vunpack.c.l.b16 %v3795
  %v4315 = vunpack.c.l.b16 %v3796
  %v4316 = vunpack.c.l.b16 %v3797
  %v4317 = vunpack.c.l.b16 %v3798
  %v4318 = vunpack.c.l.b16 %v3799
  %v4319 = vunpack.c.l.b16 %v3800
  %v4320 = vunpack.c.l.b16 %v3801
  %v4321 = vunpack.c.l.b16 %v3802
  %v4322 = vunpack.c.l.b16 %v3803
  %v4323 = vunpack.c.l.b16 %v3804
  %v4324 = vunpack.c.l.b16 %v3805
  %v4325 = vunpack.c.l.b16 %v3806
  %v4326 = vunpack.c.l.b16 %v3807
  %v4327 = vunpack.c.l.b16 %v3808
  %v4328 = vunpack.c.l.b16 %v3809
  %v4329 = vunpack.c.l.b16 %v3810
  %v4330 = vunpack.c.l.b16 %v3811
  %v4331 = vunpack.c.l.b16 %v3812
  %v4332 = vunpack.c.l.b16 %v3813
  %v4333 = vunpack.c.l.b16 %v3814
  %v4334 = vunpack.c.l.b16 %v3815
  %v4335 = vunpack.c.l.b16 %v3816
  %v4336 = vunpack.c.l.b16 %v3817
  %v4337 = vunpack.c.l.b16 %v3818
  %v4338 = vunpack.c.l.b16 %v3819
  %v4339 = vunpack.c.l.b16 %v3820
  %v4340 = vunpack.c.l.b16 %v3821
  %v4341 = vunpack.c.l.b16 %v3822
  %v4342 = vunpack.c.l.b16 %v3823
  %v4343 = vunpack.c.l.b16 %v3824
  %v4344 = vunpack.c.l.b16 %v3825
  %v4345 = vunpack.c.l.b16 %v3826
  %v4346 = vunpack.c.l.b16 %v3827
  %v4347 = vunpack.c.l.b16 %v3828
  %v4348 = vunpack.c.l.b16 %v3829
  %v4349 = vunpack.c.l.b16 %v3830
  %v4350 = vunpack.c.l.b16 %v3831
  %v4351 = vunpack.c.l.b16 %v3832
  %v4352 = vunpack.c.l.b16 %v3833
  %v4353 = vunpack.c.l.b16 %v3834
  %v4354 = vunpack.c.l.b16 %v3835
  %v4355 = vunpack.c.l.b16 %v3836
  %v4356 = vunpack.c.l.b16 %v3837
  %v4357 = vunpack.c.l.b16 %v3838
  %v4358 = vunpack.c.l.b16 %v3839
  %v4359 = vunpack.c.l.b16 %v3840
  %v4360 = vunpack.c.l.b16 %v3841
  %v4361 = vunpack.c.l.b16 %v3842
  %v4362 = vunpack.c.l.b16 %v3843
  %v4363 = vunpack.c.l.b16 %v3844
  %v4364 = vunpack.c.l.b16 %v3845
  %v4365 = vunpack.c.l.b16 %v3846
  %v4366 = vunpack.c.l.b16 %v3847
  %v4367 = vunpack.c.l.b16 %v3848
  %v4368 = vunpack.c.l.b16 %v3849
  %v4369 = vunpack.c.l.b16 %v3850
  %v4370 = vunpack.c.l.b16 %v3851
  %v4371 = vunpack.c.l.b16 %v3852
  %v4372 = vunpack.c.l.b16 %v3853
  %v4373 = vunpack.c.l.b16 %v3854
  %v4374 = vunpack.c.l.b16 %v3855
  %v4375 = vunpack.c.l.b16 %v3856
  %v4376 = vunpack.c.l.b16 %v3857
  %v4377 = vunpack.c.l.b16 %v3858
  %v4378 = vunpack.c.l.b16 %v3859
  %v4379 = vunpack.c.l.b16 %v3860
  %v4380 = vunpack.c.l.b16 %v3861
  %v4381 = vunpack.c.l.b16 %v3862
  %v4382 = vunpack.c.l.b16 %v3863
  %v4383 = vunpack.c.l.b16 %v3864
  %v4384 = vunpack.c.l.b16 %v3865
  %v4385 = vunpack.c.l.b16 %v3866
  %v4386 = vunpack.c.l.b16 %v3867
  %v4387 = vunpack.c.l.b16 %v3868
  %v4388 = vunpack.c.l.b16 %v3869
  %v4389 = vunpack.c.l.b16 %v3870
  %v4390 = vunpack.c.l.b16 %v3871
  %v4391 = vunpack.c.l.b16 %v3872
  %v4392 = vunpack.c.l.b16 %v3873
  %v4393 = vunpack.c.l.b16 %v3874
  %v4394 = vunpack.c.l.b16 %v3875
  %v4395 = vunpack.c.l.b16 %v3876
  %v4396 = vunpack.c.l.b16 %v3877
  %v4397 = vunpack.c.l.b16 %v3878
  %v4398 = vunpack.c.l.b16 %v3879
  %v4399 = vunpack.c.l.b16 %v3880
  %v4400 = vunpack.c.l.b16 %v3881
  %v4401 = vunpack.c.l.b16 %v3882
  %v4402 = vunpack.c.l.b16 %v3883
  %v4403 = vunpack.c.l.b16 %v3884
  %v4404 = vunpack.c.l.b16 %v3885
  %v4405 = vunpack.c.l.b16 %v3886
  %v4406 = vunpack.c.l.b16 %v3887
  %v4407 = vunpack.c.l.b16 %v3888
  %v4408 = vunpack.c.l.b16 %v3889
  %v4409 = vunpack.c.l.b16 %v3890
  %v4410 = vunpack.c.l.b16 %v3891
  %v4411 = vunpack.c.l.b16 %v3892
  %v4412 = vunpack.c.l.b16 %v3893
  %v4413 = vunpack.c.l.b16 %v3894
  %v4414 = vunpack.c.l.b16 %v3895
  %v4415 = vunpack.c.l.b16 %v3896
  %v4416 = vunpack.c.l.b16 %v3897
  %v4417 = vunpack.c.l.b16 %v3898
  %v4418 = vunpack.c.l.b16 %v3899
  %v4419 = vunpack.c.l.b16 %v3900
  %v4420 = vunpack.c.l.b16 %v3901
  %v4421 = vunpack.c.l.b16 %v3902
  %v4422 = vunpack.c.l.b16 %v3903
  %v4423 = vunpack.c.l.b16 %v3904
  %v4424 = vunpack.c.l.b16 %v3905
  %v4425 = vunpack.c.l.b16 %v3906
  %v4426 = vunpack.c.l.b16 %v3907
  %v4427 = vunpack.c.l.b16 %v3908
  %v4428 = vunpack.c.l.b16 %v3909
  %v4429 = vunpack.c.l.b16 %v3910
  %v4430 = vunpack.c.l.b16 %v3911
  %v4431 = vunpack.c.l.b16 %v3912
  %v4432 = vunpack.c.l.b16 %v3913
  %v4433 = vunpack.c.l.b16 %v3914
  %v4434 = vunpack.c.l.b16 %v3915
  %v4435 = vunpack.c.l.b16 %v3916
  %v4436 = vunpack.c.l.b16 %v3917
  %v4437 = vunpack.c.l.b16 %v3918
  %v4438 = vunpack.c.l.b16 %v3919
  %v4439 = vunpack.c.l.b16 %v3920
  %v4440 = vunpack.c.l.b16 %v3921
  %v4441 = vunpack.c.l.b16 %v3922
  %v4442 = vunpack.c.l.b16 %v3923
  %v4443 = vunpack.c.l.b16 %v3924
  %v4444 = vunpack.c.l.b16 %v3925
  %v4445 = vunpack.c.l.b16 %v3926
  %v4446 = vunpack.c.l.b16 %v3927
  %v4447 = vunpack.c.l.b16 %v3928
  %v4448 = vunpack.c.l.b16 %v3929
  %v4449 = vunpack.c.l.b16 %v3930
  %v4450 = vunpack.c.l.b16 %v3931
  %v4451 = vunpack.c.l.b16 %v3932
  %v4452 = vunpack.c.l.b16 %v3933
  %v4453 = vunpack.c.l.b16 %v3934
  %v4454 = vunpack.c.l.b16 %v3935
  %v4455 = vunpack.c.l.b16 %v3936
  %v4456 = vunpack.c.l.b16 %v3937
  %v4457 = vunpack.c.l.b16 %v3938
  %v4458 = vunpack.c.l.b16 %v3939
  %v4459 = vunpack.c.l.b16 %v3940
  %v4460 = vunpack.c.l.b16 %v3941
  %v4461 = vunpack.c.l.b16 %v3942
  %v4462 = vunpack.c.l.b16 %v3943
  %v4463 = vunpack.c.l.b16 %v3944
  %v4464 = vunpack.c.l.b16 %v3945
  %v4465 = vunpack.c.l.b16 %v3946
  %v4466 = vunpack.c.l.b16 %v3947
  %v4467 = vunpack.c.l.b16 %v3948
  %v4468 = vunpack.c.l.b16 %v3949
  %v4469 = vunpack.c.l.b16 %v3950
  %v4470 = vunpack.c.l.b16 %v3951
  %v4471 = vunpack.c.l.b16 %v3952
  %v4472 = vunpack.c.l.b16 %v3953
  %v4473 = vunpack.c.l.b16 %v3954
  %v4474 = vunpack.c.l.b16 %v3955
  %v4475 = vunpack.c.l.b16 %v3956
  %v4476 = vunpack.c.l.b16 %v3957
  %v4477 = vunpack.c.l.b16 %v3958
  %v4478 = vunpack.c.l.b16 %v3959
  %v4479 = vunpack.c.l.b16 %v3960
  %v4480 = vunpack.c.l.b16 %v3961
  %v4481 = vunpack.c.l.b16 %v3962
  %v4482 = vunpack.c.l.b16 %v3963
  %v4483 = vunpack.c.l.b16 %v3964
  %v4484 = vunpack.c.l.b16 %v3965
  %v4485 = vunpack.c.l.b16 %v3966
  %v4486 = vunpack.c.l.b16 %v3967
  %v4487 = vunpack.c.l.b16 %v3968
  %v4488 = vunpack.c.l.b16 %v3969
  %v4489 = vunpack.c.l.b16 %v3970
  %v4490 = vunpack.c.l.b16 %v3971
  %v4491 = vunpack.c.l.b16 %v3972
  %v4492 = vunpack.c.l.b16 %v3973
  %v4493 = vunpack.c.l.b16 %v3974
  %v4494 = vunpack.c.l.b16 %v3975
  %v4495 = vunpack.c.l.b16 %v3976
  %v4496 = vunpack.c.l.b16 %v3977
  %v4497 = vunpack.c.l.b16 %v3978
  %v4498 = vunpack.c.l.b16 %v3979
  %v4499 = vunpack.c.l.b16 %v3980
  %v4500 = vunpack.c.l.b16 %v3981
  %v4501 = vunpack.c.l.b16 %v3982
  %v4502 = vunpack.c.l.b16 %v3983
  %v4503 = vunpack.c.l.b16 %v3984
  %v4504 = vunpack.c.l.b16 %v3985
  %v4505 = vunpack.c.l.b16 %v3986
  %v4506 = vunpack.c.l.b16 %v3987
  %v4507 = vunpack.c.l.b16 %v3988
  %v4508 = vunpack.c.l.b16 %v3989
  %v4509 = vunpack.c.l.b16 %v3990
  %v4510 = vunpack.c.l.b16 %v3991
  %v4511 = vunpack.c.l.b16 %v3992
  %v4512 = vunpack.c.l.b16 %v3993
  %v4513 = vunpack.c.l.b16 %v3994
  %v4514 = vunpack.c.l.b16 %v3995
  %v4515 = vunpack.c.l.b16 %v3996
  %v4516 = vunpack.c.l.b16 %v3997
  %v4517 = vunpack.c.l.b16 %v3998
  %v4518 = vunpack.c.l.b16 %v3999
  %v4519 = vunpack.c.l.b16 %v4000
  %v4520 = vunpack.c.l.b16 %v4001
  %v4521 = vunpack.c.l.b16 %v4002
  %v4522 = vunpack.c.l.b16 %v4003
  %v4523 = vunpack.c.l.b16 %v4004
  %v4524 = vunpack.c.l.b16 %v4005
  %v4525 = vunpack.c.l.b16 %v4006
  %v4526 = vunpack.c.l.b16 %v4007
  %v4527 = vunpack.c.l.b16 %v4008
  %v4528 = vunpack.c.l.b16 %v4009
  %v4529 = vunpack.c.l.b16 %v4010
  %v4530 = vunpack.c.l.b16 %v4011
  %v4531 = vunpack.c.l.b16 %v4012
  %v4532 = vunpack.c.l.b16 %v4013
  %v4533 = vunpack.c.l.b16 %v4014
  %v4534 = vunpack.c.l.b16 %v4015
  %v4535 = vunpack.c.l.b16 %v4016
  %v4536 = vunpack.c.l.b16 %v4017
  %v4537 = vunpack.c.l.b16 %v4018
  %v4538 = vunpack.c.l.b16 %v4019
  %v4539 = vunpack.c.l.b16 %v4020
  %v4540 = vunpack.c.l.b16 %v4021
  %v4541 = vunpack.c.l.b16 %v4022
  %v4542 = vunpack.c.l.b16 %v4023
  %v4543 = vunpack.c.l.b16 %v4024
  %v4544 = vunpack.c.l.b16 %v4025
  %v4545 = vunpack.c.l.b16 %v4026
  %v4546 = vunpack.c.l.b16 %v4027
  %v4547 = vunpack.c.l.b16 %v4028
  %v4548 = vunpack.c.l.b16 %v4029
  %v4549 = vunpack.c.l.b16 %v4030
  %v4550 = vunpack.c.l.b16 %v4031
  %v4551 = vunpack.c.l.b16 %v4032
  %v4552 = vunpack.c.l.b16 %v4033
  %v4553 = vunpack.c.l.b16 %v4034
  %v4554 = vunpack.c.l.b16 %v4035
  %v4555 = vunpack.c.l.b16 %v4036
  %v4556 = vunpack.c.l.b16 %v4037
  %v4557 = vunpack.c.l.b16 %v4038
  %v4558 = vunpack.c.l.b16 %v4039
  %v4559 = vunpack.c.l.b16 %v4040
  %v4560 = vpack.c.b16 %v4305, %v4304
  %v4561 = vpack.c.b16 %v4307, %v4306
  %v4562 = vpack.c.b16 %v4309, %v4308
  %v4563 = vpack.c.b16 %v4311, %v4310
  %v4564 = vpack.c.b16 %v4313, %v4312
  %v4565 = vpack.c.b16 %v4315, %v4314
  %v4566 = vpack.c.b16 %v4317, %v4316
  %v4567 = vpack.c.b16 %v4319, %v4318
  %v4568 = vpack.c.b16 %v4321, %v4320
  %v4569 = vpack.c.b16 %v4323, %v4322
  %v4570 = vpack.c.b16 %v4325, %v4324
  %v4571 = vpack.c.b16 %v4327, %v4326
  %v4572 = vpack.c.b16 %v4329, %v4328
  %v4573 = vpack.c.b16 %v4331, %v4330
  %v4574 = vpack.c.b16 %v4333, %v4332
  %v4575 = vpack.c.b16 %v4335, %v4334
  %v4576 = vpack.c.b16 %v4337, %v4336
  %v4577 = vpack.c.b16 %v4339, %v4338
  %v4578 = vpack.c.b16 %v4341, %v4340
  %v4579 = vpack.c.b16 %v4343, %v4342
  %v4580 = vpack.c.b16 %v4345, %v4344
  %v4581 = vpack.c.b16 %v4347, %v4346
  %v4582 = vpack.c.b16 %v4349, %v4348
  %v4583 = vpack.c.b16 %v4351, %v4350
  %v4584 = vpack.c.b16 %v4353, %v4352
  %v4585 = vpack.c.b16 %v4355, %v4354
  %v4586 = vpack.c.b16 %v4357, %v4356
  %v4587 = vpack.c.b16 %v4359, %v4358
  %v4588 = vpack.c.b16 %v4361, %v4360
  %v4589 = vpack.c.b16 %v4363, %v4362
  %v4590 = vpack.c.b16 %v4365, %v4364
  %v4591 = vpack.c.b16 %v4367, %v4366
  %v4592 = vpack.c.b16 %v4369, %v4368
  %v4593 = vpack.c.b16 %v4371, %v4370
  %v4594 = vpack.c.b16 %v4373, %v4372
  %v4595 = vpack.c.b16 %v4375, %v4374
  %v4596 = vpack.c.b16 %v4377, %v4376
  %v4597 = vpack.c.b16 %v4379, %v4378
  %v4598 = vpack.c.b16 %v4381, %v4380
  %v4599 = vpack.c.b16 %v4383, %v4382
  %v4600 = vpack.c.b16 %v4385, %v4384
  %v4601 = vpack.c.b16 %v4387, %v4386
  %v4602 = vpack.c.b16 %v4389, %v4388
  %v4603 = vpack.c.b16 %v4391, %v4390
  %v4604 = vpack.c.b16 %v4393, %v4392
  %v4605 = vpack.c.b16 %v4395, %v4394
  %v4606 = vpack.c.b16 %v4397, %v4396
  %v4607 = vpack.c.b16 %v4399, %v4398
  %v4608 = vpack.c.b16 %v4401, %v4400
  %v4609 = vpack.c.b16 %v4403, %v4402
  %v4610 = vpack.c.b16 %v4405, %v4404
  %v4611 = vpack.c.b16 %v4407, %v4406
  %v4612 = vpack.c.b16 %v4409, %v4408
  %v4613 = vpack.c.b16 %v4411, %v4410
  %v4614 = vpack.c.b16 %v4413, %v4412
  %v4615 = vpack.c.b16 %v4415, %v4414
  %v4616 = vpack.c.b16 %v4417, %v4416
  %v4617 = vpack.c.b16 %v4419, %v4418
  %v4618 = vpack.c.b16 %v4421, %v4420
  %v4619 = vpack.c.b16 %v4423, %v4422
  %v4620 = vpack.c.b16 %v4425, %v4424
  %v4621 = vpack.c.b16 %v4427, %v4426
  %v4622 = vpack.c.b16 %v4429, %v4428
  %v4623 = vpack.c.b16 %v4431, %v4430
  %v4624 = vpack.c.b16 %v4433, %v4432
  %v4625 = vpack.c.b16 %v4435, %v4434
  %v4626 = vpack.c.b16 %v4437, %v4436
  %v4627 = vpack.c.b16 %v4439, %v4438
  %v4628 = vpack.c.b16 %v4441, %v4440
  %v4629 = vpack.c.b16 %v4443, %v4442
  %v4630 = vpack.c.b16 %v4445, %v4444
  %v4631 = vpack.c.b16 %v4447, %v4446
  %v4632 = vpack.c.b16 %v4449, %v4448
  %v4633 = vpack.c.b16 %v4451, %v4450
  %v4634 = vpack.c.b16 %v4453, %v4452
  %v4635 = vpack.c.b16 %v4455, %v4454
  %v4636 = vpack.c.b16 %v4457, %v4456
  %v4637 = vpack.c.b16 %v4459, %v4458
  %v4638 = vpack.c.b16 %v4461, %v4460
  %v4639 = vpack.c.b16 %v4463, %v4462
  %v4640 = vpack.c.b16 %v4465, %v4464
  %v4641 = vpack.c.b16 %v4467, %v4466
  %v4642 = vpack.c.b16 %v4469, %v4468
  %v4643 = vpack.c.b16 %v4471, %v4470
  %v4644 = vpack.c.b16 %v4473, %v4472
  %v4645 = vpack.c.b16 %v4475, %v4474
  %v4646 = vpack.c.b16 %v4477, %v4476
  %v4647 = vpack.c.b16 %v4479, %v4478
  %v4648 = vpack.c.b16 %v4481, %v4480
  %v4649 = vpack.c.b16 %v4483, %v4482
  %v4650 = vpack.c.b16 %v4485, %v4484
  %v4651 = vpack.c.b16 %v4487, %v4486
  %v4652 = vpack.c.b16 %v4489, %v4488
  %v4653 = vpack.c.b16 %v4491, %v4490
  %v4654 = vpack.c.b16 %v4493, %v4492
  %v4655 = vpack.c.b16 %v4495, %v4494
  %v4656 = vpack.c.b16 %v4497, %v4496
  %v4657 = vpack.c.b16 %v4499, %v4498
  %v4658 = vpack.c.b16 %v4501, %v4500
  %v4659 = vpack.c.b16 %v4503, %v4502
  %v4660 = vpack.c.b16 %v4505, %v4504
  %v4661 = vpack.c.b16 %v4507, %v4506
  %v4662 = vpack.c.b16 %v4509, %v4508
  %v4663 = vpack.c.b16 %v4511, %v4510
  %v4664 = vpack.c.b16 %v4513, %v4512
  %v4665 = vpack.c.b16 %v4515, %v4514
  %v4666 = vpack.c.b16 %v4517, %v4516
  %v4667 = vpack.c.b16 %v4519, %v4518
  %v4668 = vpack.c.b16 %v4521, %v4520
  %v4669 = vpack.c.b16 %v4523, %v4522
  %v4670 = vpack.c.b16 %v4525, %v4524
  %v4671 = vpack.c.b16 %v4527, %v4526
  %v4672 = vpack.c.b16 %v4529, %v4528
  %v4673 = vpack.c.b16 %v4531, %v4530
  %v4674 = vpack.c.b16 %v4533, %v4532
  %v4675 = vpack.c.b16 %v4535, %v4534
  %v4676 = vpack.c.b16 %v4537, %v4536
  %v4677 = vpack.c.b16 %v4539, %v4538
  %v4678 = vpack.c.b16 %v4541, %v4540
  %v4679 = vpack.c.b16 %v4543, %v4542
  %v4680 = vpack.c.b16 %v4545, %v4544
  %v4681 = vpack.c.b16 %v4547, %v4546
  %v4682 = vpack.c.b16 %v4549, %v4548
  %v4683 = vpack.c.b16 %v4551, %v4550
  %v4684 = vpack.c.b16 %v4553, %v4552
  %v4685 = vpack.c.b16 %v4555, %v4554
  %v4686 = vpack.c.b16 %v4557, %v4556
  %v4687 = vpack.c.b16 %v4559, %v4558
  %4816 = vmatprep.subr.bf16.mxu0 0
  %4817 = vmatpush1.bf16.msra.mxu0 %v4567
  %4818 = vmatprep.subr.bf16.mxu0 0
  %4819 = vmatpush1.bf16.msra.mxu0 %v4566
  %4820 = vmatprep.subr.bf16.mxu0 0
  %4821 = vmatpush1.bf16.msra.mxu0 %v4565
  %4822 = vmatprep.subr.bf16.mxu0 0
  %4823 = vmatpush1.bf16.msra.mxu0 %v4564
  %4824 = vmatprep.subr.bf16.mxu0 0
  %4825 = vmatpush1.bf16.msra.mxu0 %v4563
  %4826 = vmatprep.subr.bf16.mxu0 0
  %4827 = vmatpush1.bf16.msra.mxu0 %v4562
  %4828 = vmatprep.subr.bf16.mxu0 0
  %4829 = vmatpush1.bf16.msra.mxu0 %v4561
  %4830 = vmatprep.subr.bf16.mxu0 0
  %4831 = vmatpush1.bf16.msra.mxu0 %v4560
  %4832 = vmatprep.subr.bf16.mxu0 0
  %4833 = vmatpush2.bf16.msra.mxu0 %v4575
  %4834 = vmatprep.subr.bf16.mxu0 0
  %4835 = vmatpush2.bf16.msra.mxu0 %v4574
  %4836 = vmatprep.subr.bf16.mxu0 0
  %4837 = vmatpush2.bf16.msra.mxu0 %v4573
  %4838 = vmatprep.subr.bf16.mxu0 0
  %4839 = vmatpush2.bf16.msra.mxu0 %v4572
  %4840 = vmatprep.subr.bf16.mxu0 0
  %4841 = vmatpush2.bf16.msra.mxu0 %v4571
  %4842 = vmatprep.subr.bf16.mxu0 0
  %4843 = vmatpush2.bf16.msra.mxu0 %v4570
  %4844 = vmatprep.subr.bf16.mxu0 0
  %4845 = vmatpush2.bf16.msra.mxu0 %v4569
  %4846 = vmatprep.subr.bf16.mxu0 0
  %4847 = vmatpush2.bf16.msra.mxu0 %v4568
  %4848 = vmatprep.mubr.bf16.mxu0 %v3754
  %4849 = vmatmul.mubr.bf16.gmra.mxu0 %v3753
  %v4850 = vpop.f32.mrf.mxu0
  %v4851 = vadd.f32 %v4046, %v4850
  %v4852 = vpop.f32.mrf.mxu0
  %v4853 = vpop.f32.mrf.mxu0
  %v4854 = vadd.f32 %v4046, %v4853
  %v4855 = vpop.f32.mrf.mxu0
  %4856 = vmatprep.mubr.bf16.mxu0 %v3770
  %4857 = vmatmul.mubr.bf16.gmra.mxu0 %v3769
  %v4858 = vpop.f32.mrf.mxu0
  %v4859 = vadd.f32 %v4046, %v4858
  %v4860 = vpop.f32.mrf.mxu0
  %v4861 = vpop.f32.mrf.mxu0
  %v4862 = vadd.f32 %v4046, %v4861
  %v4863 = vpop.f32.mrf.mxu0
  %4864 = vdwg.mxu0
  %4865 = vmatprep.subr.bf16.mxu0 0
  %4866 = vmatpush1.bf16.msra.mxu0 %v4583
  %4867 = vmatprep.subr.bf16.mxu0 0
  %4868 = vmatpush1.bf16.msra.mxu0 %v4582
  %4869 = vmatprep.subr.bf16.mxu0 0
  %4870 = vmatpush1.bf16.msra.mxu0 %v4581
  %4871 = vmatprep.subr.bf16.mxu0 0
  %4872 = vmatpush1.bf16.msra.mxu0 %v4580
  %4873 = vmatprep.subr.bf16.mxu0 0
  %4874 = vmatpush1.bf16.msra.mxu0 %v4579
  %4875 = vmatprep.subr.bf16.mxu0 0
  %4876 = vmatpush1.bf16.msra.mxu0 %v4578
  %4877 = vmatprep.subr.bf16.mxu0 0
  %4878 = vmatpush1.bf16.msra.mxu0 %v4577
  %4879 = vmatprep.subr.bf16.mxu0 0
  %4880 = vmatpush1.bf16.msra.mxu0 %v4576
  %4881 = vmatprep.subr.bf16.mxu0 0
  %4882 = vmatpush2.bf16.msra.mxu0 %v4591
  %4883 = vmatprep.subr.bf16.mxu0 0
  %4884 = vmatpush2.bf16.msra.mxu0 %v4590
  %4885 = vmatprep.subr.bf16.mxu0 0
  %4886 = vmatpush2.bf16.msra.mxu0 %v4589
  %4887 = vmatprep.subr.bf16.mxu0 0
  %4888 = vmatpush2.bf16.msra.mxu0 %v4588
  %4889 = vmatprep.subr.bf16.mxu0 0
  %4890 = vmatpush2.bf16.msra.mxu0 %v4587
  %4891 = vmatprep.subr.bf16.mxu0 0
  %4892 = vmatpush2.bf16.msra.mxu0 %v4586
  %4893 = vmatprep.subr.bf16.mxu0 0
  %4894 = vmatpush2.bf16.msra.mxu0 %v4585
  %4895 = vmatprep.subr.bf16.mxu0 0
  %4896 = vmatpush2.bf16.msra.mxu0 %v4584
  %4897 = vmatprep.mubr.bf16.mxu0 %v3756
  %4898 = vmatmul.mubr.bf16.gmra.mxu0 %v3755
  %v4899 = vpop.f32.mrf.mxu0
  %v4900 = vadd.f32 %v4851, %v4899
  %v4901 = vpop.f32.mrf.mxu0
  %v4902 = vpop.f32.mrf.mxu0
  %v4903 = vadd.f32 %v4854, %v4902
  %v4904 = vpop.f32.mrf.mxu0
  %4905 = vmatprep.mubr.bf16.mxu0 %v3772
  %4906 = vmatmul.mubr.bf16.gmra.mxu0 %v3771
  %v4907 = vpop.f32.mrf.mxu0
  %v4908 = vadd.f32 %v4859, %v4907
  %v4909 = vpop.f32.mrf.mxu0
  %v4910 = vpop.f32.mrf.mxu0
  %v4911 = vadd.f32 %v4862, %v4910
  %v4912 = vpop.f32.mrf.mxu0
  %4913 = vdwg.mxu0
  %4914 = vmatprep.subr.bf16.mxu0 0
  %4915 = vmatpush1.bf16.msra.mxu0 %v4599
  %4916 = vmatprep.subr.bf16.mxu0 0
  %4917 = vmatpush1.bf16.msra.mxu0 %v4598
  %4918 = vmatprep.subr.bf16.mxu0 0
  %4919 = vmatpush1.bf16.msra.mxu0 %v4597
  %4920 = vmatprep.subr.bf16.mxu0 0
  %4921 = vmatpush1.bf16.msra.mxu0 %v4596
  %4922 = vmatprep.subr.bf16.mxu0 0
  %4923 = vmatpush1.bf16.msra.mxu0 %v4595
  %4924 = vmatprep.subr.bf16.mxu0 0
  %4925 = vmatpush1.bf16.msra.mxu0 %v4594
  %4926 = vmatprep.subr.bf16.mxu0 0
  %4927 = vmatpush1.bf16.msra.mxu0 %v4593
  %4928 = vmatprep.subr.bf16.mxu0 0
  %4929 = vmatpush1.bf16.msra.mxu0 %v4592
  %4930 = vmatprep.subr.bf16.mxu0 0
  %4931 = vmatpush2.bf16.msra.mxu0 %v4607
  %4932 = vmatprep.subr.bf16.mxu0 0
  %4933 = vmatpush2.bf16.msra.mxu0 %v4606
  %4934 = vmatprep.subr.bf16.mxu0 0
  %4935 = vmatpush2.bf16.msra.mxu0 %v4605
  %4936 = vmatprep.subr.bf16.mxu0 0
  %4937 = vmatpush2.bf16.msra.mxu0 %v4604
  %4938 = vmatprep.subr.bf16.mxu0 0
  %4939 = vmatpush2.bf16.msra.mxu0 %v4603
  %4940 = vmatprep.subr.bf16.mxu0 0
  %4941 = vmatpush2.bf16.msra.mxu0 %v4602
  %4942 = vmatprep.subr.bf16.mxu0 0
  %4943 = vmatpush2.bf16.msra.mxu0 %v4601
  %4944 = vmatprep.subr.bf16.mxu0 0
  %4945 = vmatpush2.bf16.msra.mxu0 %v4600
  %4946 = vmatprep.mubr.bf16.mxu0 %v3758
  %4947 = vmatmul.mubr.bf16.gmra.mxu0 %v3757
  %v4948 = vpop.f32.mrf.mxu0
  %v4949 = vadd.f32 %v4900, %v4948
  %v4950 = vpop.f32.mrf.mxu0
  %v4951 = vpop.f32.mrf.mxu0
  %v4952 = vadd.f32 %v4903, %v4951
  %v4953 = vpop.f32.mrf.mxu0
  %4954 = vmatprep.mubr.bf16.mxu0 %v3774
  %4955 = vmatmul.mubr.bf16.gmra.mxu0 %v3773
  %v4956 = vpop.f32.mrf.mxu0
  %v4957 = vadd.f32 %v4908, %v4956
  %v4958 = vpop.f32.mrf.mxu0
  %v4959 = vpop.f32.mrf.mxu0
  %v4960 = vadd.f32 %v4911, %v4959
  %v4961 = vpop.f32.mrf.mxu0
  %4962 = vdwg.mxu0
  %4963 = vmatprep.subr.bf16.mxu0 0
  %4964 = vmatpush1.bf16.msra.mxu0 %v4615
  %4965 = vmatprep.subr.bf16.mxu0 0
  %4966 = vmatpush1.bf16.msra.mxu0 %v4614
  %4967 = vmatprep.subr.bf16.mxu0 0
  %4968 = vmatpush1.bf16.msra.mxu0 %v4613
  %4969 = vmatprep.subr.bf16.mxu0 0
  %4970 = vmatpush1.bf16.msra.mxu0 %v4612
  %4971 = vmatprep.subr.bf16.mxu0 0
  %4972 = vmatpush1.bf16.msra.mxu0 %v4611
  %4973 = vmatprep.subr.bf16.mxu0 0
  %4974 = vmatpush1.bf16.msra.mxu0 %v4610
  %4975 = vmatprep.subr.bf16.mxu0 0
  %4976 = vmatpush1.bf16.msra.mxu0 %v4609
  %4977 = vmatprep.subr.bf16.mxu0 0
  %4978 = vmatpush1.bf16.msra.mxu0 %v4608
  %4979 = vmatprep.subr.bf16.mxu0 0
  %4980 = vmatpush2.bf16.msra.mxu0 %v4623
  %4981 = vmatprep.subr.bf16.mxu0 0
  %4982 = vmatpush2.bf16.msra.mxu0 %v4622
  %4983 = vmatprep.subr.bf16.mxu0 0
  %4984 = vmatpush2.bf16.msra.mxu0 %v4621
  %4985 = vmatprep.subr.bf16.mxu0 0
  %4986 = vmatpush2.bf16.msra.mxu0 %v4620
  %4987 = vmatprep.subr.bf16.mxu0 0
  %4988 = vmatpush2.bf16.msra.mxu0 %v4619
  %4989 = vmatprep.subr.bf16.mxu0 0
  %4990 = vmatpush2.bf16.msra.mxu0 %v4618
  %4991 = vmatprep.subr.bf16.mxu0 0
  %4992 = vmatpush2.bf16.msra.mxu0 %v4617
  %4993 = vmatprep.subr.bf16.mxu0 0
  %4994 = vmatpush2.bf16.msra.mxu0 %v4616
  %4995 = vmatprep.mubr.bf16.mxu0 %v3760
  %4996 = vmatmul.mubr.bf16.gmra.mxu0 %v3759
  %v4997 = vpop.f32.mrf.mxu0
  %v4998 = vadd.f32 %v4949, %v4997
  %v4999 = vpop.f32.mrf.mxu0
  %v5000 = vpop.f32.mrf.mxu0
  %v5001 = vadd.f32 %v4952, %v5000
  %v5002 = vpop.f32.mrf.mxu0
  %5003 = vmatprep.mubr.bf16.mxu0 %v3776
  %5004 = vmatmul.mubr.bf16.gmra.mxu0 %v3775
  %v5005 = vpop.f32.mrf.mxu0
  %v5006 = vadd.f32 %v4957, %v5005
  %v5007 = vpop.f32.mrf.mxu0
  %v5008 = vpop.f32.mrf.mxu0
  %v5009 = vadd.f32 %v4960, %v5008
  %v5010 = vpop.f32.mrf.mxu0
  %5011 = vdwg.mxu0
  %5012 = vmatprep.subr.bf16.mxu0 0
  %5013 = vmatpush1.bf16.msra.mxu0 %v4631
  %5014 = vmatprep.subr.bf16.mxu0 0
  %5015 = vmatpush1.bf16.msra.mxu0 %v4630
  %5016 = vmatprep.subr.bf16.mxu0 0
  %5017 = vmatpush1.bf16.msra.mxu0 %v4629
  %5018 = vmatprep.subr.bf16.mxu0 0
  %5019 = vmatpush1.bf16.msra.mxu0 %v4628
  %5020 = vmatprep.subr.bf16.mxu0 0
  %5021 = vmatpush1.bf16.msra.mxu0 %v4627
  %5022 = vmatprep.subr.bf16.mxu0 0
  %5023 = vmatpush1.bf16.msra.mxu0 %v4626
  %5024 = vmatprep.subr.bf16.mxu0 0
  %5025 = vmatpush1.bf16.msra.mxu0 %v4625
  %5026 = vmatprep.subr.bf16.mxu0 0
  %5027 = vmatpush1.bf16.msra.mxu0 %v4624
  %5028 = vmatprep.subr.bf16.mxu0 0
  %5029 = vmatpush2.bf16.msra.mxu0 %v4639
  %5030 = vmatprep.subr.bf16.mxu0 0
  %5031 = vmatpush2.bf16.msra.mxu0 %v4638
  %5032 = vmatprep.subr.bf16.mxu0 0
  %5033 = vmatpush2.bf16.msra.mxu0 %v4637
  %5034 = vmatprep.subr.bf16.mxu0 0
  %5035 = vmatpush2.bf16.msra.mxu0 %v4636
  %5036 = vmatprep.subr.bf16.mxu0 0
  %5037 = vmatpush2.bf16.msra.mxu0 %v4635
  %5038 = vmatprep.subr.bf16.mxu0 0
  %5039 = vmatpush2.bf16.msra.mxu0 %v4634
  %5040 = vmatprep.subr.bf16.mxu0 0
  %5041 = vmatpush2.bf16.msra.mxu0 %v4633
  %5042 = vmatprep.subr.bf16.mxu0 0
  %5043 = vmatpush2.bf16.msra.mxu0 %v4632
  %5044 = vmatprep.mubr.bf16.mxu0 %v3762
  %5045 = vmatmul.mubr.bf16.gmra.mxu0 %v3761
  %v5046 = vpop.f32.mrf.mxu0
  %v5047 = vadd.f32 %v4998, %v5046
  %v5048 = vpop.f32.mrf.mxu0
  %v5049 = vpop.f32.mrf.mxu0
  %v5050 = vadd.f32 %v5001, %v5049
  %v5051 = vpop.f32.mrf.mxu0
  %5052 = vmatprep.mubr.bf16.mxu0 %v3778
  %5053 = vmatmul.mubr.bf16.gmra.mxu0 %v3777
  %v5054 = vpop.f32.mrf.mxu0
  %v5055 = vadd.f32 %v5006, %v5054
  %v5056 = vpop.f32.mrf.mxu0
  %v5057 = vpop.f32.mrf.mxu0
  %v5058 = vadd.f32 %v5009, %v5057
  %v5059 = vpop.f32.mrf.mxu0
  %5060 = vdwg.mxu0
  %5061 = vmatprep.subr.bf16.mxu0 0
  %5062 = vmatpush1.bf16.msra.mxu0 %v4647
  %5063 = vmatprep.subr.bf16.mxu0 0
  %5064 = vmatpush1.bf16.msra.mxu0 %v4646
  %5065 = vmatprep.subr.bf16.mxu0 0
  %5066 = vmatpush1.bf16.msra.mxu0 %v4645
  %5067 = vmatprep.subr.bf16.mxu0 0
  %5068 = vmatpush1.bf16.msra.mxu0 %v4644
  %5069 = vmatprep.subr.bf16.mxu0 0
  %5070 = vmatpush1.bf16.msra.mxu0 %v4643
  %5071 = vmatprep.subr.bf16.mxu0 0
  %5072 = vmatpush1.bf16.msra.mxu0 %v4642
  %5073 = vmatprep.subr.bf16.mxu0 0
  %5074 = vmatpush1.bf16.msra.mxu0 %v4641
  %5075 = vmatprep.subr.bf16.mxu0 0
  %5076 = vmatpush1.bf16.msra.mxu0 %v4640
  %5077 = vmatprep.subr.bf16.mxu0 0
  %5078 = vmatpush2.bf16.msra.mxu0 %v4655
  %5079 = vmatprep.subr.bf16.mxu0 0
  %5080 = vmatpush2.bf16.msra.mxu0 %v4654
  %5081 = vmatprep.subr.bf16.mxu0 0
  %5082 = vmatpush2.bf16.msra.mxu0 %v4653
  %5083 = vmatprep.subr.bf16.mxu0 0
  %5084 = vmatpush2.bf16.msra.mxu0 %v4652
  %5085 = vmatprep.subr.bf16.mxu0 0
  %5086 = vmatpush2.bf16.msra.mxu0 %v4651
  %5087 = vmatprep.subr.bf16.mxu0 0
  %5088 = vmatpush2.bf16.msra.mxu0 %v4650
  %5089 = vmatprep.subr.bf16.mxu0 0
  %5090 = vmatpush2.bf16.msra.mxu0 %v4649
  %5091 = vmatprep.subr.bf16.mxu0 0
  %5092 = vmatpush2.bf16.msra.mxu0 %v4648
  %5093 = vmatprep.mubr.bf16.mxu0 %v3764
  %5094 = vmatmul.mubr.bf16.gmra.mxu0 %v3763
  %v5095 = vpop.f32.mrf.mxu0
  %v5096 = vadd.f32 %v5047, %v5095
  %v5097 = vpop.f32.mrf.mxu0
  %v5098 = vpop.f32.mrf.mxu0
  %v5099 = vadd.f32 %v5050, %v5098
  %v5100 = vpop.f32.mrf.mxu0
  %5101 = vmatprep.mubr.bf16.mxu0 %v3780
  %5102 = vmatmul.mubr.bf16.gmra.mxu0 %v3779
  %v5103 = vpop.f32.mrf.mxu0
  %v5104 = vadd.f32 %v5055, %v5103
  %v5105 = vpop.f32.mrf.mxu0
  %v5106 = vpop.f32.mrf.mxu0
  %v5107 = vadd.f32 %v5058, %v5106
  %v5108 = vpop.f32.mrf.mxu0
  %5109 = vdwg.mxu0
  %5110 = vmatprep.subr.bf16.mxu0 0
  %5111 = vmatpush1.bf16.msra.mxu0 %v4663
  %5112 = vmatprep.subr.bf16.mxu0 0
  %5113 = vmatpush1.bf16.msra.mxu0 %v4662
  %5114 = vmatprep.subr.bf16.mxu0 0
  %5115 = vmatpush1.bf16.msra.mxu0 %v4661
  %5116 = vmatprep.subr.bf16.mxu0 0
  %5117 = vmatpush1.bf16.msra.mxu0 %v4660
  %5118 = vmatprep.subr.bf16.mxu0 0
  %5119 = vmatpush1.bf16.msra.mxu0 %v4659
  %5120 = vmatprep.subr.bf16.mxu0 0
  %5121 = vmatpush1.bf16.msra.mxu0 %v4658
  %5122 = vmatprep.subr.bf16.mxu0 0
  %5123 = vmatpush1.bf16.msra.mxu0 %v4657
  %5124 = vmatprep.subr.bf16.mxu0 0
  %5125 = vmatpush1.bf16.msra.mxu0 %v4656
  %5126 = vmatprep.subr.bf16.mxu0 0
  %5127 = vmatpush2.bf16.msra.mxu0 %v4671
  %5128 = vmatprep.subr.bf16.mxu0 0
  %5129 = vmatpush2.bf16.msra.mxu0 %v4670
  %5130 = vmatprep.subr.bf16.mxu0 0
  %5131 = vmatpush2.bf16.msra.mxu0 %v4669
  %5132 = vmatprep.subr.bf16.mxu0 0
  %5133 = vmatpush2.bf16.msra.mxu0 %v4668
  %5134 = vmatprep.subr.bf16.mxu0 0
  %5135 = vmatpush2.bf16.msra.mxu0 %v4667
  %5136 = vmatprep.subr.bf16.mxu0 0
  %5137 = vmatpush2.bf16.msra.mxu0 %v4666
  %5138 = vmatprep.subr.bf16.mxu0 0
  %5139 = vmatpush2.bf16.msra.mxu0 %v4665
  %5140 = vmatprep.subr.bf16.mxu0 0
  %5141 = vmatpush2.bf16.msra.mxu0 %v4664
  %5142 = vmatprep.mubr.bf16.mxu0 %v3766
  %5143 = vmatmul.mubr.bf16.gmra.mxu0 %v3765
  %v5144 = vpop.f32.mrf.mxu0
  %v5145 = vadd.f32 %v5096, %v5144
  %v5146 = vpop.f32.mrf.mxu0
  %v5147 = vpop.f32.mrf.mxu0
  %v5148 = vadd.f32 %v5099, %v5147
  %v5149 = vpop.f32.mrf.mxu0
  %5150 = vmatprep.mubr.bf16.mxu0 %v3782
  %5151 = vmatmul.mubr.bf16.gmra.mxu0 %v3781
  %v5152 = vpop.f32.mrf.mxu0
  %v5153 = vadd.f32 %v5104, %v5152
  %v5154 = vpop.f32.mrf.mxu0
  %v5155 = vpop.f32.mrf.mxu0
  %v5156 = vadd.f32 %v5107, %v5155
  %v5157 = vpop.f32.mrf.mxu0
  %5158 = vdwg.mxu0
  %5159 = vmatprep.subr.bf16.mxu0 0
  %5160 = vmatpush1.bf16.msra.mxu0 %v4679
  %5161 = vmatprep.subr.bf16.mxu0 0
  %5162 = vmatpush1.bf16.msra.mxu0 %v4678
  %5163 = vmatprep.subr.bf16.mxu0 0
  %5164 = vmatpush1.bf16.msra.mxu0 %v4677
  %5165 = vmatprep.subr.bf16.mxu0 0
  %5166 = vmatpush1.bf16.msra.mxu0 %v4676
  %5167 = vmatprep.subr.bf16.mxu0 0
  %5168 = vmatpush1.bf16.msra.mxu0 %v4675
  %5169 = vmatprep.subr.bf16.mxu0 0
  %5170 = vmatpush1.bf16.msra.mxu0 %v4674
  %5171 = vmatprep.subr.bf16.mxu0 0
  %5172 = vmatpush1.bf16.msra.mxu0 %v4673
  %5173 = vmatprep.subr.bf16.mxu0 0
  %5174 = vmatpush1.bf16.msra.mxu0 %v4672
  %5175 = vmatprep.subr.bf16.mxu0 0
  %5176 = vmatpush2.bf16.msra.mxu0 %v4687
  %5177 = vmatprep.subr.bf16.mxu0 0
  %5178 = vmatpush2.bf16.msra.mxu0 %v4686
  %5179 = vmatprep.subr.bf16.mxu0 0
  %5180 = vmatpush2.bf16.msra.mxu0 %v4685
  %5181 = vmatprep.subr.bf16.mxu0 0
  %5182 = vmatpush2.bf16.msra.mxu0 %v4684
  %5183 = vmatprep.subr.bf16.mxu0 0
  %5184 = vmatpush2.bf16.msra.mxu0 %v4683
  %5185 = vmatprep.subr.bf16.mxu0 0
  %5186 = vmatpush2.bf16.msra.mxu0 %v4682
  %5187 = vmatprep.subr.bf16.mxu0 0
  %5188 = vmatpush2.bf16.msra.mxu0 %v4681
  %5189 = vmatprep.subr.bf16.mxu0 0
  %5190 = vmatpush2.bf16.msra.mxu0 %v4680
  %5191 = vmatprep.mubr.bf16.mxu0 %v3768
  %5192 = vmatmul.mubr.bf16.gmra.mxu0 %v3767
  %v5193 = vpop.f32.mrf.mxu0
  %v5194 = vadd.f32 %v5145, %v5193
  %v5195 = vpop.f32.mrf.mxu0
  %v5196 = vpop.f32.mrf.mxu0
  %v5197 = vadd.f32 %v5148, %v5196
  %v5198 = vpop.f32.mrf.mxu0
  %5199 = vmatprep.mubr.bf16.mxu0 %v3784
  %5200 = vmatmul.mubr.bf16.gmra.mxu0 %v3783
  %v5201 = vpop.f32.mrf.mxu0
  %v5202 = vadd.f32 %v5153, %v5201
  %v5203 = vpop.f32.mrf.mxu0
  %v5204 = vpop.f32.mrf.mxu0
  %v5205 = vadd.f32 %v5156, %v5204
  %v5206 = vpop.f32.mrf.mxu0
  %5207 = vdwg.mxu0
  %v5208 = vadd.f32 %v2977, %v5194
  %v5209 = vadd.f32 %v2978, %v5197
  %v5210 = vadd.f32 %v2979, %v5202
  %v5211 = vadd.f32 %v2980, %v5205
  %v5212 = vld [vmem:[%s13] sm:$0x1]
  %v5213 = vld [vmem:[%s14] sm:$0x1]
  %v5214 = vsel %vm311, %v5208, 0.0
  %5215 = vadd.xlane.f32.xlu0 %v5214
  %v5216 = vpop.xlane.xlu0 %5215
  %v5217 = vsel %vm311, %v5209, 0.0
  %5218 = vadd.xlane.f32.xlu0 %v5217
  %v5219 = vpop.xlane.xlu0 %5218
  %v5220 = vsel %vm311, %v5210, 0.0
  %5221 = vadd.xlane.f32.xlu0 %v5220
  %v5222 = vpop.xlane.xlu0 %5221
  %v5223 = vsel %vm311, %v5211, 0.0
  %5224 = vadd.xlane.f32.xlu0 %v5223
  %v5225 = vpop.xlane.xlu0 %5224
  %v5226 = vmul.f32 %v5216, %v2920
  %v5227 = vmul.f32 %v5219, %v2920
  %v5228 = vmul.f32 %v5222, %v2920
  %v5229 = vmul.f32 %v5225, %v2920
  %v5230 = vsub.f32 %v5208, %v5226
  %v5231 = vsub.f32 %v5209, %v5227
  %v5232 = vsub.f32 %v5210, %v5228
  %v5233 = vsub.f32 %v5211, %v5229
  %v5234 = vmul.f32 %v5230, %v5230
  %v5235 = vmul.f32 %v5231, %v5231
  %v5236 = vmul.f32 %v5232, %v5232
  %v5237 = vmul.f32 %v5233, %v5233
  %v5238 = vsel %vm311, %v5234, 0.0
  %5239 = vadd.xlane.f32.xlu0 %v5238
  %v5240 = vpop.xlane.xlu0 %5239
  %v5241 = vsel %vm311, %v5235, 0.0
  %5242 = vadd.xlane.f32.xlu0 %v5241
  %v5243 = vpop.xlane.xlu0 %5242
  %v5244 = vsel %vm311, %v5236, 0.0
  %5245 = vadd.xlane.f32.xlu0 %v5244
  %v5246 = vpop.xlane.xlu0 %5245
  %v5247 = vsel %vm311, %v5237, 0.0
  %5248 = vadd.xlane.f32.xlu0 %v5247
  %v5249 = vpop.xlane.xlu0 %5248
  %v5250 = vmul.f32 %v5240, %v2920
  %v5251 = vmul.f32 %v5243, %v2920
  %v5252 = vmul.f32 %v5246, %v2920
  %v5253 = vmul.f32 %v5249, %v2920
  %v5254 = vadd.f32 %v5250, 1e-05
  %v5255 = vadd.f32 %v5251, 1e-05
  %v5256 = vadd.f32 %v5252, 1e-05
  %v5257 = vadd.f32 %v5253, 1e-05
  %v5258 = vrsqrt.pop %v5254
  %v5259 = vrsqrt.pop %v5255
  %v5260 = vrsqrt.pop %v5256
  %v5261 = vrsqrt.pop %v5257
  %v5262 = vmul.f32 %v5230, %v5258
  %v5263 = vmul.f32 %v5231, %v5259
  %v5264 = vmul.f32 %v5232, %v5260
  %v5265 = vmul.f32 %v5233, %v5261
  %v5267 = vlaneseq
  %v5268 = vshrl.u32 %v5267, 7
  %v5269 = vsub.s32 0, %v5268
  %v5270 = vrot.slane %v5212, %v5269
  %v5272 = vmul.f32 %v5262, %v5270
  %v5273 = vmul.f32 %v5263, %v5270
  %v5274 = vmul.f32 %v5264, %v5270
  %v5275 = vmul.f32 %v5265, %v5270
  %v5277 = vlaneseq
  %v5278 = vshrl.u32 %v5277, 7
  %v5279 = vsub.s32 0, %v5278
  %v5280 = vrot.slane %v5213, %v5279
  %v5282 = vadd.f32 %v5272, %v5280
  %v5283 = vadd.f32 %v5273, %v5280
  %v5284 = vadd.f32 %v5274, %v5280
  %v5285 = vadd.f32 %v5275, %v5280
  %s5286 = scalar_lea.vmem %s3, 384
  %v5287 = vld [vmem:[%s5286] sm:$0xff]
  %v5288 = vld [vmem:[%s5286 + $0x8] sm:$0xff]
  %v5289 = vld [vmem:[%s5286 + $0x10] sm:$0xff]
  %v5290 = vld [vmem:[%s5286 + $0x18] sm:$0xff]
  %s5291 = scalar_lea.vmem %s4, 12
  %v5292 = vld [vmem:[%s5291] sm:$0x1]
  %v5294 = vlaneseq
  %v5295 = vshrl.u32 %v5294, 7
  %v5296 = vsub.s32 0, %v5295
  %v5297 = vrot.slane %v5292, %v5296
  %v5300 = vsel %vm311, %v5282, 0
  %v5303 = vsel %vm311, %v5283, 0
  %v5306 = vsel %vm311, %v5284, 0
  %v5309 = vsel %vm311, %v5285, 0
  %5311 = vmatprep.subr.mxu0 0.0
  %5312 = vmatpush1.msra.mxu0 0.0
  %5313 = vmatprep.subr.mxu0 0.0
  %5314 = vmatpush1.msra.mxu0 0.0
  %5315 = vmatprep.subr.mxu0 0.0
  %5316 = vmatpush1.msra.mxu0 0.0
  %5317 = vmatprep.subr.mxu0 0.0
  %5318 = vmatpush1.msra.mxu0 0.0
  %5319 = vmatprep.subr.mxu0 0.0
  %5320 = vmatpush1.msra.mxu0 0.0
  %5321 = vmatprep.subr.mxu0 0.0
  %5322 = vmatpush1.msra.mxu0 0.0
  %5323 = vmatprep.subr.mxu0 0.0
  %5324 = vmatpush1.msra.mxu0 0.0
  %5325 = vmatprep.subr.mxu0 0.0
  %5326 = vmatpush1.msra.mxu0 0.0
  %5327 = vmatprep.subr.mxu0 0.0
  %5328 = vmatpush1.msra.mxu0 0.0
  %5329 = vmatprep.subr.mxu0 0.0
  %5330 = vmatpush1.msra.mxu0 0.0
  %5331 = vmatprep.subr.mxu0 0.0
  %5332 = vmatpush1.msra.mxu0 0.0
  %5333 = vmatprep.subr.mxu0 0.0
  %5334 = vmatpush1.msra.mxu0 0.0
  %5335 = vmatprep.subr.mxu0 0.0
  %5336 = vmatpush1.msra.mxu0 %v5290
  %5337 = vmatprep.subr.mxu0 0.0
  %5338 = vmatpush1.msra.mxu0 %v5289
  %5339 = vmatprep.subr.mxu0 0.0
  %5340 = vmatpush1.msra.mxu0 %v5288
  %5341 = vmatprep.subr.mxu0 0.0
  %5342 = vmatpush1.msra.mxu0 %v5287
  %5343 = vmatprep.subr.mxu0 0.0
  %5344 = vmatpush2.msra.mxu0 0.0
  %5345 = vmatprep.subr.mxu0 0.0
  %5346 = vmatpush2.msra.mxu0 0.0
  %5347 = vmatprep.subr.mxu0 0.0
  %5348 = vmatpush2.msra.mxu0 0.0
  %5349 = vmatprep.subr.mxu0 0.0
  %5350 = vmatpush2.msra.mxu0 0.0
  %5351 = vmatprep.subr.mxu0 0.0
  %5352 = vmatpush2.msra.mxu0 0.0
  %5353 = vmatprep.subr.mxu0 0.0
  %5354 = vmatpush2.msra.mxu0 0.0
  %5355 = vmatprep.subr.mxu0 0.0
  %5356 = vmatpush2.msra.mxu0 0.0
  %5357 = vmatprep.subr.mxu0 0.0
  %5358 = vmatpush2.msra.mxu0 0.0
  %5359 = vmatprep.subr.mxu0 0.0
  %5360 = vmatpush2.msra.mxu0 0.0
  %5361 = vmatprep.subr.mxu0 0.0
  %5362 = vmatpush2.msra.mxu0 0.0
  %5363 = vmatprep.subr.mxu0 0.0
  %5364 = vmatpush2.msra.mxu0 0.0
  %5365 = vmatprep.subr.mxu0 0.0
  %5366 = vmatpush2.msra.mxu0 0.0
  %5367 = vmatprep.subr.mxu0 0.0
  %5368 = vmatpush2.msra.mxu0 0.0
  %5369 = vmatprep.subr.mxu0 0.0
  %5370 = vmatpush2.msra.mxu0 0.0
  %5371 = vmatprep.subr.mxu0 0.0
  %5372 = vmatpush2.msra.mxu0 0.0
  %5373 = vmatprep.subr.mxu0 0.0
  %5374 = vmatpush2.msra.mxu0 0.0
  %5375 = vmatprep.mubr.f32.mxu0 0.0
  %5376 = vmatmul.mubr.f32.gmra.mxu0 %v5300
  %v5377 = vpop.f32.mrf.mxu0
  %v5378 = vadd.f32 %v5297, %v5377
  %v5379 = vpop.f32.mrf.mxu0
  %5380 = vmatprep.mubr.f32.mxu0 0.0
  %5381 = vmatmul.mubr.f32.gmra.mxu0 %v5303
  %v5382 = vpop.f32.mrf.mxu0
  %v5383 = vadd.f32 %v5297, %v5382
  %v5384 = vpop.f32.mrf.mxu0
  %5385 = vmatprep.mubr.f32.mxu0 0.0
  %5386 = vmatmul.mubr.f32.gmra.mxu0 %v5306
  %v5387 = vpop.f32.mrf.mxu0
  %v5388 = vadd.f32 %v5297, %v5387
  %v5389 = vpop.f32.mrf.mxu0
  %5390 = vmatprep.mubr.f32.mxu0 0.0
  %5391 = vmatmul.mubr.f32.gmra.mxu0 %v5309
  %v5392 = vpop.f32.mrf.mxu0
  %v5393 = vadd.f32 %v5297, %v5392
  %v5394 = vpop.f32.mrf.mxu0
  %5395 = vdwg.mxu0
  %s5396 = scalar_lea.vmem %s3, 416
  %v5397 = vld [vmem:[%s5396] sm:$0xff]
  %v5398 = vld [vmem:[%s5396 + $0x8] sm:$0xff]
  %v5399 = vld [vmem:[%s5396 + $0x10] sm:$0xff]
  %v5400 = vld [vmem:[%s5396 + $0x18] sm:$0xff]
  %s5401 = scalar_lea.vmem %s4, 13
  %v5402 = vld [vmem:[%s5401] sm:$0x1]
  %v5404 = vlaneseq
  %v5405 = vshrl.u32 %v5404, 7
  %v5406 = vsub.s32 0, %v5405
  %v5407 = vrot.slane %v5402, %v5406
  %5409 = vmatprep.subr.mxu0 0.0
  %5410 = vmatpush1.msra.mxu0 0.0
  %5411 = vmatprep.subr.mxu0 0.0
  %5412 = vmatpush1.msra.mxu0 0.0
  %5413 = vmatprep.subr.mxu0 0.0
  %5414 = vmatpush1.msra.mxu0 0.0
  %5415 = vmatprep.subr.mxu0 0.0
  %5416 = vmatpush1.msra.mxu0 0.0
  %5417 = vmatprep.subr.mxu0 0.0
  %5418 = vmatpush1.msra.mxu0 0.0
  %5419 = vmatprep.subr.mxu0 0.0
  %5420 = vmatpush1.msra.mxu0 0.0
  %5421 = vmatprep.subr.mxu0 0.0
  %5422 = vmatpush1.msra.mxu0 0.0
  %5423 = vmatprep.subr.mxu0 0.0
  %5424 = vmatpush1.msra.mxu0 0.0
  %5425 = vmatprep.subr.mxu0 0.0
  %5426 = vmatpush1.msra.mxu0 0.0
  %5427 = vmatprep.subr.mxu0 0.0
  %5428 = vmatpush1.msra.mxu0 0.0
  %5429 = vmatprep.subr.mxu0 0.0
  %5430 = vmatpush1.msra.mxu0 0.0
  %5431 = vmatprep.subr.mxu0 0.0
  %5432 = vmatpush1.msra.mxu0 0.0
  %5433 = vmatprep.subr.mxu0 0.0
  %5434 = vmatpush1.msra.mxu0 %v5400
  %5435 = vmatprep.subr.mxu0 0.0
  %5436 = vmatpush1.msra.mxu0 %v5399
  %5437 = vmatprep.subr.mxu0 0.0
  %5438 = vmatpush1.msra.mxu0 %v5398
  %5439 = vmatprep.subr.mxu0 0.0
  %5440 = vmatpush1.msra.mxu0 %v5397
  %5441 = vmatprep.subr.mxu0 0.0
  %5442 = vmatpush2.msra.mxu0 0.0
  %5443 = vmatprep.subr.mxu0 0.0
  %5444 = vmatpush2.msra.mxu0 0.0
  %5445 = vmatprep.subr.mxu0 0.0
  %5446 = vmatpush2.msra.mxu0 0.0
  %5447 = vmatprep.subr.mxu0 0.0
  %5448 = vmatpush2.msra.mxu0 0.0
  %5449 = vmatprep.subr.mxu0 0.0
  %5450 = vmatpush2.msra.mxu0 0.0
  %5451 = vmatprep.subr.mxu0 0.0
  %5452 = vmatpush2.msra.mxu0 0.0
  %5453 = vmatprep.subr.mxu0 0.0
  %5454 = vmatpush2.msra.mxu0 0.0
  %5455 = vmatprep.subr.mxu0 0.0
  %5456 = vmatpush2.msra.mxu0 0.0
  %5457 = vmatprep.subr.mxu0 0.0
  %5458 = vmatpush2.msra.mxu0 0.0
  %5459 = vmatprep.subr.mxu0 0.0
  %5460 = vmatpush2.msra.mxu0 0.0
  %5461 = vmatprep.subr.mxu0 0.0
  %5462 = vmatpush2.msra.mxu0 0.0
  %5463 = vmatprep.subr.mxu0 0.0
  %5464 = vmatpush2.msra.mxu0 0.0
  %5465 = vmatprep.subr.mxu0 0.0
  %5466 = vmatpush2.msra.mxu0 0.0
  %5467 = vmatprep.subr.mxu0 0.0
  %5468 = vmatpush2.msra.mxu0 0.0
  %5469 = vmatprep.subr.mxu0 0.0
  %5470 = vmatpush2.msra.mxu0 0.0
  %5471 = vmatprep.subr.mxu0 0.0
  %5472 = vmatpush2.msra.mxu0 0.0
  %5473 = vmatprep.mubr.f32.mxu0 0.0
  %5474 = vmatmul.mubr.f32.gmra.mxu0 %v5300
  %v5475 = vpop.f32.mrf.mxu0
  %v5476 = vadd.f32 %v5407, %v5475
  %v5477 = vpop.f32.mrf.mxu0
  %5478 = vmatprep.mubr.f32.mxu0 0.0
  %5479 = vmatmul.mubr.f32.gmra.mxu0 %v5303
  %v5480 = vpop.f32.mrf.mxu0
  %v5481 = vadd.f32 %v5407, %v5480
  %v5482 = vpop.f32.mrf.mxu0
  %5483 = vmatprep.mubr.f32.mxu0 0.0
  %5484 = vmatmul.mubr.f32.gmra.mxu0 %v5306
  %v5485 = vpop.f32.mrf.mxu0
  %v5486 = vadd.f32 %v5407, %v5485
  %v5487 = vpop.f32.mrf.mxu0
  %5488 = vmatprep.mubr.f32.mxu0 0.0
  %5489 = vmatmul.mubr.f32.gmra.mxu0 %v5309
  %v5490 = vpop.f32.mrf.mxu0
  %v5491 = vadd.f32 %v5407, %v5490
  %v5492 = vpop.f32.mrf.mxu0
  %5493 = vdwg.mxu0
  %s5494 = scalar_lea.vmem %s3, 448
  %v5495 = vld [vmem:[%s5494] sm:$0xff]
  %v5496 = vld [vmem:[%s5494 + $0x8] sm:$0xff]
  %v5497 = vld [vmem:[%s5494 + $0x10] sm:$0xff]
  %v5498 = vld [vmem:[%s5494 + $0x18] sm:$0xff]
  %s5499 = scalar_lea.vmem %s4, 14
  %v5500 = vld [vmem:[%s5499] sm:$0x1]
  %v5502 = vlaneseq
  %v5503 = vshrl.u32 %v5502, 7
  %v5504 = vsub.s32 0, %v5503
  %v5505 = vrot.slane %v5500, %v5504
  %5507 = vmatprep.subr.mxu0 0.0
  %5508 = vmatpush1.msra.mxu0 0.0
  %5509 = vmatprep.subr.mxu0 0.0
  %5510 = vmatpush1.msra.mxu0 0.0
  %5511 = vmatprep.subr.mxu0 0.0
  %5512 = vmatpush1.msra.mxu0 0.0
  %5513 = vmatprep.subr.mxu0 0.0
  %5514 = vmatpush1.msra.mxu0 0.0
  %5515 = vmatprep.subr.mxu0 0.0
  %5516 = vmatpush1.msra.mxu0 0.0
  %5517 = vmatprep.subr.mxu0 0.0
  %5518 = vmatpush1.msra.mxu0 0.0
  %5519 = vmatprep.subr.mxu0 0.0
  %5520 = vmatpush1.msra.mxu0 0.0
  %5521 = vmatprep.subr.mxu0 0.0
  %5522 = vmatpush1.msra.mxu0 0.0
  %5523 = vmatprep.subr.mxu0 0.0
  %5524 = vmatpush1.msra.mxu0 0.0
  %5525 = vmatprep.subr.mxu0 0.0
  %5526 = vmatpush1.msra.mxu0 0.0
  %5527 = vmatprep.subr.mxu0 0.0
  %5528 = vmatpush1.msra.mxu0 0.0
  %5529 = vmatprep.subr.mxu0 0.0
  %5530 = vmatpush1.msra.mxu0 0.0
  %5531 = vmatprep.subr.mxu0 0.0
  %5532 = vmatpush1.msra.mxu0 %v5498
  %5533 = vmatprep.subr.mxu0 0.0
  %5534 = vmatpush1.msra.mxu0 %v5497
  %5535 = vmatprep.subr.mxu0 0.0
  %5536 = vmatpush1.msra.mxu0 %v5496
  %5537 = vmatprep.subr.mxu0 0.0
  %5538 = vmatpush1.msra.mxu0 %v5495
  %5539 = vmatprep.subr.mxu0 0.0
  %5540 = vmatpush2.msra.mxu0 0.0
  %5541 = vmatprep.subr.mxu0 0.0
  %5542 = vmatpush2.msra.mxu0 0.0
  %5543 = vmatprep.subr.mxu0 0.0
  %5544 = vmatpush2.msra.mxu0 0.0
  %5545 = vmatprep.subr.mxu0 0.0
  %5546 = vmatpush2.msra.mxu0 0.0
  %5547 = vmatprep.subr.mxu0 0.0
  %5548 = vmatpush2.msra.mxu0 0.0
  %5549 = vmatprep.subr.mxu0 0.0
  %5550 = vmatpush2.msra.mxu0 0.0
  %5551 = vmatprep.subr.mxu0 0.0
  %5552 = vmatpush2.msra.mxu0 0.0
  %5553 = vmatprep.subr.mxu0 0.0
  %5554 = vmatpush2.msra.mxu0 0.0
  %5555 = vmatprep.subr.mxu0 0.0
  %5556 = vmatpush2.msra.mxu0 0.0
  %5557 = vmatprep.subr.mxu0 0.0
  %5558 = vmatpush2.msra.mxu0 0.0
  %5559 = vmatprep.subr.mxu0 0.0
  %5560 = vmatpush2.msra.mxu0 0.0
  %5561 = vmatprep.subr.mxu0 0.0
  %5562 = vmatpush2.msra.mxu0 0.0
  %5563 = vmatprep.subr.mxu0 0.0
  %5564 = vmatpush2.msra.mxu0 0.0
  %5565 = vmatprep.subr.mxu0 0.0
  %5566 = vmatpush2.msra.mxu0 0.0
  %5567 = vmatprep.subr.mxu0 0.0
  %5568 = vmatpush2.msra.mxu0 0.0
  %5569 = vmatprep.subr.mxu0 0.0
  %5570 = vmatpush2.msra.mxu0 0.0
  %5571 = vmatprep.mubr.f32.mxu0 0.0
  %5572 = vmatmul.mubr.f32.gmra.mxu0 %v5300
  %v5573 = vpop.f32.mrf.mxu0
  %v5574 = vadd.f32 %v5505, %v5573
  %v5575 = vpop.f32.mrf.mxu0
  %5576 = vmatprep.mubr.f32.mxu0 0.0
  %5577 = vmatmul.mubr.f32.gmra.mxu0 %v5303
  %v5578 = vpop.f32.mrf.mxu0
  %v5579 = vadd.f32 %v5505, %v5578
  %v5580 = vpop.f32.mrf.mxu0
  %5581 = vmatprep.mubr.f32.mxu0 0.0
  %5582 = vmatmul.mubr.f32.gmra.mxu0 %v5306
  %v5583 = vpop.f32.mrf.mxu0
  %v5584 = vadd.f32 %v5505, %v5583
  %v5585 = vpop.f32.mrf.mxu0
  %5586 = vmatprep.mubr.f32.mxu0 0.0
  %5587 = vmatmul.mubr.f32.gmra.mxu0 %v5309
  %v5588 = vpop.f32.mrf.mxu0
  %v5589 = vadd.f32 %v5505, %v5588
  %v5590 = vpop.f32.mrf.mxu0
  %5591 = vdwg.mxu0
  %v5593 = vsel %vm605, %v5378, 0
  %v5596 = vsel %vm605, %v5383, 0
  %v5599 = vsel %vm605, %v5388, 0
  %v5602 = vsel %vm605, %v5393, 0
  %v5605 = vsel %vm605, %v5476, 0
  %v5608 = vsel %vm605, %v5481, 0
  %v5611 = vsel %vm605, %v5486, 0
  %v5614 = vsel %vm605, %v5491, 0
  %5616 = vmatprep.subr.mxu0 0.0
  %5617 = vmatpush1.xpose.msra.mxu0 0.0
  %5618 = vmatprep.subr.mxu0 0.0
  %5619 = vmatpush1.xpose.msra.mxu0 0.0
  %5620 = vmatprep.subr.mxu0 0.0
  %5621 = vmatpush1.xpose.msra.mxu0 0.0
  %5622 = vmatprep.subr.mxu0 0.0
  %5623 = vmatpush1.xpose.msra.mxu0 0.0
  %5624 = vmatprep.subr.mxu0 0.0
  %5625 = vmatpush1.xpose.msra.mxu0 0.0
  %5626 = vmatprep.subr.mxu0 0.0
  %5627 = vmatpush1.xpose.msra.mxu0 0.0
  %5628 = vmatprep.subr.mxu0 0.0
  %5629 = vmatpush1.xpose.msra.mxu0 0.0
  %5630 = vmatprep.subr.mxu0 0.0
  %5631 = vmatpush1.xpose.msra.mxu0 0.0
  %5632 = vmatprep.subr.mxu0 0.0
  %5633 = vmatpush1.xpose.msra.mxu0 0.0
  %5634 = vmatprep.subr.mxu0 0.0
  %5635 = vmatpush1.xpose.msra.mxu0 0.0
  %5636 = vmatprep.subr.mxu0 0.0
  %5637 = vmatpush1.xpose.msra.mxu0 0.0
  %5638 = vmatprep.subr.mxu0 0.0
  %5639 = vmatpush1.xpose.msra.mxu0 0.0
  %5640 = vmatprep.subr.mxu0 0.0
  %5641 = vmatpush1.xpose.msra.mxu0 %v5614
  %5642 = vmatprep.subr.mxu0 0.0
  %5643 = vmatpush1.xpose.msra.mxu0 %v5611
  %5644 = vmatprep.subr.mxu0 0.0
  %5645 = vmatpush1.xpose.msra.mxu0 %v5608
  %5646 = vmatprep.subr.mxu0 0.0
  %5647 = vmatpush1.xpose.msra.mxu0 %v5605
  %5648 = vmatprep.subr.mxu0 0.0
  %5649 = vmatpush2.xpose.msra.mxu0 0.0
  %5650 = vmatprep.subr.mxu0 0.0
  %5651 = vmatpush2.xpose.msra.mxu0 0.0
  %5652 = vmatprep.subr.mxu0 0.0
  %5653 = vmatpush2.xpose.msra.mxu0 0.0
  %5654 = vmatprep.subr.mxu0 0.0
  %5655 = vmatpush2.xpose.msra.mxu0 0.0
  %5656 = vmatprep.subr.mxu0 0.0
  %5657 = vmatpush2.xpose.msra.mxu0 0.0
  %5658 = vmatprep.subr.mxu0 0.0
  %5659 = vmatpush2.xpose.msra.mxu0 0.0
  %5660 = vmatprep.subr.mxu0 0.0
  %5661 = vmatpush2.xpose.msra.mxu0 0.0
  %5662 = vmatprep.subr.mxu0 0.0
  %5663 = vmatpush2.xpose.msra.mxu0 0.0
  %5664 = vmatprep.subr.mxu0 0.0
  %5665 = vmatpush2.xpose.msra.mxu0 0.0
  %5666 = vmatprep.subr.mxu0 0.0
  %5667 = vmatpush2.xpose.msra.mxu0 0.0
  %5668 = vmatprep.subr.mxu0 0.0
  %5669 = vmatpush2.xpose.msra.mxu0 0.0
  %5670 = vmatprep.subr.mxu0 0.0
  %5671 = vmatpush2.xpose.msra.mxu0 0.0
  %5672 = vmatprep.subr.mxu0 0.0
  %5673 = vmatpush2.xpose.msra.mxu0 0.0
  %5674 = vmatprep.subr.mxu0 0.0
  %5675 = vmatpush2.xpose.msra.mxu0 0.0
  %5676 = vmatprep.subr.mxu0 0.0
  %5677 = vmatpush2.xpose.msra.mxu0 0.0
  %5678 = vmatprep.subr.mxu0 0.0
  %5679 = vmatpush2.xpose.msra.mxu0 0.0
  %5680 = vmatprep.mubr.f32.mxu0 0.0
  %5681 = vmatmul.mubr.f32.gmra.mxu0 %v5593
  %v5682 = vpop.f32.mrf.mxu0
  %v5683 = vadd.f32 %v296, %v5682
  %v5684 = vpop.f32.mrf.mxu0
  %5685 = vmatprep.mubr.f32.mxu0 0.0
  %5686 = vmatmul.mubr.f32.gmra.mxu0 %v5596
  %v5687 = vpop.f32.mrf.mxu0
  %v5688 = vadd.f32 %v297, %v5687
  %v5689 = vpop.f32.mrf.mxu0
  %5690 = vmatprep.mubr.f32.mxu0 0.0
  %5691 = vmatmul.mubr.f32.gmra.mxu0 %v5599
  %v5692 = vpop.f32.mrf.mxu0
  %v5693 = vadd.f32 %v298, %v5692
  %v5694 = vpop.f32.mrf.mxu0
  %5695 = vmatprep.mubr.f32.mxu0 0.0
  %5696 = vmatmul.mubr.f32.gmra.mxu0 %v5602
  %v5697 = vpop.f32.mrf.mxu0
  %v5698 = vadd.f32 %v299, %v5697
  %v5699 = vpop.f32.mrf.mxu0
  %5700 = vdwg.mxu0
  %v5701 = vsel %vm311, %v5683, -inf
  %5702 = vmax.xlane.f32.xlu0 %v5701
  %v5703 = vpop.xlane.xlu0 %5702
  %v5704 = vsel %vm311, %v5688, -inf
  %5705 = vmax.xlane.f32.xlu0 %v5704
  %v5706 = vpop.xlane.xlu0 %5705
  %v5707 = vsel %vm311, %v5693, -inf
  %5708 = vmax.xlane.f32.xlu0 %v5707
  %v5709 = vpop.xlane.xlu0 %5708
  %v5710 = vsel %vm311, %v5698, -inf
  %5711 = vmax.xlane.f32.xlu0 %v5710
  %v5712 = vpop.xlane.xlu0 %5711
  %v5713 = vsub.f32 %v5683, %v5703
  %v5714 = vsub.f32 %v5688, %v5706
  %v5715 = vsub.f32 %v5693, %v5709
  %v5716 = vsub.f32 %v5698, %v5712
  %v5717 = vmul.f32 %v5713, 1.442695
  %v5718 = vpow.pop %v5717
  %v5719 = vmul.f32 %v5714, 1.442695
  %v5720 = vpow.pop %v5719
  %v5721 = vmul.f32 %v5715, 1.442695
  %v5722 = vpow.pop %v5721
  %v5723 = vmul.f32 %v5716, 1.442695
  %v5724 = vpow.pop %v5723
  %v5725 = vsel %vm311, %v5718, 0.0
  %5726 = vadd.xlane.f32.xlu0 %v5725
  %v5727 = vpop.xlane.xlu0 %5726
  %v5728 = vsel %vm311, %v5720, 0.0
  %5729 = vadd.xlane.f32.xlu0 %v5728
  %v5730 = vpop.xlane.xlu0 %5729
  %v5731 = vsel %vm311, %v5722, 0.0
  %5732 = vadd.xlane.f32.xlu0 %v5731
  %v5733 = vpop.xlane.xlu0 %5732
  %v5734 = vsel %vm311, %v5724, 0.0
  %5735 = vadd.xlane.f32.xlu0 %v5734
  %v5736 = vpop.xlane.xlu0 %5735
  %v5737 = vrcp.pop %v5727
  %v5738 = vrcp.pop %v5730
  %v5739 = vrcp.pop %v5733
  %v5740 = vrcp.pop %v5736
  %v5741 = vmul.f32 %v5718, %v5737
  %v5742 = vmul.f32 %v5720, %v5738
  %v5743 = vmul.f32 %v5722, %v5739
  %v5744 = vmul.f32 %v5724, %v5740
  %v5746 = vsel %vm311, %v5741, 0
  %v5749 = vsel %vm311, %v5742, 0
  %v5752 = vsel %vm311, %v5743, 0
  %v5755 = vsel %vm311, %v5744, 0
  %5757 = vmatprep.subr.mxu0 0.0
  %5758 = vmatpush1.msra.mxu0 0.0
  %5759 = vmatprep.subr.mxu0 0.0
  %5760 = vmatpush1.msra.mxu0 0.0
  %5761 = vmatprep.subr.mxu0 0.0
  %5762 = vmatpush1.msra.mxu0 0.0
  %5763 = vmatprep.subr.mxu0 0.0
  %5764 = vmatpush1.msra.mxu0 0.0
  %5765 = vmatprep.subr.mxu0 0.0
  %5766 = vmatpush1.msra.mxu0 0.0
  %5767 = vmatprep.subr.mxu0 0.0
  %5768 = vmatpush1.msra.mxu0 0.0
  %5769 = vmatprep.subr.mxu0 0.0
  %5770 = vmatpush1.msra.mxu0 0.0
  %5771 = vmatprep.subr.mxu0 0.0
  %5772 = vmatpush1.msra.mxu0 0.0
  %5773 = vmatprep.subr.mxu0 0.0
  %5774 = vmatpush1.msra.mxu0 0.0
  %5775 = vmatprep.subr.mxu0 0.0
  %5776 = vmatpush1.msra.mxu0 0.0
  %5777 = vmatprep.subr.mxu0 0.0
  %5778 = vmatpush1.msra.mxu0 0.0
  %5779 = vmatprep.subr.mxu0 0.0
  %5780 = vmatpush1.msra.mxu0 0.0
  %5781 = vmatprep.subr.mxu0 0.0
  %5782 = vmatpush1.msra.mxu0 %v5589
  %5783 = vmatprep.subr.mxu0 0.0
  %5784 = vmatpush1.msra.mxu0 %v5584
  %5785 = vmatprep.subr.mxu0 0.0
  %5786 = vmatpush1.msra.mxu0 %v5579
  %5787 = vmatprep.subr.mxu0 0.0
  %5788 = vmatpush1.msra.mxu0 %v5574
  %5789 = vmatprep.subr.mxu0 0.0
  %5790 = vmatpush2.msra.mxu0 0.0
  %5791 = vmatprep.subr.mxu0 0.0
  %5792 = vmatpush2.msra.mxu0 0.0
  %5793 = vmatprep.subr.mxu0 0.0
  %5794 = vmatpush2.msra.mxu0 0.0
  %5795 = vmatprep.subr.mxu0 0.0
  %5796 = vmatpush2.msra.mxu0 0.0
  %5797 = vmatprep.subr.mxu0 0.0
  %5798 = vmatpush2.msra.mxu0 0.0
  %5799 = vmatprep.subr.mxu0 0.0
  %5800 = vmatpush2.msra.mxu0 0.0
  %5801 = vmatprep.subr.mxu0 0.0
  %5802 = vmatpush2.msra.mxu0 0.0
  %5803 = vmatprep.subr.mxu0 0.0
  %5804 = vmatpush2.msra.mxu0 0.0
  %5805 = vmatprep.subr.mxu0 0.0
  %5806 = vmatpush2.msra.mxu0 0.0
  %5807 = vmatprep.subr.mxu0 0.0
  %5808 = vmatpush2.msra.mxu0 0.0
  %5809 = vmatprep.subr.mxu0 0.0
  %5810 = vmatpush2.msra.mxu0 0.0
  %5811 = vmatprep.subr.mxu0 0.0
  %5812 = vmatpush2.msra.mxu0 0.0
  %5813 = vmatprep.subr.mxu0 0.0
  %5814 = vmatpush2.msra.mxu0 0.0
  %5815 = vmatprep.subr.mxu0 0.0
  %5816 = vmatpush2.msra.mxu0 0.0
  %5817 = vmatprep.subr.mxu0 0.0
  %5818 = vmatpush2.msra.mxu0 0.0
  %5819 = vmatprep.subr.mxu0 0.0
  %5820 = vmatpush2.msra.mxu0 0.0
  %5821 = vmatprep.mubr.f32.mxu0 0.0
  %5822 = vmatmul.mubr.f32.gmra.mxu0 %v5746
  %v5823 = vpop.f32.mrf.mxu0
  %v5824 = vadd.f32 0.0, %v5823
  %v5825 = vpop.f32.mrf.mxu0
  %5826 = vmatprep.mubr.f32.mxu0 0.0
  %5827 = vmatmul.mubr.f32.gmra.mxu0 %v5749
  %v5828 = vpop.f32.mrf.mxu0
  %v5829 = vadd.f32 0.0, %v5828
  %v5830 = vpop.f32.mrf.mxu0
  %5831 = vmatprep.mubr.f32.mxu0 0.0
  %5832 = vmatmul.mubr.f32.gmra.mxu0 %v5752
  %v5833 = vpop.f32.mrf.mxu0
  %v5834 = vadd.f32 0.0, %v5833
  %v5835 = vpop.f32.mrf.mxu0
  %5836 = vmatprep.mubr.f32.mxu0 0.0
  %5837 = vmatmul.mubr.f32.gmra.mxu0 %v5755
  %v5838 = vpop.f32.mrf.mxu0
  %v5839 = vadd.f32 0.0, %v5838
  %v5840 = vpop.f32.mrf.mxu0
  %5841 = vdwg.mxu0
  %s5842 = scalar_lea.vmem %s5, 32
  %v5843 = vld [vmem:[%s5842] sm:$0xff]
  %s5844 = scalar_lea.vmem %s3, 480
  %v5845 = vld [vmem:[%s5844] sm:$0xff]
  %v5846 = vld [vmem:[%s5844 + $0x8] sm:$0xff]
  %v5847 = vld [vmem:[%s5844 + $0x10] sm:$0xff]
  %v5848 = vld [vmem:[%s5844 + $0x18] sm:$0xff]
  %s5849 = scalar_lea.vmem %s4, 15
  %v5850 = vld [vmem:[%s5849] sm:$0x1]
  %v5852 = vlaneseq
  %v5853 = vshrl.u32 %v5852, 7
  %v5854 = vsub.s32 0, %v5853
  %v5855 = vrot.slane %v5850, %v5854
  %5857 = vmatprep.subr.mxu0 0.0
  %5858 = vmatpush1.msra.mxu0 0.0
  %5859 = vmatprep.subr.mxu0 0.0
  %5860 = vmatpush1.msra.mxu0 0.0
  %5861 = vmatprep.subr.mxu0 0.0
  %5862 = vmatpush1.msra.mxu0 0.0
  %5863 = vmatprep.subr.mxu0 0.0
  %5864 = vmatpush1.msra.mxu0 0.0
  %5865 = vmatprep.subr.mxu0 0.0
  %5866 = vmatpush1.msra.mxu0 0.0
  %5867 = vmatprep.subr.mxu0 0.0
  %5868 = vmatpush1.msra.mxu0 0.0
  %5869 = vmatprep.subr.mxu0 0.0
  %5870 = vmatpush1.msra.mxu0 0.0
  %5871 = vmatprep.subr.mxu0 0.0
  %5872 = vmatpush1.msra.mxu0 0.0
  %5873 = vmatprep.subr.mxu0 0.0
  %5874 = vmatpush1.msra.mxu0 0.0
  %5875 = vmatprep.subr.mxu0 0.0
  %5876 = vmatpush1.msra.mxu0 0.0
  %5877 = vmatprep.subr.mxu0 0.0
  %5878 = vmatpush1.msra.mxu0 0.0
  %5879 = vmatprep.subr.mxu0 0.0
  %5880 = vmatpush1.msra.mxu0 0.0
  %5881 = vmatprep.subr.mxu0 0.0
  %5882 = vmatpush1.msra.mxu0 %v5848
  %5883 = vmatprep.subr.mxu0 0.0
  %5884 = vmatpush1.msra.mxu0 %v5847
  %5885 = vmatprep.subr.mxu0 0.0
  %5886 = vmatpush1.msra.mxu0 %v5846
  %5887 = vmatprep.subr.mxu0 0.0
  %5888 = vmatpush1.msra.mxu0 %v5845
  %5889 = vmatprep.subr.mxu0 0.0
  %5890 = vmatpush2.msra.mxu0 0.0
  %5891 = vmatprep.subr.mxu0 0.0
  %5892 = vmatpush2.msra.mxu0 0.0
  %5893 = vmatprep.subr.mxu0 0.0
  %5894 = vmatpush2.msra.mxu0 0.0
  %5895 = vmatprep.subr.mxu0 0.0
  %5896 = vmatpush2.msra.mxu0 0.0
  %5897 = vmatprep.subr.mxu0 0.0
  %5898 = vmatpush2.msra.mxu0 0.0
  %5899 = vmatprep.subr.mxu0 0.0
  %5900 = vmatpush2.msra.mxu0 0.0
  %5901 = vmatprep.subr.mxu0 0.0
  %5902 = vmatpush2.msra.mxu0 0.0
  %5903 = vmatprep.subr.mxu0 0.0
  %5904 = vmatpush2.msra.mxu0 0.0
  %5905 = vmatprep.subr.mxu0 0.0
  %5906 = vmatpush2.msra.mxu0 0.0
  %5907 = vmatprep.subr.mxu0 0.0
  %5908 = vmatpush2.msra.mxu0 0.0
  %5909 = vmatprep.subr.mxu0 0.0
  %5910 = vmatpush2.msra.mxu0 0.0
  %5911 = vmatprep.subr.mxu0 0.0
  %5912 = vmatpush2.msra.mxu0 0.0
  %5913 = vmatprep.subr.mxu0 0.0
  %5914 = vmatpush2.msra.mxu0 0.0
  %5915 = vmatprep.subr.mxu0 0.0
  %5916 = vmatpush2.msra.mxu0 0.0
  %5917 = vmatprep.subr.mxu0 0.0
  %5918 = vmatpush2.msra.mxu0 0.0
  %5919 = vmatprep.subr.mxu0 0.0
  %5920 = vmatpush2.msra.mxu0 0.0
  %5921 = vmatprep.mubr.f32.mxu0 0.0
  %5922 = vmatmul.mubr.f32.gmra.mxu0 %v5300
  %v5923 = vpop.f32.mrf.mxu0
  %v5924 = vadd.f32 %v5855, %v5923
  %v5925 = vpop.f32.mrf.mxu0
  %5926 = vmatprep.mubr.f32.mxu0 0.0
  %5927 = vmatmul.mubr.f32.gmra.mxu0 %v5303
  %v5928 = vpop.f32.mrf.mxu0
  %v5929 = vadd.f32 %v5855, %v5928
  %v5930 = vpop.f32.mrf.mxu0
  %5931 = vmatprep.mubr.f32.mxu0 0.0
  %5932 = vmatmul.mubr.f32.gmra.mxu0 %v5306
  %v5933 = vpop.f32.mrf.mxu0
  %v5934 = vadd.f32 %v5855, %v5933
  %v5935 = vpop.f32.mrf.mxu0
  %5936 = vmatprep.mubr.f32.mxu0 0.0
  %5937 = vmatmul.mubr.f32.gmra.mxu0 %v5309
  %v5938 = vpop.f32.mrf.mxu0
  %v5939 = vadd.f32 %v5855, %v5938
  %v5940 = vpop.f32.mrf.mxu0
  %5941 = vdwg.mxu0
  %s5942 = scalar_lea.vmem %s3, 512
  %v5943 = vld [vmem:[%s5942] sm:$0xff]
  %v5944 = vld [vmem:[%s5942 + $0x8] sm:$0xff]
  %v5945 = vld [vmem:[%s5942 + $0x10] sm:$0xff]
  %v5946 = vld [vmem:[%s5942 + $0x18] sm:$0xff]
  %s5947 = scalar_lea.vmem %s4, 16
  %v5948 = vld [vmem:[%s5947] sm:$0x1]
  %v5950 = vlaneseq
  %v5951 = vshrl.u32 %v5950, 7
  %v5952 = vsub.s32 0, %v5951
  %v5953 = vrot.slane %v5948, %v5952
  %5955 = vmatprep.subr.mxu0 0.0
  %5956 = vmatpush1.msra.mxu0 0.0
  %5957 = vmatprep.subr.mxu0 0.0
  %5958 = vmatpush1.msra.mxu0 0.0
  %5959 = vmatprep.subr.mxu0 0.0
  %5960 = vmatpush1.msra.mxu0 0.0
  %5961 = vmatprep.subr.mxu0 0.0
  %5962 = vmatpush1.msra.mxu0 0.0
  %5963 = vmatprep.subr.mxu0 0.0
  %5964 = vmatpush1.msra.mxu0 0.0
  %5965 = vmatprep.subr.mxu0 0.0
  %5966 = vmatpush1.msra.mxu0 0.0
  %5967 = vmatprep.subr.mxu0 0.0
  %5968 = vmatpush1.msra.mxu0 0.0
  %5969 = vmatprep.subr.mxu0 0.0
  %5970 = vmatpush1.msra.mxu0 0.0
  %5971 = vmatprep.subr.mxu0 0.0
  %5972 = vmatpush1.msra.mxu0 0.0
  %5973 = vmatprep.subr.mxu0 0.0
  %5974 = vmatpush1.msra.mxu0 0.0
  %5975 = vmatprep.subr.mxu0 0.0
  %5976 = vmatpush1.msra.mxu0 0.0
  %5977 = vmatprep.subr.mxu0 0.0
  %5978 = vmatpush1.msra.mxu0 0.0
  %5979 = vmatprep.subr.mxu0 0.0
  %5980 = vmatpush1.msra.mxu0 %v5946
  %5981 = vmatprep.subr.mxu0 0.0
  %5982 = vmatpush1.msra.mxu0 %v5945
  %5983 = vmatprep.subr.mxu0 0.0
  %5984 = vmatpush1.msra.mxu0 %v5944
  %5985 = vmatprep.subr.mxu0 0.0
  %5986 = vmatpush1.msra.mxu0 %v5943
  %5987 = vmatprep.subr.mxu0 0.0
  %5988 = vmatpush2.msra.mxu0 0.0
  %5989 = vmatprep.subr.mxu0 0.0
  %5990 = vmatpush2.msra.mxu0 0.0
  %5991 = vmatprep.subr.mxu0 0.0
  %5992 = vmatpush2.msra.mxu0 0.0
  %5993 = vmatprep.subr.mxu0 0.0
  %5994 = vmatpush2.msra.mxu0 0.0
  %5995 = vmatprep.subr.mxu0 0.0
  %5996 = vmatpush2.msra.mxu0 0.0
  %5997 = vmatprep.subr.mxu0 0.0
  %5998 = vmatpush2.msra.mxu0 0.0
  %5999 = vmatprep.subr.mxu0 0.0
  %6000 = vmatpush2.msra.mxu0 0.0
  %6001 = vmatprep.subr.mxu0 0.0
  %6002 = vmatpush2.msra.mxu0 0.0
  %6003 = vmatprep.subr.mxu0 0.0
  %6004 = vmatpush2.msra.mxu0 0.0
  %6005 = vmatprep.subr.mxu0 0.0
  %6006 = vmatpush2.msra.mxu0 0.0
  %6007 = vmatprep.subr.mxu0 0.0
  %6008 = vmatpush2.msra.mxu0 0.0
  %6009 = vmatprep.subr.mxu0 0.0
  %6010 = vmatpush2.msra.mxu0 0.0
  %6011 = vmatprep.subr.mxu0 0.0
  %6012 = vmatpush2.msra.mxu0 0.0
  %6013 = vmatprep.subr.mxu0 0.0
  %6014 = vmatpush2.msra.mxu0 0.0
  %6015 = vmatprep.subr.mxu0 0.0
  %6016 = vmatpush2.msra.mxu0 0.0
  %6017 = vmatprep.subr.mxu0 0.0
  %6018 = vmatpush2.msra.mxu0 0.0
  %6019 = vmatprep.mubr.f32.mxu0 0.0
  %6020 = vmatmul.mubr.f32.gmra.mxu0 %v5300
  %v6021 = vpop.f32.mrf.mxu0
  %v6022 = vadd.f32 %v5953, %v6021
  %v6023 = vpop.f32.mrf.mxu0
  %6024 = vmatprep.mubr.f32.mxu0 0.0
  %6025 = vmatmul.mubr.f32.gmra.mxu0 %v5303
  %v6026 = vpop.f32.mrf.mxu0
  %v6027 = vadd.f32 %v5953, %v6026
  %v6028 = vpop.f32.mrf.mxu0
  %6029 = vmatprep.mubr.f32.mxu0 0.0
  %6030 = vmatmul.mubr.f32.gmra.mxu0 %v5306
  %v6031 = vpop.f32.mrf.mxu0
  %v6032 = vadd.f32 %v5953, %v6031
  %v6033 = vpop.f32.mrf.mxu0
  %6034 = vmatprep.mubr.f32.mxu0 0.0
  %6035 = vmatmul.mubr.f32.gmra.mxu0 %v5309
  %v6036 = vpop.f32.mrf.mxu0
  %v6037 = vadd.f32 %v5953, %v6036
  %v6038 = vpop.f32.mrf.mxu0
  %6039 = vdwg.mxu0
  %s6040 = scalar_lea.vmem %s3, 544
  %v6041 = vld [vmem:[%s6040] sm:$0xff]
  %v6042 = vld [vmem:[%s6040 + $0x8] sm:$0xff]
  %v6043 = vld [vmem:[%s6040 + $0x10] sm:$0xff]
  %v6044 = vld [vmem:[%s6040 + $0x18] sm:$0xff]
  %s6045 = scalar_lea.vmem %s4, 17
  %v6046 = vld [vmem:[%s6045] sm:$0x1]
  %v6048 = vlaneseq
  %v6049 = vshrl.u32 %v6048, 7
  %v6050 = vsub.s32 0, %v6049
  %v6051 = vrot.slane %v6046, %v6050
  %6053 = vmatprep.subr.mxu0 0.0
  %6054 = vmatpush1.msra.mxu0 0.0
  %6055 = vmatprep.subr.mxu0 0.0
  %6056 = vmatpush1.msra.mxu0 0.0
  %6057 = vmatprep.subr.mxu0 0.0
  %6058 = vmatpush1.msra.mxu0 0.0
  %6059 = vmatprep.subr.mxu0 0.0
  %6060 = vmatpush1.msra.mxu0 0.0
  %6061 = vmatprep.subr.mxu0 0.0
  %6062 = vmatpush1.msra.mxu0 0.0
  %6063 = vmatprep.subr.mxu0 0.0
  %6064 = vmatpush1.msra.mxu0 0.0
  %6065 = vmatprep.subr.mxu0 0.0
  %6066 = vmatpush1.msra.mxu0 0.0
  %6067 = vmatprep.subr.mxu0 0.0
  %6068 = vmatpush1.msra.mxu0 0.0
  %6069 = vmatprep.subr.mxu0 0.0
  %6070 = vmatpush1.msra.mxu0 0.0
  %6071 = vmatprep.subr.mxu0 0.0
  %6072 = vmatpush1.msra.mxu0 0.0
  %6073 = vmatprep.subr.mxu0 0.0
  %6074 = vmatpush1.msra.mxu0 0.0
  %6075 = vmatprep.subr.mxu0 0.0
  %6076 = vmatpush1.msra.mxu0 0.0
  %6077 = vmatprep.subr.mxu0 0.0
  %6078 = vmatpush1.msra.mxu0 %v6044
  %6079 = vmatprep.subr.mxu0 0.0
  %6080 = vmatpush1.msra.mxu0 %v6043
  %6081 = vmatprep.subr.mxu0 0.0
  %6082 = vmatpush1.msra.mxu0 %v6042
  %6083 = vmatprep.subr.mxu0 0.0
  %6084 = vmatpush1.msra.mxu0 %v6041
  %6085 = vmatprep.subr.mxu0 0.0
  %6086 = vmatpush2.msra.mxu0 0.0
  %6087 = vmatprep.subr.mxu0 0.0
  %6088 = vmatpush2.msra.mxu0 0.0
  %6089 = vmatprep.subr.mxu0 0.0
  %6090 = vmatpush2.msra.mxu0 0.0
  %6091 = vmatprep.subr.mxu0 0.0
  %6092 = vmatpush2.msra.mxu0 0.0
  %6093 = vmatprep.subr.mxu0 0.0
  %6094 = vmatpush2.msra.mxu0 0.0
  %6095 = vmatprep.subr.mxu0 0.0
  %6096 = vmatpush2.msra.mxu0 0.0
  %6097 = vmatprep.subr.mxu0 0.0
  %6098 = vmatpush2.msra.mxu0 0.0
  %6099 = vmatprep.subr.mxu0 0.0
  %6100 = vmatpush2.msra.mxu0 0.0
  %6101 = vmatprep.subr.mxu0 0.0
  %6102 = vmatpush2.msra.mxu0 0.0
  %6103 = vmatprep.subr.mxu0 0.0
  %6104 = vmatpush2.msra.mxu0 0.0
  %6105 = vmatprep.subr.mxu0 0.0
  %6106 = vmatpush2.msra.mxu0 0.0
  %6107 = vmatprep.subr.mxu0 0.0
  %6108 = vmatpush2.msra.mxu0 0.0
  %6109 = vmatprep.subr.mxu0 0.0
  %6110 = vmatpush2.msra.mxu0 0.0
  %6111 = vmatprep.subr.mxu0 0.0
  %6112 = vmatpush2.msra.mxu0 0.0
  %6113 = vmatprep.subr.mxu0 0.0
  %6114 = vmatpush2.msra.mxu0 0.0
  %6115 = vmatprep.subr.mxu0 0.0
  %6116 = vmatpush2.msra.mxu0 0.0
  %6117 = vmatprep.mubr.f32.mxu0 0.0
  %6118 = vmatmul.mubr.f32.gmra.mxu0 %v5300
  %v6119 = vpop.f32.mrf.mxu0
  %v6120 = vadd.f32 %v6051, %v6119
  %v6121 = vpop.f32.mrf.mxu0
  %6122 = vmatprep.mubr.f32.mxu0 0.0
  %6123 = vmatmul.mubr.f32.gmra.mxu0 %v5303
  %v6124 = vpop.f32.mrf.mxu0
  %v6125 = vadd.f32 %v6051, %v6124
  %v6126 = vpop.f32.mrf.mxu0
  %6127 = vmatprep.mubr.f32.mxu0 0.0
  %6128 = vmatmul.mubr.f32.gmra.mxu0 %v5306
  %v6129 = vpop.f32.mrf.mxu0
  %v6130 = vadd.f32 %v6051, %v6129
  %v6131 = vpop.f32.mrf.mxu0
  %6132 = vmatprep.mubr.f32.mxu0 0.0
  %6133 = vmatmul.mubr.f32.gmra.mxu0 %v5309
  %v6134 = vpop.f32.mrf.mxu0
  %v6135 = vadd.f32 %v6051, %v6134
  %v6136 = vpop.f32.mrf.mxu0
  %6137 = vdwg.mxu0
  %v6139 = vsel %vm605, %v5924, 0
  %v6142 = vsel %vm605, %v5929, 0
  %v6145 = vsel %vm605, %v5934, 0
  %v6148 = vsel %vm605, %v5939, 0
  %v6151 = vsel %vm605, %v6022, 0
  %v6154 = vsel %vm605, %v6027, 0
  %v6157 = vsel %vm605, %v6032, 0
  %v6160 = vsel %vm605, %v6037, 0
  %6162 = vmatprep.subr.mxu0 0.0
  %6163 = vmatpush1.xpose.msra.mxu0 0.0
  %6164 = vmatprep.subr.mxu0 0.0
  %6165 = vmatpush1.xpose.msra.mxu0 0.0
  %6166 = vmatprep.subr.mxu0 0.0
  %6167 = vmatpush1.xpose.msra.mxu0 0.0
  %6168 = vmatprep.subr.mxu0 0.0
  %6169 = vmatpush1.xpose.msra.mxu0 0.0
  %6170 = vmatprep.subr.mxu0 0.0
  %6171 = vmatpush1.xpose.msra.mxu0 0.0
  %6172 = vmatprep.subr.mxu0 0.0
  %6173 = vmatpush1.xpose.msra.mxu0 0.0
  %6174 = vmatprep.subr.mxu0 0.0
  %6175 = vmatpush1.xpose.msra.mxu0 0.0
  %6176 = vmatprep.subr.mxu0 0.0
  %6177 = vmatpush1.xpose.msra.mxu0 0.0
  %6178 = vmatprep.subr.mxu0 0.0
  %6179 = vmatpush1.xpose.msra.mxu0 0.0
  %6180 = vmatprep.subr.mxu0 0.0
  %6181 = vmatpush1.xpose.msra.mxu0 0.0
  %6182 = vmatprep.subr.mxu0 0.0
  %6183 = vmatpush1.xpose.msra.mxu0 0.0
  %6184 = vmatprep.subr.mxu0 0.0
  %6185 = vmatpush1.xpose.msra.mxu0 0.0
  %6186 = vmatprep.subr.mxu0 0.0
  %6187 = vmatpush1.xpose.msra.mxu0 %v6160
  %6188 = vmatprep.subr.mxu0 0.0
  %6189 = vmatpush1.xpose.msra.mxu0 %v6157
  %6190 = vmatprep.subr.mxu0 0.0
  %6191 = vmatpush1.xpose.msra.mxu0 %v6154
  %6192 = vmatprep.subr.mxu0 0.0
  %6193 = vmatpush1.xpose.msra.mxu0 %v6151
  %6194 = vmatprep.subr.mxu0 0.0
  %6195 = vmatpush2.xpose.msra.mxu0 0.0
  %6196 = vmatprep.subr.mxu0 0.0
  %6197 = vmatpush2.xpose.msra.mxu0 0.0
  %6198 = vmatprep.subr.mxu0 0.0
  %6199 = vmatpush2.xpose.msra.mxu0 0.0
  %6200 = vmatprep.subr.mxu0 0.0
  %6201 = vmatpush2.xpose.msra.mxu0 0.0
  %6202 = vmatprep.subr.mxu0 0.0
  %6203 = vmatpush2.xpose.msra.mxu0 0.0
  %6204 = vmatprep.subr.mxu0 0.0
  %6205 = vmatpush2.xpose.msra.mxu0 0.0
  %6206 = vmatprep.subr.mxu0 0.0
  %6207 = vmatpush2.xpose.msra.mxu0 0.0
  %6208 = vmatprep.subr.mxu0 0.0
  %6209 = vmatpush2.xpose.msra.mxu0 0.0
  %6210 = vmatprep.subr.mxu0 0.0
  %6211 = vmatpush2.xpose.msra.mxu0 0.0
  %6212 = vmatprep.subr.mxu0 0.0
  %6213 = vmatpush2.xpose.msra.mxu0 0.0
  %6214 = vmatprep.subr.mxu0 0.0
  %6215 = vmatpush2.xpose.msra.mxu0 0.0
  %6216 = vmatprep.subr.mxu0 0.0
  %6217 = vmatpush2.xpose.msra.mxu0 0.0
  %6218 = vmatprep.subr.mxu0 0.0
  %6219 = vmatpush2.xpose.msra.mxu0 0.0
  %6220 = vmatprep.subr.mxu0 0.0
  %6221 = vmatpush2.xpose.msra.mxu0 0.0
  %6222 = vmatprep.subr.mxu0 0.0
  %6223 = vmatpush2.xpose.msra.mxu0 0.0
  %6224 = vmatprep.subr.mxu0 0.0
  %6225 = vmatpush2.xpose.msra.mxu0 0.0
  %6226 = vmatprep.mubr.f32.mxu0 0.0
  %6227 = vmatmul.mubr.f32.gmra.mxu0 %v6139
  %v6228 = vpop.f32.mrf.mxu0
  %v6229 = vadd.f32 %v296, %v6228
  %v6230 = vpop.f32.mrf.mxu0
  %6231 = vmatprep.mubr.f32.mxu0 0.0
  %6232 = vmatmul.mubr.f32.gmra.mxu0 %v6142
  %v6233 = vpop.f32.mrf.mxu0
  %v6234 = vadd.f32 %v297, %v6233
  %v6235 = vpop.f32.mrf.mxu0
  %6236 = vmatprep.mubr.f32.mxu0 0.0
  %6237 = vmatmul.mubr.f32.gmra.mxu0 %v6145
  %v6238 = vpop.f32.mrf.mxu0
  %v6239 = vadd.f32 %v298, %v6238
  %v6240 = vpop.f32.mrf.mxu0
  %6241 = vmatprep.mubr.f32.mxu0 0.0
  %6242 = vmatmul.mubr.f32.gmra.mxu0 %v6148
  %v6243 = vpop.f32.mrf.mxu0
  %v6244 = vadd.f32 %v299, %v6243
  %v6245 = vpop.f32.mrf.mxu0
  %6246 = vdwg.mxu0
  %v6247 = vsel %vm311, %v6229, -inf
  %6248 = vmax.xlane.f32.xlu0 %v6247
  %v6249 = vpop.xlane.xlu0 %6248
  %v6250 = vsel %vm311, %v6234, -inf
  %6251 = vmax.xlane.f32.xlu0 %v6250
  %v6252 = vpop.xlane.xlu0 %6251
  %v6253 = vsel %vm311, %v6239, -inf
  %6254 = vmax.xlane.f32.xlu0 %v6253
  %v6255 = vpop.xlane.xlu0 %6254
  %v6256 = vsel %vm311, %v6244, -inf
  %6257 = vmax.xlane.f32.xlu0 %v6256
  %v6258 = vpop.xlane.xlu0 %6257
  %v6259 = vsub.f32 %v6229, %v6249
  %v6260 = vsub.f32 %v6234, %v6252
  %v6261 = vsub.f32 %v6239, %v6255
  %v6262 = vsub.f32 %v6244, %v6258
  %v6263 = vmul.f32 %v6259, 1.442695
  %v6264 = vpow.pop %v6263
  %v6265 = vmul.f32 %v6260, 1.442695
  %v6266 = vpow.pop %v6265
  %v6267 = vmul.f32 %v6261, 1.442695
  %v6268 = vpow.pop %v6267
  %v6269 = vmul.f32 %v6262, 1.442695
  %v6270 = vpow.pop %v6269
  %v6271 = vsel %vm311, %v6264, 0.0
  %6272 = vadd.xlane.f32.xlu0 %v6271
  %v6273 = vpop.xlane.xlu0 %6272
  %v6274 = vsel %vm311, %v6266, 0.0
  %6275 = vadd.xlane.f32.xlu0 %v6274
  %v6276 = vpop.xlane.xlu0 %6275
  %v6277 = vsel %vm311, %v6268, 0.0
  %6278 = vadd.xlane.f32.xlu0 %v6277
  %v6279 = vpop.xlane.xlu0 %6278
  %v6280 = vsel %vm311, %v6270, 0.0
  %6281 = vadd.xlane.f32.xlu0 %v6280
  %v6282 = vpop.xlane.xlu0 %6281
  %v6283 = vrcp.pop %v6273
  %v6284 = vrcp.pop %v6276
  %v6285 = vrcp.pop %v6279
  %v6286 = vrcp.pop %v6282
  %v6287 = vmul.f32 %v6264, %v6283
  %v6288 = vmul.f32 %v6266, %v6284
  %v6289 = vmul.f32 %v6268, %v6285
  %v6290 = vmul.f32 %v6270, %v6286
  %v6292 = vsel %vm311, %v6287, 0
  %v6295 = vsel %vm311, %v6288, 0
  %v6298 = vsel %vm311, %v6289, 0
  %v6301 = vsel %vm311, %v6290, 0
  %6303 = vmatprep.subr.mxu0 0.0
  %6304 = vmatpush1.msra.mxu0 0.0
  %6305 = vmatprep.subr.mxu0 0.0
  %6306 = vmatpush1.msra.mxu0 0.0
  %6307 = vmatprep.subr.mxu0 0.0
  %6308 = vmatpush1.msra.mxu0 0.0
  %6309 = vmatprep.subr.mxu0 0.0
  %6310 = vmatpush1.msra.mxu0 0.0
  %6311 = vmatprep.subr.mxu0 0.0
  %6312 = vmatpush1.msra.mxu0 0.0
  %6313 = vmatprep.subr.mxu0 0.0
  %6314 = vmatpush1.msra.mxu0 0.0
  %6315 = vmatprep.subr.mxu0 0.0
  %6316 = vmatpush1.msra.mxu0 0.0
  %6317 = vmatprep.subr.mxu0 0.0
  %6318 = vmatpush1.msra.mxu0 0.0
  %6319 = vmatprep.subr.mxu0 0.0
  %6320 = vmatpush1.msra.mxu0 0.0
  %6321 = vmatprep.subr.mxu0 0.0
  %6322 = vmatpush1.msra.mxu0 0.0
  %6323 = vmatprep.subr.mxu0 0.0
  %6324 = vmatpush1.msra.mxu0 0.0
  %6325 = vmatprep.subr.mxu0 0.0
  %6326 = vmatpush1.msra.mxu0 0.0
  %6327 = vmatprep.subr.mxu0 0.0
  %6328 = vmatpush1.msra.mxu0 %v6135
  %6329 = vmatprep.subr.mxu0 0.0
  %6330 = vmatpush1.msra.mxu0 %v6130
  %6331 = vmatprep.subr.mxu0 0.0
  %6332 = vmatpush1.msra.mxu0 %v6125
  %6333 = vmatprep.subr.mxu0 0.0
  %6334 = vmatpush1.msra.mxu0 %v6120
  %6335 = vmatprep.subr.mxu0 0.0
  %6336 = vmatpush2.msra.mxu0 0.0
  %6337 = vmatprep.subr.mxu0 0.0
  %6338 = vmatpush2.msra.mxu0 0.0
  %6339 = vmatprep.subr.mxu0 0.0
  %6340 = vmatpush2.msra.mxu0 0.0
  %6341 = vmatprep.subr.mxu0 0.0
  %6342 = vmatpush2.msra.mxu0 0.0
  %6343 = vmatprep.subr.mxu0 0.0
  %6344 = vmatpush2.msra.mxu0 0.0
  %6345 = vmatprep.subr.mxu0 0.0
  %6346 = vmatpush2.msra.mxu0 0.0
  %6347 = vmatprep.subr.mxu0 0.0
  %6348 = vmatpush2.msra.mxu0 0.0
  %6349 = vmatprep.subr.mxu0 0.0
  %6350 = vmatpush2.msra.mxu0 0.0
  %6351 = vmatprep.subr.mxu0 0.0
  %6352 = vmatpush2.msra.mxu0 0.0
  %6353 = vmatprep.subr.mxu0 0.0
  %6354 = vmatpush2.msra.mxu0 0.0
  %6355 = vmatprep.subr.mxu0 0.0
  %6356 = vmatpush2.msra.mxu0 0.0
  %6357 = vmatprep.subr.mxu0 0.0
  %6358 = vmatpush2.msra.mxu0 0.0
  %6359 = vmatprep.subr.mxu0 0.0
  %6360 = vmatpush2.msra.mxu0 0.0
  %6361 = vmatprep.subr.mxu0 0.0
  %6362 = vmatpush2.msra.mxu0 0.0
  %6363 = vmatprep.subr.mxu0 0.0
  %6364 = vmatpush2.msra.mxu0 0.0
  %6365 = vmatprep.subr.mxu0 0.0
  %6366 = vmatpush2.msra.mxu0 0.0
  %6367 = vmatprep.mubr.f32.mxu0 0.0
  %6368 = vmatmul.mubr.f32.gmra.mxu0 %v6292
  %v6369 = vpop.f32.mrf.mxu0
  %v6370 = vadd.f32 0.0, %v6369
  %v6371 = vpop.f32.mrf.mxu0
  %6372 = vmatprep.mubr.f32.mxu0 0.0
  %6373 = vmatmul.mubr.f32.gmra.mxu0 %v6295
  %v6374 = vpop.f32.mrf.mxu0
  %v6375 = vadd.f32 0.0, %v6374
  %v6376 = vpop.f32.mrf.mxu0
  %6377 = vmatprep.mubr.f32.mxu0 0.0
  %6378 = vmatmul.mubr.f32.gmra.mxu0 %v6298
  %v6379 = vpop.f32.mrf.mxu0
  %v6380 = vadd.f32 0.0, %v6379
  %v6381 = vpop.f32.mrf.mxu0
  %6382 = vmatprep.mubr.f32.mxu0 0.0
  %6383 = vmatmul.mubr.f32.gmra.mxu0 %v6301
  %v6384 = vpop.f32.mrf.mxu0
  %v6385 = vadd.f32 0.0, %v6384
  %v6386 = vpop.f32.mrf.mxu0
  %6387 = vdwg.mxu0
  %s6388 = scalar_lea.vmem %s5, 40
  %v6389 = vld [vmem:[%s6388] sm:$0xff]
  %v6391 = vsel %vm605, %v6370, 0
  %v6394 = vsel %vm605, %v6375, 0
  %v6397 = vsel %vm605, %v6380, 0
  %v6400 = vsel %vm605, %v6385, 0
  %6402 = vmatprep.subr.mxu0 0.0
  %6403 = vmatpush1.msra.mxu0 0.0
  %6404 = vmatprep.subr.mxu0 0.0
  %6405 = vmatpush1.msra.mxu0 0.0
  %6406 = vmatprep.subr.mxu0 0.0
  %6407 = vmatpush1.msra.mxu0 0.0
  %6408 = vmatprep.subr.mxu0 0.0
  %6409 = vmatpush1.msra.mxu0 0.0
  %6410 = vmatprep.subr.mxu0 0.0
  %6411 = vmatpush1.msra.mxu0 0.0
  %6412 = vmatprep.subr.mxu0 0.0
  %6413 = vmatpush1.msra.mxu0 0.0
  %6414 = vmatprep.subr.mxu0 0.0
  %6415 = vmatpush1.msra.mxu0 0.0
  %6416 = vmatprep.subr.mxu0 0.0
  %6417 = vmatpush1.msra.mxu0 0.0
  %6418 = vmatprep.subr.mxu0 0.0
  %6419 = vmatpush1.msra.mxu0 0.0
  %6420 = vmatprep.subr.mxu0 0.0
  %6421 = vmatpush1.msra.mxu0 0.0
  %6422 = vmatprep.subr.mxu0 0.0
  %6423 = vmatpush1.msra.mxu0 0.0
  %6424 = vmatprep.subr.mxu0 0.0
  %6425 = vmatpush1.msra.mxu0 0.0
  %6426 = vmatprep.subr.mxu0 0.0
  %6427 = vmatpush1.msra.mxu0 0.0
  %6428 = vmatprep.subr.mxu0 0.0
  %6429 = vmatpush1.msra.mxu0 0.0
  %6430 = vmatprep.subr.mxu0 0.0
  %6431 = vmatpush1.msra.mxu0 0.0
  %6432 = vmatprep.subr.mxu0 0.0
  %6433 = vmatpush1.msra.mxu0 %v6389
  %6434 = vmatprep.subr.mxu0 0.0
  %6435 = vmatpush2.msra.mxu0 0.0
  %6436 = vmatprep.subr.mxu0 0.0
  %6437 = vmatpush2.msra.mxu0 0.0
  %6438 = vmatprep.subr.mxu0 0.0
  %6439 = vmatpush2.msra.mxu0 0.0
  %6440 = vmatprep.subr.mxu0 0.0
  %6441 = vmatpush2.msra.mxu0 0.0
  %6442 = vmatprep.subr.mxu0 0.0
  %6443 = vmatpush2.msra.mxu0 0.0
  %6444 = vmatprep.subr.mxu0 0.0
  %6445 = vmatpush2.msra.mxu0 0.0
  %6446 = vmatprep.subr.mxu0 0.0
  %6447 = vmatpush2.msra.mxu0 0.0
  %6448 = vmatprep.subr.mxu0 0.0
  %6449 = vmatpush2.msra.mxu0 0.0
  %6450 = vmatprep.subr.mxu0 0.0
  %6451 = vmatpush2.msra.mxu0 0.0
  %6452 = vmatprep.subr.mxu0 0.0
  %6453 = vmatpush2.msra.mxu0 0.0
  %6454 = vmatprep.subr.mxu0 0.0
  %6455 = vmatpush2.msra.mxu0 0.0
  %6456 = vmatprep.subr.mxu0 0.0
  %6457 = vmatpush2.msra.mxu0 0.0
  %6458 = vmatprep.subr.mxu0 0.0
  %6459 = vmatpush2.msra.mxu0 0.0
  %6460 = vmatprep.subr.mxu0 0.0
  %6461 = vmatpush2.msra.mxu0 0.0
  %6462 = vmatprep.subr.mxu0 0.0
  %6463 = vmatpush2.msra.mxu0 0.0
  %6464 = vmatprep.subr.mxu0 0.0
  %6465 = vmatpush2.msra.mxu0 0.0
  %6466 = vmatprep.mubr.f32.mxu0 0.0
  %6467 = vmatmul.mubr.f32.gmra.mxu0 %v6391
  %v6468 = vpop.f32.mrf.mxu0
  %v6469 = vadd.f32 0.0, %v6468
  %v6470 = vpop.f32.mrf.mxu0
  %6471 = vmatprep.mubr.f32.mxu0 0.0
  %6472 = vmatmul.mubr.f32.gmra.mxu0 %v6394
  %v6473 = vpop.f32.mrf.mxu0
  %v6474 = vadd.f32 0.0, %v6473
  %v6475 = vpop.f32.mrf.mxu0
  %6476 = vmatprep.mubr.f32.mxu0 0.0
  %6477 = vmatmul.mubr.f32.gmra.mxu0 %v6397
  %v6478 = vpop.f32.mrf.mxu0
  %v6479 = vadd.f32 0.0, %v6478
  %v6480 = vpop.f32.mrf.mxu0
  %6481 = vmatprep.mubr.f32.mxu0 0.0
  %6482 = vmatmul.mubr.f32.gmra.mxu0 %v6400
  %v6483 = vpop.f32.mrf.mxu0
  %v6484 = vadd.f32 0.0, %v6483
  %v6485 = vpop.f32.mrf.mxu0
  %6486 = vdwg.mxu0
  %v6488 = vsel %vm605, %v5824, 0
  %v6491 = vsel %vm605, %v5829, 0
  %v6494 = vsel %vm605, %v5834, 0
  %v6497 = vsel %vm605, %v5839, 0
  %6499 = vmatprep.subr.mxu0 0.0
  %6500 = vmatpush1.msra.mxu0 0.0
  %6501 = vmatprep.subr.mxu0 0.0
  %6502 = vmatpush1.msra.mxu0 0.0
  %6503 = vmatprep.subr.mxu0 0.0
  %6504 = vmatpush1.msra.mxu0 0.0
  %6505 = vmatprep.subr.mxu0 0.0
  %6506 = vmatpush1.msra.mxu0 0.0
  %6507 = vmatprep.subr.mxu0 0.0
  %6508 = vmatpush1.msra.mxu0 0.0
  %6509 = vmatprep.subr.mxu0 0.0
  %6510 = vmatpush1.msra.mxu0 0.0
  %6511 = vmatprep.subr.mxu0 0.0
  %6512 = vmatpush1.msra.mxu0 0.0
  %6513 = vmatprep.subr.mxu0 0.0
  %6514 = vmatpush1.msra.mxu0 0.0
  %6515 = vmatprep.subr.mxu0 0.0
  %6516 = vmatpush1.msra.mxu0 0.0
  %6517 = vmatprep.subr.mxu0 0.0
  %6518 = vmatpush1.msra.mxu0 0.0
  %6519 = vmatprep.subr.mxu0 0.0
  %6520 = vmatpush1.msra.mxu0 0.0
  %6521 = vmatprep.subr.mxu0 0.0
  %6522 = vmatpush1.msra.mxu0 0.0
  %6523 = vmatprep.subr.mxu0 0.0
  %6524 = vmatpush1.msra.mxu0 0.0
  %6525 = vmatprep.subr.mxu0 0.0
  %6526 = vmatpush1.msra.mxu0 0.0
  %6527 = vmatprep.subr.mxu0 0.0
  %6528 = vmatpush1.msra.mxu0 0.0
  %6529 = vmatprep.subr.mxu0 0.0
  %6530 = vmatpush1.msra.mxu0 %v5843
  %6531 = vmatprep.subr.mxu0 0.0
  %6532 = vmatpush2.msra.mxu0 0.0
  %6533 = vmatprep.subr.mxu0 0.0
  %6534 = vmatpush2.msra.mxu0 0.0
  %6535 = vmatprep.subr.mxu0 0.0
  %6536 = vmatpush2.msra.mxu0 0.0
  %6537 = vmatprep.subr.mxu0 0.0
  %6538 = vmatpush2.msra.mxu0 0.0
  %6539 = vmatprep.subr.mxu0 0.0
  %6540 = vmatpush2.msra.mxu0 0.0
  %6541 = vmatprep.subr.mxu0 0.0
  %6542 = vmatpush2.msra.mxu0 0.0
  %6543 = vmatprep.subr.mxu0 0.0
  %6544 = vmatpush2.msra.mxu0 0.0
  %6545 = vmatprep.subr.mxu0 0.0
  %6546 = vmatpush2.msra.mxu0 0.0
  %6547 = vmatprep.subr.mxu0 0.0
  %6548 = vmatpush2.msra.mxu0 0.0
  %6549 = vmatprep.subr.mxu0 0.0
  %6550 = vmatpush2.msra.mxu0 0.0
  %6551 = vmatprep.subr.mxu0 0.0
  %6552 = vmatpush2.msra.mxu0 0.0
  %6553 = vmatprep.subr.mxu0 0.0
  %6554 = vmatpush2.msra.mxu0 0.0
  %6555 = vmatprep.subr.mxu0 0.0
  %6556 = vmatpush2.msra.mxu0 0.0
  %6557 = vmatprep.subr.mxu0 0.0
  %6558 = vmatpush2.msra.mxu0 0.0
  %6559 = vmatprep.subr.mxu0 0.0
  %6560 = vmatpush2.msra.mxu0 0.0
  %6561 = vmatprep.subr.mxu0 0.0
  %6562 = vmatpush2.msra.mxu0 0.0
  %6563 = vmatprep.mubr.f32.mxu0 0.0
  %6564 = vmatmul.mubr.f32.gmra.mxu0 %v6488
  %v6565 = vpop.f32.mrf.mxu0
  %v6566 = vadd.f32 %v6469, %v6565
  %v6567 = vpop.f32.mrf.mxu0
  %6568 = vmatprep.mubr.f32.mxu0 0.0
  %6569 = vmatmul.mubr.f32.gmra.mxu0 %v6491
  %v6570 = vpop.f32.mrf.mxu0
  %v6571 = vadd.f32 %v6474, %v6570
  %v6572 = vpop.f32.mrf.mxu0
  %6573 = vmatprep.mubr.f32.mxu0 0.0
  %6574 = vmatmul.mubr.f32.gmra.mxu0 %v6494
  %v6575 = vpop.f32.mrf.mxu0
  %v6576 = vadd.f32 %v6479, %v6575
  %v6577 = vpop.f32.mrf.mxu0
  %6578 = vmatprep.mubr.f32.mxu0 0.0
  %6579 = vmatmul.mubr.f32.gmra.mxu0 %v6497
  %v6580 = vpop.f32.mrf.mxu0
  %v6581 = vadd.f32 %v6484, %v6580
  %v6582 = vpop.f32.mrf.mxu0
  %6583 = vdwg.mxu0
  %s6584 = scalar_lea.vmem %s3, 576
  %v6585 = vld [vmem:[%s6584] sm:$0xff]
  %v6586 = vld [vmem:[%s6584 + $0x8] sm:$0xff]
  %v6587 = vld [vmem:[%s6584 + $0x10] sm:$0xff]
  %v6588 = vld [vmem:[%s6584 + $0x18] sm:$0xff]
  %s6589 = scalar_lea.vmem %s4, 18
  %v6590 = vld [vmem:[%s6589] sm:$0x1]
  %v6592 = vlaneseq
  %v6593 = vshrl.u32 %v6592, 7
  %v6594 = vsub.s32 0, %v6593
  %v6595 = vrot.slane %v6590, %v6594
  %6597 = vmatprep.subr.mxu0 0.0
  %6598 = vmatpush1.msra.mxu0 0.0
  %6599 = vmatprep.subr.mxu0 0.0
  %6600 = vmatpush1.msra.mxu0 0.0
  %6601 = vmatprep.subr.mxu0 0.0
  %6602 = vmatpush1.msra.mxu0 0.0
  %6603 = vmatprep.subr.mxu0 0.0
  %6604 = vmatpush1.msra.mxu0 0.0
  %6605 = vmatprep.subr.mxu0 0.0
  %6606 = vmatpush1.msra.mxu0 0.0
  %6607 = vmatprep.subr.mxu0 0.0
  %6608 = vmatpush1.msra.mxu0 0.0
  %6609 = vmatprep.subr.mxu0 0.0
  %6610 = vmatpush1.msra.mxu0 0.0
  %6611 = vmatprep.subr.mxu0 0.0
  %6612 = vmatpush1.msra.mxu0 0.0
  %6613 = vmatprep.subr.mxu0 0.0
  %6614 = vmatpush1.msra.mxu0 0.0
  %6615 = vmatprep.subr.mxu0 0.0
  %6616 = vmatpush1.msra.mxu0 0.0
  %6617 = vmatprep.subr.mxu0 0.0
  %6618 = vmatpush1.msra.mxu0 0.0
  %6619 = vmatprep.subr.mxu0 0.0
  %6620 = vmatpush1.msra.mxu0 0.0
  %6621 = vmatprep.subr.mxu0 0.0
  %6622 = vmatpush1.msra.mxu0 %v6588
  %6623 = vmatprep.subr.mxu0 0.0
  %6624 = vmatpush1.msra.mxu0 %v6587
  %6625 = vmatprep.subr.mxu0 0.0
  %6626 = vmatpush1.msra.mxu0 %v6586
  %6627 = vmatprep.subr.mxu0 0.0
  %6628 = vmatpush1.msra.mxu0 %v6585
  %6629 = vmatprep.subr.mxu0 0.0
  %6630 = vmatpush2.msra.mxu0 0.0
  %6631 = vmatprep.subr.mxu0 0.0
  %6632 = vmatpush2.msra.mxu0 0.0
  %6633 = vmatprep.subr.mxu0 0.0
  %6634 = vmatpush2.msra.mxu0 0.0
  %6635 = vmatprep.subr.mxu0 0.0
  %6636 = vmatpush2.msra.mxu0 0.0
  %6637 = vmatprep.subr.mxu0 0.0
  %6638 = vmatpush2.msra.mxu0 0.0
  %6639 = vmatprep.subr.mxu0 0.0
  %6640 = vmatpush2.msra.mxu0 0.0
  %6641 = vmatprep.subr.mxu0 0.0
  %6642 = vmatpush2.msra.mxu0 0.0
  %6643 = vmatprep.subr.mxu0 0.0
  %6644 = vmatpush2.msra.mxu0 0.0
  %6645 = vmatprep.subr.mxu0 0.0
  %6646 = vmatpush2.msra.mxu0 0.0
  %6647 = vmatprep.subr.mxu0 0.0
  %6648 = vmatpush2.msra.mxu0 0.0
  %6649 = vmatprep.subr.mxu0 0.0
  %6650 = vmatpush2.msra.mxu0 0.0
  %6651 = vmatprep.subr.mxu0 0.0
  %6652 = vmatpush2.msra.mxu0 0.0
  %6653 = vmatprep.subr.mxu0 0.0
  %6654 = vmatpush2.msra.mxu0 0.0
  %6655 = vmatprep.subr.mxu0 0.0
  %6656 = vmatpush2.msra.mxu0 0.0
  %6657 = vmatprep.subr.mxu0 0.0
  %6658 = vmatpush2.msra.mxu0 0.0
  %6659 = vmatprep.subr.mxu0 0.0
  %6660 = vmatpush2.msra.mxu0 0.0
  %6661 = vmatprep.mubr.f32.mxu0 0.0
  %6662 = vmatmul.mubr.f32.gmra.mxu0 %v5300
  %v6663 = vpop.f32.mrf.mxu0
  %v6664 = vadd.f32 %v6595, %v6663
  %v6665 = vpop.f32.mrf.mxu0
  %6666 = vmatprep.mubr.f32.mxu0 0.0
  %6667 = vmatmul.mubr.f32.gmra.mxu0 %v5303
  %v6668 = vpop.f32.mrf.mxu0
  %v6669 = vadd.f32 %v6595, %v6668
  %v6670 = vpop.f32.mrf.mxu0
  %6671 = vmatprep.mubr.f32.mxu0 0.0
  %6672 = vmatmul.mubr.f32.gmra.mxu0 %v5306
  %v6673 = vpop.f32.mrf.mxu0
  %v6674 = vadd.f32 %v6595, %v6673
  %v6675 = vpop.f32.mrf.mxu0
  %6676 = vmatprep.mubr.f32.mxu0 0.0
  %6677 = vmatmul.mubr.f32.gmra.mxu0 %v5309
  %v6678 = vpop.f32.mrf.mxu0
  %v6679 = vadd.f32 %v6595, %v6678
  %v6680 = vpop.f32.mrf.mxu0
  %6681 = vdwg.mxu0
  %s6682 = scalar_lea.vmem %s3, 608
  %v6683 = vld [vmem:[%s6682] sm:$0xff]
  %v6684 = vld [vmem:[%s6682 + $0x8] sm:$0xff]
  %v6685 = vld [vmem:[%s6682 + $0x10] sm:$0xff]
  %v6686 = vld [vmem:[%s6682 + $0x18] sm:$0xff]
  %s6687 = scalar_lea.vmem %s4, 19
  %v6688 = vld [vmem:[%s6687] sm:$0x1]
  %v6690 = vlaneseq
  %v6691 = vshrl.u32 %v6690, 7
  %v6692 = vsub.s32 0, %v6691
  %v6693 = vrot.slane %v6688, %v6692
  %6695 = vmatprep.subr.mxu0 0.0
  %6696 = vmatpush1.msra.mxu0 0.0
  %6697 = vmatprep.subr.mxu0 0.0
  %6698 = vmatpush1.msra.mxu0 0.0
  %6699 = vmatprep.subr.mxu0 0.0
  %6700 = vmatpush1.msra.mxu0 0.0
  %6701 = vmatprep.subr.mxu0 0.0
  %6702 = vmatpush1.msra.mxu0 0.0
  %6703 = vmatprep.subr.mxu0 0.0
  %6704 = vmatpush1.msra.mxu0 0.0
  %6705 = vmatprep.subr.mxu0 0.0
  %6706 = vmatpush1.msra.mxu0 0.0
  %6707 = vmatprep.subr.mxu0 0.0
  %6708 = vmatpush1.msra.mxu0 0.0
  %6709 = vmatprep.subr.mxu0 0.0
  %6710 = vmatpush1.msra.mxu0 0.0
  %6711 = vmatprep.subr.mxu0 0.0
  %6712 = vmatpush1.msra.mxu0 0.0
  %6713 = vmatprep.subr.mxu0 0.0
  %6714 = vmatpush1.msra.mxu0 0.0
  %6715 = vmatprep.subr.mxu0 0.0
  %6716 = vmatpush1.msra.mxu0 0.0
  %6717 = vmatprep.subr.mxu0 0.0
  %6718 = vmatpush1.msra.mxu0 0.0
  %6719 = vmatprep.subr.mxu0 0.0
  %6720 = vmatpush1.msra.mxu0 %v6686
  %6721 = vmatprep.subr.mxu0 0.0
  %6722 = vmatpush1.msra.mxu0 %v6685
  %6723 = vmatprep.subr.mxu0 0.0
  %6724 = vmatpush1.msra.mxu0 %v6684
  %6725 = vmatprep.subr.mxu0 0.0
  %6726 = vmatpush1.msra.mxu0 %v6683
  %6727 = vmatprep.subr.mxu0 0.0
  %6728 = vmatpush2.msra.mxu0 0.0
  %6729 = vmatprep.subr.mxu0 0.0
  %6730 = vmatpush2.msra.mxu0 0.0
  %6731 = vmatprep.subr.mxu0 0.0
  %6732 = vmatpush2.msra.mxu0 0.0
  %6733 = vmatprep.subr.mxu0 0.0
  %6734 = vmatpush2.msra.mxu0 0.0
  %6735 = vmatprep.subr.mxu0 0.0
  %6736 = vmatpush2.msra.mxu0 0.0
  %6737 = vmatprep.subr.mxu0 0.0
  %6738 = vmatpush2.msra.mxu0 0.0
  %6739 = vmatprep.subr.mxu0 0.0
  %6740 = vmatpush2.msra.mxu0 0.0
  %6741 = vmatprep.subr.mxu0 0.0
  %6742 = vmatpush2.msra.mxu0 0.0
  %6743 = vmatprep.subr.mxu0 0.0
  %6744 = vmatpush2.msra.mxu0 0.0
  %6745 = vmatprep.subr.mxu0 0.0
  %6746 = vmatpush2.msra.mxu0 0.0
  %6747 = vmatprep.subr.mxu0 0.0
  %6748 = vmatpush2.msra.mxu0 0.0
  %6749 = vmatprep.subr.mxu0 0.0
  %6750 = vmatpush2.msra.mxu0 0.0
  %6751 = vmatprep.subr.mxu0 0.0
  %6752 = vmatpush2.msra.mxu0 0.0
  %6753 = vmatprep.subr.mxu0 0.0
  %6754 = vmatpush2.msra.mxu0 0.0
  %6755 = vmatprep.subr.mxu0 0.0
  %6756 = vmatpush2.msra.mxu0 0.0
  %6757 = vmatprep.subr.mxu0 0.0
  %6758 = vmatpush2.msra.mxu0 0.0
  %6759 = vmatprep.mubr.f32.mxu0 0.0
  %6760 = vmatmul.mubr.f32.gmra.mxu0 %v5300
  %v6761 = vpop.f32.mrf.mxu0
  %v6762 = vadd.f32 %v6693, %v6761
  %v6763 = vpop.f32.mrf.mxu0
  %6764 = vmatprep.mubr.f32.mxu0 0.0
  %6765 = vmatmul.mubr.f32.gmra.mxu0 %v5303
  %v6766 = vpop.f32.mrf.mxu0
  %v6767 = vadd.f32 %v6693, %v6766
  %v6768 = vpop.f32.mrf.mxu0
  %6769 = vmatprep.mubr.f32.mxu0 0.0
  %6770 = vmatmul.mubr.f32.gmra.mxu0 %v5306
  %v6771 = vpop.f32.mrf.mxu0
  %v6772 = vadd.f32 %v6693, %v6771
  %v6773 = vpop.f32.mrf.mxu0
  %6774 = vmatprep.mubr.f32.mxu0 0.0
  %6775 = vmatmul.mubr.f32.gmra.mxu0 %v5309
  %v6776 = vpop.f32.mrf.mxu0
  %v6777 = vadd.f32 %v6693, %v6776
  %v6778 = vpop.f32.mrf.mxu0
  %6779 = vdwg.mxu0
  %s6780 = scalar_lea.vmem %s3, 640
  %v6781 = vld [vmem:[%s6780] sm:$0xff]
  %v6782 = vld [vmem:[%s6780 + $0x8] sm:$0xff]
  %v6783 = vld [vmem:[%s6780 + $0x10] sm:$0xff]
  %v6784 = vld [vmem:[%s6780 + $0x18] sm:$0xff]
  %s6785 = scalar_lea.vmem %s4, 20
  %v6786 = vld [vmem:[%s6785] sm:$0x1]
  %v6788 = vlaneseq
  %v6789 = vshrl.u32 %v6788, 7
  %v6790 = vsub.s32 0, %v6789
  %v6791 = vrot.slane %v6786, %v6790
  %6793 = vmatprep.subr.mxu0 0.0
  %6794 = vmatpush1.msra.mxu0 0.0
  %6795 = vmatprep.subr.mxu0 0.0
  %6796 = vmatpush1.msra.mxu0 0.0
  %6797 = vmatprep.subr.mxu0 0.0
  %6798 = vmatpush1.msra.mxu0 0.0
  %6799 = vmatprep.subr.mxu0 0.0
  %6800 = vmatpush1.msra.mxu0 0.0
  %6801 = vmatprep.subr.mxu0 0.0
  %6802 = vmatpush1.msra.mxu0 0.0
  %6803 = vmatprep.subr.mxu0 0.0
  %6804 = vmatpush1.msra.mxu0 0.0
  %6805 = vmatprep.subr.mxu0 0.0
  %6806 = vmatpush1.msra.mxu0 0.0
  %6807 = vmatprep.subr.mxu0 0.0
  %6808 = vmatpush1.msra.mxu0 0.0
  %6809 = vmatprep.subr.mxu0 0.0
  %6810 = vmatpush1.msra.mxu0 0.0
  %6811 = vmatprep.subr.mxu0 0.0
  %6812 = vmatpush1.msra.mxu0 0.0
  %6813 = vmatprep.subr.mxu0 0.0
  %6814 = vmatpush1.msra.mxu0 0.0
  %6815 = vmatprep.subr.mxu0 0.0
  %6816 = vmatpush1.msra.mxu0 0.0
  %6817 = vmatprep.subr.mxu0 0.0
  %6818 = vmatpush1.msra.mxu0 %v6784
  %6819 = vmatprep.subr.mxu0 0.0
  %6820 = vmatpush1.msra.mxu0 %v6783
  %6821 = vmatprep.subr.mxu0 0.0
  %6822 = vmatpush1.msra.mxu0 %v6782
  %6823 = vmatprep.subr.mxu0 0.0
  %6824 = vmatpush1.msra.mxu0 %v6781
  %6825 = vmatprep.subr.mxu0 0.0
  %6826 = vmatpush2.msra.mxu0 0.0
  %6827 = vmatprep.subr.mxu0 0.0
  %6828 = vmatpush2.msra.mxu0 0.0
  %6829 = vmatprep.subr.mxu0 0.0
  %6830 = vmatpush2.msra.mxu0 0.0
  %6831 = vmatprep.subr.mxu0 0.0
  %6832 = vmatpush2.msra.mxu0 0.0
  %6833 = vmatprep.subr.mxu0 0.0
  %6834 = vmatpush2.msra.mxu0 0.0
  %6835 = vmatprep.subr.mxu0 0.0
  %6836 = vmatpush2.msra.mxu0 0.0
  %6837 = vmatprep.subr.mxu0 0.0
  %6838 = vmatpush2.msra.mxu0 0.0
  %6839 = vmatprep.subr.mxu0 0.0
  %6840 = vmatpush2.msra.mxu0 0.0
  %6841 = vmatprep.subr.mxu0 0.0
  %6842 = vmatpush2.msra.mxu0 0.0
  %6843 = vmatprep.subr.mxu0 0.0
  %6844 = vmatpush2.msra.mxu0 0.0
  %6845 = vmatprep.subr.mxu0 0.0
  %6846 = vmatpush2.msra.mxu0 0.0
  %6847 = vmatprep.subr.mxu0 0.0
  %6848 = vmatpush2.msra.mxu0 0.0
  %6849 = vmatprep.subr.mxu0 0.0
  %6850 = vmatpush2.msra.mxu0 0.0
  %6851 = vmatprep.subr.mxu0 0.0
  %6852 = vmatpush2.msra.mxu0 0.0
  %6853 = vmatprep.subr.mxu0 0.0
  %6854 = vmatpush2.msra.mxu0 0.0
  %6855 = vmatprep.subr.mxu0 0.0
  %6856 = vmatpush2.msra.mxu0 0.0
  %6857 = vmatprep.mubr.f32.mxu0 0.0
  %6858 = vmatmul.mubr.f32.gmra.mxu0 %v5300
  %v6859 = vpop.f32.mrf.mxu0
  %v6860 = vadd.f32 %v6791, %v6859
  %v6861 = vpop.f32.mrf.mxu0
  %6862 = vmatprep.mubr.f32.mxu0 0.0
  %6863 = vmatmul.mubr.f32.gmra.mxu0 %v5303
  %v6864 = vpop.f32.mrf.mxu0
  %v6865 = vadd.f32 %v6791, %v6864
  %v6866 = vpop.f32.mrf.mxu0
  %6867 = vmatprep.mubr.f32.mxu0 0.0
  %6868 = vmatmul.mubr.f32.gmra.mxu0 %v5306
  %v6869 = vpop.f32.mrf.mxu0
  %v6870 = vadd.f32 %v6791, %v6869
  %v6871 = vpop.f32.mrf.mxu0
  %6872 = vmatprep.mubr.f32.mxu0 0.0
  %6873 = vmatmul.mubr.f32.gmra.mxu0 %v5309
  %v6874 = vpop.f32.mrf.mxu0
  %v6875 = vadd.f32 %v6791, %v6874
  %v6876 = vpop.f32.mrf.mxu0
  %6877 = vdwg.mxu0
  %v6879 = vsel %vm605, %v6664, 0
  %v6882 = vsel %vm605, %v6669, 0
  %v6885 = vsel %vm605, %v6674, 0
  %v6888 = vsel %vm605, %v6679, 0
  %v6891 = vsel %vm605, %v6762, 0
  %v6894 = vsel %vm605, %v6767, 0
  %v6897 = vsel %vm605, %v6772, 0
  %v6900 = vsel %vm605, %v6777, 0
  %6902 = vmatprep.subr.mxu0 0.0
  %6903 = vmatpush1.xpose.msra.mxu0 0.0
  %6904 = vmatprep.subr.mxu0 0.0
  %6905 = vmatpush1.xpose.msra.mxu0 0.0
  %6906 = vmatprep.subr.mxu0 0.0
  %6907 = vmatpush1.xpose.msra.mxu0 0.0
  %6908 = vmatprep.subr.mxu0 0.0
  %6909 = vmatpush1.xpose.msra.mxu0 0.0
  %6910 = vmatprep.subr.mxu0 0.0
  %6911 = vmatpush1.xpose.msra.mxu0 0.0
  %6912 = vmatprep.subr.mxu0 0.0
  %6913 = vmatpush1.xpose.msra.mxu0 0.0
  %6914 = vmatprep.subr.mxu0 0.0
  %6915 = vmatpush1.xpose.msra.mxu0 0.0
  %6916 = vmatprep.subr.mxu0 0.0
  %6917 = vmatpush1.xpose.msra.mxu0 0.0
  %6918 = vmatprep.subr.mxu0 0.0
  %6919 = vmatpush1.xpose.msra.mxu0 0.0
  %6920 = vmatprep.subr.mxu0 0.0
  %6921 = vmatpush1.xpose.msra.mxu0 0.0
  %6922 = vmatprep.subr.mxu0 0.0
  %6923 = vmatpush1.xpose.msra.mxu0 0.0
  %6924 = vmatprep.subr.mxu0 0.0
  %6925 = vmatpush1.xpose.msra.mxu0 0.0
  %6926 = vmatprep.subr.mxu0 0.0
  %6927 = vmatpush1.xpose.msra.mxu0 %v6900
  %6928 = vmatprep.subr.mxu0 0.0
  %6929 = vmatpush1.xpose.msra.mxu0 %v6897
  %6930 = vmatprep.subr.mxu0 0.0
  %6931 = vmatpush1.xpose.msra.mxu0 %v6894
  %6932 = vmatprep.subr.mxu0 0.0
  %6933 = vmatpush1.xpose.msra.mxu0 %v6891
  %6934 = vmatprep.subr.mxu0 0.0
  %6935 = vmatpush2.xpose.msra.mxu0 0.0
  %6936 = vmatprep.subr.mxu0 0.0
  %6937 = vmatpush2.xpose.msra.mxu0 0.0
  %6938 = vmatprep.subr.mxu0 0.0
  %6939 = vmatpush2.xpose.msra.mxu0 0.0
  %6940 = vmatprep.subr.mxu0 0.0
  %6941 = vmatpush2.xpose.msra.mxu0 0.0
  %6942 = vmatprep.subr.mxu0 0.0
  %6943 = vmatpush2.xpose.msra.mxu0 0.0
  %6944 = vmatprep.subr.mxu0 0.0
  %6945 = vmatpush2.xpose.msra.mxu0 0.0
  %6946 = vmatprep.subr.mxu0 0.0
  %6947 = vmatpush2.xpose.msra.mxu0 0.0
  %6948 = vmatprep.subr.mxu0 0.0
  %6949 = vmatpush2.xpose.msra.mxu0 0.0
  %6950 = vmatprep.subr.mxu0 0.0
  %6951 = vmatpush2.xpose.msra.mxu0 0.0
  %6952 = vmatprep.subr.mxu0 0.0
  %6953 = vmatpush2.xpose.msra.mxu0 0.0
  %6954 = vmatprep.subr.mxu0 0.0
  %6955 = vmatpush2.xpose.msra.mxu0 0.0
  %6956 = vmatprep.subr.mxu0 0.0
  %6957 = vmatpush2.xpose.msra.mxu0 0.0
  %6958 = vmatprep.subr.mxu0 0.0
  %6959 = vmatpush2.xpose.msra.mxu0 0.0
  %6960 = vmatprep.subr.mxu0 0.0
  %6961 = vmatpush2.xpose.msra.mxu0 0.0
  %6962 = vmatprep.subr.mxu0 0.0
  %6963 = vmatpush2.xpose.msra.mxu0 0.0
  %6964 = vmatprep.subr.mxu0 0.0
  %6965 = vmatpush2.xpose.msra.mxu0 0.0
  %6966 = vmatprep.mubr.f32.mxu0 0.0
  %6967 = vmatmul.mubr.f32.gmra.mxu0 %v6879
  %v6968 = vpop.f32.mrf.mxu0
  %v6969 = vadd.f32 %v296, %v6968
  %v6970 = vpop.f32.mrf.mxu0
  %6971 = vmatprep.mubr.f32.mxu0 0.0
  %6972 = vmatmul.mubr.f32.gmra.mxu0 %v6882
  %v6973 = vpop.f32.mrf.mxu0
  %v6974 = vadd.f32 %v297, %v6973
  %v6975 = vpop.f32.mrf.mxu0
  %6976 = vmatprep.mubr.f32.mxu0 0.0
  %6977 = vmatmul.mubr.f32.gmra.mxu0 %v6885
  %v6978 = vpop.f32.mrf.mxu0
  %v6979 = vadd.f32 %v298, %v6978
  %v6980 = vpop.f32.mrf.mxu0
  %6981 = vmatprep.mubr.f32.mxu0 0.0
  %6982 = vmatmul.mubr.f32.gmra.mxu0 %v6888
  %v6983 = vpop.f32.mrf.mxu0
  %v6984 = vadd.f32 %v299, %v6983
  %v6985 = vpop.f32.mrf.mxu0
  %6986 = vdwg.mxu0
  %v6987 = vsel %vm311, %v6969, -inf
  %6988 = vmax.xlane.f32.xlu0 %v6987
  %v6989 = vpop.xlane.xlu0 %6988
  %v6990 = vsel %vm311, %v6974, -inf
  %6991 = vmax.xlane.f32.xlu0 %v6990
  %v6992 = vpop.xlane.xlu0 %6991
  %v6993 = vsel %vm311, %v6979, -inf
  %6994 = vmax.xlane.f32.xlu0 %v6993
  %v6995 = vpop.xlane.xlu0 %6994
  %v6996 = vsel %vm311, %v6984, -inf
  %6997 = vmax.xlane.f32.xlu0 %v6996
  %v6998 = vpop.xlane.xlu0 %6997
  %v6999 = vsub.f32 %v6969, %v6989
  %v7000 = vsub.f32 %v6974, %v6992
  %v7001 = vsub.f32 %v6979, %v6995
  %v7002 = vsub.f32 %v6984, %v6998
  %v7003 = vmul.f32 %v6999, 1.442695
  %v7004 = vpow.pop %v7003
  %v7005 = vmul.f32 %v7000, 1.442695
  %v7006 = vpow.pop %v7005
  %v7007 = vmul.f32 %v7001, 1.442695
  %v7008 = vpow.pop %v7007
  %v7009 = vmul.f32 %v7002, 1.442695
  %v7010 = vpow.pop %v7009
  %v7011 = vsel %vm311, %v7004, 0.0
  %7012 = vadd.xlane.f32.xlu0 %v7011
  %v7013 = vpop.xlane.xlu0 %7012
  %v7014 = vsel %vm311, %v7006, 0.0
  %7015 = vadd.xlane.f32.xlu0 %v7014
  %v7016 = vpop.xlane.xlu0 %7015
  %v7017 = vsel %vm311, %v7008, 0.0
  %7018 = vadd.xlane.f32.xlu0 %v7017
  %v7019 = vpop.xlane.xlu0 %7018
  %v7020 = vsel %vm311, %v7010, 0.0
  %7021 = vadd.xlane.f32.xlu0 %v7020
  %v7022 = vpop.xlane.xlu0 %7021
  %v7023 = vrcp.pop %v7013
  %v7024 = vrcp.pop %v7016
  %v7025 = vrcp.pop %v7019
  %v7026 = vrcp.pop %v7022
  %v7027 = vmul.f32 %v7004, %v7023
  %v7028 = vmul.f32 %v7006, %v7024
  %v7029 = vmul.f32 %v7008, %v7025
  %v7030 = vmul.f32 %v7010, %v7026
  %v7032 = vsel %vm311, %v7027, 0
  %v7035 = vsel %vm311, %v7028, 0
  %v7038 = vsel %vm311, %v7029, 0
  %v7041 = vsel %vm311, %v7030, 0
  %7043 = vmatprep.subr.mxu0 0.0
  %7044 = vmatpush1.msra.mxu0 0.0
  %7045 = vmatprep.subr.mxu0 0.0
  %7046 = vmatpush1.msra.mxu0 0.0
  %7047 = vmatprep.subr.mxu0 0.0
  %7048 = vmatpush1.msra.mxu0 0.0
  %7049 = vmatprep.subr.mxu0 0.0
  %7050 = vmatpush1.msra.mxu0 0.0
  %7051 = vmatprep.subr.mxu0 0.0
  %7052 = vmatpush1.msra.mxu0 0.0
  %7053 = vmatprep.subr.mxu0 0.0
  %7054 = vmatpush1.msra.mxu0 0.0
  %7055 = vmatprep.subr.mxu0 0.0
  %7056 = vmatpush1.msra.mxu0 0.0
  %7057 = vmatprep.subr.mxu0 0.0
  %7058 = vmatpush1.msra.mxu0 0.0
  %7059 = vmatprep.subr.mxu0 0.0
  %7060 = vmatpush1.msra.mxu0 0.0
  %7061 = vmatprep.subr.mxu0 0.0
  %7062 = vmatpush1.msra.mxu0 0.0
  %7063 = vmatprep.subr.mxu0 0.0
  %7064 = vmatpush1.msra.mxu0 0.0
  %7065 = vmatprep.subr.mxu0 0.0
  %7066 = vmatpush1.msra.mxu0 0.0
  %7067 = vmatprep.subr.mxu0 0.0
  %7068 = vmatpush1.msra.mxu0 %v6875
  %7069 = vmatprep.subr.mxu0 0.0
  %7070 = vmatpush1.msra.mxu0 %v6870
  %7071 = vmatprep.subr.mxu0 0.0
  %7072 = vmatpush1.msra.mxu0 %v6865
  %7073 = vmatprep.subr.mxu0 0.0
  %7074 = vmatpush1.msra.mxu0 %v6860
  %7075 = vmatprep.subr.mxu0 0.0
  %7076 = vmatpush2.msra.mxu0 0.0
  %7077 = vmatprep.subr.mxu0 0.0
  %7078 = vmatpush2.msra.mxu0 0.0
  %7079 = vmatprep.subr.mxu0 0.0
  %7080 = vmatpush2.msra.mxu0 0.0
  %7081 = vmatprep.subr.mxu0 0.0
  %7082 = vmatpush2.msra.mxu0 0.0
  %7083 = vmatprep.subr.mxu0 0.0
  %7084 = vmatpush2.msra.mxu0 0.0
  %7085 = vmatprep.subr.mxu0 0.0
  %7086 = vmatpush2.msra.mxu0 0.0
  %7087 = vmatprep.subr.mxu0 0.0
  %7088 = vmatpush2.msra.mxu0 0.0
  %7089 = vmatprep.subr.mxu0 0.0
  %7090 = vmatpush2.msra.mxu0 0.0
  %7091 = vmatprep.subr.mxu0 0.0
  %7092 = vmatpush2.msra.mxu0 0.0
  %7093 = vmatprep.subr.mxu0 0.0
  %7094 = vmatpush2.msra.mxu0 0.0
  %7095 = vmatprep.subr.mxu0 0.0
  %7096 = vmatpush2.msra.mxu0 0.0
  %7097 = vmatprep.subr.mxu0 0.0
  %7098 = vmatpush2.msra.mxu0 0.0
  %7099 = vmatprep.subr.mxu0 0.0
  %7100 = vmatpush2.msra.mxu0 0.0
  %7101 = vmatprep.subr.mxu0 0.0
  %7102 = vmatpush2.msra.mxu0 0.0
  %7103 = vmatprep.subr.mxu0 0.0
  %7104 = vmatpush2.msra.mxu0 0.0
  %7105 = vmatprep.subr.mxu0 0.0
  %7106 = vmatpush2.msra.mxu0 0.0
  %7107 = vmatprep.mubr.f32.mxu0 0.0
  %7108 = vmatmul.mubr.f32.gmra.mxu0 %v7032
  %v7109 = vpop.f32.mrf.mxu0
  %v7110 = vadd.f32 0.0, %v7109
  %v7111 = vpop.f32.mrf.mxu0
  %7112 = vmatprep.mubr.f32.mxu0 0.0
  %7113 = vmatmul.mubr.f32.gmra.mxu0 %v7035
  %v7114 = vpop.f32.mrf.mxu0
  %v7115 = vadd.f32 0.0, %v7114
  %v7116 = vpop.f32.mrf.mxu0
  %7117 = vmatprep.mubr.f32.mxu0 0.0
  %7118 = vmatmul.mubr.f32.gmra.mxu0 %v7038
  %v7119 = vpop.f32.mrf.mxu0
  %v7120 = vadd.f32 0.0, %v7119
  %v7121 = vpop.f32.mrf.mxu0
  %7122 = vmatprep.mubr.f32.mxu0 0.0
  %7123 = vmatmul.mubr.f32.gmra.mxu0 %v7041
  %v7124 = vpop.f32.mrf.mxu0
  %v7125 = vadd.f32 0.0, %v7124
  %v7126 = vpop.f32.mrf.mxu0
  %7127 = vdwg.mxu0
  %s7128 = scalar_lea.vmem %s5, 48
  %v7129 = vld [vmem:[%s7128] sm:$0xff]
  %v7131 = vsel %vm605, %v7110, 0
  %v7134 = vsel %vm605, %v7115, 0
  %v7137 = vsel %vm605, %v7120, 0
  %v7140 = vsel %vm605, %v7125, 0
  %7142 = vmatprep.subr.mxu0 0.0
  %7143 = vmatpush1.msra.mxu0 0.0
  %7144 = vmatprep.subr.mxu0 0.0
  %7145 = vmatpush1.msra.mxu0 0.0
  %7146 = vmatprep.subr.mxu0 0.0
  %7147 = vmatpush1.msra.mxu0 0.0
  %7148 = vmatprep.subr.mxu0 0.0
  %7149 = vmatpush1.msra.mxu0 0.0
  %7150 = vmatprep.subr.mxu0 0.0
  %7151 = vmatpush1.msra.mxu0 0.0
  %7152 = vmatprep.subr.mxu0 0.0
  %7153 = vmatpush1.msra.mxu0 0.0
  %7154 = vmatprep.subr.mxu0 0.0
  %7155 = vmatpush1.msra.mxu0 0.0
  %7156 = vmatprep.subr.mxu0 0.0
  %7157 = vmatpush1.msra.mxu0 0.0
  %7158 = vmatprep.subr.mxu0 0.0
  %7159 = vmatpush1.msra.mxu0 0.0
  %7160 = vmatprep.subr.mxu0 0.0
  %7161 = vmatpush1.msra.mxu0 0.0
  %7162 = vmatprep.subr.mxu0 0.0
  %7163 = vmatpush1.msra.mxu0 0.0
  %7164 = vmatprep.subr.mxu0 0.0
  %7165 = vmatpush1.msra.mxu0 0.0
  %7166 = vmatprep.subr.mxu0 0.0
  %7167 = vmatpush1.msra.mxu0 0.0
  %7168 = vmatprep.subr.mxu0 0.0
  %7169 = vmatpush1.msra.mxu0 0.0
  %7170 = vmatprep.subr.mxu0 0.0
  %7171 = vmatpush1.msra.mxu0 0.0
  %7172 = vmatprep.subr.mxu0 0.0
  %7173 = vmatpush1.msra.mxu0 %v7129
  %7174 = vmatprep.subr.mxu0 0.0
  %7175 = vmatpush2.msra.mxu0 0.0
  %7176 = vmatprep.subr.mxu0 0.0
  %7177 = vmatpush2.msra.mxu0 0.0
  %7178 = vmatprep.subr.mxu0 0.0
  %7179 = vmatpush2.msra.mxu0 0.0
  %7180 = vmatprep.subr.mxu0 0.0
  %7181 = vmatpush2.msra.mxu0 0.0
  %7182 = vmatprep.subr.mxu0 0.0
  %7183 = vmatpush2.msra.mxu0 0.0
  %7184 = vmatprep.subr.mxu0 0.0
  %7185 = vmatpush2.msra.mxu0 0.0
  %7186 = vmatprep.subr.mxu0 0.0
  %7187 = vmatpush2.msra.mxu0 0.0
  %7188 = vmatprep.subr.mxu0 0.0
  %7189 = vmatpush2.msra.mxu0 0.0
  %7190 = vmatprep.subr.mxu0 0.0
  %7191 = vmatpush2.msra.mxu0 0.0
  %7192 = vmatprep.subr.mxu0 0.0
  %7193 = vmatpush2.msra.mxu0 0.0
  %7194 = vmatprep.subr.mxu0 0.0
  %7195 = vmatpush2.msra.mxu0 0.0
  %7196 = vmatprep.subr.mxu0 0.0
  %7197 = vmatpush2.msra.mxu0 0.0
  %7198 = vmatprep.subr.mxu0 0.0
  %7199 = vmatpush2.msra.mxu0 0.0
  %7200 = vmatprep.subr.mxu0 0.0
  %7201 = vmatpush2.msra.mxu0 0.0
  %7202 = vmatprep.subr.mxu0 0.0
  %7203 = vmatpush2.msra.mxu0 0.0
  %7204 = vmatprep.subr.mxu0 0.0
  %7205 = vmatpush2.msra.mxu0 0.0
  %7206 = vmatprep.mubr.f32.mxu0 0.0
  %7207 = vmatmul.mubr.f32.gmra.mxu0 %v7131
  %v7208 = vpop.f32.mrf.mxu0
  %v7209 = vadd.f32 0.0, %v7208
  %v7210 = vpop.f32.mrf.mxu0
  %7211 = vmatprep.mubr.f32.mxu0 0.0
  %7212 = vmatmul.mubr.f32.gmra.mxu0 %v7134
  %v7213 = vpop.f32.mrf.mxu0
  %v7214 = vadd.f32 0.0, %v7213
  %v7215 = vpop.f32.mrf.mxu0
  %7216 = vmatprep.mubr.f32.mxu0 0.0
  %7217 = vmatmul.mubr.f32.gmra.mxu0 %v7137
  %v7218 = vpop.f32.mrf.mxu0
  %v7219 = vadd.f32 0.0, %v7218
  %v7220 = vpop.f32.mrf.mxu0
  %7221 = vmatprep.mubr.f32.mxu0 0.0
  %7222 = vmatmul.mubr.f32.gmra.mxu0 %v7140
  %v7223 = vpop.f32.mrf.mxu0
  %v7224 = vadd.f32 0.0, %v7223
  %v7225 = vpop.f32.mrf.mxu0
  %7226 = vdwg.mxu0
  %v7227 = vadd.f32 %v6566, %v7209
  %v7228 = vadd.f32 %v6571, %v7214
  %v7229 = vadd.f32 %v6576, %v7219
  %v7230 = vadd.f32 %v6581, %v7224
  %s7231 = scalar_lea.vmem %s3, 672
  %v7232 = vld [vmem:[%s7231] sm:$0xff]
  %v7233 = vld [vmem:[%s7231 + $0x8] sm:$0xff]
  %v7234 = vld [vmem:[%s7231 + $0x10] sm:$0xff]
  %v7235 = vld [vmem:[%s7231 + $0x18] sm:$0xff]
  %s7236 = scalar_lea.vmem %s4, 21
  %v7237 = vld [vmem:[%s7236] sm:$0x1]
  %v7239 = vlaneseq
  %v7240 = vshrl.u32 %v7239, 7
  %v7241 = vsub.s32 0, %v7240
  %v7242 = vrot.slane %v7237, %v7241
  %7244 = vmatprep.subr.mxu0 0.0
  %7245 = vmatpush1.msra.mxu0 0.0
  %7246 = vmatprep.subr.mxu0 0.0
  %7247 = vmatpush1.msra.mxu0 0.0
  %7248 = vmatprep.subr.mxu0 0.0
  %7249 = vmatpush1.msra.mxu0 0.0
  %7250 = vmatprep.subr.mxu0 0.0
  %7251 = vmatpush1.msra.mxu0 0.0
  %7252 = vmatprep.subr.mxu0 0.0
  %7253 = vmatpush1.msra.mxu0 0.0
  %7254 = vmatprep.subr.mxu0 0.0
  %7255 = vmatpush1.msra.mxu0 0.0
  %7256 = vmatprep.subr.mxu0 0.0
  %7257 = vmatpush1.msra.mxu0 0.0
  %7258 = vmatprep.subr.mxu0 0.0
  %7259 = vmatpush1.msra.mxu0 0.0
  %7260 = vmatprep.subr.mxu0 0.0
  %7261 = vmatpush1.msra.mxu0 0.0
  %7262 = vmatprep.subr.mxu0 0.0
  %7263 = vmatpush1.msra.mxu0 0.0
  %7264 = vmatprep.subr.mxu0 0.0
  %7265 = vmatpush1.msra.mxu0 0.0
  %7266 = vmatprep.subr.mxu0 0.0
  %7267 = vmatpush1.msra.mxu0 0.0
  %7268 = vmatprep.subr.mxu0 0.0
  %7269 = vmatpush1.msra.mxu0 %v7235
  %7270 = vmatprep.subr.mxu0 0.0
  %7271 = vmatpush1.msra.mxu0 %v7234
  %7272 = vmatprep.subr.mxu0 0.0
  %7273 = vmatpush1.msra.mxu0 %v7233
  %7274 = vmatprep.subr.mxu0 0.0
  %7275 = vmatpush1.msra.mxu0 %v7232
  %7276 = vmatprep.subr.mxu0 0.0
  %7277 = vmatpush2.msra.mxu0 0.0
  %7278 = vmatprep.subr.mxu0 0.0
  %7279 = vmatpush2.msra.mxu0 0.0
  %7280 = vmatprep.subr.mxu0 0.0
  %7281 = vmatpush2.msra.mxu0 0.0
  %7282 = vmatprep.subr.mxu0 0.0
  %7283 = vmatpush2.msra.mxu0 0.0
  %7284 = vmatprep.subr.mxu0 0.0
  %7285 = vmatpush2.msra.mxu0 0.0
  %7286 = vmatprep.subr.mxu0 0.0
  %7287 = vmatpush2.msra.mxu0 0.0
  %7288 = vmatprep.subr.mxu0 0.0
  %7289 = vmatpush2.msra.mxu0 0.0
  %7290 = vmatprep.subr.mxu0 0.0
  %7291 = vmatpush2.msra.mxu0 0.0
  %7292 = vmatprep.subr.mxu0 0.0
  %7293 = vmatpush2.msra.mxu0 0.0
  %7294 = vmatprep.subr.mxu0 0.0
  %7295 = vmatpush2.msra.mxu0 0.0
  %7296 = vmatprep.subr.mxu0 0.0
  %7297 = vmatpush2.msra.mxu0 0.0
  %7298 = vmatprep.subr.mxu0 0.0
  %7299 = vmatpush2.msra.mxu0 0.0
  %7300 = vmatprep.subr.mxu0 0.0
  %7301 = vmatpush2.msra.mxu0 0.0
  %7302 = vmatprep.subr.mxu0 0.0
  %7303 = vmatpush2.msra.mxu0 0.0
  %7304 = vmatprep.subr.mxu0 0.0
  %7305 = vmatpush2.msra.mxu0 0.0
  %7306 = vmatprep.subr.mxu0 0.0
  %7307 = vmatpush2.msra.mxu0 0.0
  %7308 = vmatprep.mubr.f32.mxu0 0.0
  %7309 = vmatmul.mubr.f32.gmra.mxu0 %v5300
  %v7310 = vpop.f32.mrf.mxu0
  %v7311 = vadd.f32 %v7242, %v7310
  %v7312 = vpop.f32.mrf.mxu0
  %7313 = vmatprep.mubr.f32.mxu0 0.0
  %7314 = vmatmul.mubr.f32.gmra.mxu0 %v5303
  %v7315 = vpop.f32.mrf.mxu0
  %v7316 = vadd.f32 %v7242, %v7315
  %v7317 = vpop.f32.mrf.mxu0
  %7318 = vmatprep.mubr.f32.mxu0 0.0
  %7319 = vmatmul.mubr.f32.gmra.mxu0 %v5306
  %v7320 = vpop.f32.mrf.mxu0
  %v7321 = vadd.f32 %v7242, %v7320
  %v7322 = vpop.f32.mrf.mxu0
  %7323 = vmatprep.mubr.f32.mxu0 0.0
  %7324 = vmatmul.mubr.f32.gmra.mxu0 %v5309
  %v7325 = vpop.f32.mrf.mxu0
  %v7326 = vadd.f32 %v7242, %v7325
  %v7327 = vpop.f32.mrf.mxu0
  %7328 = vdwg.mxu0
  %s7329 = scalar_lea.vmem %s3, 704
  %v7330 = vld [vmem:[%s7329] sm:$0xff]
  %v7331 = vld [vmem:[%s7329 + $0x8] sm:$0xff]
  %v7332 = vld [vmem:[%s7329 + $0x10] sm:$0xff]
  %v7333 = vld [vmem:[%s7329 + $0x18] sm:$0xff]
  %s7334 = scalar_lea.vmem %s4, 22
  %v7335 = vld [vmem:[%s7334] sm:$0x1]
  %v7337 = vlaneseq
  %v7338 = vshrl.u32 %v7337, 7
  %v7339 = vsub.s32 0, %v7338
  %v7340 = vrot.slane %v7335, %v7339
  %7342 = vmatprep.subr.mxu0 0.0
  %7343 = vmatpush1.msra.mxu0 0.0
  %7344 = vmatprep.subr.mxu0 0.0
  %7345 = vmatpush1.msra.mxu0 0.0
  %7346 = vmatprep.subr.mxu0 0.0
  %7347 = vmatpush1.msra.mxu0 0.0
  %7348 = vmatprep.subr.mxu0 0.0
  %7349 = vmatpush1.msra.mxu0 0.0
  %7350 = vmatprep.subr.mxu0 0.0
  %7351 = vmatpush1.msra.mxu0 0.0
  %7352 = vmatprep.subr.mxu0 0.0
  %7353 = vmatpush1.msra.mxu0 0.0
  %7354 = vmatprep.subr.mxu0 0.0
  %7355 = vmatpush1.msra.mxu0 0.0
  %7356 = vmatprep.subr.mxu0 0.0
  %7357 = vmatpush1.msra.mxu0 0.0
  %7358 = vmatprep.subr.mxu0 0.0
  %7359 = vmatpush1.msra.mxu0 0.0
  %7360 = vmatprep.subr.mxu0 0.0
  %7361 = vmatpush1.msra.mxu0 0.0
  %7362 = vmatprep.subr.mxu0 0.0
  %7363 = vmatpush1.msra.mxu0 0.0
  %7364 = vmatprep.subr.mxu0 0.0
  %7365 = vmatpush1.msra.mxu0 0.0
  %7366 = vmatprep.subr.mxu0 0.0
  %7367 = vmatpush1.msra.mxu0 %v7333
  %7368 = vmatprep.subr.mxu0 0.0
  %7369 = vmatpush1.msra.mxu0 %v7332
  %7370 = vmatprep.subr.mxu0 0.0
  %7371 = vmatpush1.msra.mxu0 %v7331
  %7372 = vmatprep.subr.mxu0 0.0
  %7373 = vmatpush1.msra.mxu0 %v7330
  %7374 = vmatprep.subr.mxu0 0.0
  %7375 = vmatpush2.msra.mxu0 0.0
  %7376 = vmatprep.subr.mxu0 0.0
  %7377 = vmatpush2.msra.mxu0 0.0
  %7378 = vmatprep.subr.mxu0 0.0
  %7379 = vmatpush2.msra.mxu0 0.0
  %7380 = vmatprep.subr.mxu0 0.0
  %7381 = vmatpush2.msra.mxu0 0.0
  %7382 = vmatprep.subr.mxu0 0.0
  %7383 = vmatpush2.msra.mxu0 0.0
  %7384 = vmatprep.subr.mxu0 0.0
  %7385 = vmatpush2.msra.mxu0 0.0
  %7386 = vmatprep.subr.mxu0 0.0
  %7387 = vmatpush2.msra.mxu0 0.0
  %7388 = vmatprep.subr.mxu0 0.0
  %7389 = vmatpush2.msra.mxu0 0.0
  %7390 = vmatprep.subr.mxu0 0.0
  %7391 = vmatpush2.msra.mxu0 0.0
  %7392 = vmatprep.subr.mxu0 0.0
  %7393 = vmatpush2.msra.mxu0 0.0
  %7394 = vmatprep.subr.mxu0 0.0
  %7395 = vmatpush2.msra.mxu0 0.0
  %7396 = vmatprep.subr.mxu0 0.0
  %7397 = vmatpush2.msra.mxu0 0.0
  %7398 = vmatprep.subr.mxu0 0.0
  %7399 = vmatpush2.msra.mxu0 0.0
  %7400 = vmatprep.subr.mxu0 0.0
  %7401 = vmatpush2.msra.mxu0 0.0
  %7402 = vmatprep.subr.mxu0 0.0
  %7403 = vmatpush2.msra.mxu0 0.0
  %7404 = vmatprep.subr.mxu0 0.0
  %7405 = vmatpush2.msra.mxu0 0.0
  %7406 = vmatprep.mubr.f32.mxu0 0.0
  %7407 = vmatmul.mubr.f32.gmra.mxu0 %v5300
  %v7408 = vpop.f32.mrf.mxu0
  %v7409 = vadd.f32 %v7340, %v7408
  %v7410 = vpop.f32.mrf.mxu0
  %7411 = vmatprep.mubr.f32.mxu0 0.0
  %7412 = vmatmul.mubr.f32.gmra.mxu0 %v5303
  %v7413 = vpop.f32.mrf.mxu0
  %v7414 = vadd.f32 %v7340, %v7413
  %v7415 = vpop.f32.mrf.mxu0
  %7416 = vmatprep.mubr.f32.mxu0 0.0
  %7417 = vmatmul.mubr.f32.gmra.mxu0 %v5306
  %v7418 = vpop.f32.mrf.mxu0
  %v7419 = vadd.f32 %v7340, %v7418
  %v7420 = vpop.f32.mrf.mxu0
  %7421 = vmatprep.mubr.f32.mxu0 0.0
  %7422 = vmatmul.mubr.f32.gmra.mxu0 %v5309
  %v7423 = vpop.f32.mrf.mxu0
  %v7424 = vadd.f32 %v7340, %v7423
  %v7425 = vpop.f32.mrf.mxu0
  %7426 = vdwg.mxu0
  %s7427 = scalar_lea.vmem %s3, 736
  %v7428 = vld [vmem:[%s7427] sm:$0xff]
  %v7429 = vld [vmem:[%s7427 + $0x8] sm:$0xff]
  %v7430 = vld [vmem:[%s7427 + $0x10] sm:$0xff]
  %v7431 = vld [vmem:[%s7427 + $0x18] sm:$0xff]
  %s7432 = scalar_lea.vmem %s4, 23
  %v7433 = vld [vmem:[%s7432] sm:$0x1]
  %v7435 = vlaneseq
  %v7436 = vshrl.u32 %v7435, 7
  %v7437 = vsub.s32 0, %v7436
  %v7438 = vrot.slane %v7433, %v7437
  %7440 = vmatprep.subr.mxu0 0.0
  %7441 = vmatpush1.msra.mxu0 0.0
  %7442 = vmatprep.subr.mxu0 0.0
  %7443 = vmatpush1.msra.mxu0 0.0
  %7444 = vmatprep.subr.mxu0 0.0
  %7445 = vmatpush1.msra.mxu0 0.0
  %7446 = vmatprep.subr.mxu0 0.0
  %7447 = vmatpush1.msra.mxu0 0.0
  %7448 = vmatprep.subr.mxu0 0.0
  %7449 = vmatpush1.msra.mxu0 0.0
  %7450 = vmatprep.subr.mxu0 0.0
  %7451 = vmatpush1.msra.mxu0 0.0
  %7452 = vmatprep.subr.mxu0 0.0
  %7453 = vmatpush1.msra.mxu0 0.0
  %7454 = vmatprep.subr.mxu0 0.0
  %7455 = vmatpush1.msra.mxu0 0.0
  %7456 = vmatprep.subr.mxu0 0.0
  %7457 = vmatpush1.msra.mxu0 0.0
  %7458 = vmatprep.subr.mxu0 0.0
  %7459 = vmatpush1.msra.mxu0 0.0
  %7460 = vmatprep.subr.mxu0 0.0
  %7461 = vmatpush1.msra.mxu0 0.0
  %7462 = vmatprep.subr.mxu0 0.0
  %7463 = vmatpush1.msra.mxu0 0.0
  %7464 = vmatprep.subr.mxu0 0.0
  %7465 = vmatpush1.msra.mxu0 %v7431
  %7466 = vmatprep.subr.mxu0 0.0
  %7467 = vmatpush1.msra.mxu0 %v7430
  %7468 = vmatprep.subr.mxu0 0.0
  %7469 = vmatpush1.msra.mxu0 %v7429
  %7470 = vmatprep.subr.mxu0 0.0
  %7471 = vmatpush1.msra.mxu0 %v7428
  %7472 = vmatprep.subr.mxu0 0.0
  %7473 = vmatpush2.msra.mxu0 0.0
  %7474 = vmatprep.subr.mxu0 0.0
  %7475 = vmatpush2.msra.mxu0 0.0
  %7476 = vmatprep.subr.mxu0 0.0
  %7477 = vmatpush2.msra.mxu0 0.0
  %7478 = vmatprep.subr.mxu0 0.0
  %7479 = vmatpush2.msra.mxu0 0.0
  %7480 = vmatprep.subr.mxu0 0.0
  %7481 = vmatpush2.msra.mxu0 0.0
  %7482 = vmatprep.subr.mxu0 0.0
  %7483 = vmatpush2.msra.mxu0 0.0
  %7484 = vmatprep.subr.mxu0 0.0
  %7485 = vmatpush2.msra.mxu0 0.0
  %7486 = vmatprep.subr.mxu0 0.0
  %7487 = vmatpush2.msra.mxu0 0.0
  %7488 = vmatprep.subr.mxu0 0.0
  %7489 = vmatpush2.msra.mxu0 0.0
  %7490 = vmatprep.subr.mxu0 0.0
  %7491 = vmatpush2.msra.mxu0 0.0
  %7492 = vmatprep.subr.mxu0 0.0
  %7493 = vmatpush2.msra.mxu0 0.0
  %7494 = vmatprep.subr.mxu0 0.0
  %7495 = vmatpush2.msra.mxu0 0.0
  %7496 = vmatprep.subr.mxu0 0.0
  %7497 = vmatpush2.msra.mxu0 0.0
  %7498 = vmatprep.subr.mxu0 0.0
  %7499 = vmatpush2.msra.mxu0 0.0
  %7500 = vmatprep.subr.mxu0 0.0
  %7501 = vmatpush2.msra.mxu0 0.0
  %7502 = vmatprep.subr.mxu0 0.0
  %7503 = vmatpush2.msra.mxu0 0.0
  %7504 = vmatprep.mubr.f32.mxu0 0.0
  %7505 = vmatmul.mubr.f32.gmra.mxu0 %v5300
  %v7506 = vpop.f32.mrf.mxu0
  %v7507 = vadd.f32 %v7438, %v7506
  %v7508 = vpop.f32.mrf.mxu0
  %7509 = vmatprep.mubr.f32.mxu0 0.0
  %7510 = vmatmul.mubr.f32.gmra.mxu0 %v5303
  %v7511 = vpop.f32.mrf.mxu0
  %v7512 = vadd.f32 %v7438, %v7511
  %v7513 = vpop.f32.mrf.mxu0
  %7514 = vmatprep.mubr.f32.mxu0 0.0
  %7515 = vmatmul.mubr.f32.gmra.mxu0 %v5306
  %v7516 = vpop.f32.mrf.mxu0
  %v7517 = vadd.f32 %v7438, %v7516
  %v7518 = vpop.f32.mrf.mxu0
  %7519 = vmatprep.mubr.f32.mxu0 0.0
  %7520 = vmatmul.mubr.f32.gmra.mxu0 %v5309
  %v7521 = vpop.f32.mrf.mxu0
  %v7522 = vadd.f32 %v7438, %v7521
  %v7523 = vpop.f32.mrf.mxu0
  %7524 = vdwg.mxu0
  %v7526 = vsel %vm605, %v7311, 0
  %v7529 = vsel %vm605, %v7316, 0
  %v7532 = vsel %vm605, %v7321, 0
  %v7535 = vsel %vm605, %v7326, 0
  %v7538 = vsel %vm605, %v7409, 0
  %v7541 = vsel %vm605, %v7414, 0
  %v7544 = vsel %vm605, %v7419, 0
  %v7547 = vsel %vm605, %v7424, 0
  %7549 = vmatprep.subr.mxu0 0.0
  %7550 = vmatpush1.xpose.msra.mxu0 0.0
  %7551 = vmatprep.subr.mxu0 0.0
  %7552 = vmatpush1.xpose.msra.mxu0 0.0
  %7553 = vmatprep.subr.mxu0 0.0
  %7554 = vmatpush1.xpose.msra.mxu0 0.0
  %7555 = vmatprep.subr.mxu0 0.0
  %7556 = vmatpush1.xpose.msra.mxu0 0.0
  %7557 = vmatprep.subr.mxu0 0.0
  %7558 = vmatpush1.xpose.msra.mxu0 0.0
  %7559 = vmatprep.subr.mxu0 0.0
  %7560 = vmatpush1.xpose.msra.mxu0 0.0
  %7561 = vmatprep.subr.mxu0 0.0
  %7562 = vmatpush1.xpose.msra.mxu0 0.0
  %7563 = vmatprep.subr.mxu0 0.0
  %7564 = vmatpush1.xpose.msra.mxu0 0.0
  %7565 = vmatprep.subr.mxu0 0.0
  %7566 = vmatpush1.xpose.msra.mxu0 0.0
  %7567 = vmatprep.subr.mxu0 0.0
  %7568 = vmatpush1.xpose.msra.mxu0 0.0
  %7569 = vmatprep.subr.mxu0 0.0
  %7570 = vmatpush1.xpose.msra.mxu0 0.0
  %7571 = vmatprep.subr.mxu0 0.0
  %7572 = vmatpush1.xpose.msra.mxu0 0.0
  %7573 = vmatprep.subr.mxu0 0.0
  %7574 = vmatpush1.xpose.msra.mxu0 %v7547
  %7575 = vmatprep.subr.mxu0 0.0
  %7576 = vmatpush1.xpose.msra.mxu0 %v7544
  %7577 = vmatprep.subr.mxu0 0.0
  %7578 = vmatpush1.xpose.msra.mxu0 %v7541
  %7579 = vmatprep.subr.mxu0 0.0
  %7580 = vmatpush1.xpose.msra.mxu0 %v7538
  %7581 = vmatprep.subr.mxu0 0.0
  %7582 = vmatpush2.xpose.msra.mxu0 0.0
  %7583 = vmatprep.subr.mxu0 0.0
  %7584 = vmatpush2.xpose.msra.mxu0 0.0
  %7585 = vmatprep.subr.mxu0 0.0
  %7586 = vmatpush2.xpose.msra.mxu0 0.0
  %7587 = vmatprep.subr.mxu0 0.0
  %7588 = vmatpush2.xpose.msra.mxu0 0.0
  %7589 = vmatprep.subr.mxu0 0.0
  %7590 = vmatpush2.xpose.msra.mxu0 0.0
  %7591 = vmatprep.subr.mxu0 0.0
  %7592 = vmatpush2.xpose.msra.mxu0 0.0
  %7593 = vmatprep.subr.mxu0 0.0
  %7594 = vmatpush2.xpose.msra.mxu0 0.0
  %7595 = vmatprep.subr.mxu0 0.0
  %7596 = vmatpush2.xpose.msra.mxu0 0.0
  %7597 = vmatprep.subr.mxu0 0.0
  %7598 = vmatpush2.xpose.msra.mxu0 0.0
  %7599 = vmatprep.subr.mxu0 0.0
  %7600 = vmatpush2.xpose.msra.mxu0 0.0
  %7601 = vmatprep.subr.mxu0 0.0
  %7602 = vmatpush2.xpose.msra.mxu0 0.0
  %7603 = vmatprep.subr.mxu0 0.0
  %7604 = vmatpush2.xpose.msra.mxu0 0.0
  %7605 = vmatprep.subr.mxu0 0.0
  %7606 = vmatpush2.xpose.msra.mxu0 0.0
  %7607 = vmatprep.subr.mxu0 0.0
  %7608 = vmatpush2.xpose.msra.mxu0 0.0
  %7609 = vmatprep.subr.mxu0 0.0
  %7610 = vmatpush2.xpose.msra.mxu0 0.0
  %7611 = vmatprep.subr.mxu0 0.0
  %7612 = vmatpush2.xpose.msra.mxu0 0.0
  %7613 = vmatprep.mubr.f32.mxu0 0.0
  %7614 = vmatmul.mubr.f32.gmra.mxu0 %v7526
  %v7615 = vpop.f32.mrf.mxu0
  %v7616 = vadd.f32 %v296, %v7615
  %v7617 = vpop.f32.mrf.mxu0
  %7618 = vmatprep.mubr.f32.mxu0 0.0
  %7619 = vmatmul.mubr.f32.gmra.mxu0 %v7529
  %v7620 = vpop.f32.mrf.mxu0
  %v7621 = vadd.f32 %v297, %v7620
  %v7622 = vpop.f32.mrf.mxu0
  %7623 = vmatprep.mubr.f32.mxu0 0.0
  %7624 = vmatmul.mubr.f32.gmra.mxu0 %v7532
  %v7625 = vpop.f32.mrf.mxu0
  %v7626 = vadd.f32 %v298, %v7625
  %v7627 = vpop.f32.mrf.mxu0
  %7628 = vmatprep.mubr.f32.mxu0 0.0
  %7629 = vmatmul.mubr.f32.gmra.mxu0 %v7535
  %v7630 = vpop.f32.mrf.mxu0
  %v7631 = vadd.f32 %v299, %v7630
  %v7632 = vpop.f32.mrf.mxu0
  %7633 = vdwg.mxu0
  %v7634 = vsel %vm311, %v7616, -inf
  %7635 = vmax.xlane.f32.xlu0 %v7634
  %v7636 = vpop.xlane.xlu0 %7635
  %v7637 = vsel %vm311, %v7621, -inf
  %7638 = vmax.xlane.f32.xlu0 %v7637
  %v7639 = vpop.xlane.xlu0 %7638
  %v7640 = vsel %vm311, %v7626, -inf
  %7641 = vmax.xlane.f32.xlu0 %v7640
  %v7642 = vpop.xlane.xlu0 %7641
  %v7643 = vsel %vm311, %v7631, -inf
  %7644 = vmax.xlane.f32.xlu0 %v7643
  %v7645 = vpop.xlane.xlu0 %7644
  %v7646 = vsub.f32 %v7616, %v7636
  %v7647 = vsub.f32 %v7621, %v7639
  %v7648 = vsub.f32 %v7626, %v7642
  %v7649 = vsub.f32 %v7631, %v7645
  %v7650 = vmul.f32 %v7646, 1.442695
  %v7651 = vpow.pop %v7650
  %v7652 = vmul.f32 %v7647, 1.442695
  %v7653 = vpow.pop %v7652
  %v7654 = vmul.f32 %v7648, 1.442695
  %v7655 = vpow.pop %v7654
  %v7656 = vmul.f32 %v7649, 1.442695
  %v7657 = vpow.pop %v7656
  %v7658 = vsel %vm311, %v7651, 0.0
  %7659 = vadd.xlane.f32.xlu0 %v7658
  %v7660 = vpop.xlane.xlu0 %7659
  %v7661 = vsel %vm311, %v7653, 0.0
  %7662 = vadd.xlane.f32.xlu0 %v7661
  %v7663 = vpop.xlane.xlu0 %7662
  %v7664 = vsel %vm311, %v7655, 0.0
  %7665 = vadd.xlane.f32.xlu0 %v7664
  %v7666 = vpop.xlane.xlu0 %7665
  %v7667 = vsel %vm311, %v7657, 0.0
  %7668 = vadd.xlane.f32.xlu0 %v7667
  %v7669 = vpop.xlane.xlu0 %7668
  %v7670 = vrcp.pop %v7660
  %v7671 = vrcp.pop %v7663
  %v7672 = vrcp.pop %v7666
  %v7673 = vrcp.pop %v7669
  %v7674 = vmul.f32 %v7651, %v7670
  %v7675 = vmul.f32 %v7653, %v7671
  %v7676 = vmul.f32 %v7655, %v7672
  %v7677 = vmul.f32 %v7657, %v7673
  %v7679 = vsel %vm311, %v7674, 0
  %v7682 = vsel %vm311, %v7675, 0
  %v7685 = vsel %vm311, %v7676, 0
  %v7688 = vsel %vm311, %v7677, 0
  %7690 = vmatprep.subr.mxu0 0.0
  %7691 = vmatpush1.msra.mxu0 0.0
  %7692 = vmatprep.subr.mxu0 0.0
  %7693 = vmatpush1.msra.mxu0 0.0
  %7694 = vmatprep.subr.mxu0 0.0
  %7695 = vmatpush1.msra.mxu0 0.0
  %7696 = vmatprep.subr.mxu0 0.0
  %7697 = vmatpush1.msra.mxu0 0.0
  %7698 = vmatprep.subr.mxu0 0.0
  %7699 = vmatpush1.msra.mxu0 0.0
  %7700 = vmatprep.subr.mxu0 0.0
  %7701 = vmatpush1.msra.mxu0 0.0
  %7702 = vmatprep.subr.mxu0 0.0
  %7703 = vmatpush1.msra.mxu0 0.0
  %7704 = vmatprep.subr.mxu0 0.0
  %7705 = vmatpush1.msra.mxu0 0.0
  %7706 = vmatprep.subr.mxu0 0.0
  %7707 = vmatpush1.msra.mxu0 0.0
  %7708 = vmatprep.subr.mxu0 0.0
  %7709 = vmatpush1.msra.mxu0 0.0
  %7710 = vmatprep.subr.mxu0 0.0
  %7711 = vmatpush1.msra.mxu0 0.0
  %7712 = vmatprep.subr.mxu0 0.0
  %7713 = vmatpush1.msra.mxu0 0.0
  %7714 = vmatprep.subr.mxu0 0.0
  %7715 = vmatpush1.msra.mxu0 %v7522
  %7716 = vmatprep.subr.mxu0 0.0
  %7717 = vmatpush1.msra.mxu0 %v7517
  %7718 = vmatprep.subr.mxu0 0.0
  %7719 = vmatpush1.msra.mxu0 %v7512
  %7720 = vmatprep.subr.mxu0 0.0
  %7721 = vmatpush1.msra.mxu0 %v7507
  %7722 = vmatprep.subr.mxu0 0.0
  %7723 = vmatpush2.msra.mxu0 0.0
  %7724 = vmatprep.subr.mxu0 0.0
  %7725 = vmatpush2.msra.mxu0 0.0
  %7726 = vmatprep.subr.mxu0 0.0
  %7727 = vmatpush2.msra.mxu0 0.0
  %7728 = vmatprep.subr.mxu0 0.0
  %7729 = vmatpush2.msra.mxu0 0.0
  %7730 = vmatprep.subr.mxu0 0.0
  %7731 = vmatpush2.msra.mxu0 0.0
  %7732 = vmatprep.subr.mxu0 0.0
  %7733 = vmatpush2.msra.mxu0 0.0
  %7734 = vmatprep.subr.mxu0 0.0
  %7735 = vmatpush2.msra.mxu0 0.0
  %7736 = vmatprep.subr.mxu0 0.0
  %7737 = vmatpush2.msra.mxu0 0.0
  %7738 = vmatprep.subr.mxu0 0.0
  %7739 = vmatpush2.msra.mxu0 0.0
  %7740 = vmatprep.subr.mxu0 0.0
  %7741 = vmatpush2.msra.mxu0 0.0
  %7742 = vmatprep.subr.mxu0 0.0
  %7743 = vmatpush2.msra.mxu0 0.0
  %7744 = vmatprep.subr.mxu0 0.0
  %7745 = vmatpush2.msra.mxu0 0.0
  %7746 = vmatprep.subr.mxu0 0.0
  %7747 = vmatpush2.msra.mxu0 0.0
  %7748 = vmatprep.subr.mxu0 0.0
  %7749 = vmatpush2.msra.mxu0 0.0
  %7750 = vmatprep.subr.mxu0 0.0
  %7751 = vmatpush2.msra.mxu0 0.0
  %7752 = vmatprep.subr.mxu0 0.0
  %7753 = vmatpush2.msra.mxu0 0.0
  %7754 = vmatprep.mubr.f32.mxu0 0.0
  %7755 = vmatmul.mubr.f32.gmra.mxu0 %v7679
  %v7756 = vpop.f32.mrf.mxu0
  %v7757 = vadd.f32 0.0, %v7756
  %v7758 = vpop.f32.mrf.mxu0
  %7759 = vmatprep.mubr.f32.mxu0 0.0
  %7760 = vmatmul.mubr.f32.gmra.mxu0 %v7682
  %v7761 = vpop.f32.mrf.mxu0
  %v7762 = vadd.f32 0.0, %v7761
  %v7763 = vpop.f32.mrf.mxu0
  %7764 = vmatprep.mubr.f32.mxu0 0.0
  %7765 = vmatmul.mubr.f32.gmra.mxu0 %v7685
  %v7766 = vpop.f32.mrf.mxu0
  %v7767 = vadd.f32 0.0, %v7766
  %v7768 = vpop.f32.mrf.mxu0
  %7769 = vmatprep.mubr.f32.mxu0 0.0
  %7770 = vmatmul.mubr.f32.gmra.mxu0 %v7688
  %v7771 = vpop.f32.mrf.mxu0
  %v7772 = vadd.f32 0.0, %v7771
  %v7773 = vpop.f32.mrf.mxu0
  %7774 = vdwg.mxu0
  %s7775 = scalar_lea.vmem %s5, 56
  %v7776 = vld [vmem:[%s7775] sm:$0xff]
  %v7778 = vsel %vm605, %v7757, 0
  %v7781 = vsel %vm605, %v7762, 0
  %v7784 = vsel %vm605, %v7767, 0
  %v7787 = vsel %vm605, %v7772, 0
  %7789 = vmatprep.subr.mxu0 0.0
  %7790 = vmatpush1.msra.mxu0 0.0
  %7791 = vmatprep.subr.mxu0 0.0
  %7792 = vmatpush1.msra.mxu0 0.0
  %7793 = vmatprep.subr.mxu0 0.0
  %7794 = vmatpush1.msra.mxu0 0.0
  %7795 = vmatprep.subr.mxu0 0.0
  %7796 = vmatpush1.msra.mxu0 0.0
  %7797 = vmatprep.subr.mxu0 0.0
  %7798 = vmatpush1.msra.mxu0 0.0
  %7799 = vmatprep.subr.mxu0 0.0
  %7800 = vmatpush1.msra.mxu0 0.0
  %7801 = vmatprep.subr.mxu0 0.0
  %7802 = vmatpush1.msra.mxu0 0.0
  %7803 = vmatprep.subr.mxu0 0.0
  %7804 = vmatpush1.msra.mxu0 0.0
  %7805 = vmatprep.subr.mxu0 0.0
  %7806 = vmatpush1.msra.mxu0 0.0
  %7807 = vmatprep.subr.mxu0 0.0
  %7808 = vmatpush1.msra.mxu0 0.0
  %7809 = vmatprep.subr.mxu0 0.0
  %7810 = vmatpush1.msra.mxu0 0.0
  %7811 = vmatprep.subr.mxu0 0.0
  %7812 = vmatpush1.msra.mxu0 0.0
  %7813 = vmatprep.subr.mxu0 0.0
  %7814 = vmatpush1.msra.mxu0 0.0
  %7815 = vmatprep.subr.mxu0 0.0
  %7816 = vmatpush1.msra.mxu0 0.0
  %7817 = vmatprep.subr.mxu0 0.0
  %7818 = vmatpush1.msra.mxu0 0.0
  %7819 = vmatprep.subr.mxu0 0.0
  %7820 = vmatpush1.msra.mxu0 %v7776
  %7821 = vmatprep.subr.mxu0 0.0
  %7822 = vmatpush2.msra.mxu0 0.0
  %7823 = vmatprep.subr.mxu0 0.0
  %7824 = vmatpush2.msra.mxu0 0.0
  %7825 = vmatprep.subr.mxu0 0.0
  %7826 = vmatpush2.msra.mxu0 0.0
  %7827 = vmatprep.subr.mxu0 0.0
  %7828 = vmatpush2.msra.mxu0 0.0
  %7829 = vmatprep.subr.mxu0 0.0
  %7830 = vmatpush2.msra.mxu0 0.0
  %7831 = vmatprep.subr.mxu0 0.0
  %7832 = vmatpush2.msra.mxu0 0.0
  %7833 = vmatprep.subr.mxu0 0.0
  %7834 = vmatpush2.msra.mxu0 0.0
  %7835 = vmatprep.subr.mxu0 0.0
  %7836 = vmatpush2.msra.mxu0 0.0
  %7837 = vmatprep.subr.mxu0 0.0
  %7838 = vmatpush2.msra.mxu0 0.0
  %7839 = vmatprep.subr.mxu0 0.0
  %7840 = vmatpush2.msra.mxu0 0.0
  %7841 = vmatprep.subr.mxu0 0.0
  %7842 = vmatpush2.msra.mxu0 0.0
  %7843 = vmatprep.subr.mxu0 0.0
  %7844 = vmatpush2.msra.mxu0 0.0
  %7845 = vmatprep.subr.mxu0 0.0
  %7846 = vmatpush2.msra.mxu0 0.0
  %7847 = vmatprep.subr.mxu0 0.0
  %7848 = vmatpush2.msra.mxu0 0.0
  %7849 = vmatprep.subr.mxu0 0.0
  %7850 = vmatpush2.msra.mxu0 0.0
  %7851 = vmatprep.subr.mxu0 0.0
  %7852 = vmatpush2.msra.mxu0 0.0
  %7853 = vmatprep.mubr.f32.mxu0 0.0
  %7854 = vmatmul.mubr.f32.gmra.mxu0 %v7778
  %v7855 = vpop.f32.mrf.mxu0
  %v7856 = vadd.f32 0.0, %v7855
  %v7857 = vpop.f32.mrf.mxu0
  %7858 = vmatprep.mubr.f32.mxu0 0.0
  %7859 = vmatmul.mubr.f32.gmra.mxu0 %v7781
  %v7860 = vpop.f32.mrf.mxu0
  %v7861 = vadd.f32 0.0, %v7860
  %v7862 = vpop.f32.mrf.mxu0
  %7863 = vmatprep.mubr.f32.mxu0 0.0
  %7864 = vmatmul.mubr.f32.gmra.mxu0 %v7784
  %v7865 = vpop.f32.mrf.mxu0
  %v7866 = vadd.f32 0.0, %v7865
  %v7867 = vpop.f32.mrf.mxu0
  %7868 = vmatprep.mubr.f32.mxu0 0.0
  %7869 = vmatmul.mubr.f32.gmra.mxu0 %v7787
  %v7870 = vpop.f32.mrf.mxu0
  %v7871 = vadd.f32 0.0, %v7870
  %v7872 = vpop.f32.mrf.mxu0
  %7873 = vdwg.mxu0
  %v7874 = vadd.f32 %v7227, %v7856
  %v7875 = vadd.f32 %v7228, %v7861
  %v7876 = vadd.f32 %v7229, %v7866
  %v7877 = vadd.f32 %v7230, %v7871
  %s7878 = scalar_lea.vmem %s6, 1
  %v7879 = vld [vmem:[%s7878] sm:$0x1]
  %v7881 = vlaneseq
  %v7882 = vshrl.u32 %v7881, 7
  %v7883 = vsub.s32 0, %v7882
  %v7884 = vrot.slane %v7879, %v7883
  %v7886 = vadd.f32 %v7874, %v7884
  %v7887 = vadd.f32 %v7875, %v7884
  %v7888 = vadd.f32 %v7876, %v7884
  %v7889 = vadd.f32 %v7877, %v7884
  %v7890 = vadd.f32 %v5282, %v7886
  %v7891 = vadd.f32 %v5283, %v7887
  %v7892 = vadd.f32 %v5284, %v7888
  %v7893 = vadd.f32 %v5285, %v7889
  %s7894 = scalar_lea.vmem %s7, 1
  %v7895 = vld [vmem:[%s7894] sm:$0x1]
  %s7896 = scalar_lea.vmem %s8, 1
  %v7897 = vld [vmem:[%s7896] sm:$0x1]
  %v7898 = vsel %vm311, %v7890, 0.0
  %7899 = vadd.xlane.f32.xlu0 %v7898
  %v7900 = vpop.xlane.xlu0 %7899
  %v7901 = vsel %vm311, %v7891, 0.0
  %7902 = vadd.xlane.f32.xlu0 %v7901
  %v7903 = vpop.xlane.xlu0 %7902
  %v7904 = vsel %vm311, %v7892, 0.0
  %7905 = vadd.xlane.f32.xlu0 %v7904
  %v7906 = vpop.xlane.xlu0 %7905
  %v7907 = vsel %vm311, %v7893, 0.0
  %7908 = vadd.xlane.f32.xlu0 %v7907
  %v7909 = vpop.xlane.xlu0 %7908
  %v7910 = vmul.f32 %v7900, %v2920
  %v7911 = vmul.f32 %v7903, %v2920
  %v7912 = vmul.f32 %v7906, %v2920
  %v7913 = vmul.f32 %v7909, %v2920
  %v7914 = vsub.f32 %v7890, %v7910
  %v7915 = vsub.f32 %v7891, %v7911
  %v7916 = vsub.f32 %v7892, %v7912
  %v7917 = vsub.f32 %v7893, %v7913
  %v7918 = vmul.f32 %v7914, %v7914
  %v7919 = vmul.f32 %v7915, %v7915
  %v7920 = vmul.f32 %v7916, %v7916
  %v7921 = vmul.f32 %v7917, %v7917
  %v7922 = vsel %vm311, %v7918, 0.0
  %7923 = vadd.xlane.f32.xlu0 %v7922
  %v7924 = vpop.xlane.xlu0 %7923
  %v7925 = vsel %vm311, %v7919, 0.0
  %7926 = vadd.xlane.f32.xlu0 %v7925
  %v7927 = vpop.xlane.xlu0 %7926
  %v7928 = vsel %vm311, %v7920, 0.0
  %7929 = vadd.xlane.f32.xlu0 %v7928
  %v7930 = vpop.xlane.xlu0 %7929
  %v7931 = vsel %vm311, %v7921, 0.0
  %7932 = vadd.xlane.f32.xlu0 %v7931
  %v7933 = vpop.xlane.xlu0 %7932
  %v7934 = vmul.f32 %v7924, %v2920
  %v7935 = vmul.f32 %v7927, %v2920
  %v7936 = vmul.f32 %v7930, %v2920
  %v7937 = vmul.f32 %v7933, %v2920
  %v7938 = vadd.f32 %v7934, 1e-05
  %v7939 = vadd.f32 %v7935, 1e-05
  %v7940 = vadd.f32 %v7936, 1e-05
  %v7941 = vadd.f32 %v7937, 1e-05
  %v7942 = vrsqrt.pop %v7938
  %v7943 = vrsqrt.pop %v7939
  %v7944 = vrsqrt.pop %v7940
  %v7945 = vrsqrt.pop %v7941
  %v7946 = vmul.f32 %v7914, %v7942
  %v7947 = vmul.f32 %v7915, %v7943
  %v7948 = vmul.f32 %v7916, %v7944
  %v7949 = vmul.f32 %v7917, %v7945
  %v7951 = vlaneseq
  %v7952 = vshrl.u32 %v7951, 7
  %v7953 = vsub.s32 0, %v7952
  %v7954 = vrot.slane %v7895, %v7953
  %v7956 = vmul.f32 %v7946, %v7954
  %v7957 = vmul.f32 %v7947, %v7954
  %v7958 = vmul.f32 %v7948, %v7954
  %v7959 = vmul.f32 %v7949, %v7954
  %v7961 = vlaneseq
  %v7962 = vshrl.u32 %v7961, 7
  %v7963 = vsub.s32 0, %v7962
  %v7964 = vrot.slane %v7897, %v7963
  %v7966 = vadd.f32 %v7956, %v7964
  %v7967 = vadd.f32 %v7957, %v7964
  %v7968 = vadd.f32 %v7958, %v7964
  %v7969 = vadd.f32 %v7959, %v7964
  %v7970 = vpack.c.bf16 %v7967, %v7966
  %v7971 = vpack.c.bf16 %v7969, %v7968
  %s7972 = scalar_lea.vmem %s9, 256
  %v7973 = vld [vmem:[%s7972] sm:$0xff]
  %v7974 = vld [vmem:[%s7972 + $0x8] sm:$0xff]
  %v7975 = vld [vmem:[%s7972 + $0x10] sm:$0xff]
  %v7976 = vld [vmem:[%s7972 + $0x18] sm:$0xff]
  %v7977 = vld [vmem:[%s7972 + $0x20] sm:$0xff]
  %v7978 = vld [vmem:[%s7972 + $0x28] sm:$0xff]
  %v7979 = vld [vmem:[%s7972 + $0x30] sm:$0xff]
  %v7980 = vld [vmem:[%s7972 + $0x38] sm:$0xff]
  %v7981 = vld [vmem:[%s7972 + $0x40] sm:$0xff]
  %v7982 = vld [vmem:[%s7972 + $0x48] sm:$0xff]
  %v7983 = vld [vmem:[%s7972 + $0x50] sm:$0xff]
  %v7984 = vld [vmem:[%s7972 + $0x58] sm:$0xff]
  %v7985 = vld [vmem:[%s7972 + $0x60] sm:$0xff]
  %v7986 = vld [vmem:[%s7972 + $0x68] sm:$0xff]
  %v7987 = vld [vmem:[%s7972 + $0x70] sm:$0xff]
  %v7988 = vld [vmem:[%s7972 + $0x78] sm:$0xff]
  %v7989 = vld [vmem:[%s7972 + $0x80] sm:$0xff]
  %v7990 = vld [vmem:[%s7972 + $0x88] sm:$0xff]
  %v7991 = vld [vmem:[%s7972 + $0x90] sm:$0xff]
  %v7992 = vld [vmem:[%s7972 + $0x98] sm:$0xff]
  %v7993 = vld [vmem:[%s7972 + $0xa0] sm:$0xff]
  %v7994 = vld [vmem:[%s7972 + $0xa8] sm:$0xff]
  %v7995 = vld [vmem:[%s7972 + $0xb0] sm:$0xff]
  %v7996 = vld [vmem:[%s7972 + $0xb8] sm:$0xff]
  %v7997 = vld [vmem:[%s7972 + $0xc0] sm:$0xff]
  %v7998 = vld [vmem:[%s7972 + $0xc8] sm:$0xff]
  %v7999 = vld [vmem:[%s7972 + $0xd0] sm:$0xff]
  %v8000 = vld [vmem:[%s7972 + $0xd8] sm:$0xff]
  %v8001 = vld [vmem:[%s7972 + $0xe0] sm:$0xff]
  %v8002 = vld [vmem:[%s7972 + $0xe8] sm:$0xff]
  %v8003 = vld [vmem:[%s7972 + $0xf0] sm:$0xff]
  %v8004 = vld [vmem:[%s7972 + $0xf8] sm:$0xff]
  %s8005 = scalar_lea.vmem %s10, 16
  %v8006 = vld [vmem:[%s8005] sm:$0xff]
  %v8007 = vld [vmem:[%s8005 + $0x8] sm:$0xff]
  %v8010 = vlaneseq
  %v8011 = vshrl.u32 %v8010, 7
  %v8012 = vsub.s32 0, %v8011
  %v8013 = vrot.slane %v8006, %v8012
  %v8014 = vlaneseq
  %v8015 = vshrl.u32 %v8014, 7
  %v8016 = vsub.s32 1, %v8015
  %v8017 = vrot.slane %v8006, %v8016
  %v8018 = vlaneseq
  %v8019 = vshrl.u32 %v8018, 7
  %v8020 = vsub.s32 2, %v8019
  %v8021 = vrot.slane %v8006, %v8020
  %v8022 = vlaneseq
  %v8023 = vshrl.u32 %v8022, 7
  %v8024 = vsub.s32 3, %v8023
  %v8025 = vrot.slane %v8006, %v8024
  %v8026 = vlaneseq
  %v8027 = vshrl.u32 %v8026, 7
  %v8028 = vsub.s32 4, %v8027
  %v8029 = vrot.slane %v8006, %v8028
  %v8030 = vlaneseq
  %v8031 = vshrl.u32 %v8030, 7
  %v8032 = vsub.s32 5, %v8031
  %v8033 = vrot.slane %v8006, %v8032
  %v8034 = vlaneseq
  %v8035 = vshrl.u32 %v8034, 7
  %v8036 = vsub.s32 6, %v8035
  %v8037 = vrot.slane %v8006, %v8036
  %v8038 = vlaneseq
  %v8039 = vshrl.u32 %v8038, 7
  %v8040 = vsub.s32 7, %v8039
  %v8041 = vrot.slane %v8006, %v8040
  %v8042 = vlaneseq
  %v8043 = vshrl.u32 %v8042, 7
  %v8044 = vsub.s32 0, %v8043
  %v8045 = vrot.slane %v8007, %v8044
  %v8046 = vlaneseq
  %v8047 = vshrl.u32 %v8046, 7
  %v8048 = vsub.s32 1, %v8047
  %v8049 = vrot.slane %v8007, %v8048
  %v8050 = vlaneseq
  %v8051 = vshrl.u32 %v8050, 7
  %v8052 = vsub.s32 2, %v8051
  %v8053 = vrot.slane %v8007, %v8052
  %v8054 = vlaneseq
  %v8055 = vshrl.u32 %v8054, 7
  %v8056 = vsub.s32 3, %v8055
  %v8057 = vrot.slane %v8007, %v8056
  %v8058 = vlaneseq
  %v8059 = vshrl.u32 %v8058, 7
  %v8060 = vsub.s32 4, %v8059
  %v8061 = vrot.slane %v8007, %v8060
  %v8062 = vlaneseq
  %v8063 = vshrl.u32 %v8062, 7
  %v8064 = vsub.s32 5, %v8063
  %v8065 = vrot.slane %v8007, %v8064
  %v8066 = vlaneseq
  %v8067 = vshrl.u32 %v8066, 7
  %v8068 = vsub.s32 6, %v8067
  %v8069 = vrot.slane %v8007, %v8068
  %v8070 = vlaneseq
  %v8071 = vshrl.u32 %v8070, 7
  %v8072 = vsub.s32 7, %v8071
  %v8073 = vrot.slane %v8007, %v8072
  %v8122 = vunpack.c.l.b16 %v7973
  %v8123 = vunpack.c.h.b16 %v7973
  %v8124 = vunpack.c.l.b16 %v7974
  %v8125 = vunpack.c.h.b16 %v7974
  %v8126 = vunpack.c.l.b16 %v7975
  %v8127 = vunpack.c.h.b16 %v7975
  %v8128 = vunpack.c.l.b16 %v7976
  %v8129 = vunpack.c.h.b16 %v7976
  %v8130 = vunpack.c.l.b16 %v7977
  %v8131 = vunpack.c.h.b16 %v7977
  %v8132 = vunpack.c.l.b16 %v7978
  %v8133 = vunpack.c.h.b16 %v7978
  %v8134 = vunpack.c.l.b16 %v7979
  %v8135 = vunpack.c.h.b16 %v7979
  %v8136 = vunpack.c.l.b16 %v7980
  %v8137 = vunpack.c.h.b16 %v7980
  %v8138 = vunpack.c.l.b16 %v7981
  %v8139 = vunpack.c.h.b16 %v7981
  %v8140 = vunpack.c.l.b16 %v7982
  %v8141 = vunpack.c.h.b16 %v7982
  %v8142 = vunpack.c.l.b16 %v7983
  %v8143 = vunpack.c.h.b16 %v7983
  %v8144 = vunpack.c.l.b16 %v7984
  %v8145 = vunpack.c.h.b16 %v7984
  %v8146 = vunpack.c.l.b16 %v7985
  %v8147 = vunpack.c.h.b16 %v7985
  %v8148 = vunpack.c.l.b16 %v7986
  %v8149 = vunpack.c.h.b16 %v7986
  %v8150 = vunpack.c.l.b16 %v7987
  %v8151 = vunpack.c.h.b16 %v7987
  %v8152 = vunpack.c.l.b16 %v7988
  %v8153 = vunpack.c.h.b16 %v7988
  %v8154 = vunpack.c.l.b16 %v7989
  %v8155 = vunpack.c.h.b16 %v7989
  %v8156 = vunpack.c.l.b16 %v7990
  %v8157 = vunpack.c.h.b16 %v7990
  %v8158 = vunpack.c.l.b16 %v7991
  %v8159 = vunpack.c.h.b16 %v7991
  %v8160 = vunpack.c.l.b16 %v7992
  %v8161 = vunpack.c.h.b16 %v7992
  %v8162 = vunpack.c.l.b16 %v7993
  %v8163 = vunpack.c.h.b16 %v7993
  %v8164 = vunpack.c.l.b16 %v7994
  %v8165 = vunpack.c.h.b16 %v7994
  %v8166 = vunpack.c.l.b16 %v7995
  %v8167 = vunpack.c.h.b16 %v7995
  %v8168 = vunpack.c.l.b16 %v7996
  %v8169 = vunpack.c.h.b16 %v7996
  %v8170 = vunpack.c.l.b16 %v7997
  %v8171 = vunpack.c.h.b16 %v7997
  %v8172 = vunpack.c.l.b16 %v7998
  %v8173 = vunpack.c.h.b16 %v7998
  %v8174 = vunpack.c.l.b16 %v7999
  %v8175 = vunpack.c.h.b16 %v7999
  %v8176 = vunpack.c.l.b16 %v8000
  %v8177 = vunpack.c.h.b16 %v8000
  %v8178 = vunpack.c.l.b16 %v8001
  %v8179 = vunpack.c.h.b16 %v8001
  %v8180 = vunpack.c.l.b16 %v8002
  %v8181 = vunpack.c.h.b16 %v8002
  %v8182 = vunpack.c.l.b16 %v8003
  %v8183 = vunpack.c.h.b16 %v8003
  %v8184 = vunpack.c.l.b16 %v8004
  %v8185 = vunpack.c.h.b16 %v8004
  %v8186 = vpack.c.b16 %v8138, %v8122
  %v8187 = vpack.c.b16 %v8139, %v8123
  %v8188 = vpack.c.b16 %v8140, %v8124
  %v8189 = vpack.c.b16 %v8141, %v8125
  %v8190 = vpack.c.b16 %v8142, %v8126
  %v8191 = vpack.c.b16 %v8143, %v8127
  %v8192 = vpack.c.b16 %v8144, %v8128
  %v8193 = vpack.c.b16 %v8145, %v8129
  %v8194 = vpack.c.b16 %v8146, %v8130
  %v8195 = vpack.c.b16 %v8147, %v8131
  %v8196 = vpack.c.b16 %v8148, %v8132
  %v8197 = vpack.c.b16 %v8149, %v8133
  %v8198 = vpack.c.b16 %v8150, %v8134
  %v8199 = vpack.c.b16 %v8151, %v8135
  %v8200 = vpack.c.b16 %v8152, %v8136
  %v8201 = vpack.c.b16 %v8153, %v8137
  %v8202 = vpack.c.b16 %v8170, %v8154
  %v8203 = vpack.c.b16 %v8171, %v8155
  %v8204 = vpack.c.b16 %v8172, %v8156
  %v8205 = vpack.c.b16 %v8173, %v8157
  %v8206 = vpack.c.b16 %v8174, %v8158
  %v8207 = vpack.c.b16 %v8175, %v8159
  %v8208 = vpack.c.b16 %v8176, %v8160
  %v8209 = vpack.c.b16 %v8177, %v8161
  %v8210 = vpack.c.b16 %v8178, %v8162
  %v8211 = vpack.c.b16 %v8179, %v8163
  %v8212 = vpack.c.b16 %v8180, %v8164
  %v8213 = vpack.c.b16 %v8181, %v8165
  %v8214 = vpack.c.b16 %v8182, %v8166
  %v8215 = vpack.c.b16 %v8183, %v8167
  %v8216 = vpack.c.b16 %v8184, %v8168
  %v8217 = vpack.c.b16 %v8185, %v8169
  %v8251 = vsel %vm311, %v7970, 0
  %v8254 = vsel %vm311, %v7971, 0
  %8256 = vmatprep.subr.bf16.mxu0 0
  %8257 = vmatpush1.bf16.msra.mxu0 0
  %8258 = vmatprep.subr.bf16.mxu0 0
  %8259 = vmatpush1.bf16.msra.mxu0 0
  %8260 = vmatprep.subr.bf16.mxu0 0
  %8261 = vmatpush1.bf16.msra.mxu0 0
  %8262 = vmatprep.subr.bf16.mxu0 0
  %8263 = vmatpush1.bf16.msra.mxu0 0
  %8264 = vmatprep.subr.bf16.mxu0 0
  %8265 = vmatpush1.bf16.msra.mxu0 0
  %8266 = vmatprep.subr.bf16.mxu0 0
  %8267 = vmatpush1.bf16.msra.mxu0 0
  %8268 = vmatprep.subr.bf16.mxu0 %v8203
  %8269 = vmatpush1.bf16.msra.mxu0 %v8202
  %8270 = vmatprep.subr.bf16.mxu0 %v8187
  %8271 = vmatpush1.bf16.msra.mxu0 %v8186
  %8272 = vmatprep.subr.bf16.mxu0 0
  %8273 = vmatpush2.bf16.msra.mxu0 0
  %8274 = vmatprep.subr.bf16.mxu0 0
  %8275 = vmatpush2.bf16.msra.mxu0 0
  %8276 = vmatprep.subr.bf16.mxu0 0
  %8277 = vmatpush2.bf16.msra.mxu0 0
  %8278 = vmatprep.subr.bf16.mxu0 0
  %8279 = vmatpush2.bf16.msra.mxu0 0
  %8280 = vmatprep.subr.bf16.mxu0 0
  %8281 = vmatpush2.bf16.msra.mxu0 0
  %8282 = vmatprep.subr.bf16.mxu0 0
  %8283 = vmatpush2.bf16.msra.mxu0 0
  %8284 = vmatprep.subr.bf16.mxu0 0
  %8285 = vmatpush2.bf16.msra.mxu0 0
  %8286 = vmatprep.subr.bf16.mxu0 0
  %8287 = vmatpush2.bf16.msra.mxu0 0
  %8288 = vmatprep.mubr.bf16.mxu0 0
  %8289 = vmatmul.mubr.bf16.gmra.mxu0 %v8251
  %v8290 = vpop.f32.mrf.mxu0
  %v8291 = vadd.f32 %v8013, %v8290
  %v8292 = vpop.f32.mrf.mxu0
  %v8293 = vadd.f32 %v8017, %v8292
  %v8294 = vpop.f32.mrf.mxu0
  %v8295 = vadd.f32 %v8013, %v8294
  %v8296 = vpop.f32.mrf.mxu0
  %v8297 = vadd.f32 %v8017, %v8296
  %8298 = vmatprep.mubr.bf16.mxu0 0
  %8299 = vmatmul.mubr.bf16.gmra.mxu0 %v8254
  %v8300 = vpop.f32.mrf.mxu0
  %v8301 = vadd.f32 %v8013, %v8300
  %v8302 = vpop.f32.mrf.mxu0
  %v8303 = vadd.f32 %v8017, %v8302
  %v8304 = vpop.f32.mrf.mxu0
  %v8305 = vadd.f32 %v8013, %v8304
  %v8306 = vpop.f32.mrf.mxu0
  %v8307 = vadd.f32 %v8017, %v8306
  %8308 = vdwg.mxu0
  %8309 = vmatprep.subr.bf16.mxu0 0
  %8310 = vmatpush1.bf16.msra.mxu0 0
  %8311 = vmatprep.subr.bf16.mxu0 0
  %8312 = vmatpush1.bf16.msra.mxu0 0
  %8313 = vmatprep.subr.bf16.mxu0 0
  %8314 = vmatpush1.bf16.msra.mxu0 0
  %8315 = vmatprep.subr.bf16.mxu0 0
  %8316 = vmatpush1.bf16.msra.mxu0 0
  %8317 = vmatprep.subr.bf16.mxu0 0
  %8318 = vmatpush1.bf16.msra.mxu0 0
  %8319 = vmatprep.subr.bf16.mxu0 0
  %8320 = vmatpush1.bf16.msra.mxu0 0
  %8321 = vmatprep.subr.bf16.mxu0 %v8205
  %8322 = vmatpush1.bf16.msra.mxu0 %v8204
  %8323 = vmatprep.subr.bf16.mxu0 %v8189
  %8324 = vmatpush1.bf16.msra.mxu0 %v8188
  %8325 = vmatprep.subr.bf16.mxu0 0
  %8326 = vmatpush2.bf16.msra.mxu0 0
  %8327 = vmatprep.subr.bf16.mxu0 0
  %8328 = vmatpush2.bf16.msra.mxu0 0
  %8329 = vmatprep.subr.bf16.mxu0 0
  %8330 = vmatpush2.bf16.msra.mxu0 0
  %8331 = vmatprep.subr.bf16.mxu0 0
  %8332 = vmatpush2.bf16.msra.mxu0 0
  %8333 = vmatprep.subr.bf16.mxu0 0
  %8334 = vmatpush2.bf16.msra.mxu0 0
  %8335 = vmatprep.subr.bf16.mxu0 0
  %8336 = vmatpush2.bf16.msra.mxu0 0
  %8337 = vmatprep.subr.bf16.mxu0 0
  %8338 = vmatpush2.bf16.msra.mxu0 0
  %8339 = vmatprep.subr.bf16.mxu0 0
  %8340 = vmatpush2.bf16.msra.mxu0 0
  %8341 = vmatprep.mubr.bf16.mxu0 0
  %8342 = vmatmul.mubr.bf16.gmra.mxu0 %v8251
  %v8343 = vpop.f32.mrf.mxu0
  %v8344 = vadd.f32 %v8021, %v8343
  %v8345 = vpop.f32.mrf.mxu0
  %v8346 = vadd.f32 %v8025, %v8345
  %v8347 = vpop.f32.mrf.mxu0
  %v8348 = vadd.f32 %v8021, %v8347
  %v8349 = vpop.f32.mrf.mxu0
  %v8350 = vadd.f32 %v8025, %v8349
  %8351 = vmatprep.mubr.bf16.mxu0 0
  %8352 = vmatmul.mubr.bf16.gmra.mxu0 %v8254
  %v8353 = vpop.f32.mrf.mxu0
  %v8354 = vadd.f32 %v8021, %v8353
  %v8355 = vpop.f32.mrf.mxu0
  %v8356 = vadd.f32 %v8025, %v8355
  %v8357 = vpop.f32.mrf.mxu0
  %v8358 = vadd.f32 %v8021, %v8357
  %v8359 = vpop.f32.mrf.mxu0
  %v8360 = vadd.f32 %v8025, %v8359
  %8361 = vdwg.mxu0
  %8362 = vmatprep.subr.bf16.mxu0 0
  %8363 = vmatpush1.bf16.msra.mxu0 0
  %8364 = vmatprep.subr.bf16.mxu0 0
  %8365 = vmatpush1.bf16.msra.mxu0 0
  %8366 = vmatprep.subr.bf16.mxu0 0
  %8367 = vmatpush1.bf16.msra.mxu0 0
  %8368 = vmatprep.subr.bf16.mxu0 0
  %8369 = vmatpush1.bf16.msra.mxu0 0
  %8370 = vmatprep.subr.bf16.mxu0 0
  %8371 = vmatpush1.bf16.msra.mxu0 0
  %8372 = vmatprep.subr.bf16.mxu0 0
  %8373 = vmatpush1.bf16.msra.mxu0 0
  %8374 = vmatprep.subr.bf16.mxu0 %v8207
  %8375 = vmatpush1.bf16.msra.mxu0 %v8206
  %8376 = vmatprep.subr.bf16.mxu0 %v8191
  %8377 = vmatpush1.bf16.msra.mxu0 %v8190
  %8378 = vmatprep.subr.bf16.mxu0 0
  %8379 = vmatpush2.bf16.msra.mxu0 0
  %8380 = vmatprep.subr.bf16.mxu0 0
  %8381 = vmatpush2.bf16.msra.mxu0 0
  %8382 = vmatprep.subr.bf16.mxu0 0
  %8383 = vmatpush2.bf16.msra.mxu0 0
  %8384 = vmatprep.subr.bf16.mxu0 0
  %8385 = vmatpush2.bf16.msra.mxu0 0
  %8386 = vmatprep.subr.bf16.mxu0 0
  %8387 = vmatpush2.bf16.msra.mxu0 0
  %8388 = vmatprep.subr.bf16.mxu0 0
  %8389 = vmatpush2.bf16.msra.mxu0 0
  %8390 = vmatprep.subr.bf16.mxu0 0
  %8391 = vmatpush2.bf16.msra.mxu0 0
  %8392 = vmatprep.subr.bf16.mxu0 0
  %8393 = vmatpush2.bf16.msra.mxu0 0
  %8394 = vmatprep.mubr.bf16.mxu0 0
  %8395 = vmatmul.mubr.bf16.gmra.mxu0 %v8251
  %v8396 = vpop.f32.mrf.mxu0
  %v8397 = vadd.f32 %v8029, %v8396
  %v8398 = vpop.f32.mrf.mxu0
  %v8399 = vadd.f32 %v8033, %v8398
  %v8400 = vpop.f32.mrf.mxu0
  %v8401 = vadd.f32 %v8029, %v8400
  %v8402 = vpop.f32.mrf.mxu0
  %v8403 = vadd.f32 %v8033, %v8402
  %8404 = vmatprep.mubr.bf16.mxu0 0
  %8405 = vmatmul.mubr.bf16.gmra.mxu0 %v8254
  %v8406 = vpop.f32.mrf.mxu0
  %v8407 = vadd.f32 %v8029, %v8406
  %v8408 = vpop.f32.mrf.mxu0
  %v8409 = vadd.f32 %v8033, %v8408
  %v8410 = vpop.f32.mrf.mxu0
  %v8411 = vadd.f32 %v8029, %v8410
  %v8412 = vpop.f32.mrf.mxu0
  %v8413 = vadd.f32 %v8033, %v8412
  %8414 = vdwg.mxu0
  %8415 = vmatprep.subr.bf16.mxu0 0
  %8416 = vmatpush1.bf16.msra.mxu0 0
  %8417 = vmatprep.subr.bf16.mxu0 0
  %8418 = vmatpush1.bf16.msra.mxu0 0
  %8419 = vmatprep.subr.bf16.mxu0 0
  %8420 = vmatpush1.bf16.msra.mxu0 0
  %8421 = vmatprep.subr.bf16.mxu0 0
  %8422 = vmatpush1.bf16.msra.mxu0 0
  %8423 = vmatprep.subr.bf16.mxu0 0
  %8424 = vmatpush1.bf16.msra.mxu0 0
  %8425 = vmatprep.subr.bf16.mxu0 0
  %8426 = vmatpush1.bf16.msra.mxu0 0
  %8427 = vmatprep.subr.bf16.mxu0 %v8209
  %8428 = vmatpush1.bf16.msra.mxu0 %v8208
  %8429 = vmatprep.subr.bf16.mxu0 %v8193
  %8430 = vmatpush1.bf16.msra.mxu0 %v8192
  %8431 = vmatprep.subr.bf16.mxu0 0
  %8432 = vmatpush2.bf16.msra.mxu0 0
  %8433 = vmatprep.subr.bf16.mxu0 0
  %8434 = vmatpush2.bf16.msra.mxu0 0
  %8435 = vmatprep.subr.bf16.mxu0 0
  %8436 = vmatpush2.bf16.msra.mxu0 0
  %8437 = vmatprep.subr.bf16.mxu0 0
  %8438 = vmatpush2.bf16.msra.mxu0 0
  %8439 = vmatprep.subr.bf16.mxu0 0
  %8440 = vmatpush2.bf16.msra.mxu0 0
  %8441 = vmatprep.subr.bf16.mxu0 0
  %8442 = vmatpush2.bf16.msra.mxu0 0
  %8443 = vmatprep.subr.bf16.mxu0 0
  %8444 = vmatpush2.bf16.msra.mxu0 0
  %8445 = vmatprep.subr.bf16.mxu0 0
  %8446 = vmatpush2.bf16.msra.mxu0 0
  %8447 = vmatprep.mubr.bf16.mxu0 0
  %8448 = vmatmul.mubr.bf16.gmra.mxu0 %v8251
  %v8449 = vpop.f32.mrf.mxu0
  %v8450 = vadd.f32 %v8037, %v8449
  %v8451 = vpop.f32.mrf.mxu0
  %v8452 = vadd.f32 %v8041, %v8451
  %v8453 = vpop.f32.mrf.mxu0
  %v8454 = vadd.f32 %v8037, %v8453
  %v8455 = vpop.f32.mrf.mxu0
  %v8456 = vadd.f32 %v8041, %v8455
  %8457 = vmatprep.mubr.bf16.mxu0 0
  %8458 = vmatmul.mubr.bf16.gmra.mxu0 %v8254
  %v8459 = vpop.f32.mrf.mxu0
  %v8460 = vadd.f32 %v8037, %v8459
  %v8461 = vpop.f32.mrf.mxu0
  %v8462 = vadd.f32 %v8041, %v8461
  %v8463 = vpop.f32.mrf.mxu0
  %v8464 = vadd.f32 %v8037, %v8463
  %v8465 = vpop.f32.mrf.mxu0
  %v8466 = vadd.f32 %v8041, %v8465
  %8467 = vdwg.mxu0
  %8468 = vmatprep.subr.bf16.mxu0 0
  %8469 = vmatpush1.bf16.msra.mxu0 0
  %8470 = vmatprep.subr.bf16.mxu0 0
  %8471 = vmatpush1.bf16.msra.mxu0 0
  %8472 = vmatprep.subr.bf16.mxu0 0
  %8473 = vmatpush1.bf16.msra.mxu0 0
  %8474 = vmatprep.subr.bf16.mxu0 0
  %8475 = vmatpush1.bf16.msra.mxu0 0
  %8476 = vmatprep.subr.bf16.mxu0 0
  %8477 = vmatpush1.bf16.msra.mxu0 0
  %8478 = vmatprep.subr.bf16.mxu0 0
  %8479 = vmatpush1.bf16.msra.mxu0 0
  %8480 = vmatprep.subr.bf16.mxu0 %v8211
  %8481 = vmatpush1.bf16.msra.mxu0 %v8210
  %8482 = vmatprep.subr.bf16.mxu0 %v8195
  %8483 = vmatpush1.bf16.msra.mxu0 %v8194
  %8484 = vmatprep.subr.bf16.mxu0 0
  %8485 = vmatpush2.bf16.msra.mxu0 0
  %8486 = vmatprep.subr.bf16.mxu0 0
  %8487 = vmatpush2.bf16.msra.mxu0 0
  %8488 = vmatprep.subr.bf16.mxu0 0
  %8489 = vmatpush2.bf16.msra.mxu0 0
  %8490 = vmatprep.subr.bf16.mxu0 0
  %8491 = vmatpush2.bf16.msra.mxu0 0
  %8492 = vmatprep.subr.bf16.mxu0 0
  %8493 = vmatpush2.bf16.msra.mxu0 0
  %8494 = vmatprep.subr.bf16.mxu0 0
  %8495 = vmatpush2.bf16.msra.mxu0 0
  %8496 = vmatprep.subr.bf16.mxu0 0
  %8497 = vmatpush2.bf16.msra.mxu0 0
  %8498 = vmatprep.subr.bf16.mxu0 0
  %8499 = vmatpush2.bf16.msra.mxu0 0
  %8500 = vmatprep.mubr.bf16.mxu0 0
  %8501 = vmatmul.mubr.bf16.gmra.mxu0 %v8251
  %v8502 = vpop.f32.mrf.mxu0
  %v8503 = vadd.f32 %v8045, %v8502
  %v8504 = vpop.f32.mrf.mxu0
  %v8505 = vadd.f32 %v8049, %v8504
  %v8506 = vpop.f32.mrf.mxu0
  %v8507 = vadd.f32 %v8045, %v8506
  %v8508 = vpop.f32.mrf.mxu0
  %v8509 = vadd.f32 %v8049, %v8508
  %8510 = vmatprep.mubr.bf16.mxu0 0
  %8511 = vmatmul.mubr.bf16.gmra.mxu0 %v8254
  %v8512 = vpop.f32.mrf.mxu0
  %v8513 = vadd.f32 %v8045, %v8512
  %v8514 = vpop.f32.mrf.mxu0
  %v8515 = vadd.f32 %v8049, %v8514
  %v8516 = vpop.f32.mrf.mxu0
  %v8517 = vadd.f32 %v8045, %v8516
  %v8518 = vpop.f32.mrf.mxu0
  %v8519 = vadd.f32 %v8049, %v8518
  %8520 = vdwg.mxu0
  %8521 = vmatprep.subr.bf16.mxu0 0
  %8522 = vmatpush1.bf16.msra.mxu0 0
  %8523 = vmatprep.subr.bf16.mxu0 0
  %8524 = vmatpush1.bf16.msra.mxu0 0
  %8525 = vmatprep.subr.bf16.mxu0 0
  %8526 = vmatpush1.bf16.msra.mxu0 0
  %8527 = vmatprep.subr.bf16.mxu0 0
  %8528 = vmatpush1.bf16.msra.mxu0 0
  %8529 = vmatprep.subr.bf16.mxu0 0
  %8530 = vmatpush1.bf16.msra.mxu0 0
  %8531 = vmatprep.subr.bf16.mxu0 0
  %8532 = vmatpush1.bf16.msra.mxu0 0
  %8533 = vmatprep.subr.bf16.mxu0 %v8213
  %8534 = vmatpush1.bf16.msra.mxu0 %v8212
  %8535 = vmatprep.subr.bf16.mxu0 %v8197
  %8536 = vmatpush1.bf16.msra.mxu0 %v8196
  %8537 = vmatprep.subr.bf16.mxu0 0
  %8538 = vmatpush2.bf16.msra.mxu0 0
  %8539 = vmatprep.subr.bf16.mxu0 0
  %8540 = vmatpush2.bf16.msra.mxu0 0
  %8541 = vmatprep.subr.bf16.mxu0 0
  %8542 = vmatpush2.bf16.msra.mxu0 0
  %8543 = vmatprep.subr.bf16.mxu0 0
  %8544 = vmatpush2.bf16.msra.mxu0 0
  %8545 = vmatprep.subr.bf16.mxu0 0
  %8546 = vmatpush2.bf16.msra.mxu0 0
  %8547 = vmatprep.subr.bf16.mxu0 0
  %8548 = vmatpush2.bf16.msra.mxu0 0
  %8549 = vmatprep.subr.bf16.mxu0 0
  %8550 = vmatpush2.bf16.msra.mxu0 0
  %8551 = vmatprep.subr.bf16.mxu0 0
  %8552 = vmatpush2.bf16.msra.mxu0 0
  %8553 = vmatprep.mubr.bf16.mxu0 0
  %8554 = vmatmul.mubr.bf16.gmra.mxu0 %v8251
  %v8555 = vpop.f32.mrf.mxu0
  %v8556 = vadd.f32 %v8053, %v8555
  %v8557 = vpop.f32.mrf.mxu0
  %v8558 = vadd.f32 %v8057, %v8557
  %v8559 = vpop.f32.mrf.mxu0
  %v8560 = vadd.f32 %v8053, %v8559
  %v8561 = vpop.f32.mrf.mxu0
  %v8562 = vadd.f32 %v8057, %v8561
  %8563 = vmatprep.mubr.bf16.mxu0 0
  %8564 = vmatmul.mubr.bf16.gmra.mxu0 %v8254
  %v8565 = vpop.f32.mrf.mxu0
  %v8566 = vadd.f32 %v8053, %v8565
  %v8567 = vpop.f32.mrf.mxu0
  %v8568 = vadd.f32 %v8057, %v8567
  %v8569 = vpop.f32.mrf.mxu0
  %v8570 = vadd.f32 %v8053, %v8569
  %v8571 = vpop.f32.mrf.mxu0
  %v8572 = vadd.f32 %v8057, %v8571
  %8573 = vdwg.mxu0
  %8574 = vmatprep.subr.bf16.mxu0 0
  %8575 = vmatpush1.bf16.msra.mxu0 0
  %8576 = vmatprep.subr.bf16.mxu0 0
  %8577 = vmatpush1.bf16.msra.mxu0 0
  %8578 = vmatprep.subr.bf16.mxu0 0
  %8579 = vmatpush1.bf16.msra.mxu0 0
  %8580 = vmatprep.subr.bf16.mxu0 0
  %8581 = vmatpush1.bf16.msra.mxu0 0
  %8582 = vmatprep.subr.bf16.mxu0 0
  %8583 = vmatpush1.bf16.msra.mxu0 0
  %8584 = vmatprep.subr.bf16.mxu0 0
  %8585 = vmatpush1.bf16.msra.mxu0 0
  %8586 = vmatprep.subr.bf16.mxu0 %v8215
  %8587 = vmatpush1.bf16.msra.mxu0 %v8214
  %8588 = vmatprep.subr.bf16.mxu0 %v8199
  %8589 = vmatpush1.bf16.msra.mxu0 %v8198
  %8590 = vmatprep.subr.bf16.mxu0 0
  %8591 = vmatpush2.bf16.msra.mxu0 0
  %8592 = vmatprep.subr.bf16.mxu0 0
  %8593 = vmatpush2.bf16.msra.mxu0 0
  %8594 = vmatprep.subr.bf16.mxu0 0
  %8595 = vmatpush2.bf16.msra.mxu0 0
  %8596 = vmatprep.subr.bf16.mxu0 0
  %8597 = vmatpush2.bf16.msra.mxu0 0
  %8598 = vmatprep.subr.bf16.mxu0 0
  %8599 = vmatpush2.bf16.msra.mxu0 0
  %8600 = vmatprep.subr.bf16.mxu0 0
  %8601 = vmatpush2.bf16.msra.mxu0 0
  %8602 = vmatprep.subr.bf16.mxu0 0
  %8603 = vmatpush2.bf16.msra.mxu0 0
  %8604 = vmatprep.subr.bf16.mxu0 0
  %8605 = vmatpush2.bf16.msra.mxu0 0
  %8606 = vmatprep.mubr.bf16.mxu0 0
  %8607 = vmatmul.mubr.bf16.gmra.mxu0 %v8251
  %v8608 = vpop.f32.mrf.mxu0
  %v8609 = vadd.f32 %v8061, %v8608
  %v8610 = vpop.f32.mrf.mxu0
  %v8611 = vadd.f32 %v8065, %v8610
  %v8612 = vpop.f32.mrf.mxu0
  %v8613 = vadd.f32 %v8061, %v8612
  %v8614 = vpop.f32.mrf.mxu0
  %v8615 = vadd.f32 %v8065, %v8614
  %8616 = vmatprep.mubr.bf16.mxu0 0
  %8617 = vmatmul.mubr.bf16.gmra.mxu0 %v8254
  %v8618 = vpop.f32.mrf.mxu0
  %v8619 = vadd.f32 %v8061, %v8618
  %v8620 = vpop.f32.mrf.mxu0
  %v8621 = vadd.f32 %v8065, %v8620
  %v8622 = vpop.f32.mrf.mxu0
  %v8623 = vadd.f32 %v8061, %v8622
  %v8624 = vpop.f32.mrf.mxu0
  %v8625 = vadd.f32 %v8065, %v8624
  %8626 = vdwg.mxu0
  %8627 = vmatprep.subr.bf16.mxu0 0
  %8628 = vmatpush1.bf16.msra.mxu0 0
  %8629 = vmatprep.subr.bf16.mxu0 0
  %8630 = vmatpush1.bf16.msra.mxu0 0
  %8631 = vmatprep.subr.bf16.mxu0 0
  %8632 = vmatpush1.bf16.msra.mxu0 0
  %8633 = vmatprep.subr.bf16.mxu0 0
  %8634 = vmatpush1.bf16.msra.mxu0 0
  %8635 = vmatprep.subr.bf16.mxu0 0
  %8636 = vmatpush1.bf16.msra.mxu0 0
  %8637 = vmatprep.subr.bf16.mxu0 0
  %8638 = vmatpush1.bf16.msra.mxu0 0
  %8639 = vmatprep.subr.bf16.mxu0 %v8217
  %8640 = vmatpush1.bf16.msra.mxu0 %v8216
  %8641 = vmatprep.subr.bf16.mxu0 %v8201
  %8642 = vmatpush1.bf16.msra.mxu0 %v8200
  %8643 = vmatprep.subr.bf16.mxu0 0
  %8644 = vmatpush2.bf16.msra.mxu0 0
  %8645 = vmatprep.subr.bf16.mxu0 0
  %8646 = vmatpush2.bf16.msra.mxu0 0
  %8647 = vmatprep.subr.bf16.mxu0 0
  %8648 = vmatpush2.bf16.msra.mxu0 0
  %8649 = vmatprep.subr.bf16.mxu0 0
  %8650 = vmatpush2.bf16.msra.mxu0 0
  %8651 = vmatprep.subr.bf16.mxu0 0
  %8652 = vmatpush2.bf16.msra.mxu0 0
  %8653 = vmatprep.subr.bf16.mxu0 0
  %8654 = vmatpush2.bf16.msra.mxu0 0
  %8655 = vmatprep.subr.bf16.mxu0 0
  %8656 = vmatpush2.bf16.msra.mxu0 0
  %8657 = vmatprep.subr.bf16.mxu0 0
  %8658 = vmatpush2.bf16.msra.mxu0 0
  %8659 = vmatprep.mubr.bf16.mxu0 0
  %8660 = vmatmul.mubr.bf16.gmra.mxu0 %v8251
  %v8661 = vpop.f32.mrf.mxu0
  %v8662 = vadd.f32 %v8069, %v8661
  %v8663 = vpop.f32.mrf.mxu0
  %v8664 = vadd.f32 %v8073, %v8663
  %v8665 = vpop.f32.mrf.mxu0
  %v8666 = vadd.f32 %v8069, %v8665
  %v8667 = vpop.f32.mrf.mxu0
  %v8668 = vadd.f32 %v8073, %v8667
  %8669 = vmatprep.mubr.bf16.mxu0 0
  %8670 = vmatmul.mubr.bf16.gmra.mxu0 %v8254
  %v8671 = vpop.f32.mrf.mxu0
  %v8672 = vadd.f32 %v8069, %v8671
  %v8673 = vpop.f32.mrf.mxu0
  %v8674 = vadd.f32 %v8073, %v8673
  %v8675 = vpop.f32.mrf.mxu0
  %v8676 = vadd.f32 %v8069, %v8675
  %v8677 = vpop.f32.mrf.mxu0
  %v8678 = vadd.f32 %v8073, %v8677
  %8679 = vdwg.mxu0
  %v8680 = vmax.f32 %v8291, 0.0
  %v8681 = vmax.f32 %v8293, 0.0
  %v8682 = vmax.f32 %v8344, 0.0
  %v8683 = vmax.f32 %v8346, 0.0
  %v8684 = vmax.f32 %v8397, 0.0
  %v8685 = vmax.f32 %v8399, 0.0
  %v8686 = vmax.f32 %v8450, 0.0
  %v8687 = vmax.f32 %v8452, 0.0
  %v8688 = vmax.f32 %v8503, 0.0
  %v8689 = vmax.f32 %v8505, 0.0
  %v8690 = vmax.f32 %v8556, 0.0
  %v8691 = vmax.f32 %v8558, 0.0
  %v8692 = vmax.f32 %v8609, 0.0
  %v8693 = vmax.f32 %v8611, 0.0
  %v8694 = vmax.f32 %v8662, 0.0
  %v8695 = vmax.f32 %v8664, 0.0
  %v8696 = vmax.f32 %v8295, 0.0
  %v8697 = vmax.f32 %v8297, 0.0
  %v8698 = vmax.f32 %v8348, 0.0
  %v8699 = vmax.f32 %v8350, 0.0
  %v8700 = vmax.f32 %v8401, 0.0
  %v8701 = vmax.f32 %v8403, 0.0
  %v8702 = vmax.f32 %v8454, 0.0
  %v8703 = vmax.f32 %v8456, 0.0
  %v8704 = vmax.f32 %v8507, 0.0
  %v8705 = vmax.f32 %v8509, 0.0
  %v8706 = vmax.f32 %v8560, 0.0
  %v8707 = vmax.f32 %v8562, 0.0
  %v8708 = vmax.f32 %v8613, 0.0
  %v8709 = vmax.f32 %v8615, 0.0
  %v8710 = vmax.f32 %v8666, 0.0
  %v8711 = vmax.f32 %v8668, 0.0
  %v8712 = vmax.f32 %v8301, 0.0
  %v8713 = vmax.f32 %v8303, 0.0
  %v8714 = vmax.f32 %v8354, 0.0
  %v8715 = vmax.f32 %v8356, 0.0
  %v8716 = vmax.f32 %v8407, 0.0
  %v8717 = vmax.f32 %v8409, 0.0
  %v8718 = vmax.f32 %v8460, 0.0
  %v8719 = vmax.f32 %v8462, 0.0
  %v8720 = vmax.f32 %v8513, 0.0
  %v8721 = vmax.f32 %v8515, 0.0
  %v8722 = vmax.f32 %v8566, 0.0
  %v8723 = vmax.f32 %v8568, 0.0
  %v8724 = vmax.f32 %v8619, 0.0
  %v8725 = vmax.f32 %v8621, 0.0
  %v8726 = vmax.f32 %v8672, 0.0
  %v8727 = vmax.f32 %v8674, 0.0
  %v8728 = vmax.f32 %v8305, 0.0
  %v8729 = vmax.f32 %v8307, 0.0
  %v8730 = vmax.f32 %v8358, 0.0
  %v8731 = vmax.f32 %v8360, 0.0
  %v8732 = vmax.f32 %v8411, 0.0
  %v8733 = vmax.f32 %v8413, 0.0
  %v8734 = vmax.f32 %v8464, 0.0
  %v8735 = vmax.f32 %v8466, 0.0
  %v8736 = vmax.f32 %v8517, 0.0
  %v8737 = vmax.f32 %v8519, 0.0
  %v8738 = vmax.f32 %v8570, 0.0
  %v8739 = vmax.f32 %v8572, 0.0
  %v8740 = vmax.f32 %v8623, 0.0
  %v8741 = vmax.f32 %v8625, 0.0
  %v8742 = vmax.f32 %v8676, 0.0
  %v8743 = vmax.f32 %v8678, 0.0
  %v8744 = vpack.c.bf16 %v8696, %v8680
  %v8745 = vpack.c.bf16 %v8697, %v8681
  %v8746 = vpack.c.bf16 %v8698, %v8682
  %v8747 = vpack.c.bf16 %v8699, %v8683
  %v8748 = vpack.c.bf16 %v8700, %v8684
  %v8749 = vpack.c.bf16 %v8701, %v8685
  %v8750 = vpack.c.bf16 %v8702, %v8686
  %v8751 = vpack.c.bf16 %v8703, %v8687
  %v8752 = vpack.c.bf16 %v8704, %v8688
  %v8753 = vpack.c.bf16 %v8705, %v8689
  %v8754 = vpack.c.bf16 %v8706, %v8690
  %v8755 = vpack.c.bf16 %v8707, %v8691
  %v8756 = vpack.c.bf16 %v8708, %v8692
  %v8757 = vpack.c.bf16 %v8709, %v8693
  %v8758 = vpack.c.bf16 %v8710, %v8694
  %v8759 = vpack.c.bf16 %v8711, %v8695
  %v8760 = vpack.c.bf16 %v8728, %v8712
  %v8761 = vpack.c.bf16 %v8729, %v8713
  %v8762 = vpack.c.bf16 %v8730, %v8714
  %v8763 = vpack.c.bf16 %v8731, %v8715
  %v8764 = vpack.c.bf16 %v8732, %v8716
  %v8765 = vpack.c.bf16 %v8733, %v8717
  %v8766 = vpack.c.bf16 %v8734, %v8718
  %v8767 = vpack.c.bf16 %v8735, %v8719
  %v8768 = vpack.c.bf16 %v8736, %v8720
  %v8769 = vpack.c.bf16 %v8737, %v8721
  %v8770 = vpack.c.bf16 %v8738, %v8722
  %v8771 = vpack.c.bf16 %v8739, %v8723
  %v8772 = vpack.c.bf16 %v8740, %v8724
  %v8773 = vpack.c.bf16 %v8741, %v8725
  %v8774 = vpack.c.bf16 %v8742, %v8726
  %v8775 = vpack.c.bf16 %v8743, %v8727
  %s8776 = scalar_lea.vmem %s11, 1024
  %v8777 = vld [vmem:[%s8776] sm:$0xf]
  %v8778 = vld [vmem:[%s8776 + $0x4] sm:$0xf]
  %v8779 = vld [vmem:[%s8776 + $0x8] sm:$0xf]
  %v8780 = vld [vmem:[%s8776 + $0xc] sm:$0xf]
  %v8781 = vld [vmem:[%s8776 + $0x10] sm:$0xf]
  %v8782 = vld [vmem:[%s8776 + $0x14] sm:$0xf]
  %v8783 = vld [vmem:[%s8776 + $0x18] sm:$0xf]
  %v8784 = vld [vmem:[%s8776 + $0x1c] sm:$0xf]
  %v8785 = vld [vmem:[%s8776 + $0x20] sm:$0xf]
  %v8786 = vld [vmem:[%s8776 + $0x24] sm:$0xf]
  %v8787 = vld [vmem:[%s8776 + $0x28] sm:$0xf]
  %v8788 = vld [vmem:[%s8776 + $0x2c] sm:$0xf]
  %v8789 = vld [vmem:[%s8776 + $0x30] sm:$0xf]
  %v8790 = vld [vmem:[%s8776 + $0x34] sm:$0xf]
  %v8791 = vld [vmem:[%s8776 + $0x38] sm:$0xf]
  %v8792 = vld [vmem:[%s8776 + $0x3c] sm:$0xf]
  %v8793 = vld [vmem:[%s8776 + $0x40] sm:$0xf]
  %v8794 = vld [vmem:[%s8776 + $0x44] sm:$0xf]
  %v8795 = vld [vmem:[%s8776 + $0x48] sm:$0xf]
  %v8796 = vld [vmem:[%s8776 + $0x4c] sm:$0xf]
  %v8797 = vld [vmem:[%s8776 + $0x50] sm:$0xf]
  %v8798 = vld [vmem:[%s8776 + $0x54] sm:$0xf]
  %v8799 = vld [vmem:[%s8776 + $0x58] sm:$0xf]
  %v8800 = vld [vmem:[%s8776 + $0x5c] sm:$0xf]
  %v8801 = vld [vmem:[%s8776 + $0x60] sm:$0xf]
  %v8802 = vld [vmem:[%s8776 + $0x64] sm:$0xf]
  %v8803 = vld [vmem:[%s8776 + $0x68] sm:$0xf]
  %v8804 = vld [vmem:[%s8776 + $0x6c] sm:$0xf]
  %v8805 = vld [vmem:[%s8776 + $0x70] sm:$0xf]
  %v8806 = vld [vmem:[%s8776 + $0x74] sm:$0xf]
  %v8807 = vld [vmem:[%s8776 + $0x78] sm:$0xf]
  %v8808 = vld [vmem:[%s8776 + $0x7c] sm:$0xf]
  %v8809 = vld [vmem:[%s8776 + $0x80] sm:$0xf]
  %v8810 = vld [vmem:[%s8776 + $0x84] sm:$0xf]
  %v8811 = vld [vmem:[%s8776 + $0x88] sm:$0xf]
  %v8812 = vld [vmem:[%s8776 + $0x8c] sm:$0xf]
  %v8813 = vld [vmem:[%s8776 + $0x90] sm:$0xf]
  %v8814 = vld [vmem:[%s8776 + $0x94] sm:$0xf]
  %v8815 = vld [vmem:[%s8776 + $0x98] sm:$0xf]
  %v8816 = vld [vmem:[%s8776 + $0x9c] sm:$0xf]
  %v8817 = vld [vmem:[%s8776 + $0xa0] sm:$0xf]
  %v8818 = vld [vmem:[%s8776 + $0xa4] sm:$0xf]
  %v8819 = vld [vmem:[%s8776 + $0xa8] sm:$0xf]
  %v8820 = vld [vmem:[%s8776 + $0xac] sm:$0xf]
  %v8821 = vld [vmem:[%s8776 + $0xb0] sm:$0xf]
  %v8822 = vld [vmem:[%s8776 + $0xb4] sm:$0xf]
  %v8823 = vld [vmem:[%s8776 + $0xb8] sm:$0xf]
  %v8824 = vld [vmem:[%s8776 + $0xbc] sm:$0xf]
  %v8825 = vld [vmem:[%s8776 + $0xc0] sm:$0xf]
  %v8826 = vld [vmem:[%s8776 + $0xc4] sm:$0xf]
  %v8827 = vld [vmem:[%s8776 + $0xc8] sm:$0xf]
  %v8828 = vld [vmem:[%s8776 + $0xcc] sm:$0xf]
  %v8829 = vld [vmem:[%s8776 + $0xd0] sm:$0xf]
  %v8830 = vld [vmem:[%s8776 + $0xd4] sm:$0xf]
  %v8831 = vld [vmem:[%s8776 + $0xd8] sm:$0xf]
  %v8832 = vld [vmem:[%s8776 + $0xdc] sm:$0xf]
  %v8833 = vld [vmem:[%s8776 + $0xe0] sm:$0xf]
  %v8834 = vld [vmem:[%s8776 + $0xe4] sm:$0xf]
  %v8835 = vld [vmem:[%s8776 + $0xe8] sm:$0xf]
  %v8836 = vld [vmem:[%s8776 + $0xec] sm:$0xf]
  %v8837 = vld [vmem:[%s8776 + $0xf0] sm:$0xf]
  %v8838 = vld [vmem:[%s8776 + $0xf4] sm:$0xf]
  %v8839 = vld [vmem:[%s8776 + $0xf8] sm:$0xf]
  %v8840 = vld [vmem:[%s8776 + $0xfc] sm:$0xf]
  %v8841 = vld [vmem:[%s8776 + $0x100] sm:$0xf]
  %v8842 = vld [vmem:[%s8776 + $0x104] sm:$0xf]
  %v8843 = vld [vmem:[%s8776 + $0x108] sm:$0xf]
  %v8844 = vld [vmem:[%s8776 + $0x10c] sm:$0xf]
  %v8845 = vld [vmem:[%s8776 + $0x110] sm:$0xf]
  %v8846 = vld [vmem:[%s8776 + $0x114] sm:$0xf]
  %v8847 = vld [vmem:[%s8776 + $0x118] sm:$0xf]
  %v8848 = vld [vmem:[%s8776 + $0x11c] sm:$0xf]
  %v8849 = vld [vmem:[%s8776 + $0x120] sm:$0xf]
  %v8850 = vld [vmem:[%s8776 + $0x124] sm:$0xf]
  %v8851 = vld [vmem:[%s8776 + $0x128] sm:$0xf]
  %v8852 = vld [vmem:[%s8776 + $0x12c] sm:$0xf]
  %v8853 = vld [vmem:[%s8776 + $0x130] sm:$0xf]
  %v8854 = vld [vmem:[%s8776 + $0x134] sm:$0xf]
  %v8855 = vld [vmem:[%s8776 + $0x138] sm:$0xf]
  %v8856 = vld [vmem:[%s8776 + $0x13c] sm:$0xf]
  %v8857 = vld [vmem:[%s8776 + $0x140] sm:$0xf]
  %v8858 = vld [vmem:[%s8776 + $0x144] sm:$0xf]
  %v8859 = vld [vmem:[%s8776 + $0x148] sm:$0xf]
  %v8860 = vld [vmem:[%s8776 + $0x14c] sm:$0xf]
  %v8861 = vld [vmem:[%s8776 + $0x150] sm:$0xf]
  %v8862 = vld [vmem:[%s8776 + $0x154] sm:$0xf]
  %v8863 = vld [vmem:[%s8776 + $0x158] sm:$0xf]
  %v8864 = vld [vmem:[%s8776 + $0x15c] sm:$0xf]
  %v8865 = vld [vmem:[%s8776 + $0x160] sm:$0xf]
  %v8866 = vld [vmem:[%s8776 + $0x164] sm:$0xf]
  %v8867 = vld [vmem:[%s8776 + $0x168] sm:$0xf]
  %v8868 = vld [vmem:[%s8776 + $0x16c] sm:$0xf]
  %v8869 = vld [vmem:[%s8776 + $0x170] sm:$0xf]
  %v8870 = vld [vmem:[%s8776 + $0x174] sm:$0xf]
  %v8871 = vld [vmem:[%s8776 + $0x178] sm:$0xf]
  %v8872 = vld [vmem:[%s8776 + $0x17c] sm:$0xf]
  %v8873 = vld [vmem:[%s8776 + $0x180] sm:$0xf]
  %v8874 = vld [vmem:[%s8776 + $0x184] sm:$0xf]
  %v8875 = vld [vmem:[%s8776 + $0x188] sm:$0xf]
  %v8876 = vld [vmem:[%s8776 + $0x18c] sm:$0xf]
  %v8877 = vld [vmem:[%s8776 + $0x190] sm:$0xf]
  %v8878 = vld [vmem:[%s8776 + $0x194] sm:$0xf]
  %v8879 = vld [vmem:[%s8776 + $0x198] sm:$0xf]
  %v8880 = vld [vmem:[%s8776 + $0x19c] sm:$0xf]
  %v8881 = vld [vmem:[%s8776 + $0x1a0] sm:$0xf]
  %v8882 = vld [vmem:[%s8776 + $0x1a4] sm:$0xf]
  %v8883 = vld [vmem:[%s8776 + $0x1a8] sm:$0xf]
  %v8884 = vld [vmem:[%s8776 + $0x1ac] sm:$0xf]
  %v8885 = vld [vmem:[%s8776 + $0x1b0] sm:$0xf]
  %v8886 = vld [vmem:[%s8776 + $0x1b4] sm:$0xf]
  %v8887 = vld [vmem:[%s8776 + $0x1b8] sm:$0xf]
  %v8888 = vld [vmem:[%s8776 + $0x1bc] sm:$0xf]
  %v8889 = vld [vmem:[%s8776 + $0x1c0] sm:$0xf]
  %v8890 = vld [vmem:[%s8776 + $0x1c4] sm:$0xf]
  %v8891 = vld [vmem:[%s8776 + $0x1c8] sm:$0xf]
  %v8892 = vld [vmem:[%s8776 + $0x1cc] sm:$0xf]
  %v8893 = vld [vmem:[%s8776 + $0x1d0] sm:$0xf]
  %v8894 = vld [vmem:[%s8776 + $0x1d4] sm:$0xf]
  %v8895 = vld [vmem:[%s8776 + $0x1d8] sm:$0xf]
  %v8896 = vld [vmem:[%s8776 + $0x1dc] sm:$0xf]
  %v8897 = vld [vmem:[%s8776 + $0x1e0] sm:$0xf]
  %v8898 = vld [vmem:[%s8776 + $0x1e4] sm:$0xf]
  %v8899 = vld [vmem:[%s8776 + $0x1e8] sm:$0xf]
  %v8900 = vld [vmem:[%s8776 + $0x1ec] sm:$0xf]
  %v8901 = vld [vmem:[%s8776 + $0x1f0] sm:$0xf]
  %v8902 = vld [vmem:[%s8776 + $0x1f4] sm:$0xf]
  %v8903 = vld [vmem:[%s8776 + $0x1f8] sm:$0xf]
  %v8904 = vld [vmem:[%s8776 + $0x1fc] sm:$0xf]
  %v8905 = vld [vmem:[%s8776 + $0x200] sm:$0xf]
  %v8906 = vld [vmem:[%s8776 + $0x204] sm:$0xf]
  %v8907 = vld [vmem:[%s8776 + $0x208] sm:$0xf]
  %v8908 = vld [vmem:[%s8776 + $0x20c] sm:$0xf]
  %v8909 = vld [vmem:[%s8776 + $0x210] sm:$0xf]
  %v8910 = vld [vmem:[%s8776 + $0x214] sm:$0xf]
  %v8911 = vld [vmem:[%s8776 + $0x218] sm:$0xf]
  %v8912 = vld [vmem:[%s8776 + $0x21c] sm:$0xf]
  %v8913 = vld [vmem:[%s8776 + $0x220] sm:$0xf]
  %v8914 = vld [vmem:[%s8776 + $0x224] sm:$0xf]
  %v8915 = vld [vmem:[%s8776 + $0x228] sm:$0xf]
  %v8916 = vld [vmem:[%s8776 + $0x22c] sm:$0xf]
  %v8917 = vld [vmem:[%s8776 + $0x230] sm:$0xf]
  %v8918 = vld [vmem:[%s8776 + $0x234] sm:$0xf]
  %v8919 = vld [vmem:[%s8776 + $0x238] sm:$0xf]
  %v8920 = vld [vmem:[%s8776 + $0x23c] sm:$0xf]
  %v8921 = vld [vmem:[%s8776 + $0x240] sm:$0xf]
  %v8922 = vld [vmem:[%s8776 + $0x244] sm:$0xf]
  %v8923 = vld [vmem:[%s8776 + $0x248] sm:$0xf]
  %v8924 = vld [vmem:[%s8776 + $0x24c] sm:$0xf]
  %v8925 = vld [vmem:[%s8776 + $0x250] sm:$0xf]
  %v8926 = vld [vmem:[%s8776 + $0x254] sm:$0xf]
  %v8927 = vld [vmem:[%s8776 + $0x258] sm:$0xf]
  %v8928 = vld [vmem:[%s8776 + $0x25c] sm:$0xf]
  %v8929 = vld [vmem:[%s8776 + $0x260] sm:$0xf]
  %v8930 = vld [vmem:[%s8776 + $0x264] sm:$0xf]
  %v8931 = vld [vmem:[%s8776 + $0x268] sm:$0xf]
  %v8932 = vld [vmem:[%s8776 + $0x26c] sm:$0xf]
  %v8933 = vld [vmem:[%s8776 + $0x270] sm:$0xf]
  %v8934 = vld [vmem:[%s8776 + $0x274] sm:$0xf]
  %v8935 = vld [vmem:[%s8776 + $0x278] sm:$0xf]
  %v8936 = vld [vmem:[%s8776 + $0x27c] sm:$0xf]
  %v8937 = vld [vmem:[%s8776 + $0x280] sm:$0xf]
  %v8938 = vld [vmem:[%s8776 + $0x284] sm:$0xf]
  %v8939 = vld [vmem:[%s8776 + $0x288] sm:$0xf]
  %v8940 = vld [vmem:[%s8776 + $0x28c] sm:$0xf]
  %v8941 = vld [vmem:[%s8776 + $0x290] sm:$0xf]
  %v8942 = vld [vmem:[%s8776 + $0x294] sm:$0xf]
  %v8943 = vld [vmem:[%s8776 + $0x298] sm:$0xf]
  %v8944 = vld [vmem:[%s8776 + $0x29c] sm:$0xf]
  %v8945 = vld [vmem:[%s8776 + $0x2a0] sm:$0xf]
  %v8946 = vld [vmem:[%s8776 + $0x2a4] sm:$0xf]
  %v8947 = vld [vmem:[%s8776 + $0x2a8] sm:$0xf]
  %v8948 = vld [vmem:[%s8776 + $0x2ac] sm:$0xf]
  %v8949 = vld [vmem:[%s8776 + $0x2b0] sm:$0xf]
  %v8950 = vld [vmem:[%s8776 + $0x2b4] sm:$0xf]
  %v8951 = vld [vmem:[%s8776 + $0x2b8] sm:$0xf]
  %v8952 = vld [vmem:[%s8776 + $0x2bc] sm:$0xf]
  %v8953 = vld [vmem:[%s8776 + $0x2c0] sm:$0xf]
  %v8954 = vld [vmem:[%s8776 + $0x2c4] sm:$0xf]
  %v8955 = vld [vmem:[%s8776 + $0x2c8] sm:$0xf]
  %v8956 = vld [vmem:[%s8776 + $0x2cc] sm:$0xf]
  %v8957 = vld [vmem:[%s8776 + $0x2d0] sm:$0xf]
  %v8958 = vld [vmem:[%s8776 + $0x2d4] sm:$0xf]
  %v8959 = vld [vmem:[%s8776 + $0x2d8] sm:$0xf]
  %v8960 = vld [vmem:[%s8776 + $0x2dc] sm:$0xf]
  %v8961 = vld [vmem:[%s8776 + $0x2e0] sm:$0xf]
  %v8962 = vld [vmem:[%s8776 + $0x2e4] sm:$0xf]
  %v8963 = vld [vmem:[%s8776 + $0x2e8] sm:$0xf]
  %v8964 = vld [vmem:[%s8776 + $0x2ec] sm:$0xf]
  %v8965 = vld [vmem:[%s8776 + $0x2f0] sm:$0xf]
  %v8966 = vld [vmem:[%s8776 + $0x2f4] sm:$0xf]
  %v8967 = vld [vmem:[%s8776 + $0x2f8] sm:$0xf]
  %v8968 = vld [vmem:[%s8776 + $0x2fc] sm:$0xf]
  %v8969 = vld [vmem:[%s8776 + $0x300] sm:$0xf]
  %v8970 = vld [vmem:[%s8776 + $0x304] sm:$0xf]
  %v8971 = vld [vmem:[%s8776 + $0x308] sm:$0xf]
  %v8972 = vld [vmem:[%s8776 + $0x30c] sm:$0xf]
  %v8973 = vld [vmem:[%s8776 + $0x310] sm:$0xf]
  %v8974 = vld [vmem:[%s8776 + $0x314] sm:$0xf]
  %v8975 = vld [vmem:[%s8776 + $0x318] sm:$0xf]
  %v8976 = vld [vmem:[%s8776 + $0x31c] sm:$0xf]
  %v8977 = vld [vmem:[%s8776 + $0x320] sm:$0xf]
  %v8978 = vld [vmem:[%s8776 + $0x324] sm:$0xf]
  %v8979 = vld [vmem:[%s8776 + $0x328] sm:$0xf]
  %v8980 = vld [vmem:[%s8776 + $0x32c] sm:$0xf]
  %v8981 = vld [vmem:[%s8776 + $0x330] sm:$0xf]
  %v8982 = vld [vmem:[%s8776 + $0x334] sm:$0xf]
  %v8983 = vld [vmem:[%s8776 + $0x338] sm:$0xf]
  %v8984 = vld [vmem:[%s8776 + $0x33c] sm:$0xf]
  %v8985 = vld [vmem:[%s8776 + $0x340] sm:$0xf]
  %v8986 = vld [vmem:[%s8776 + $0x344] sm:$0xf]
  %v8987 = vld [vmem:[%s8776 + $0x348] sm:$0xf]
  %v8988 = vld [vmem:[%s8776 + $0x34c] sm:$0xf]
  %v8989 = vld [vmem:[%s8776 + $0x350] sm:$0xf]
  %v8990 = vld [vmem:[%s8776 + $0x354] sm:$0xf]
  %v8991 = vld [vmem:[%s8776 + $0x358] sm:$0xf]
  %v8992 = vld [vmem:[%s8776 + $0x35c] sm:$0xf]
  %v8993 = vld [vmem:[%s8776 + $0x360] sm:$0xf]
  %v8994 = vld [vmem:[%s8776 + $0x364] sm:$0xf]
  %v8995 = vld [vmem:[%s8776 + $0x368] sm:$0xf]
  %v8996 = vld [vmem:[%s8776 + $0x36c] sm:$0xf]
  %v8997 = vld [vmem:[%s8776 + $0x370] sm:$0xf]
  %v8998 = vld [vmem:[%s8776 + $0x374] sm:$0xf]
  %v8999 = vld [vmem:[%s8776 + $0x378] sm:$0xf]
  %v9000 = vld [vmem:[%s8776 + $0x37c] sm:$0xf]
  %v9001 = vld [vmem:[%s8776 + $0x380] sm:$0xf]
  %v9002 = vld [vmem:[%s8776 + $0x384] sm:$0xf]
  %v9003 = vld [vmem:[%s8776 + $0x388] sm:$0xf]
  %v9004 = vld [vmem:[%s8776 + $0x38c] sm:$0xf]
  %v9005 = vld [vmem:[%s8776 + $0x390] sm:$0xf]
  %v9006 = vld [vmem:[%s8776 + $0x394] sm:$0xf]
  %v9007 = vld [vmem:[%s8776 + $0x398] sm:$0xf]
  %v9008 = vld [vmem:[%s8776 + $0x39c] sm:$0xf]
  %v9009 = vld [vmem:[%s8776 + $0x3a0] sm:$0xf]
  %v9010 = vld [vmem:[%s8776 + $0x3a4] sm:$0xf]
  %v9011 = vld [vmem:[%s8776 + $0x3a8] sm:$0xf]
  %v9012 = vld [vmem:[%s8776 + $0x3ac] sm:$0xf]
  %v9013 = vld [vmem:[%s8776 + $0x3b0] sm:$0xf]
  %v9014 = vld [vmem:[%s8776 + $0x3b4] sm:$0xf]
  %v9015 = vld [vmem:[%s8776 + $0x3b8] sm:$0xf]
  %v9016 = vld [vmem:[%s8776 + $0x3bc] sm:$0xf]
  %v9017 = vld [vmem:[%s8776 + $0x3c0] sm:$0xf]
  %v9018 = vld [vmem:[%s8776 + $0x3c4] sm:$0xf]
  %v9019 = vld [vmem:[%s8776 + $0x3c8] sm:$0xf]
  %v9020 = vld [vmem:[%s8776 + $0x3cc] sm:$0xf]
  %v9021 = vld [vmem:[%s8776 + $0x3d0] sm:$0xf]
  %v9022 = vld [vmem:[%s8776 + $0x3d4] sm:$0xf]
  %v9023 = vld [vmem:[%s8776 + $0x3d8] sm:$0xf]
  %v9024 = vld [vmem:[%s8776 + $0x3dc] sm:$0xf]
  %v9025 = vld [vmem:[%s8776 + $0x3e0] sm:$0xf]
  %v9026 = vld [vmem:[%s8776 + $0x3e4] sm:$0xf]
  %v9027 = vld [vmem:[%s8776 + $0x3e8] sm:$0xf]
  %v9028 = vld [vmem:[%s8776 + $0x3ec] sm:$0xf]
  %v9029 = vld [vmem:[%s8776 + $0x3f0] sm:$0xf]
  %v9030 = vld [vmem:[%s8776 + $0x3f4] sm:$0xf]
  %v9031 = vld [vmem:[%s8776 + $0x3f8] sm:$0xf]
  %v9032 = vld [vmem:[%s8776 + $0x3fc] sm:$0xf]
  %s9033 = scalar_lea.vmem %s12, 1
  %v9034 = vld [vmem:[%s9033] sm:$0x1]
  %v9036 = vlaneseq
  %v9037 = vshrl.u32 %v9036, 7
  %v9038 = vsub.s32 0, %v9037
  %v9039 = vrot.slane %v9034, %v9038
  %v9297 = vunpack.c.l.b16 %v8777
  %v9298 = vunpack.c.l.b16 %v8778
  %v9299 = vunpack.c.l.b16 %v8779
  %v9300 = vunpack.c.l.b16 %v8780
  %v9301 = vunpack.c.l.b16 %v8781
  %v9302 = vunpack.c.l.b16 %v8782
  %v9303 = vunpack.c.l.b16 %v8783
  %v9304 = vunpack.c.l.b16 %v8784
  %v9305 = vunpack.c.l.b16 %v8785
  %v9306 = vunpack.c.l.b16 %v8786
  %v9307 = vunpack.c.l.b16 %v8787
  %v9308 = vunpack.c.l.b16 %v8788
  %v9309 = vunpack.c.l.b16 %v8789
  %v9310 = vunpack.c.l.b16 %v8790
  %v9311 = vunpack.c.l.b16 %v8791
  %v9312 = vunpack.c.l.b16 %v8792
  %v9313 = vunpack.c.l.b16 %v8793
  %v9314 = vunpack.c.l.b16 %v8794
  %v9315 = vunpack.c.l.b16 %v8795
  %v9316 = vunpack.c.l.b16 %v8796
  %v9317 = vunpack.c.l.b16 %v8797
  %v9318 = vunpack.c.l.b16 %v8798
  %v9319 = vunpack.c.l.b16 %v8799
  %v9320 = vunpack.c.l.b16 %v8800
  %v9321 = vunpack.c.l.b16 %v8801
  %v9322 = vunpack.c.l.b16 %v8802
  %v9323 = vunpack.c.l.b16 %v8803
  %v9324 = vunpack.c.l.b16 %v8804
  %v9325 = vunpack.c.l.b16 %v8805
  %v9326 = vunpack.c.l.b16 %v8806
  %v9327 = vunpack.c.l.b16 %v8807
  %v9328 = vunpack.c.l.b16 %v8808
  %v9329 = vunpack.c.l.b16 %v8809
  %v9330 = vunpack.c.l.b16 %v8810
  %v9331 = vunpack.c.l.b16 %v8811
  %v9332 = vunpack.c.l.b16 %v8812
  %v9333 = vunpack.c.l.b16 %v8813
  %v9334 = vunpack.c.l.b16 %v8814
  %v9335 = vunpack.c.l.b16 %v8815
  %v9336 = vunpack.c.l.b16 %v8816
  %v9337 = vunpack.c.l.b16 %v8817
  %v9338 = vunpack.c.l.b16 %v8818
  %v9339 = vunpack.c.l.b16 %v8819
  %v9340 = vunpack.c.l.b16 %v8820
  %v9341 = vunpack.c.l.b16 %v8821
  %v9342 = vunpack.c.l.b16 %v8822
  %v9343 = vunpack.c.l.b16 %v8823
  %v9344 = vunpack.c.l.b16 %v8824
  %v9345 = vunpack.c.l.b16 %v8825
  %v9346 = vunpack.c.l.b16 %v8826
  %v9347 = vunpack.c.l.b16 %v8827
  %v9348 = vunpack.c.l.b16 %v8828
  %v9349 = vunpack.c.l.b16 %v8829
  %v9350 = vunpack.c.l.b16 %v8830
  %v9351 = vunpack.c.l.b16 %v8831
  %v9352 = vunpack.c.l.b16 %v8832
  %v9353 = vunpack.c.l.b16 %v8833
  %v9354 = vunpack.c.l.b16 %v8834
  %v9355 = vunpack.c.l.b16 %v8835
  %v9356 = vunpack.c.l.b16 %v8836
  %v9357 = vunpack.c.l.b16 %v8837
  %v9358 = vunpack.c.l.b16 %v8838
  %v9359 = vunpack.c.l.b16 %v8839
  %v9360 = vunpack.c.l.b16 %v8840
  %v9361 = vunpack.c.l.b16 %v8841
  %v9362 = vunpack.c.l.b16 %v8842
  %v9363 = vunpack.c.l.b16 %v8843
  %v9364 = vunpack.c.l.b16 %v8844
  %v9365 = vunpack.c.l.b16 %v8845
  %v9366 = vunpack.c.l.b16 %v8846
  %v9367 = vunpack.c.l.b16 %v8847
  %v9368 = vunpack.c.l.b16 %v8848
  %v9369 = vunpack.c.l.b16 %v8849
  %v9370 = vunpack.c.l.b16 %v8850
  %v9371 = vunpack.c.l.b16 %v8851
  %v9372 = vunpack.c.l.b16 %v8852
  %v9373 = vunpack.c.l.b16 %v8853
  %v9374 = vunpack.c.l.b16 %v8854
  %v9375 = vunpack.c.l.b16 %v8855
  %v9376 = vunpack.c.l.b16 %v8856
  %v9377 = vunpack.c.l.b16 %v8857
  %v9378 = vunpack.c.l.b16 %v8858
  %v9379 = vunpack.c.l.b16 %v8859
  %v9380 = vunpack.c.l.b16 %v8860
  %v9381 = vunpack.c.l.b16 %v8861
  %v9382 = vunpack.c.l.b16 %v8862
  %v9383 = vunpack.c.l.b16 %v8863
  %v9384 = vunpack.c.l.b16 %v8864
  %v9385 = vunpack.c.l.b16 %v8865
  %v9386 = vunpack.c.l.b16 %v8866
  %v9387 = vunpack.c.l.b16 %v8867
  %v9388 = vunpack.c.l.b16 %v8868
  %v9389 = vunpack.c.l.b16 %v8869
  %v9390 = vunpack.c.l.b16 %v8870
  %v9391 = vunpack.c.l.b16 %v8871
  %v9392 = vunpack.c.l.b16 %v8872
  %v9393 = vunpack.c.l.b16 %v8873
  %v9394 = vunpack.c.l.b16 %v8874
  %v9395 = vunpack.c.l.b16 %v8875
  %v9396 = vunpack.c.l.b16 %v8876
  %v9397 = vunpack.c.l.b16 %v8877
  %v9398 = vunpack.c.l.b16 %v8878
  %v9399 = vunpack.c.l.b16 %v8879
  %v9400 = vunpack.c.l.b16 %v8880
  %v9401 = vunpack.c.l.b16 %v8881
  %v9402 = vunpack.c.l.b16 %v8882
  %v9403 = vunpack.c.l.b16 %v8883
  %v9404 = vunpack.c.l.b16 %v8884
  %v9405 = vunpack.c.l.b16 %v8885
  %v9406 = vunpack.c.l.b16 %v8886
  %v9407 = vunpack.c.l.b16 %v8887
  %v9408 = vunpack.c.l.b16 %v8888
  %v9409 = vunpack.c.l.b16 %v8889
  %v9410 = vunpack.c.l.b16 %v8890
  %v9411 = vunpack.c.l.b16 %v8891
  %v9412 = vunpack.c.l.b16 %v8892
  %v9413 = vunpack.c.l.b16 %v8893
  %v9414 = vunpack.c.l.b16 %v8894
  %v9415 = vunpack.c.l.b16 %v8895
  %v9416 = vunpack.c.l.b16 %v8896
  %v9417 = vunpack.c.l.b16 %v8897
  %v9418 = vunpack.c.l.b16 %v8898
  %v9419 = vunpack.c.l.b16 %v8899
  %v9420 = vunpack.c.l.b16 %v8900
  %v9421 = vunpack.c.l.b16 %v8901
  %v9422 = vunpack.c.l.b16 %v8902
  %v9423 = vunpack.c.l.b16 %v8903
  %v9424 = vunpack.c.l.b16 %v8904
  %v9425 = vunpack.c.l.b16 %v8905
  %v9426 = vunpack.c.l.b16 %v8906
  %v9427 = vunpack.c.l.b16 %v8907
  %v9428 = vunpack.c.l.b16 %v8908
  %v9429 = vunpack.c.l.b16 %v8909
  %v9430 = vunpack.c.l.b16 %v8910
  %v9431 = vunpack.c.l.b16 %v8911
  %v9432 = vunpack.c.l.b16 %v8912
  %v9433 = vunpack.c.l.b16 %v8913
  %v9434 = vunpack.c.l.b16 %v8914
  %v9435 = vunpack.c.l.b16 %v8915
  %v9436 = vunpack.c.l.b16 %v8916
  %v9437 = vunpack.c.l.b16 %v8917
  %v9438 = vunpack.c.l.b16 %v8918
  %v9439 = vunpack.c.l.b16 %v8919
  %v9440 = vunpack.c.l.b16 %v8920
  %v9441 = vunpack.c.l.b16 %v8921
  %v9442 = vunpack.c.l.b16 %v8922
  %v9443 = vunpack.c.l.b16 %v8923
  %v9444 = vunpack.c.l.b16 %v8924
  %v9445 = vunpack.c.l.b16 %v8925
  %v9446 = vunpack.c.l.b16 %v8926
  %v9447 = vunpack.c.l.b16 %v8927
  %v9448 = vunpack.c.l.b16 %v8928
  %v9449 = vunpack.c.l.b16 %v8929
  %v9450 = vunpack.c.l.b16 %v8930
  %v9451 = vunpack.c.l.b16 %v8931
  %v9452 = vunpack.c.l.b16 %v8932
  %v9453 = vunpack.c.l.b16 %v8933
  %v9454 = vunpack.c.l.b16 %v8934
  %v9455 = vunpack.c.l.b16 %v8935
  %v9456 = vunpack.c.l.b16 %v8936
  %v9457 = vunpack.c.l.b16 %v8937
  %v9458 = vunpack.c.l.b16 %v8938
  %v9459 = vunpack.c.l.b16 %v8939
  %v9460 = vunpack.c.l.b16 %v8940
  %v9461 = vunpack.c.l.b16 %v8941
  %v9462 = vunpack.c.l.b16 %v8942
  %v9463 = vunpack.c.l.b16 %v8943
  %v9464 = vunpack.c.l.b16 %v8944
  %v9465 = vunpack.c.l.b16 %v8945
  %v9466 = vunpack.c.l.b16 %v8946
  %v9467 = vunpack.c.l.b16 %v8947
  %v9468 = vunpack.c.l.b16 %v8948
  %v9469 = vunpack.c.l.b16 %v8949
  %v9470 = vunpack.c.l.b16 %v8950
  %v9471 = vunpack.c.l.b16 %v8951
  %v9472 = vunpack.c.l.b16 %v8952
  %v9473 = vunpack.c.l.b16 %v8953
  %v9474 = vunpack.c.l.b16 %v8954
  %v9475 = vunpack.c.l.b16 %v8955
  %v9476 = vunpack.c.l.b16 %v8956
  %v9477 = vunpack.c.l.b16 %v8957
  %v9478 = vunpack.c.l.b16 %v8958
  %v9479 = vunpack.c.l.b16 %v8959
  %v9480 = vunpack.c.l.b16 %v8960
  %v9481 = vunpack.c.l.b16 %v8961
  %v9482 = vunpack.c.l.b16 %v8962
  %v9483 = vunpack.c.l.b16 %v8963
  %v9484 = vunpack.c.l.b16 %v8964
  %v9485 = vunpack.c.l.b16 %v8965
  %v9486 = vunpack.c.l.b16 %v8966
  %v9487 = vunpack.c.l.b16 %v8967
  %v9488 = vunpack.c.l.b16 %v8968
  %v9489 = vunpack.c.l.b16 %v8969
  %v9490 = vunpack.c.l.b16 %v8970
  %v9491 = vunpack.c.l.b16 %v8971
  %v9492 = vunpack.c.l.b16 %v8972
  %v9493 = vunpack.c.l.b16 %v8973
  %v9494 = vunpack.c.l.b16 %v8974
  %v9495 = vunpack.c.l.b16 %v8975
  %v9496 = vunpack.c.l.b16 %v8976
  %v9497 = vunpack.c.l.b16 %v8977
  %v9498 = vunpack.c.l.b16 %v8978
  %v9499 = vunpack.c.l.b16 %v8979
  %v9500 = vunpack.c.l.b16 %v8980
  %v9501 = vunpack.c.l.b16 %v8981
  %v9502 = vunpack.c.l.b16 %v8982
  %v9503 = vunpack.c.l.b16 %v8983
  %v9504 = vunpack.c.l.b16 %v8984
  %v9505 = vunpack.c.l.b16 %v8985
  %v9506 = vunpack.c.l.b16 %v8986
  %v9507 = vunpack.c.l.b16 %v8987
  %v9508 = vunpack.c.l.b16 %v8988
  %v9509 = vunpack.c.l.b16 %v8989
  %v9510 = vunpack.c.l.b16 %v8990
  %v9511 = vunpack.c.l.b16 %v8991
  %v9512 = vunpack.c.l.b16 %v8992
  %v9513 = vunpack.c.l.b16 %v8993
  %v9514 = vunpack.c.l.b16 %v8994
  %v9515 = vunpack.c.l.b16 %v8995
  %v9516 = vunpack.c.l.b16 %v8996
  %v9517 = vunpack.c.l.b16 %v8997
  %v9518 = vunpack.c.l.b16 %v8998
  %v9519 = vunpack.c.l.b16 %v8999
  %v9520 = vunpack.c.l.b16 %v9000
  %v9521 = vunpack.c.l.b16 %v9001
  %v9522 = vunpack.c.l.b16 %v9002
  %v9523 = vunpack.c.l.b16 %v9003
  %v9524 = vunpack.c.l.b16 %v9004
  %v9525 = vunpack.c.l.b16 %v9005
  %v9526 = vunpack.c.l.b16 %v9006
  %v9527 = vunpack.c.l.b16 %v9007
  %v9528 = vunpack.c.l.b16 %v9008
  %v9529 = vunpack.c.l.b16 %v9009
  %v9530 = vunpack.c.l.b16 %v9010
  %v9531 = vunpack.c.l.b16 %v9011
  %v9532 = vunpack.c.l.b16 %v9012
  %v9533 = vunpack.c.l.b16 %v9013
  %v9534 = vunpack.c.l.b16 %v9014
  %v9535 = vunpack.c.l.b16 %v9015
  %v9536 = vunpack.c.l.b16 %v9016
  %v9537 = vunpack.c.l.b16 %v9017
  %v9538 = vunpack.c.l.b16 %v9018
  %v9539 = vunpack.c.l.b16 %v9019
  %v9540 = vunpack.c.l.b16 %v9020
  %v9541 = vunpack.c.l.b16 %v9021
  %v9542 = vunpack.c.l.b16 %v9022
  %v9543 = vunpack.c.l.b16 %v9023
  %v9544 = vunpack.c.l.b16 %v9024
  %v9545 = vunpack.c.l.b16 %v9025
  %v9546 = vunpack.c.l.b16 %v9026
  %v9547 = vunpack.c.l.b16 %v9027
  %v9548 = vunpack.c.l.b16 %v9028
  %v9549 = vunpack.c.l.b16 %v9029
  %v9550 = vunpack.c.l.b16 %v9030
  %v9551 = vunpack.c.l.b16 %v9031
  %v9552 = vunpack.c.l.b16 %v9032
  %v9553 = vpack.c.b16 %v9298, %v9297
  %v9554 = vpack.c.b16 %v9300, %v9299
  %v9555 = vpack.c.b16 %v9302, %v9301
  %v9556 = vpack.c.b16 %v9304, %v9303
  %v9557 = vpack.c.b16 %v9306, %v9305
  %v9558 = vpack.c.b16 %v9308, %v9307
  %v9559 = vpack.c.b16 %v9310, %v9309
  %v9560 = vpack.c.b16 %v9312, %v9311
  %v9561 = vpack.c.b16 %v9314, %v9313
  %v9562 = vpack.c.b16 %v9316, %v9315
  %v9563 = vpack.c.b16 %v9318, %v9317
  %v9564 = vpack.c.b16 %v9320, %v9319
  %v9565 = vpack.c.b16 %v9322, %v9321
  %v9566 = vpack.c.b16 %v9324, %v9323
  %v9567 = vpack.c.b16 %v9326, %v9325
  %v9568 = vpack.c.b16 %v9328, %v9327
  %v9569 = vpack.c.b16 %v9330, %v9329
  %v9570 = vpack.c.b16 %v9332, %v9331
  %v9571 = vpack.c.b16 %v9334, %v9333
  %v9572 = vpack.c.b16 %v9336, %v9335
  %v9573 = vpack.c.b16 %v9338, %v9337
  %v9574 = vpack.c.b16 %v9340, %v9339
  %v9575 = vpack.c.b16 %v9342, %v9341
  %v9576 = vpack.c.b16 %v9344, %v9343
  %v9577 = vpack.c.b16 %v9346, %v9345
  %v9578 = vpack.c.b16 %v9348, %v9347
  %v9579 = vpack.c.b16 %v9350, %v9349
  %v9580 = vpack.c.b16 %v9352, %v9351
  %v9581 = vpack.c.b16 %v9354, %v9353
  %v9582 = vpack.c.b16 %v9356, %v9355
  %v9583 = vpack.c.b16 %v9358, %v9357
  %v9584 = vpack.c.b16 %v9360, %v9359
  %v9585 = vpack.c.b16 %v9362, %v9361
  %v9586 = vpack.c.b16 %v9364, %v9363
  %v9587 = vpack.c.b16 %v9366, %v9365
  %v9588 = vpack.c.b16 %v9368, %v9367
  %v9589 = vpack.c.b16 %v9370, %v9369
  %v9590 = vpack.c.b16 %v9372, %v9371
  %v9591 = vpack.c.b16 %v9374, %v9373
  %v9592 = vpack.c.b16 %v9376, %v9375
  %v9593 = vpack.c.b16 %v9378, %v9377
  %v9594 = vpack.c.b16 %v9380, %v9379
  %v9595 = vpack.c.b16 %v9382, %v9381
  %v9596 = vpack.c.b16 %v9384, %v9383
  %v9597 = vpack.c.b16 %v9386, %v9385
  %v9598 = vpack.c.b16 %v9388, %v9387
  %v9599 = vpack.c.b16 %v9390, %v9389
  %v9600 = vpack.c.b16 %v9392, %v9391
  %v9601 = vpack.c.b16 %v9394, %v9393
  %v9602 = vpack.c.b16 %v9396, %v9395
  %v9603 = vpack.c.b16 %v9398, %v9397
  %v9604 = vpack.c.b16 %v9400, %v9399
  %v9605 = vpack.c.b16 %v9402, %v9401
  %v9606 = vpack.c.b16 %v9404, %v9403
  %v9607 = vpack.c.b16 %v9406, %v9405
  %v9608 = vpack.c.b16 %v9408, %v9407
  %v9609 = vpack.c.b16 %v9410, %v9409
  %v9610 = vpack.c.b16 %v9412, %v9411
  %v9611 = vpack.c.b16 %v9414, %v9413
  %v9612 = vpack.c.b16 %v9416, %v9415
  %v9613 = vpack.c.b16 %v9418, %v9417
  %v9614 = vpack.c.b16 %v9420, %v9419
  %v9615 = vpack.c.b16 %v9422, %v9421
  %v9616 = vpack.c.b16 %v9424, %v9423
  %v9617 = vpack.c.b16 %v9426, %v9425
  %v9618 = vpack.c.b16 %v9428, %v9427
  %v9619 = vpack.c.b16 %v9430, %v9429
  %v9620 = vpack.c.b16 %v9432, %v9431
  %v9621 = vpack.c.b16 %v9434, %v9433
  %v9622 = vpack.c.b16 %v9436, %v9435
  %v9623 = vpack.c.b16 %v9438, %v9437
  %v9624 = vpack.c.b16 %v9440, %v9439
  %v9625 = vpack.c.b16 %v9442, %v9441
  %v9626 = vpack.c.b16 %v9444, %v9443
  %v9627 = vpack.c.b16 %v9446, %v9445
  %v9628 = vpack.c.b16 %v9448, %v9447
  %v9629 = vpack.c.b16 %v9450, %v9449
  %v9630 = vpack.c.b16 %v9452, %v9451
  %v9631 = vpack.c.b16 %v9454, %v9453
  %v9632 = vpack.c.b16 %v9456, %v9455
  %v9633 = vpack.c.b16 %v9458, %v9457
  %v9634 = vpack.c.b16 %v9460, %v9459
  %v9635 = vpack.c.b16 %v9462, %v9461
  %v9636 = vpack.c.b16 %v9464, %v9463
  %v9637 = vpack.c.b16 %v9466, %v9465
  %v9638 = vpack.c.b16 %v9468, %v9467
  %v9639 = vpack.c.b16 %v9470, %v9469
  %v9640 = vpack.c.b16 %v9472, %v9471
  %v9641 = vpack.c.b16 %v9474, %v9473
  %v9642 = vpack.c.b16 %v9476, %v9475
  %v9643 = vpack.c.b16 %v9478, %v9477
  %v9644 = vpack.c.b16 %v9480, %v9479
  %v9645 = vpack.c.b16 %v9482, %v9481
  %v9646 = vpack.c.b16 %v9484, %v9483
  %v9647 = vpack.c.b16 %v9486, %v9485
  %v9648 = vpack.c.b16 %v9488, %v9487
  %v9649 = vpack.c.b16 %v9490, %v9489
  %v9650 = vpack.c.b16 %v9492, %v9491
  %v9651 = vpack.c.b16 %v9494, %v9493
  %v9652 = vpack.c.b16 %v9496, %v9495
  %v9653 = vpack.c.b16 %v9498, %v9497
  %v9654 = vpack.c.b16 %v9500, %v9499
  %v9655 = vpack.c.b16 %v9502, %v9501
  %v9656 = vpack.c.b16 %v9504, %v9503
  %v9657 = vpack.c.b16 %v9506, %v9505
  %v9658 = vpack.c.b16 %v9508, %v9507
  %v9659 = vpack.c.b16 %v9510, %v9509
  %v9660 = vpack.c.b16 %v9512, %v9511
  %v9661 = vpack.c.b16 %v9514, %v9513
  %v9662 = vpack.c.b16 %v9516, %v9515
  %v9663 = vpack.c.b16 %v9518, %v9517
  %v9664 = vpack.c.b16 %v9520, %v9519
  %v9665 = vpack.c.b16 %v9522, %v9521
  %v9666 = vpack.c.b16 %v9524, %v9523
  %v9667 = vpack.c.b16 %v9526, %v9525
  %v9668 = vpack.c.b16 %v9528, %v9527
  %v9669 = vpack.c.b16 %v9530, %v9529
  %v9670 = vpack.c.b16 %v9532, %v9531
  %v9671 = vpack.c.b16 %v9534, %v9533
  %v9672 = vpack.c.b16 %v9536, %v9535
  %v9673 = vpack.c.b16 %v9538, %v9537
  %v9674 = vpack.c.b16 %v9540, %v9539
  %v9675 = vpack.c.b16 %v9542, %v9541
  %v9676 = vpack.c.b16 %v9544, %v9543
  %v9677 = vpack.c.b16 %v9546, %v9545
  %v9678 = vpack.c.b16 %v9548, %v9547
  %v9679 = vpack.c.b16 %v9550, %v9549
  %v9680 = vpack.c.b16 %v9552, %v9551
  %9809 = vmatprep.subr.bf16.mxu0 0
  %9810 = vmatpush1.bf16.msra.mxu0 %v9560
  %9811 = vmatprep.subr.bf16.mxu0 0
  %9812 = vmatpush1.bf16.msra.mxu0 %v9559
  %9813 = vmatprep.subr.bf16.mxu0 0
  %9814 = vmatpush1.bf16.msra.mxu0 %v9558
  %9815 = vmatprep.subr.bf16.mxu0 0
  %9816 = vmatpush1.bf16.msra.mxu0 %v9557
  %9817 = vmatprep.subr.bf16.mxu0 0
  %9818 = vmatpush1.bf16.msra.mxu0 %v9556
  %9819 = vmatprep.subr.bf16.mxu0 0
  %9820 = vmatpush1.bf16.msra.mxu0 %v9555
  %9821 = vmatprep.subr.bf16.mxu0 0
  %9822 = vmatpush1.bf16.msra.mxu0 %v9554
  %9823 = vmatprep.subr.bf16.mxu0 0
  %9824 = vmatpush1.bf16.msra.mxu0 %v9553
  %9825 = vmatprep.subr.bf16.mxu0 0
  %9826 = vmatpush2.bf16.msra.mxu0 %v9568
  %9827 = vmatprep.subr.bf16.mxu0 0
  %9828 = vmatpush2.bf16.msra.mxu0 %v9567
  %9829 = vmatprep.subr.bf16.mxu0 0
  %9830 = vmatpush2.bf16.msra.mxu0 %v9566
  %9831 = vmatprep.subr.bf16.mxu0 0
  %9832 = vmatpush2.bf16.msra.mxu0 %v9565
  %9833 = vmatprep.subr.bf16.mxu0 0
  %9834 = vmatpush2.bf16.msra.mxu0 %v9564
  %9835 = vmatprep.subr.bf16.mxu0 0
  %9836 = vmatpush2.bf16.msra.mxu0 %v9563
  %9837 = vmatprep.subr.bf16.mxu0 0
  %9838 = vmatpush2.bf16.msra.mxu0 %v9562
  %9839 = vmatprep.subr.bf16.mxu0 0
  %9840 = vmatpush2.bf16.msra.mxu0 %v9561
  %9841 = vmatprep.mubr.bf16.mxu0 %v8745
  %9842 = vmatmul.mubr.bf16.gmra.mxu0 %v8744
  %v9843 = vpop.f32.mrf.mxu0
  %v9844 = vadd.f32 %v9039, %v9843
  %v9845 = vpop.f32.mrf.mxu0
  %v9846 = vpop.f32.mrf.mxu0
  %v9847 = vadd.f32 %v9039, %v9846
  %v9848 = vpop.f32.mrf.mxu0
  %9849 = vmatprep.mubr.bf16.mxu0 %v8761
  %9850 = vmatmul.mubr.bf16.gmra.mxu0 %v8760
  %v9851 = vpop.f32.mrf.mxu0
  %v9852 = vadd.f32 %v9039, %v9851
  %v9853 = vpop.f32.mrf.mxu0
  %v9854 = vpop.f32.mrf.mxu0
  %v9855 = vadd.f32 %v9039, %v9854
  %v9856 = vpop.f32.mrf.mxu0
  %9857 = vdwg.mxu0
  %9858 = vmatprep.subr.bf16.mxu0 0
  %9859 = vmatpush1.bf16.msra.mxu0 %v9576
  %9860 = vmatprep.subr.bf16.mxu0 0
  %9861 = vmatpush1.bf16.msra.mxu0 %v9575
  %9862 = vmatprep.subr.bf16.mxu0 0
  %9863 = vmatpush1.bf16.msra.mxu0 %v9574
  %9864 = vmatprep.subr.bf16.mxu0 0
  %9865 = vmatpush1.bf16.msra.mxu0 %v9573
  %9866 = vmatprep.subr.bf16.mxu0 0
  %9867 = vmatpush1.bf16.msra.mxu0 %v9572
  %9868 = vmatprep.subr.bf16.mxu0 0
  %9869 = vmatpush1.bf16.msra.mxu0 %v9571
  %9870 = vmatprep.subr.bf16.mxu0 0
  %9871 = vmatpush1.bf16.msra.mxu0 %v9570
  %9872 = vmatprep.subr.bf16.mxu0 0
  %9873 = vmatpush1.bf16.msra.mxu0 %v9569
  %9874 = vmatprep.subr.bf16.mxu0 0
  %9875 = vmatpush2.bf16.msra.mxu0 %v9584
  %9876 = vmatprep.subr.bf16.mxu0 0
  %9877 = vmatpush2.bf16.msra.mxu0 %v9583
  %9878 = vmatprep.subr.bf16.mxu0 0
  %9879 = vmatpush2.bf16.msra.mxu0 %v9582
  %9880 = vmatprep.subr.bf16.mxu0 0
  %9881 = vmatpush2.bf16.msra.mxu0 %v9581
  %9882 = vmatprep.subr.bf16.mxu0 0
  %9883 = vmatpush2.bf16.msra.mxu0 %v9580
  %9884 = vmatprep.subr.bf16.mxu0 0
  %9885 = vmatpush2.bf16.msra.mxu0 %v9579
  %9886 = vmatprep.subr.bf16.mxu0 0
  %9887 = vmatpush2.bf16.msra.mxu0 %v9578
  %9888 = vmatprep.subr.bf16.mxu0 0
  %9889 = vmatpush2.bf16.msra.mxu0 %v9577
  %9890 = vmatprep.mubr.bf16.mxu0 %v8747
  %9891 = vmatmul.mubr.bf16.gmra.mxu0 %v8746
  %v9892 = vpop.f32.mrf.mxu0
  %v9893 = vadd.f32 %v9844, %v9892
  %v9894 = vpop.f32.mrf.mxu0
  %v9895 = vpop.f32.mrf.mxu0
  %v9896 = vadd.f32 %v9847, %v9895
  %v9897 = vpop.f32.mrf.mxu0
  %9898 = vmatprep.mubr.bf16.mxu0 %v8763
  %9899 = vmatmul.mubr.bf16.gmra.mxu0 %v8762
  %v9900 = vpop.f32.mrf.mxu0
  %v9901 = vadd.f32 %v9852, %v9900
  %v9902 = vpop.f32.mrf.mxu0
  %v9903 = vpop.f32.mrf.mxu0
  %v9904 = vadd.f32 %v9855, %v9903
  %v9905 = vpop.f32.mrf.mxu0
  %9906 = vdwg.mxu0
  %9907 = vmatprep.subr.bf16.mxu0 0
  %9908 = vmatpush1.bf16.msra.mxu0 %v9592
  %9909 = vmatprep.subr.bf16.mxu0 0
  %9910 = vmatpush1.bf16.msra.mxu0 %v9591
  %9911 = vmatprep.subr.bf16.mxu0 0
  %9912 = vmatpush1.bf16.msra.mxu0 %v9590
  %9913 = vmatprep.subr.bf16.mxu0 0
  %9914 = vmatpush1.bf16.msra.mxu0 %v9589
  %9915 = vmatprep.subr.bf16.mxu0 0
  %9916 = vmatpush1.bf16.msra.mxu0 %v9588
  %9917 = vmatprep.subr.bf16.mxu0 0
  %9918 = vmatpush1.bf16.msra.mxu0 %v9587
  %9919 = vmatprep.subr.bf16.mxu0 0
  %9920 = vmatpush1.bf16.msra.mxu0 %v9586
  %9921 = vmatprep.subr.bf16.mxu0 0
  %9922 = vmatpush1.bf16.msra.mxu0 %v9585
  %9923 = vmatprep.subr.bf16.mxu0 0
  %9924 = vmatpush2.bf16.msra.mxu0 %v9600
  %9925 = vmatprep.subr.bf16.mxu0 0
  %9926 = vmatpush2.bf16.msra.mxu0 %v9599
  %9927 = vmatprep.subr.bf16.mxu0 0
  %9928 = vmatpush2.bf16.msra.mxu0 %v9598
  %9929 = vmatprep.subr.bf16.mxu0 0
  %9930 = vmatpush2.bf16.msra.mxu0 %v9597
  %9931 = vmatprep.subr.bf16.mxu0 0
  %9932 = vmatpush2.bf16.msra.mxu0 %v9596
  %9933 = vmatprep.subr.bf16.mxu0 0
  %9934 = vmatpush2.bf16.msra.mxu0 %v9595
  %9935 = vmatprep.subr.bf16.mxu0 0
  %9936 = vmatpush2.bf16.msra.mxu0 %v9594
  %9937 = vmatprep.subr.bf16.mxu0 0
  %9938 = vmatpush2.bf16.msra.mxu0 %v9593
  %9939 = vmatprep.mubr.bf16.mxu0 %v8749
  %9940 = vmatmul.mubr.bf16.gmra.mxu0 %v8748
  %v9941 = vpop.f32.mrf.mxu0
  %v9942 = vadd.f32 %v9893, %v9941
  %v9943 = vpop.f32.mrf.mxu0
  %v9944 = vpop.f32.mrf.mxu0
  %v9945 = vadd.f32 %v9896, %v9944
  %v9946 = vpop.f32.mrf.mxu0
  %9947 = vmatprep.mubr.bf16.mxu0 %v8765
  %9948 = vmatmul.mubr.bf16.gmra.mxu0 %v8764
  %v9949 = vpop.f32.mrf.mxu0
  %v9950 = vadd.f32 %v9901, %v9949
  %v9951 = vpop.f32.mrf.mxu0
  %v9952 = vpop.f32.mrf.mxu0
  %v9953 = vadd.f32 %v9904, %v9952
  %v9954 = vpop.f32.mrf.mxu0
  %9955 = vdwg.mxu0
  %9956 = vmatprep.subr.bf16.mxu0 0
  %9957 = vmatpush1.bf16.msra.mxu0 %v9608
  %9958 = vmatprep.subr.bf16.mxu0 0
  %9959 = vmatpush1.bf16.msra.mxu0 %v9607
  %9960 = vmatprep.subr.bf16.mxu0 0
  %9961 = vmatpush1.bf16.msra.mxu0 %v9606
  %9962 = vmatprep.subr.bf16.mxu0 0
  %9963 = vmatpush1.bf16.msra.mxu0 %v9605
  %9964 = vmatprep.subr.bf16.mxu0 0
  %9965 = vmatpush1.bf16.msra.mxu0 %v9604
  %9966 = vmatprep.subr.bf16.mxu0 0
  %9967 = vmatpush1.bf16.msra.mxu0 %v9603
  %9968 = vmatprep.subr.bf16.mxu0 0
  %9969 = vmatpush1.bf16.msra.mxu0 %v9602
  %9970 = vmatprep.subr.bf16.mxu0 0
  %9971 = vmatpush1.bf16.msra.mxu0 %v9601
  %9972 = vmatprep.subr.bf16.mxu0 0
  %9973 = vmatpush2.bf16.msra.mxu0 %v9616
  %9974 = vmatprep.subr.bf16.mxu0 0
  %9975 = vmatpush2.bf16.msra.mxu0 %v9615
  %9976 = vmatprep.subr.bf16.mxu0 0
  %9977 = vmatpush2.bf16.msra.mxu0 %v9614
  %9978 = vmatprep.subr.bf16.mxu0 0
  %9979 = vmatpush2.bf16.msra.mxu0 %v9613
  %9980 = vmatprep.subr.bf16.mxu0 0
  %9981 = vmatpush2.bf16.msra.mxu0 %v9612
  %9982 = vmatprep.subr.bf16.mxu0 0
  %9983 = vmatpush2.bf16.msra.mxu0 %v9611
  %9984 = vmatprep.subr.bf16.mxu0 0
  %9985 = vmatpush2.bf16.msra.mxu0 %v9610
  %9986 = vmatprep.subr.bf16.mxu0 0
  %9987 = vmatpush2.bf16.msra.mxu0 %v9609
  %9988 = vmatprep.mubr.bf16.mxu0 %v8751
  %9989 = vmatmul.mubr.bf16.gmra.mxu0 %v8750
  %v9990 = vpop.f32.mrf.mxu0
  %v9991 = vadd.f32 %v9942, %v9990
  %v9992 = vpop.f32.mrf.mxu0
  %v9993 = vpop.f32.mrf.mxu0
  %v9994 = vadd.f32 %v9945, %v9993
  %v9995 = vpop.f32.mrf.mxu0
  %9996 = vmatprep.mubr.bf16.mxu0 %v8767
  %9997 = vmatmul.mubr.bf16.gmra.mxu0 %v8766
  %v9998 = vpop.f32.mrf.mxu0
  %v9999 = vadd.f32 %v9950, %v9998
  %v10000 = vpop.f32.mrf.mxu0
  %v10001 = vpop.f32.mrf.mxu0
  %v10002 = vadd.f32 %v9953, %v10001
  %v10003 = vpop.f32.mrf.mxu0
  %10004 = vdwg.mxu0
  %10005 = vmatprep.subr.bf16.mxu0 0
  %10006 = vmatpush1.bf16.msra.mxu0 %v9624
  %10007 = vmatprep.subr.bf16.mxu0 0
  %10008 = vmatpush1.bf16.msra.mxu0 %v9623
  %10009 = vmatprep.subr.bf16.mxu0 0
  %10010 = vmatpush1.bf16.msra.mxu0 %v9622
  %10011 = vmatprep.subr.bf16.mxu0 0
  %10012 = vmatpush1.bf16.msra.mxu0 %v9621
  %10013 = vmatprep.subr.bf16.mxu0 0
  %10014 = vmatpush1.bf16.msra.mxu0 %v9620
  %10015 = vmatprep.subr.bf16.mxu0 0
  %10016 = vmatpush1.bf16.msra.mxu0 %v9619
  %10017 = vmatprep.subr.bf16.mxu0 0
  %10018 = vmatpush1.bf16.msra.mxu0 %v9618
  %10019 = vmatprep.subr.bf16.mxu0 0
  %10020 = vmatpush1.bf16.msra.mxu0 %v9617
  %10021 = vmatprep.subr.bf16.mxu0 0
  %10022 = vmatpush2.bf16.msra.mxu0 %v9632
  %10023 = vmatprep.subr.bf16.mxu0 0
  %10024 = vmatpush2.bf16.msra.mxu0 %v9631
  %10025 = vmatprep.subr.bf16.mxu0 0
  %10026 = vmatpush2.bf16.msra.mxu0 %v9630
  %10027 = vmatprep.subr.bf16.mxu0 0
  %10028 = vmatpush2.bf16.msra.mxu0 %v9629
  %10029 = vmatprep.subr.bf16.mxu0 0
  %10030 = vmatpush2.bf16.msra.mxu0 %v9628
  %10031 = vmatprep.subr.bf16.mxu0 0
  %10032 = vmatpush2.bf16.msra.mxu0 %v9627
  %10033 = vmatprep.subr.bf16.mxu0 0
  %10034 = vmatpush2.bf16.msra.mxu0 %v9626
  %10035 = vmatprep.subr.bf16.mxu0 0
  %10036 = vmatpush2.bf16.msra.mxu0 %v9625
  %10037 = vmatprep.mubr.bf16.mxu0 %v8753
  %10038 = vmatmul.mubr.bf16.gmra.mxu0 %v8752
  %v10039 = vpop.f32.mrf.mxu0
  %v10040 = vadd.f32 %v9991, %v10039
  %v10041 = vpop.f32.mrf.mxu0
  %v10042 = vpop.f32.mrf.mxu0
  %v10043 = vadd.f32 %v9994, %v10042
  %v10044 = vpop.f32.mrf.mxu0
  %10045 = vmatprep.mubr.bf16.mxu0 %v8769
  %10046 = vmatmul.mubr.bf16.gmra.mxu0 %v8768
  %v10047 = vpop.f32.mrf.mxu0
  %v10048 = vadd.f32 %v9999, %v10047
  %v10049 = vpop.f32.mrf.mxu0
  %v10050 = vpop.f32.mrf.mxu0
  %v10051 = vadd.f32 %v10002, %v10050
  %v10052 = vpop.f32.mrf.mxu0
  %10053 = vdwg.mxu0
  %10054 = vmatprep.subr.bf16.mxu0 0
  %10055 = vmatpush1.bf16.msra.mxu0 %v9640
  %10056 = vmatprep.subr.bf16.mxu0 0
  %10057 = vmatpush1.bf16.msra.mxu0 %v9639
  %10058 = vmatprep.subr.bf16.mxu0 0
  %10059 = vmatpush1.bf16.msra.mxu0 %v9638
  %10060 = vmatprep.subr.bf16.mxu0 0
  %10061 = vmatpush1.bf16.msra.mxu0 %v9637
  %10062 = vmatprep.subr.bf16.mxu0 0
  %10063 = vmatpush1.bf16.msra.mxu0 %v9636
  %10064 = vmatprep.subr.bf16.mxu0 0
  %10065 = vmatpush1.bf16.msra.mxu0 %v9635
  %10066 = vmatprep.subr.bf16.mxu0 0
  %10067 = vmatpush1.bf16.msra.mxu0 %v9634
  %10068 = vmatprep.subr.bf16.mxu0 0
  %10069 = vmatpush1.bf16.msra.mxu0 %v9633
  %10070 = vmatprep.subr.bf16.mxu0 0
  %10071 = vmatpush2.bf16.msra.mxu0 %v9648
  %10072 = vmatprep.subr.bf16.mxu0 0
  %10073 = vmatpush2.bf16.msra.mxu0 %v9647
  %10074 = vmatprep.subr.bf16.mxu0 0
  %10075 = vmatpush2.bf16.msra.mxu0 %v9646
  %10076 = vmatprep.subr.bf16.mxu0 0
  %10077 = vmatpush2.bf16.msra.mxu0 %v9645
  %10078 = vmatprep.subr.bf16.mxu0 0
  %10079 = vmatpush2.bf16.msra.mxu0 %v9644
  %10080 = vmatprep.subr.bf16.mxu0 0
  %10081 = vmatpush2.bf16.msra.mxu0 %v9643
  %10082 = vmatprep.subr.bf16.mxu0 0
  %10083 = vmatpush2.bf16.msra.mxu0 %v9642
  %10084 = vmatprep.subr.bf16.mxu0 0
  %10085 = vmatpush2.bf16.msra.mxu0 %v9641
  %10086 = vmatprep.mubr.bf16.mxu0 %v8755
  %10087 = vmatmul.mubr.bf16.gmra.mxu0 %v8754
  %v10088 = vpop.f32.mrf.mxu0
  %v10089 = vadd.f32 %v10040, %v10088
  %v10090 = vpop.f32.mrf.mxu0
  %v10091 = vpop.f32.mrf.mxu0
  %v10092 = vadd.f32 %v10043, %v10091
  %v10093 = vpop.f32.mrf.mxu0
  %10094 = vmatprep.mubr.bf16.mxu0 %v8771
  %10095 = vmatmul.mubr.bf16.gmra.mxu0 %v8770
  %v10096 = vpop.f32.mrf.mxu0
  %v10097 = vadd.f32 %v10048, %v10096
  %v10098 = vpop.f32.mrf.mxu0
  %v10099 = vpop.f32.mrf.mxu0
  %v10100 = vadd.f32 %v10051, %v10099
  %v10101 = vpop.f32.mrf.mxu0
  %10102 = vdwg.mxu0
  %10103 = vmatprep.subr.bf16.mxu0 0
  %10104 = vmatpush1.bf16.msra.mxu0 %v9656
  %10105 = vmatprep.subr.bf16.mxu0 0
  %10106 = vmatpush1.bf16.msra.mxu0 %v9655
  %10107 = vmatprep.subr.bf16.mxu0 0
  %10108 = vmatpush1.bf16.msra.mxu0 %v9654
  %10109 = vmatprep.subr.bf16.mxu0 0
  %10110 = vmatpush1.bf16.msra.mxu0 %v9653
  %10111 = vmatprep.subr.bf16.mxu0 0
  %10112 = vmatpush1.bf16.msra.mxu0 %v9652
  %10113 = vmatprep.subr.bf16.mxu0 0
  %10114 = vmatpush1.bf16.msra.mxu0 %v9651
  %10115 = vmatprep.subr.bf16.mxu0 0
  %10116 = vmatpush1.bf16.msra.mxu0 %v9650
  %10117 = vmatprep.subr.bf16.mxu0 0
  %10118 = vmatpush1.bf16.msra.mxu0 %v9649
  %10119 = vmatprep.subr.bf16.mxu0 0
  %10120 = vmatpush2.bf16.msra.mxu0 %v9664
  %10121 = vmatprep.subr.bf16.mxu0 0
  %10122 = vmatpush2.bf16.msra.mxu0 %v9663
  %10123 = vmatprep.subr.bf16.mxu0 0
  %10124 = vmatpush2.bf16.msra.mxu0 %v9662
  %10125 = vmatprep.subr.bf16.mxu0 0
  %10126 = vmatpush2.bf16.msra.mxu0 %v9661
  %10127 = vmatprep.subr.bf16.mxu0 0
  %10128 = vmatpush2.bf16.msra.mxu0 %v9660
  %10129 = vmatprep.subr.bf16.mxu0 0
  %10130 = vmatpush2.bf16.msra.mxu0 %v9659
  %10131 = vmatprep.subr.bf16.mxu0 0
  %10132 = vmatpush2.bf16.msra.mxu0 %v9658
  %10133 = vmatprep.subr.bf16.mxu0 0
  %10134 = vmatpush2.bf16.msra.mxu0 %v9657
  %10135 = vmatprep.mubr.bf16.mxu0 %v8757
  %10136 = vmatmul.mubr.bf16.gmra.mxu0 %v8756
  %v10137 = vpop.f32.mrf.mxu0
  %v10138 = vadd.f32 %v10089, %v10137
  %v10139 = vpop.f32.mrf.mxu0
  %v10140 = vpop.f32.mrf.mxu0
  %v10141 = vadd.f32 %v10092, %v10140
  %v10142 = vpop.f32.mrf.mxu0
  %10143 = vmatprep.mubr.bf16.mxu0 %v8773
  %10144 = vmatmul.mubr.bf16.gmra.mxu0 %v8772
  %v10145 = vpop.f32.mrf.mxu0
  %v10146 = vadd.f32 %v10097, %v10145
  %v10147 = vpop.f32.mrf.mxu0
  %v10148 = vpop.f32.mrf.mxu0
  %v10149 = vadd.f32 %v10100, %v10148
  %v10150 = vpop.f32.mrf.mxu0
  %10151 = vdwg.mxu0
  %10152 = vmatprep.subr.bf16.mxu0 0
  %10153 = vmatpush1.bf16.msra.mxu0 %v9672
  %10154 = vmatprep.subr.bf16.mxu0 0
  %10155 = vmatpush1.bf16.msra.mxu0 %v9671
  %10156 = vmatprep.subr.bf16.mxu0 0
  %10157 = vmatpush1.bf16.msra.mxu0 %v9670
  %10158 = vmatprep.subr.bf16.mxu0 0
  %10159 = vmatpush1.bf16.msra.mxu0 %v9669
  %10160 = vmatprep.subr.bf16.mxu0 0
  %10161 = vmatpush1.bf16.msra.mxu0 %v9668
  %10162 = vmatprep.subr.bf16.mxu0 0
  %10163 = vmatpush1.bf16.msra.mxu0 %v9667
  %10164 = vmatprep.subr.bf16.mxu0 0
  %10165 = vmatpush1.bf16.msra.mxu0 %v9666
  %10166 = vmatprep.subr.bf16.mxu0 0
  %10167 = vmatpush1.bf16.msra.mxu0 %v9665
  %10168 = vmatprep.subr.bf16.mxu0 0
  %10169 = vmatpush2.bf16.msra.mxu0 %v9680
  %10170 = vmatprep.subr.bf16.mxu0 0
  %10171 = vmatpush2.bf16.msra.mxu0 %v9679
  %10172 = vmatprep.subr.bf16.mxu0 0
  %10173 = vmatpush2.bf16.msra.mxu0 %v9678
  %10174 = vmatprep.subr.bf16.mxu0 0
  %10175 = vmatpush2.bf16.msra.mxu0 %v9677
  %10176 = vmatprep.subr.bf16.mxu0 0
  %10177 = vmatpush2.bf16.msra.mxu0 %v9676
  %10178 = vmatprep.subr.bf16.mxu0 0
  %10179 = vmatpush2.bf16.msra.mxu0 %v9675
  %10180 = vmatprep.subr.bf16.mxu0 0
  %10181 = vmatpush2.bf16.msra.mxu0 %v9674
  %10182 = vmatprep.subr.bf16.mxu0 0
  %10183 = vmatpush2.bf16.msra.mxu0 %v9673
  %10184 = vmatprep.mubr.bf16.mxu0 %v8759
  %10185 = vmatmul.mubr.bf16.gmra.mxu0 %v8758
  %v10186 = vpop.f32.mrf.mxu0
  %v10187 = vadd.f32 %v10138, %v10186
  %v10188 = vpop.f32.mrf.mxu0
  %v10189 = vpop.f32.mrf.mxu0
  %v10190 = vadd.f32 %v10141, %v10189
  %v10191 = vpop.f32.mrf.mxu0
  %10192 = vmatprep.mubr.bf16.mxu0 %v8775
  %10193 = vmatmul.mubr.bf16.gmra.mxu0 %v8774
  %v10194 = vpop.f32.mrf.mxu0
  %v10195 = vadd.f32 %v10146, %v10194
  %v10196 = vpop.f32.mrf.mxu0
  %v10197 = vpop.f32.mrf.mxu0
  %v10198 = vadd.f32 %v10149, %v10197
  %v10199 = vpop.f32.mrf.mxu0
  %10200 = vdwg.mxu0
  %v10201 = vadd.f32 %v7966, %v10187
  %v10202 = vadd.f32 %v7967, %v10190
  %v10203 = vadd.f32 %v7968, %v10195
  %v10204 = vadd.f32 %v7969, %v10198
  %s10205 = scalar_lea.vmem %s13, 1
  %v10206 = vld [vmem:[%s10205] sm:$0x1]
  %s10207 = scalar_lea.vmem %s14, 1
  %v10208 = vld [vmem:[%s10207] sm:$0x1]
  %v10209 = vsel %vm311, %v10201, 0.0
  %10210 = vadd.xlane.f32.xlu0 %v10209
  %v10211 = vpop.xlane.xlu0 %10210
  %v10212 = vsel %vm311, %v10202, 0.0
  %10213 = vadd.xlane.f32.xlu0 %v10212
  %v10214 = vpop.xlane.xlu0 %10213
  %v10215 = vsel %vm311, %v10203, 0.0
  %10216 = vadd.xlane.f32.xlu0 %v10215
  %v10217 = vpop.xlane.xlu0 %10216
  %v10218 = vsel %vm311, %v10204, 0.0
  %10219 = vadd.xlane.f32.xlu0 %v10218
  %v10220 = vpop.xlane.xlu0 %10219
  %v10221 = vmul.f32 %v10211, %v2920
  %v10222 = vmul.f32 %v10214, %v2920
  %v10223 = vmul.f32 %v10217, %v2920
  %v10224 = vmul.f32 %v10220, %v2920
  %v10225 = vsub.f32 %v10201, %v10221
  %v10226 = vsub.f32 %v10202, %v10222
  %v10227 = vsub.f32 %v10203, %v10223
  %v10228 = vsub.f32 %v10204, %v10224
  %v10229 = vmul.f32 %v10225, %v10225
  %v10230 = vmul.f32 %v10226, %v10226
  %v10231 = vmul.f32 %v10227, %v10227
  %v10232 = vmul.f32 %v10228, %v10228
  %v10233 = vsel %vm311, %v10229, 0.0
  %10234 = vadd.xlane.f32.xlu0 %v10233
  %v10235 = vpop.xlane.xlu0 %10234
  %v10236 = vsel %vm311, %v10230, 0.0
  %10237 = vadd.xlane.f32.xlu0 %v10236
  %v10238 = vpop.xlane.xlu0 %10237
  %v10239 = vsel %vm311, %v10231, 0.0
  %10240 = vadd.xlane.f32.xlu0 %v10239
  %v10241 = vpop.xlane.xlu0 %10240
  %v10242 = vsel %vm311, %v10232, 0.0
  %10243 = vadd.xlane.f32.xlu0 %v10242
  %v10244 = vpop.xlane.xlu0 %10243
  %v10245 = vmul.f32 %v10235, %v2920
  %v10246 = vmul.f32 %v10238, %v2920
  %v10247 = vmul.f32 %v10241, %v2920
  %v10248 = vmul.f32 %v10244, %v2920
  %v10249 = vadd.f32 %v10245, 1e-05
  %v10250 = vadd.f32 %v10246, 1e-05
  %v10251 = vadd.f32 %v10247, 1e-05
  %v10252 = vadd.f32 %v10248, 1e-05
  %v10253 = vrsqrt.pop %v10249
  %v10254 = vrsqrt.pop %v10250
  %v10255 = vrsqrt.pop %v10251
  %v10256 = vrsqrt.pop %v10252
  %v10257 = vmul.f32 %v10225, %v10253
  %v10258 = vmul.f32 %v10226, %v10254
  %v10259 = vmul.f32 %v10227, %v10255
  %v10260 = vmul.f32 %v10228, %v10256
  %v10262 = vlaneseq
  %v10263 = vshrl.u32 %v10262, 7
  %v10264 = vsub.s32 0, %v10263
  %v10265 = vrot.slane %v10206, %v10264
  %v10267 = vmul.f32 %v10257, %v10265
  %v10268 = vmul.f32 %v10258, %v10265
  %v10269 = vmul.f32 %v10259, %v10265
  %v10270 = vmul.f32 %v10260, %v10265
  %v10272 = vlaneseq
  %v10273 = vshrl.u32 %v10272, 7
  %v10274 = vsub.s32 0, %v10273
  %v10275 = vrot.slane %v10208, %v10274
  %v10277 = vadd.f32 %v10267, %v10275
  %v10278 = vadd.f32 %v10268, %v10275
  %v10279 = vadd.f32 %v10269, %v10275
  %v10280 = vadd.f32 %v10270, %v10275
  %10281 = vst.msk [vmem:[#allocation2] sm:$0xff] %vm311, %v10277
  %10283 = vrot.lane.b32.xlu0 %v10278, 32
  %v10284 = vpop.permute.xlu0 %10283
  %vm10286 = vcmask 523520
  %10287 = vst.msk [vmem:[#allocation2] sm:$0xff] %vm10286, %v10284
  %10289 = vrot.lane.b32.xlu0 %v10279, 64
  %v10290 = vpop.permute.xlu0 %10289
  %vm10292 = vcmask 785920
  %10293 = vst.msk [vmem:[#allocation2] sm:$0xff] %vm10292, %v10290
  %10295 = vrot.lane.b32.xlu0 %v10280, 96
  %v10296 = vpop.permute.xlu0 %10295
  %vm10298 = vcmask 1048320
  %10299 = vst.msk [vmem:[#allocation2] sm:$0xff] %vm10298, %v10296
  %v10300 = vld [vmem:[#allocation2] sm:$0xff]
  %v10301 = vld [vmem:[%s1] sm:$0xff]
  %10302 = vadd.xlane.f32.xlu0 %v10300
  %v10303 = vpop.xlane.xlu0 %10302
  %vm10304 = vcmask 48128
  %v10305 = vsel %vm10304, %v10301, 0.0
  %10306 = vadd.xlane.f32.xlu0 %v10305
  %v10307 = vpop.xlane.xlu0 %10306
  %v10308 = vadd.f32 %v10303, %v10307
  %v10309 = vrcp.pop 134.0
  %v10310 = vmul.f32 %v10308, %v10309
  %v10311 = vsub.f32 %v10300, %v10310
  %v10312 = vmul.f32 %v10311, %v10311
  %10313 = vadd.xlane.f32.xlu0 %v10312
  %v10314 = vpop.xlane.xlu0 %10313
  %v10315 = vsub.f32 %v10301, %v10310
  %v10316 = vmul.f32 %v10315, %v10315
  %v10317 = vsel %vm10304, %v10316, 0.0
  %10318 = vadd.xlane.f32.xlu0 %v10317
  %v10319 = vpop.xlane.xlu0 %10318
  %v10320 = vadd.f32 %v10314, %v10319
  %v10321 = vmul.f32 %v10320, %v10309
  %v10322 = vadd.f32 %v10321, 1e-05
  %v10323 = vrsqrt.pop %v10322
  %v10324 = vmul.f32 %v10311, %v10323
  %v10325 = vld [vmem:[%s15] sm:$0x1]
  %v10327 = vlaneseq
  %v10328 = vshrl.u32 %v10327, 7
  %v10329 = vsub.s32 0, %v10328
  %v10330 = vrot.slane %v10325, %v10329
  %v10332 = vmul.f32 %v10324, %v10330
  %v10333 = vld [vmem:[%s16] sm:$0x1]
  %v10335 = vlaneseq
  %v10336 = vshrl.u32 %v10335, 7
  %v10337 = vsub.s32 0, %v10336
  %v10338 = vrot.slane %v10333, %v10337
  %v10340 = vadd.f32 %v10332, %v10338
  %v10341 = vmul.f32 %v10315, %v10323
  %v10342 = vld [vmem:[%s17] sm:$0x1]
  %v10344 = vlaneseq
  %v10345 = vshrl.u32 %v10344, 7
  %v10346 = vsub.s32 0, %v10345
  %v10347 = vrot.slane %v10342, %v10346
  %v10349 = vmul.f32 %v10341, %v10347
  %v10350 = vld [vmem:[%s18] sm:$0x1]
  %v10352 = vlaneseq
  %v10353 = vshrl.u32 %v10352, 7
  %v10354 = vsub.s32 0, %v10353
  %v10355 = vrot.slane %v10350, %v10354
  %v10357 = vadd.f32 %v10349, %v10355
  %v10358 = vld [vmem:[%s19] sm:$0xff]
  %v10359 = vld [vmem:[%s19 + $0x8] sm:$0xff]
  %v10360 = vld [vmem:[%s19 + $0x10] sm:$0xff]
  %v10361 = vld [vmem:[%s19 + $0x18] sm:$0xff]
  %v10362 = vld [vmem:[%s19 + $0x20] sm:$0xff]
  %v10363 = vld [vmem:[%s19 + $0x28] sm:$0xff]
  %v10364 = vld [vmem:[%s19 + $0x30] sm:$0xff]
  %v10365 = vld [vmem:[%s19 + $0x38] sm:$0xff]
  %v10366 = vld [vmem:[%s19 + $0x40] sm:$0xff]
  %v10367 = vld [vmem:[%s19 + $0x48] sm:$0xff]
  %v10368 = vld [vmem:[%s19 + $0x50] sm:$0xff]
  %v10369 = vld [vmem:[%s19 + $0x58] sm:$0xff]
  %v10370 = vld [vmem:[%s19 + $0x60] sm:$0xff]
  %v10371 = vld [vmem:[%s19 + $0x68] sm:$0xff]
  %v10372 = vld [vmem:[%s19 + $0x70] sm:$0xff]
  %v10373 = vld [vmem:[%s19 + $0x78] sm:$0xff]
  %v10374 = vld [vmem:[%s20] sm:$0x3f]
  %v10376 = vsel %vm10304, %v10357, 0
  %v10379 = vsel %vm138, %v10374, 0
  %10381 = vmatprep.subr.mxu0 0.0
  %10382 = vmatpush1.msra.mxu0 0.0
  %10383 = vmatprep.subr.mxu0 0.0
  %10384 = vmatpush1.msra.mxu0 0.0
  %10385 = vmatprep.subr.mxu0 0.0
  %10386 = vmatpush1.msra.mxu0 0.0
  %10387 = vmatprep.subr.mxu0 0.0
  %10388 = vmatpush1.msra.mxu0 0.0
  %10389 = vmatprep.subr.mxu0 0.0
  %10390 = vmatpush1.msra.mxu0 0.0
  %10391 = vmatprep.subr.mxu0 0.0
  %10392 = vmatpush1.msra.mxu0 0.0
  %10393 = vmatprep.subr.mxu0 0.0
  %10394 = vmatpush1.msra.mxu0 0.0
  %10395 = vmatprep.subr.mxu0 0.0
  %10396 = vmatpush1.msra.mxu0 0.0
  %10397 = vmatprep.subr.mxu0 0.0
  %10398 = vmatpush1.msra.mxu0 0.0
  %10399 = vmatprep.subr.mxu0 0.0
  %10400 = vmatpush1.msra.mxu0 0.0
  %10401 = vmatprep.subr.mxu0 0.0
  %10402 = vmatpush1.msra.mxu0 0.0
  %10403 = vmatprep.subr.mxu0 0.0
  %10404 = vmatpush1.msra.mxu0 0.0
  %10405 = vmatprep.subr.mxu0 0.0
  %10406 = vmatpush1.msra.mxu0 0.0
  %10407 = vmatprep.subr.mxu0 0.0
  %10408 = vmatpush1.msra.mxu0 0.0
  %10409 = vmatprep.subr.mxu0 0.0
  %10410 = vmatpush1.msra.mxu0 0.0
  %10411 = vmatprep.subr.mxu0 0.0
  %10412 = vmatpush1.msra.mxu0 %v10379
  %10413 = vmatprep.subr.mxu0 0.0
  %10414 = vmatpush2.msra.mxu0 0.0
  %10415 = vmatprep.subr.mxu0 0.0
  %10416 = vmatpush2.msra.mxu0 0.0
  %10417 = vmatprep.subr.mxu0 0.0
  %10418 = vmatpush2.msra.mxu0 0.0
  %10419 = vmatprep.subr.mxu0 0.0
  %10420 = vmatpush2.msra.mxu0 0.0
  %10421 = vmatprep.subr.mxu0 0.0
  %10422 = vmatpush2.msra.mxu0 0.0
  %10423 = vmatprep.subr.mxu0 0.0
  %10424 = vmatpush2.msra.mxu0 0.0
  %10425 = vmatprep.subr.mxu0 0.0
  %10426 = vmatpush2.msra.mxu0 0.0
  %10427 = vmatprep.subr.mxu0 0.0
  %10428 = vmatpush2.msra.mxu0 0.0
  %10429 = vmatprep.subr.mxu0 0.0
  %10430 = vmatpush2.msra.mxu0 0.0
  %10431 = vmatprep.subr.mxu0 0.0
  %10432 = vmatpush2.msra.mxu0 0.0
  %10433 = vmatprep.subr.mxu0 0.0
  %10434 = vmatpush2.msra.mxu0 0.0
  %10435 = vmatprep.subr.mxu0 0.0
  %10436 = vmatpush2.msra.mxu0 0.0
  %10437 = vmatprep.subr.mxu0 0.0
  %10438 = vmatpush2.msra.mxu0 0.0
  %10439 = vmatprep.subr.mxu0 0.0
  %10440 = vmatpush2.msra.mxu0 0.0
  %10441 = vmatprep.subr.mxu0 0.0
  %10442 = vmatpush2.msra.mxu0 0.0
  %10443 = vmatprep.subr.mxu0 0.0
  %10444 = vmatpush2.msra.mxu0 0.0
  %10445 = vmatprep.mubr.f32.mxu0 0.0
  %10446 = vmatmul.mubr.f32.gmra.mxu0 %v10376
  %v10447 = vpop.f32.mrf.mxu0
  %v10448 = vadd.f32 0.0, %v10447
  %v10449 = vpop.f32.mrf.mxu0
  %10450 = vdwg.mxu0
  %10451 = vmatprep.subr.mxu0 0.0
  %10452 = vmatpush1.msra.mxu0 %v10373
  %10453 = vmatprep.subr.mxu0 0.0
  %10454 = vmatpush1.msra.mxu0 %v10372
  %10455 = vmatprep.subr.mxu0 0.0
  %10456 = vmatpush1.msra.mxu0 %v10371
  %10457 = vmatprep.subr.mxu0 0.0
  %10458 = vmatpush1.msra.mxu0 %v10370
  %10459 = vmatprep.subr.mxu0 0.0
  %10460 = vmatpush1.msra.mxu0 %v10369
  %10461 = vmatprep.subr.mxu0 0.0
  %10462 = vmatpush1.msra.mxu0 %v10368
  %10463 = vmatprep.subr.mxu0 0.0
  %10464 = vmatpush1.msra.mxu0 %v10367
  %10465 = vmatprep.subr.mxu0 0.0
  %10466 = vmatpush1.msra.mxu0 %v10366
  %10467 = vmatprep.subr.mxu0 0.0
  %10468 = vmatpush1.msra.mxu0 %v10365
  %10469 = vmatprep.subr.mxu0 0.0
  %10470 = vmatpush1.msra.mxu0 %v10364
  %10471 = vmatprep.subr.mxu0 0.0
  %10472 = vmatpush1.msra.mxu0 %v10363
  %10473 = vmatprep.subr.mxu0 0.0
  %10474 = vmatpush1.msra.mxu0 %v10362
  %10475 = vmatprep.subr.mxu0 0.0
  %10476 = vmatpush1.msra.mxu0 %v10361
  %10477 = vmatprep.subr.mxu0 0.0
  %10478 = vmatpush1.msra.mxu0 %v10360
  %10479 = vmatprep.subr.mxu0 0.0
  %10480 = vmatpush1.msra.mxu0 %v10359
  %10481 = vmatprep.subr.mxu0 0.0
  %10482 = vmatpush1.msra.mxu0 %v10358
  %10483 = vmatprep.subr.mxu0 0.0
  %10484 = vmatpush2.msra.mxu0 0.0
  %10485 = vmatprep.subr.mxu0 0.0
  %10486 = vmatpush2.msra.mxu0 0.0
  %10487 = vmatprep.subr.mxu0 0.0
  %10488 = vmatpush2.msra.mxu0 0.0
  %10489 = vmatprep.subr.mxu0 0.0
  %10490 = vmatpush2.msra.mxu0 0.0
  %10491 = vmatprep.subr.mxu0 0.0
  %10492 = vmatpush2.msra.mxu0 0.0
  %10493 = vmatprep.subr.mxu0 0.0
  %10494 = vmatpush2.msra.mxu0 0.0
  %10495 = vmatprep.subr.mxu0 0.0
  %10496 = vmatpush2.msra.mxu0 0.0
  %10497 = vmatprep.subr.mxu0 0.0
  %10498 = vmatpush2.msra.mxu0 0.0
  %10499 = vmatprep.subr.mxu0 0.0
  %10500 = vmatpush2.msra.mxu0 0.0
  %10501 = vmatprep.subr.mxu0 0.0
  %10502 = vmatpush2.msra.mxu0 0.0
  %10503 = vmatprep.subr.mxu0 0.0
  %10504 = vmatpush2.msra.mxu0 0.0
  %10505 = vmatprep.subr.mxu0 0.0
  %10506 = vmatpush2.msra.mxu0 0.0
  %10507 = vmatprep.subr.mxu0 0.0
  %10508 = vmatpush2.msra.mxu0 0.0
  %10509 = vmatprep.subr.mxu0 0.0
  %10510 = vmatpush2.msra.mxu0 0.0
  %10511 = vmatprep.subr.mxu0 0.0
  %10512 = vmatpush2.msra.mxu0 0.0
  %10513 = vmatprep.subr.mxu0 0.0
  %10514 = vmatpush2.msra.mxu0 0.0
  %10515 = vmatprep.mubr.f32.mxu0 0.0
  %10516 = vmatmul.mubr.f32.gmra.mxu0 %v10340
  %v10517 = vpop.f32.mrf.mxu0
  %v10518 = vadd.f32 %v10448, %v10517
  %v10519 = vpop.f32.mrf.mxu0
  %10520 = vdwg.mxu0
  %v10521 = vld [vmem:[%s21] sm:$0x1]
  %v10523 = vlaneseq
  %v10524 = vshrl.u32 %v10523, 7
  %v10525 = vsub.s32 0, %v10524
  %v10526 = vrot.slane %v10521, %v10525
  %v10528 = vadd.f32 %v10518, %v10526
  %v10529 = vmax.f32 %v10528, 0.0
  %v10530 = vld [vmem:[%s22] sm:$0xff]
  %v10531 = vld [vmem:[%s22 + $0x8] sm:$0xff]
  %v10532 = vld [vmem:[%s22 + $0x10] sm:$0xff]
  %v10533 = vld [vmem:[%s22 + $0x18] sm:$0xff]
  %v10534 = vld [vmem:[%s22 + $0x20] sm:$0xff]
  %v10535 = vld [vmem:[%s22 + $0x28] sm:$0xff]
  %v10536 = vld [vmem:[%s22 + $0x30] sm:$0xff]
  %v10537 = vld [vmem:[%s22 + $0x38] sm:$0xff]
  %v10538 = vld [vmem:[%s23] sm:$0x1]
  %v10540 = vlaneseq
  %v10541 = vshrl.u32 %v10540, 7
  %v10542 = vsub.s32 0, %v10541
  %v10543 = vrot.slane %v10538, %v10542
  %vm10545 = vcmask 523264
  %v10547 = vsel %vm10545, %v10529, 0
  %10549 = vmatprep.subr.mxu0 0.0
  %10550 = vmatpush1.msra.mxu0 0.0
  %10551 = vmatprep.subr.mxu0 0.0
  %10552 = vmatpush1.msra.mxu0 0.0
  %10553 = vmatprep.subr.mxu0 0.0
  %10554 = vmatpush1.msra.mxu0 0.0
  %10555 = vmatprep.subr.mxu0 0.0
  %10556 = vmatpush1.msra.mxu0 0.0
  %10557 = vmatprep.subr.mxu0 0.0
  %10558 = vmatpush1.msra.mxu0 0.0
  %10559 = vmatprep.subr.mxu0 0.0
  %10560 = vmatpush1.msra.mxu0 0.0
  %10561 = vmatprep.subr.mxu0 0.0
  %10562 = vmatpush1.msra.mxu0 0.0
  %10563 = vmatprep.subr.mxu0 0.0
  %10564 = vmatpush1.msra.mxu0 0.0
  %10565 = vmatprep.subr.mxu0 0.0
  %10566 = vmatpush1.msra.mxu0 %v10537
  %10567 = vmatprep.subr.mxu0 0.0
  %10568 = vmatpush1.msra.mxu0 %v10536
  %10569 = vmatprep.subr.mxu0 0.0
  %10570 = vmatpush1.msra.mxu0 %v10535
  %10571 = vmatprep.subr.mxu0 0.0
  %10572 = vmatpush1.msra.mxu0 %v10534
  %10573 = vmatprep.subr.mxu0 0.0
  %10574 = vmatpush1.msra.mxu0 %v10533
  %10575 = vmatprep.subr.mxu0 0.0
  %10576 = vmatpush1.msra.mxu0 %v10532
  %10577 = vmatprep.subr.mxu0 0.0
  %10578 = vmatpush1.msra.mxu0 %v10531
  %10579 = vmatprep.subr.mxu0 0.0
  %10580 = vmatpush1.msra.mxu0 %v10530
  %10581 = vmatprep.subr.mxu0 0.0
  %10582 = vmatpush2.msra.mxu0 0.0
  %10583 = vmatprep.subr.mxu0 0.0
  %10584 = vmatpush2.msra.mxu0 0.0
  %10585 = vmatprep.subr.mxu0 0.0
  %10586 = vmatpush2.msra.mxu0 0.0
  %10587 = vmatprep.subr.mxu0 0.0
  %10588 = vmatpush2.msra.mxu0 0.0
  %10589 = vmatprep.subr.mxu0 0.0
  %10590 = vmatpush2.msra.mxu0 0.0
  %10591 = vmatprep.subr.mxu0 0.0
  %10592 = vmatpush2.msra.mxu0 0.0
  %10593 = vmatprep.subr.mxu0 0.0
  %10594 = vmatpush2.msra.mxu0 0.0
  %10595 = vmatprep.subr.mxu0 0.0
  %10596 = vmatpush2.msra.mxu0 0.0
  %10597 = vmatprep.subr.mxu0 0.0
  %10598 = vmatpush2.msra.mxu0 0.0
  %10599 = vmatprep.subr.mxu0 0.0
  %10600 = vmatpush2.msra.mxu0 0.0
  %10601 = vmatprep.subr.mxu0 0.0
  %10602 = vmatpush2.msra.mxu0 0.0
  %10603 = vmatprep.subr.mxu0 0.0
  %10604 = vmatpush2.msra.mxu0 0.0
  %10605 = vmatprep.subr.mxu0 0.0
  %10606 = vmatpush2.msra.mxu0 0.0
  %10607 = vmatprep.subr.mxu0 0.0
  %10608 = vmatpush2.msra.mxu0 0.0
  %10609 = vmatprep.subr.mxu0 0.0
  %10610 = vmatpush2.msra.mxu0 0.0
  %10611 = vmatprep.subr.mxu0 0.0
  %10612 = vmatpush2.msra.mxu0 0.0
  %10613 = vmatprep.mubr.f32.mxu0 0.0
  %10614 = vmatmul.mubr.f32.gmra.mxu0 %v10547
  %v10615 = vpop.f32.mrf.mxu0
  %v10616 = vadd.f32 %v10543, %v10615
  %v10617 = vpop.f32.mrf.mxu0
  %10618 = vdwg.mxu0
  %v10619 = vmax.f32 %v10616, 0.0
  %v10620 = vld [vmem:[%s24] sm:$0xff]
  %v10621 = vld [vmem:[%s24 + $0x8] sm:$0xff]
  %v10622 = vld [vmem:[%s24 + $0x10] sm:$0xff]
  %v10623 = vld [vmem:[%s24 + $0x18] sm:$0xff]
  %v10624 = vld [vmem:[%s24 + $0x20] sm:$0xff]
  %v10625 = vld [vmem:[%s24 + $0x28] sm:$0xff]
  %v10626 = vld [vmem:[%s24 + $0x30] sm:$0xff]
  %v10627 = vld [vmem:[%s24 + $0x38] sm:$0xff]
  %v10628 = vld [vmem:[%s25] sm:$0xff]
  %v10629 = vld [vmem:[%s25 + $0x8] sm:$0xff]
  %v10630 = vld [vmem:[%s25 + $0x10] sm:$0xff]
  %v10631 = vld [vmem:[%s25 + $0x18] sm:$0xff]
  %v10632 = vld [vmem:[%s25 + $0x20] sm:$0xff]
  %v10633 = vld [vmem:[%s25 + $0x28] sm:$0xff]
  %v10634 = vld [vmem:[%s25 + $0x30] sm:$0xff]
  %v10635 = vld [vmem:[%s25 + $0x38] sm:$0xff]
  %v10636 = vld [vmem:[%s25 + $0x40] sm:$0xff]
  %v10637 = vld [vmem:[%s25 + $0x48] sm:$0xff]
  %v10638 = vld [vmem:[%s25 + $0x50] sm:$0xff]
  %v10639 = vld [vmem:[%s25 + $0x58] sm:$0xff]
  %v10640 = vld [vmem:[%s25 + $0x60] sm:$0xff]
  %v10641 = vld [vmem:[%s25 + $0x68] sm:$0xff]
  %v10642 = vld [vmem:[%s25 + $0x70] sm:$0xff]
  %v10643 = vld [vmem:[%s25 + $0x78] sm:$0xff]
  %10644 = vmatprep.subr.mxu0 0.0
  %10645 = vmatpush1.msra.mxu0 %v10643
  %10646 = vmatprep.subr.mxu0 0.0
  %10647 = vmatpush1.msra.mxu0 %v10642
  %10648 = vmatprep.subr.mxu0 0.0
  %10649 = vmatpush1.msra.mxu0 %v10641
  %10650 = vmatprep.subr.mxu0 0.0
  %10651 = vmatpush1.msra.mxu0 %v10640
  %10652 = vmatprep.subr.mxu0 0.0
  %10653 = vmatpush1.msra.mxu0 %v10639
  %10654 = vmatprep.subr.mxu0 0.0
  %10655 = vmatpush1.msra.mxu0 %v10638
  %10656 = vmatprep.subr.mxu0 0.0
  %10657 = vmatpush1.msra.mxu0 %v10637
  %10658 = vmatprep.subr.mxu0 0.0
  %10659 = vmatpush1.msra.mxu0 %v10636
  %10660 = vmatprep.subr.mxu0 0.0
  %10661 = vmatpush1.msra.mxu0 %v10635
  %10662 = vmatprep.subr.mxu0 0.0
  %10663 = vmatpush1.msra.mxu0 %v10634
  %10664 = vmatprep.subr.mxu0 0.0
  %10665 = vmatpush1.msra.mxu0 %v10633
  %10666 = vmatprep.subr.mxu0 0.0
  %10667 = vmatpush1.msra.mxu0 %v10632
  %10668 = vmatprep.subr.mxu0 0.0
  %10669 = vmatpush1.msra.mxu0 %v10631
  %10670 = vmatprep.subr.mxu0 0.0
  %10671 = vmatpush1.msra.mxu0 %v10630
  %10672 = vmatprep.subr.mxu0 0.0
  %10673 = vmatpush1.msra.mxu0 %v10629
  %10674 = vmatprep.subr.mxu0 0.0
  %10675 = vmatpush1.msra.mxu0 %v10628
  %10676 = vmatprep.subr.mxu0 0.0
  %10677 = vmatpush2.msra.mxu0 0.0
  %10678 = vmatprep.subr.mxu0 0.0
  %10679 = vmatpush2.msra.mxu0 0.0
  %10680 = vmatprep.subr.mxu0 0.0
  %10681 = vmatpush2.msra.mxu0 0.0
  %10682 = vmatprep.subr.mxu0 0.0
  %10683 = vmatpush2.msra.mxu0 0.0
  %10684 = vmatprep.subr.mxu0 0.0
  %10685 = vmatpush2.msra.mxu0 0.0
  %10686 = vmatprep.subr.mxu0 0.0
  %10687 = vmatpush2.msra.mxu0 0.0
  %10688 = vmatprep.subr.mxu0 0.0
  %10689 = vmatpush2.msra.mxu0 0.0
  %10690 = vmatprep.subr.mxu0 0.0
  %10691 = vmatpush2.msra.mxu0 0.0
  %10692 = vmatprep.subr.mxu0 0.0
  %10693 = vmatpush2.msra.mxu0 0.0
  %10694 = vmatprep.subr.mxu0 0.0
  %10695 = vmatpush2.msra.mxu0 0.0
  %10696 = vmatprep.subr.mxu0 0.0
  %10697 = vmatpush2.msra.mxu0 0.0
  %10698 = vmatprep.subr.mxu0 0.0
  %10699 = vmatpush2.msra.mxu0 0.0
  %10700 = vmatprep.subr.mxu0 0.0
  %10701 = vmatpush2.msra.mxu0 0.0
  %10702 = vmatprep.subr.mxu0 0.0
  %10703 = vmatpush2.msra.mxu0 0.0
  %10704 = vmatprep.subr.mxu0 0.0
  %10705 = vmatpush2.msra.mxu0 0.0
  %10706 = vmatprep.subr.mxu0 0.0
  %10707 = vmatpush2.msra.mxu0 0.0
  %10708 = vmatprep.mubr.f32.mxu0 0.0
  %10709 = vmatmul.mubr.f32.gmra.mxu0 %v10340
  %v10710 = vpop.f32.mrf.mxu0
  %v10711 = vadd.f32 0.0, %v10710
  %v10712 = vpop.f32.mrf.mxu0
  %10713 = vdwg.mxu0
  %v10715 = vsel %vm10545, %v10619, 0
  %10717 = vmatprep.subr.mxu0 0.0
  %10718 = vmatpush1.msra.mxu0 0.0
  %10719 = vmatprep.subr.mxu0 0.0
  %10720 = vmatpush1.msra.mxu0 0.0
  %10721 = vmatprep.subr.mxu0 0.0
  %10722 = vmatpush1.msra.mxu0 0.0
  %10723 = vmatprep.subr.mxu0 0.0
  %10724 = vmatpush1.msra.mxu0 0.0
  %10725 = vmatprep.subr.mxu0 0.0
  %10726 = vmatpush1.msra.mxu0 0.0
  %10727 = vmatprep.subr.mxu0 0.0
  %10728 = vmatpush1.msra.mxu0 0.0
  %10729 = vmatprep.subr.mxu0 0.0
  %10730 = vmatpush1.msra.mxu0 0.0
  %10731 = vmatprep.subr.mxu0 0.0
  %10732 = vmatpush1.msra.mxu0 0.0
  %10733 = vmatprep.subr.mxu0 0.0
  %10734 = vmatpush1.msra.mxu0 %v10627
  %10735 = vmatprep.subr.mxu0 0.0
  %10736 = vmatpush1.msra.mxu0 %v10626
  %10737 = vmatprep.subr.mxu0 0.0
  %10738 = vmatpush1.msra.mxu0 %v10625
  %10739 = vmatprep.subr.mxu0 0.0
  %10740 = vmatpush1.msra.mxu0 %v10624
  %10741 = vmatprep.subr.mxu0 0.0
  %10742 = vmatpush1.msra.mxu0 %v10623
  %10743 = vmatprep.subr.mxu0 0.0
  %10744 = vmatpush1.msra.mxu0 %v10622
  %10745 = vmatprep.subr.mxu0 0.0
  %10746 = vmatpush1.msra.mxu0 %v10621
  %10747 = vmatprep.subr.mxu0 0.0
  %10748 = vmatpush1.msra.mxu0 %v10620
  %10749 = vmatprep.subr.mxu0 0.0
  %10750 = vmatpush2.msra.mxu0 0.0
  %10751 = vmatprep.subr.mxu0 0.0
  %10752 = vmatpush2.msra.mxu0 0.0
  %10753 = vmatprep.subr.mxu0 0.0
  %10754 = vmatpush2.msra.mxu0 0.0
  %10755 = vmatprep.subr.mxu0 0.0
  %10756 = vmatpush2.msra.mxu0 0.0
  %10757 = vmatprep.subr.mxu0 0.0
  %10758 = vmatpush2.msra.mxu0 0.0
  %10759 = vmatprep.subr.mxu0 0.0
  %10760 = vmatpush2.msra.mxu0 0.0
  %10761 = vmatprep.subr.mxu0 0.0
  %10762 = vmatpush2.msra.mxu0 0.0
  %10763 = vmatprep.subr.mxu0 0.0
  %10764 = vmatpush2.msra.mxu0 0.0
  %10765 = vmatprep.subr.mxu0 0.0
  %10766 = vmatpush2.msra.mxu0 0.0
  %10767 = vmatprep.subr.mxu0 0.0
  %10768 = vmatpush2.msra.mxu0 0.0
  %10769 = vmatprep.subr.mxu0 0.0
  %10770 = vmatpush2.msra.mxu0 0.0
  %10771 = vmatprep.subr.mxu0 0.0
  %10772 = vmatpush2.msra.mxu0 0.0
  %10773 = vmatprep.subr.mxu0 0.0
  %10774 = vmatpush2.msra.mxu0 0.0
  %10775 = vmatprep.subr.mxu0 0.0
  %10776 = vmatpush2.msra.mxu0 0.0
  %10777 = vmatprep.subr.mxu0 0.0
  %10778 = vmatpush2.msra.mxu0 0.0
  %10779 = vmatprep.subr.mxu0 0.0
  %10780 = vmatpush2.msra.mxu0 0.0
  %10781 = vmatprep.mubr.f32.mxu0 0.0
  %10782 = vmatmul.mubr.f32.gmra.mxu0 %v10715
  %v10783 = vpop.f32.mrf.mxu0
  %v10784 = vadd.f32 %v10711, %v10783
  %v10785 = vpop.f32.mrf.mxu0
  %10786 = vdwg.mxu0
  %v10787 = vld [vmem:[%s26] sm:$0x3f]
  %v10789 = vsel %vm138, %v10787, 0
  %10791 = vmatprep.subr.mxu0 0.0
  %10792 = vmatpush1.msra.mxu0 0.0
  %10793 = vmatprep.subr.mxu0 0.0
  %10794 = vmatpush1.msra.mxu0 0.0
  %10795 = vmatprep.subr.mxu0 0.0
  %10796 = vmatpush1.msra.mxu0 0.0
  %10797 = vmatprep.subr.mxu0 0.0
  %10798 = vmatpush1.msra.mxu0 0.0
  %10799 = vmatprep.subr.mxu0 0.0
  %10800 = vmatpush1.msra.mxu0 0.0
  %10801 = vmatprep.subr.mxu0 0.0
  %10802 = vmatpush1.msra.mxu0 0.0
  %10803 = vmatprep.subr.mxu0 0.0
  %10804 = vmatpush1.msra.mxu0 0.0
  %10805 = vmatprep.subr.mxu0 0.0
  %10806 = vmatpush1.msra.mxu0 0.0
  %10807 = vmatprep.subr.mxu0 0.0
  %10808 = vmatpush1.msra.mxu0 0.0
  %10809 = vmatprep.subr.mxu0 0.0
  %10810 = vmatpush1.msra.mxu0 0.0
  %10811 = vmatprep.subr.mxu0 0.0
  %10812 = vmatpush1.msra.mxu0 0.0
  %10813 = vmatprep.subr.mxu0 0.0
  %10814 = vmatpush1.msra.mxu0 0.0
  %10815 = vmatprep.subr.mxu0 0.0
  %10816 = vmatpush1.msra.mxu0 0.0
  %10817 = vmatprep.subr.mxu0 0.0
  %10818 = vmatpush1.msra.mxu0 0.0
  %10819 = vmatprep.subr.mxu0 0.0
  %10820 = vmatpush1.msra.mxu0 0.0
  %10821 = vmatprep.subr.mxu0 0.0
  %10822 = vmatpush1.msra.mxu0 %v10789
  %10823 = vmatprep.subr.mxu0 0.0
  %10824 = vmatpush2.msra.mxu0 0.0
  %10825 = vmatprep.subr.mxu0 0.0
  %10826 = vmatpush2.msra.mxu0 0.0
  %10827 = vmatprep.subr.mxu0 0.0
  %10828 = vmatpush2.msra.mxu0 0.0
  %10829 = vmatprep.subr.mxu0 0.0
  %10830 = vmatpush2.msra.mxu0 0.0
  %10831 = vmatprep.subr.mxu0 0.0
  %10832 = vmatpush2.msra.mxu0 0.0
  %10833 = vmatprep.subr.mxu0 0.0
  %10834 = vmatpush2.msra.mxu0 0.0
  %10835 = vmatprep.subr.mxu0 0.0
  %10836 = vmatpush2.msra.mxu0 0.0
  %10837 = vmatprep.subr.mxu0 0.0
  %10838 = vmatpush2.msra.mxu0 0.0
  %10839 = vmatprep.subr.mxu0 0.0
  %10840 = vmatpush2.msra.mxu0 0.0
  %10841 = vmatprep.subr.mxu0 0.0
  %10842 = vmatpush2.msra.mxu0 0.0
  %10843 = vmatprep.subr.mxu0 0.0
  %10844 = vmatpush2.msra.mxu0 0.0
  %10845 = vmatprep.subr.mxu0 0.0
  %10846 = vmatpush2.msra.mxu0 0.0
  %10847 = vmatprep.subr.mxu0 0.0
  %10848 = vmatpush2.msra.mxu0 0.0
  %10849 = vmatprep.subr.mxu0 0.0
  %10850 = vmatpush2.msra.mxu0 0.0
  %10851 = vmatprep.subr.mxu0 0.0
  %10852 = vmatpush2.msra.mxu0 0.0
  %10853 = vmatprep.subr.mxu0 0.0
  %10854 = vmatpush2.msra.mxu0 0.0
  %10855 = vmatprep.mubr.f32.mxu0 0.0
  %10856 = vmatmul.mubr.f32.gmra.mxu0 %v10376
  %v10857 = vpop.f32.mrf.mxu0
  %v10858 = vadd.f32 0.0, %v10857
  %v10859 = vpop.f32.mrf.mxu0
  %10860 = vdwg.mxu0
  %v10861 = vadd.f32 %v10784, %v10858
  %v10862 = vld [vmem:[#allocation3] sm:$0x1]
  %v10864 = vlaneseq
  %v10865 = vshrl.u32 %v10864, 7
  %v10866 = vsub.s32 0, %v10865
  %v10867 = vrot.slane %v10862, %v10866
  %v10869 = vadd.f32 %v10861, %v10867
  %vm10870 = vcmask 7168
  %10871 = vst.msk [vmem:[%s28] sm:$0xff] %vm10870, %v10869
  // Predicated region
  $region114: #{tab_transformer_forward.1} parent=0 // pred_check
    _
  $region115: #{tab_transformer_forward.1} parent=0 // pred_check_branch
    %10873 = sbr.rel (0) target = $region117
  $region116: #{tab_transformer_forward.1} parent=0 // pred_region
    _
  $region117: #{tab_transformer_forward.1} parent=0 // pred_fallthru
    _
  // Predicated region
  $region118: #{tab_transformer_forward.1} parent=0 // pred_check
    _
  $region119: #{tab_transformer_forward.1} parent=0 // pred_check_branch
    %10875 = sbr.rel (0) target = $region121
  $region120: #{tab_transformer_forward.1} parent=0 // pred_region
    _
  $region121: #{tab_transformer_forward.1} parent=0 // pred_fallthru
    _

</llo_original>
